<compile_context>
chip_gen: v7x
topology: tpu7x:2x2x1
jax: 0.10.0
libtpu: 0.0.40
codegen_flags: <defaults>
</compile_context>

<pallas_src>
import functools

import jax
import jax.numpy as jnp
from jax.experimental import pallas as pl
from jax.experimental.pallas import tpu as pltpu

# ---------------- config (small, T5-like) ----------------
VOCAB = 64
D_MODEL = 32
N_HEADS = 4
D_KV = 8                      # D_MODEL // N_HEADS
INNER = N_HEADS * D_KV        # 32
D_FF = 64
N_LAYERS = 2
NUM_BUCKETS = 32
MAX_DIST = 128
LN_EPS = 1e-6
NEG_INF = -1e9

B = 2
L_ENC = 8
L_DEC = 8


# ---------------- in-kernel helpers (traced inside the fused kernel) -------
def _rmsnorm(x, w):
    """T5LayerNorm: no mean subtraction, no bias. x:(M,D) f32, w:(1,D) f32."""
    var = jnp.mean(x * x, axis=-1, keepdims=True)
    return x * jax.lax.rsqrt(var + LN_EPS) * w


def _ffn(h, wi, wo):
    """T5 DenseReluDense: relu(h @ wi) @ wo. bf16 MXU operands, f32 accum."""
    a = jnp.maximum(
        jnp.dot(h.astype(jnp.bfloat16), wi, preferred_element_type=jnp.float32),
        0.0)
    return jnp.dot(a.astype(jnp.bfloat16), wo,
                   preferred_element_type=jnp.float32)


def _split_heads(t):
    """(L, INNER) -> (H, L, D_KV) via static slices + stack (layout-safe)."""
    return jnp.stack(
        [t[:, h * D_KV:(h + 1) * D_KV] for h in range(N_HEADS)], axis=0)


def _attention(h_q, h_kv, lq, lk, wq, wk, wv, wo, bias):
    """Multi-head attention, heads batched (T5: no 1/sqrt(d) scaling).

    h_q:(lq,D) f32, h_kv:(lk,D) f32; wq/wk/wv:(D,INNER) bf16, wo:(INNER,D) bf16;
    bias:(H,lq,lk) f32 or None (cross-attention). Returns (lq, D) f32.
    """
    # Fused projections: ONE matmul per projection (all heads at once).
    q = jnp.dot(h_q.astype(jnp.bfloat16), wq,
                preferred_element_type=jnp.float32)          # (lq, INNER)
    k = jnp.dot(h_kv.astype(jnp.bfloat16), wk,
                preferred_element_type=jnp.float32)          # (lk, INNER)
    v = jnp.dot(h_kv.astype(jnp.bfloat16), wv,
                preferred_element_type=jnp.float32)          # (lk, INNER)

    qh = _split_heads(q)                                     # (H, lq, D_KV)
    kh = _split_heads(k)                                     # (H, lk, D_KV)
    vh = _split_heads(v)                                     # (H, lk, D_KV)

    # One batched score einsum + ONE softmax over all heads.
    s = jnp.einsum("hqd,hkd->hqk", qh.astype(jnp.bfloat16),
                   kh.astype(jnp.bfloat16),
                   preferred_element_type=jnp.float32)       # (H, lq, lk)
    if bias is not None:                 # rel-position bias (+ causal mask)
        s = s + bias
    s = s - jnp.max(s, axis=-1, keepdims=True)
    p = jnp.exp(s)
    denom = jnp.sum(p, axis=-1, keepdims=True)
    ctx = jnp.einsum("hqk,hkd->hqd", p.astype(jnp.bfloat16),
                     vh.astype(jnp.bfloat16),
                     preferred_element_type=jnp.float32)     # (H, lq, D_KV)
    ctx = ctx * pl.reciprocal(denom, approx=True)

    # Merge heads back along lanes (static concat, no minor-dim reshape),
    # then a single fused output projection.
    ctx2d = jnp.concatenate([ctx[h] for h in range(N_HEADS)], axis=-1)
    return jnp.dot(ctx2d.astype(jnp.bfloat16), wo,
                   preferred_element_type=jnp.float32)


# ---------------- the single fused whole-model kernel ----------------------
def _t5_kernel(ls, lt,
               x_ref, y_ref, eb_ref, db_ref,
               e_wq, e_wk, e_wv, e_wo, e_lnsa, e_lnff, e_wi, e_wff, e_lnf,
               s_wq, s_wk, s_wv, s_wo, c_wq, c_wk, c_wv, c_wo,
               d_lnsa, d_lnca, d_lnff, d_wi, d_wff, d_lnf,
               out_ref):
    enc_bias = eb_ref[...]          # (H, ls, ls) f32, shared by every layer
    dec_bias = db_ref[...]          # (H, lt, lt) f32 (rel bias + causal mask)

    # ----- encoder stack (this grid step's batch element) -----
    x = x_ref[...]                  # (ls, D) f32
    for l in range(N_LAYERS):
        h = _rmsnorm(x, e_lnsa[l])
        x = x + _attention(h, h, ls, ls,
                           e_wq[l], e_wk[l], e_wv[l], e_wo[l], enc_bias)
        h = _rmsnorm(x, e_lnff[l])
        x = x + _ffn(h, e_wi[l], e_wff[l])
    enc_out = _rmsnorm(x, e_lnf[...])                        # (ls, D) f32

    # ----- decoder stack -----
    y = y_ref[...]                  # (lt, D) f32
    for l in range(N_LAYERS):
        h = _rmsnorm(y, d_lnsa[l])
        y = y + _attention(h, h, lt, lt,
                           s_wq[l], s_wk[l], s_wv[l], s_wo[l], dec_bias)
        h = _rmsnorm(y, d_lnca[l])
        y = y + _attention(h, enc_out, lt, ls,
                           c_wq[l], c_wk[l], c_wv[l], c_wo[l], None)
        h = _rmsnorm(y, d_lnff[l])
        y = y + _ffn(h, d_wi[l], d_wff[l])
    final = _rmsnorm(y, d_lnf[...])                          # (lt, D) f32

    # Lane-dense output slab: pack (lt, D) -> (lt*D/128, 128) with static
    # slices + lane concats (no minor-dim reshape), unmasked 128-lane stores.
    per_row = 128 // D_MODEL
    n_rows = (lt * D_MODEL) // 128
    rows = []
    for r in range(n_rows):
        pieces = [final[r * per_row + j: r * per_row + j + 1, :]
                  for j in range(per_row)]
        rows.append(jnp.concatenate(pieces, axis=1))         # (1, 128)
    out_ref[...] = jnp.concatenate(rows, axis=0)[None]       # (1, n_rows, 128)


# ---------------- plain-JAX glue (index/bucket math, embeddings) -----------
def relative_position_bucket(rel, bidirectional, num_buckets, max_distance):
    ret = jnp.zeros_like(rel)
    if bidirectional:
        num_buckets //= 2
        ret = ret + (rel > 0).astype(jnp.int32) * num_buckets
        rp = jnp.abs(rel)
    else:
        rp = -jnp.minimum(rel, 0)
    max_exact = num_buckets // 2
    is_small = rp < max_exact
    rp_f = jnp.maximum(rp, 1).astype(jnp.float32)
    val_if_large = max_exact + (
        jnp.log(rp_f / max_exact) / jnp.log(max_distance / max_exact)
        * (num_buckets - max_exact)).astype(jnp.int32)
    val_if_large = jnp.minimum(val_if_large, num_buckets - 1)
    return ret + jnp.where(is_small, rp, val_if_large)


def compute_position_bias(rel_table, q_len, k_len, bidirectional):
    ctx = jnp.arange(q_len)[:, None]
    mem = jnp.arange(k_len)[None, :]
    bucket = relative_position_bucket(mem - ctx, bidirectional,
                                      NUM_BUCKETS, MAX_DIST)
    values = rel_table[bucket]                     # (q, k, H)
    return jnp.transpose(values, (2, 0, 1))        # (H, q, k) -- no batch dim


@jax.jit
def t5_forward(params, input_ids, decoder_input_ids):
    bsz, ls = input_ids.shape
    lt = decoder_input_ids.shape[1]
    assert (lt * D_MODEL) % 128 == 0 and D_MODEL <= 128

    # embeddings (data-dependent gather; kept in plain JAX glue)
    x_emb = params["shared"][input_ids].reshape(bsz * ls, D_MODEL)
    y_emb = params["shared"][decoder_input_ids].reshape(bsz * lt, D_MODEL)

    # relative-position biases, computed once (not per layer, not per batch)
    enc_bias = compute_position_bias(params["enc_rel"], ls, ls,
                                     bidirectional=True)          # (H,ls,ls)
    dec_bias = compute_position_bias(params["dec_rel"], lt, lt,
                                     bidirectional=False)         # (H,lt,lt)
    causal = jnp.where(jnp.arange(lt)[None, :] <= jnp.arange(lt)[:, None],
                       0.0, NEG_INF)
    dec_bias = dec_bias + causal[None]

    e, d = params["enc"], params["dec"]
    operands = (
        x_emb, y_emb, enc_bias, dec_bias,
        e["wq"], e["wk"], e["wv"], e["wo"],
        e["ln_sa"], e["ln_ff"], e["wi"], e["wff"], e["ln_final"],
        d["sa_wq"], d["sa_wk"], d["sa_wv"], d["sa_wo"],
        d["ca_wq"], d["ca_wk"], d["ca_wv"], d["ca_wo"],
        d["ln_sa"], d["ln_ca"], d["ln_ff"], d["wi"], d["wff"], d["ln_final"],
    )

    def _const_spec(a):
        return pl.BlockSpec(a.shape, lambda b, nd=a.ndim: (0,) * nd)

    in_specs = [
        pl.BlockSpec((ls, D_MODEL), lambda b: (b, 0)),   # x_emb: per batch
        pl.BlockSpec((lt, D_MODEL), lambda b: (b, 0)),   # y_emb: per batch
    ] + [_const_spec(a) for a in operands[2:]]           # weights/biases: once

    n_rows = (lt * D_MODEL) // 128
    out = pl.pallas_call(
        functools.partial(_t5_kernel, ls, lt),
        out_shape=jax.ShapeDtypeStruct((bsz, n_rows, 128), jnp.float32),
        grid=(bsz,),
        in_specs=in_specs,
        out_specs=pl.BlockSpec((1, n_rows, 128), lambda b: (b, 0, 0)),
        compiler_params=pltpu.CompilerParams(
            dimension_semantics=("parallel",)),           # v7x: 2nd TC on batch
    )(*operands)
    # lane-dense slab -> (bsz, lt, D_MODEL); row-major packing is exact inverse
    return out.reshape(bsz, lt, D_MODEL)


# ---------------- deterministic synthetic params ----------------
def init_params(key):
    keys = iter(jax.random.split(key, 64))

    def w(shape, std=0.02, dtype=jnp.bfloat16):
        return (jax.random.normal(next(keys), shape, jnp.float32)
                * std).astype(dtype)

    def ones_ln(n_layers):
        return jnp.ones((n_layers, 1, D_MODEL), jnp.float32)

    # matmul weights stored bf16 (MXU-native); norms/embeddings/rel tables f32
    enc = {
        "wq": w((N_LAYERS, D_MODEL, INNER)),
        "wk": w((N_LAYERS, D_MODEL, INNER)),
        "wv": w((N_LAYERS, D_MODEL, INNER)),
        "wo": w((N_LAYERS, INNER, D_MODEL)),
        "ln_sa": ones_ln(N_LAYERS),
        "ln_ff": ones_ln(N_LAYERS),
        "wi": w((N_LAYERS, D_MODEL, D_FF)),
        "wff": w((N_LAYERS, D_FF, D_MODEL)),
        "ln_final": jnp.ones((1, D_MODEL), jnp.float32),
    }
    dec = {
        "sa_wq": w((N_LAYERS, D_MODEL, INNER)),
        "sa_wk": w((N_LAYERS, D_MODEL, INNER)),
        "sa_wv": w((N_LAYERS, D_MODEL, INNER)),
        "sa_wo": w((N_LAYERS, INNER, D_MODEL)),
        "ca_wq": w((N_LAYERS, D_MODEL, INNER)),
        "ca_wk": w((N_LAYERS, D_MODEL, INNER)),
        "ca_wv": w((N_LAYERS, D_MODEL, INNER)),
        "ca_wo": w((N_LAYERS, INNER, D_MODEL)),
        "ln_sa": ones_ln(N_LAYERS),
        "ln_ca": ones_ln(N_LAYERS),
        "ln_ff": ones_ln(N_LAYERS),
        "wi": w((N_LAYERS, D_MODEL, D_FF)),
        "wff": w((N_LAYERS, D_FF, D_MODEL)),
        "ln_final": jnp.ones((1, D_MODEL), jnp.float32),
    }
    return {
        "shared": w((VOCAB, D_MODEL), std=1.0, dtype=jnp.float32),
        "enc_rel": w((NUM_BUCKETS, N_HEADS), dtype=jnp.float32),
        "dec_rel": w((NUM_BUCKETS, N_HEADS), dtype=jnp.float32),
        "enc": enc,
        "dec": dec,
    }


if __name__ == "__main__":
    root = jax.random.PRNGKey(0)
    pkey, ikey, dkey = jax.random.split(root, 3)
    params = init_params(pkey)
    input_ids = jax.random.randint(ikey, (B, L_ENC), 0, VOCAB, dtype=jnp.int32)
    decoder_input_ids = jax.random.randint(dkey, (B, L_DEC), 0, VOCAB,
                                           dtype=jnp.int32)
    out = t5_forward(params, input_ids, decoder_input_ids)
    jax.block_until_ready(out)
    assert out.shape == (B, L_DEC, D_MODEL)
    assert bool(jnp.all(jnp.isfinite(out)))
    print("KERNEL_OK")
</pallas_src>

<mosaic_0001>
module attributes {stable_mosaic.version = 11 : i64} {
  func.func @_t5_kernel(%arg0: i32, %arg1: memref<8x32xf32, #tpu.memory_space<vmem>>, %arg2: memref<8x32xf32, #tpu.memory_space<vmem>>, %arg3: memref<4x8x8xf32, #tpu.memory_space<vmem>>, %arg4: memref<4x8x8xf32, #tpu.memory_space<vmem>>, %arg5: memref<2x32x32xbf16, #tpu.memory_space<vmem>>, %arg6: memref<2x32x32xbf16, #tpu.memory_space<vmem>>, %arg7: memref<2x32x32xbf16, #tpu.memory_space<vmem>>, %arg8: memref<2x32x32xbf16, #tpu.memory_space<vmem>>, %arg9: memref<2x1x32xf32, #tpu.memory_space<vmem>>, %arg10: memref<2x1x32xf32, #tpu.memory_space<vmem>>, %arg11: memref<2x32x64xbf16, #tpu.memory_space<vmem>>, %arg12: memref<2x64x32xbf16, #tpu.memory_space<vmem>>, %arg13: memref<1x32xf32, #tpu.memory_space<vmem>>, %arg14: memref<2x32x32xbf16, #tpu.memory_space<vmem>>, %arg15: memref<2x32x32xbf16, #tpu.memory_space<vmem>>, %arg16: memref<2x32x32xbf16, #tpu.memory_space<vmem>>, %arg17: memref<2x32x32xbf16, #tpu.memory_space<vmem>>, %arg18: memref<2x32x32xbf16, #tpu.memory_space<vmem>>, %arg19: memref<2x32x32xbf16, #tpu.memory_space<vmem>>, %arg20: memref<2x32x32xbf16, #tpu.memory_space<vmem>>, %arg21: memref<2x32x32xbf16, #tpu.memory_space<vmem>>, %arg22: memref<2x1x32xf32, #tpu.memory_space<vmem>>, %arg23: memref<2x1x32xf32, #tpu.memory_space<vmem>>, %arg24: memref<2x1x32xf32, #tpu.memory_space<vmem>>, %arg25: memref<2x32x64xbf16, #tpu.memory_space<vmem>>, %arg26: memref<2x64x32xbf16, #tpu.memory_space<vmem>>, %arg27: memref<1x32xf32, #tpu.memory_space<vmem>>, %arg28: memref<1x2x128xf32, #tpu.memory_space<vmem>>) attributes {dimension_semantics = [#tpu.dimension_semantics<parallel>], iteration_bounds = array<i64: 2>, scalar_prefetch = 0 : i64, scratch_operands = 0 : i64, tpu.core_type = #tpu.core_type<tc>, window_params = [{transform_indices = @transform_0, window_bounds = array<i64: 8, 32>}, {transform_indices = @transform_1, window_bounds = array<i64: 8, 32>}, {pipeline_mode = #tpu.pipeline_mode<synchronous>, transform_indices = @transform_2, window_bounds = array<i64: 4, 8, 8>}, {pipeline_mode = #tpu.pipeline_mode<synchronous>, transform_indices = @transform_3, window_bounds = array<i64: 4, 8, 8>}, {pipeline_mode = #tpu.pipeline_mode<synchronous>, transform_indices = @transform_4, window_bounds = array<i64: 2, 32, 32>}, {pipeline_mode = #tpu.pipeline_mode<synchronous>, transform_indices = @transform_5, window_bounds = array<i64: 2, 32, 32>}, {pipeline_mode = #tpu.pipeline_mode<synchronous>, transform_indices = @transform_6, window_bounds = array<i64: 2, 32, 32>}, {pipeline_mode = #tpu.pipeline_mode<synchronous>, transform_indices = @transform_7, window_bounds = array<i64: 2, 32, 32>}, {pipeline_mode = #tpu.pipeline_mode<synchronous>, transform_indices = @transform_8, window_bounds = array<i64: 2, 1, 32>}, {pipeline_mode = #tpu.pipeline_mode<synchronous>, transform_indices = @transform_9, window_bounds = array<i64: 2, 1, 32>}, {pipeline_mode = #tpu.pipeline_mode<synchronous>, transform_indices = @transform_10, window_bounds = array<i64: 2, 32, 64>}, {pipeline_mode = #tpu.pipeline_mode<synchronous>, transform_indices = @transform_11, window_bounds = array<i64: 2, 64, 32>}, {pipeline_mode = #tpu.pipeline_mode<synchronous>, transform_indices = @transform_12, window_bounds = array<i64: 1, 32>}, {pipeline_mode = #tpu.pipeline_mode<synchronous>, transform_indices = @transform_13, window_bounds = array<i64: 2, 32, 32>}, {pipeline_mode = #tpu.pipeline_mode<synchronous>, transform_indices = @transform_14, window_bounds = array<i64: 2, 32, 32>}, {pipeline_mode = #tpu.pipeline_mode<synchronous>, transform_indices = @transform_15, window_bounds = array<i64: 2, 32, 32>}, {pipeline_mode = #tpu.pipeline_mode<synchronous>, transform_indices = @transform_16, window_bounds = array<i64: 2, 32, 32>}, {pipeline_mode = #tpu.pipeline_mode<synchronous>, transform_indices = @transform_17, window_bounds = array<i64: 2, 32, 32>}, {pipeline_mode = #tpu.pipeline_mode<synchronous>, transform_indices = @transform_18, window_bounds = array<i64: 2, 32, 32>}, {pipeline_mode = #tpu.pipeline_mode<synchronous>, transform_indices = @transform_19, window_bounds = array<i64: 2, 32, 32>}, {pipeline_mode = #tpu.pipeline_mode<synchronous>, transform_indices = @transform_20, window_bounds = array<i64: 2, 32, 32>}, {pipeline_mode = #tpu.pipeline_mode<synchronous>, transform_indices = @transform_21, window_bounds = array<i64: 2, 1, 32>}, {pipeline_mode = #tpu.pipeline_mode<synchronous>, transform_indices = @transform_22, window_bounds = array<i64: 2, 1, 32>}, {pipeline_mode = #tpu.pipeline_mode<synchronous>, transform_indices = @transform_23, window_bounds = array<i64: 2, 1, 32>}, {pipeline_mode = #tpu.pipeline_mode<synchronous>, transform_indices = @transform_24, window_bounds = array<i64: 2, 32, 64>}, {pipeline_mode = #tpu.pipeline_mode<synchronous>, transform_indices = @transform_25, window_bounds = array<i64: 2, 64, 32>}, {pipeline_mode = #tpu.pipeline_mode<synchronous>, transform_indices = @transform_26, window_bounds = array<i64: 1, 32>}, {transform_indices = @transform_27, window_bounds = array<i64: 1, 2, 128>}]} {
    %c0 = arith.constant 0 : index
    %c0_0 = arith.constant 0 : index
    %c0_1 = arith.constant 0 : index
    %0 = vector.load %arg3[%c0, %c0_0, %c0_1] : memref<4x8x8xf32, #tpu.memory_space<vmem>>, vector<4x8x8xf32>
    %c0_2 = arith.constant 0 : index
    %c0_3 = arith.constant 0 : index
    %c0_4 = arith.constant 0 : index
    %1 = vector.load %arg4[%c0_2, %c0_3, %c0_4] : memref<4x8x8xf32, #tpu.memory_space<vmem>>, vector<4x8x8xf32>
    %c0_5 = arith.constant 0 : index
    %c0_6 = arith.constant 0 : index
    %2 = vector.load %arg1[%c0_5, %c0_6] : memref<8x32xf32, #tpu.memory_space<vmem>>, vector<8x32xf32>
    %c0_7 = arith.constant 0 : index
    %c0_8 = arith.constant 0 : index
    %c0_9 = arith.constant 0 : index
    %3 = vector.load %arg9[%c0_7, %c0_8, %c0_9] : memref<2x1x32xf32, #tpu.memory_space<vmem>>, vector<1x1x32xf32>
    %4 = vector.shape_cast %3 : vector<1x1x32xf32> to vector<1x32xf32>
    %5 = arith.mulf %2, %2 : vector<8x32xf32>
    %cst = arith.constant dense<0.000000e+00> : vector<8xf32>
    %6 = vector.multi_reduction <add>, %5, %cst [1] : vector<8x32xf32> to vector<8xf32>
    %7 = vector.shape_cast %6 : vector<8xf32> to vector<8x1xf32>
    %cst_10 = arith.constant 3.200000e+01 : f32
    %8 = vector.broadcast %cst_10 : f32 to vector<8x1xf32>
    %9 = arith.divf %7, %8 : vector<8x1xf32>
    %cst_11 = arith.constant 9.99999997E-7 : f32
    %10 = vector.broadcast %cst_11 : f32 to vector<8x1xf32>
    %11 = arith.addf %9, %10 : vector<8x1xf32>
    %12 = math.rsqrt %11 : vector<8x1xf32>
    %13 = vector.broadcast %12 : vector<8x1xf32> to vector<8x32xf32>
    %14 = arith.mulf %2, %13 : vector<8x32xf32>
    %15 = vector.broadcast %4 : vector<1x32xf32> to vector<8x32xf32>
    %16 = arith.mulf %14, %15 : vector<8x32xf32>
    %c0_12 = arith.constant 0 : index
    %c0_13 = arith.constant 0 : index
    %c0_14 = arith.constant 0 : index
    %17 = vector.load %arg5[%c0_12, %c0_13, %c0_14] : memref<2x32x32xbf16, #tpu.memory_space<vmem>>, vector<1x32x32xbf16>
    %18 = vector.shape_cast %17 : vector<1x32x32xbf16> to vector<32x32xbf16>
    %c0_15 = arith.constant 0 : index
    %c0_16 = arith.constant 0 : index
    %c0_17 = arith.constant 0 : index
    %19 = vector.load %arg6[%c0_15, %c0_16, %c0_17] : memref<2x32x32xbf16, #tpu.memory_space<vmem>>, vector<1x32x32xbf16>
    %20 = vector.shape_cast %19 : vector<1x32x32xbf16> to vector<32x32xbf16>
    %c0_18 = arith.constant 0 : index
    %c0_19 = arith.constant 0 : index
    %c0_20 = arith.constant 0 : index
    %21 = vector.load %arg7[%c0_18, %c0_19, %c0_20] : memref<2x32x32xbf16, #tpu.memory_space<vmem>>, vector<1x32x32xbf16>
    %22 = vector.shape_cast %21 : vector<1x32x32xbf16> to vector<32x32xbf16>
    %c0_21 = arith.constant 0 : index
    %c0_22 = arith.constant 0 : index
    %c0_23 = arith.constant 0 : index
    %23 = vector.load %arg8[%c0_21, %c0_22, %c0_23] : memref<2x32x32xbf16, #tpu.memory_space<vmem>>, vector<1x32x32xbf16>
    %24 = vector.shape_cast %23 : vector<1x32x32xbf16> to vector<32x32xbf16>
    %25 = arith.truncf %16 : vector<8x32xf32> to vector<8x32xbf16>
    %cst_24 = arith.constant dense<0.000000e+00> : vector<8x32xf32>
    %26 = tpu.matmul %25, %18, %cst_24 {dimension_numbers = #tpu.dot_dimension_numbers<[1], [0], [0], [1], [0, 0, 1, 1], [], []>} : vector<8x32xbf16>, vector<32x32xbf16>, vector<8x32xf32> -> vector<8x32xf32>
    %27 = arith.truncf %16 : vector<8x32xf32> to vector<8x32xbf16>
    %cst_25 = arith.constant dense<0.000000e+00> : vector<8x32xf32>
    %28 = tpu.matmul %27, %20, %cst_25 {dimension_numbers = #tpu.dot_dimension_numbers<[1], [0], [0], [1], [0, 0, 1, 1], [], []>} : vector<8x32xbf16>, vector<32x32xbf16>, vector<8x32xf32> -> vector<8x32xf32>
    %29 = arith.truncf %16 : vector<8x32xf32> to vector<8x32xbf16>
    %cst_26 = arith.constant dense<0.000000e+00> : vector<8x32xf32>
    %30 = tpu.matmul %29, %22, %cst_26 {dimension_numbers = #tpu.dot_dimension_numbers<[1], [0], [0], [1], [0, 0, 1, 1], [], []>} : vector<8x32xbf16>, vector<32x32xbf16>, vector<8x32xf32> -> vector<8x32xf32>
    %31 = vector.extract_strided_slice %26 {offsets = [0, 0], sizes = [8, 8], strides = [1, 1]} : vector<8x32xf32> to vector<8x8xf32>
    %32 = vector.extract_strided_slice %26 {offsets = [0, 8], sizes = [8, 8], strides = [1, 1]} : vector<8x32xf32> to vector<8x8xf32>
    %33 = vector.extract_strided_slice %26 {offsets = [0, 16], sizes = [8, 8], strides = [1, 1]} : vector<8x32xf32> to vector<8x8xf32>
    %34 = vector.extract_strided_slice %26 {offsets = [0, 24], sizes = [8, 8], strides = [1, 1]} : vector<8x32xf32> to vector<8x8xf32>
    %35 = vector.shape_cast %31 : vector<8x8xf32> to vector<1x8x8xf32>
    %36 = vector.shape_cast %32 : vector<8x8xf32> to vector<1x8x8xf32>
    %37 = vector.shape_cast %33 : vector<8x8xf32> to vector<1x8x8xf32>
    %38 = vector.shape_cast %34 : vector<8x8xf32> to vector<1x8x8xf32>
    %39 = tpu.concatenate %35, %36, %37, %38 in 0 : vector<1x8x8xf32>, vector<1x8x8xf32>, vector<1x8x8xf32>, vector<1x8x8xf32> -> vector<4x8x8xf32>
    %40 = vector.extract_strided_slice %28 {offsets = [0, 0], sizes = [8, 8], strides = [1, 1]} : vector<8x32xf32> to vector<8x8xf32>
    %41 = vector.extract_strided_slice %28 {offsets = [0, 8], sizes = [8, 8], strides = [1, 1]} : vector<8x32xf32> to vector<8x8xf32>
    %42 = vector.extract_strided_slice %28 {offsets = [0, 16], sizes = [8, 8], strides = [1, 1]} : vector<8x32xf32> to vector<8x8xf32>
    %43 = vector.extract_strided_slice %28 {offsets = [0, 24], sizes = [8, 8], strides = [1, 1]} : vector<8x32xf32> to vector<8x8xf32>
    %44 = vector.shape_cast %40 : vector<8x8xf32> to vector<1x8x8xf32>
    %45 = vector.shape_cast %41 : vector<8x8xf32> to vector<1x8x8xf32>
    %46 = vector.shape_cast %42 : vector<8x8xf32> to vector<1x8x8xf32>
    %47 = vector.shape_cast %43 : vector<8x8xf32> to vector<1x8x8xf32>
    %48 = tpu.concatenate %44, %45, %46, %47 in 0 : vector<1x8x8xf32>, vector<1x8x8xf32>, vector<1x8x8xf32>, vector<1x8x8xf32> -> vector<4x8x8xf32>
    %49 = vector.extract_strided_slice %30 {offsets = [0, 0], sizes = [8, 8], strides = [1, 1]} : vector<8x32xf32> to vector<8x8xf32>
    %50 = vector.extract_strided_slice %30 {offsets = [0, 8], sizes = [8, 8], strides = [1, 1]} : vector<8x32xf32> to vector<8x8xf32>
    %51 = vector.extract_strided_slice %30 {offsets = [0, 16], sizes = [8, 8], strides = [1, 1]} : vector<8x32xf32> to vector<8x8xf32>
    %52 = vector.extract_strided_slice %30 {offsets = [0, 24], sizes = [8, 8], strides = [1, 1]} : vector<8x32xf32> to vector<8x8xf32>
    %53 = vector.shape_cast %49 : vector<8x8xf32> to vector<1x8x8xf32>
    %54 = vector.shape_cast %50 : vector<8x8xf32> to vector<1x8x8xf32>
    %55 = vector.shape_cast %51 : vector<8x8xf32> to vector<1x8x8xf32>
    %56 = vector.shape_cast %52 : vector<8x8xf32> to vector<1x8x8xf32>
    %57 = tpu.concatenate %53, %54, %55, %56 in 0 : vector<1x8x8xf32>, vector<1x8x8xf32>, vector<1x8x8xf32>, vector<1x8x8xf32> -> vector<4x8x8xf32>
    %58 = arith.truncf %39 : vector<4x8x8xf32> to vector<4x8x8xbf16>
    %59 = arith.truncf %48 : vector<4x8x8xf32> to vector<4x8x8xbf16>
    "tpu.trace_start"() <{level = 10 : i32, message = "hqd,hkd->hqk"}> : () -> ()
    %cst_27 = arith.constant dense<0.000000e+00> : vector<4x8x8xf32>
    %60 = tpu.matmul %58, %59, %cst_27 {dimension_numbers = #tpu.dot_dimension_numbers<[2], [2], [1], [1], [0, 0, 0, 1, 1, 1], [0], [0]>} : vector<4x8x8xbf16>, vector<4x8x8xbf16>, vector<4x8x8xf32> -> vector<4x8x8xf32>
    "tpu.trace_stop"() : () -> ()
    %61 = arith.addf %60, %0 : vector<4x8x8xf32>
    %cst_28 = arith.constant dense<0xFF800000> : vector<4x8xf32>
    %62 = vector.multi_reduction <maximumf>, %61, %cst_28 [2] : vector<4x8x8xf32> to vector<4x8xf32>
    %63 = vector.shape_cast %62 : vector<4x8xf32> to vector<4x8x1xf32>
    %64 = vector.broadcast %63 : vector<4x8x1xf32> to vector<4x8x8xf32>
    %65 = arith.subf %61, %64 : vector<4x8x8xf32>
    %66 = math.exp %65 : vector<4x8x8xf32>
    %cst_29 = arith.constant dense<0.000000e+00> : vector<4x8xf32>
    %67 = vector.multi_reduction <add>, %66, %cst_29 [2] : vector<4x8x8xf32> to vector<4x8xf32>
    %68 = vector.shape_cast %67 : vector<4x8xf32> to vector<4x8x1xf32>
    %69 = arith.truncf %66 : vector<4x8x8xf32> to vector<4x8x8xbf16>
    %70 = arith.truncf %57 : vector<4x8x8xf32> to vector<4x8x8xbf16>
    "tpu.trace_start"() <{level = 10 : i32, message = "hqk,hkd->hqd"}> : () -> ()
    %cst_30 = arith.constant dense<0.000000e+00> : vector<4x8x8xf32>
    %71 = tpu.matmul %69, %70, %cst_30 {dimension_numbers = #tpu.dot_dimension_numbers<[2], [1], [1], [2], [0, 0, 0, 1, 1, 2], [0], [0]>} : vector<4x8x8xbf16>, vector<4x8x8xbf16>, vector<4x8x8xf32> -> vector<4x8x8xf32>
    "tpu.trace_stop"() : () -> ()
    %72 = tpu.reciprocal %68 {approx = true} : vector<4x8x1xf32> -> vector<4x8x1xf32>
    %73 = vector.broadcast %72 : vector<4x8x1xf32> to vector<4x8x8xf32>
    %74 = arith.mulf %71, %73 : vector<4x8x8xf32>
    %75 = vector.extract_strided_slice %74 {offsets = [0, 0, 0], sizes = [1, 8, 8], strides = [1, 1, 1]} : vector<4x8x8xf32> to vector<1x8x8xf32>
    %76 = vector.shape_cast %75 : vector<1x8x8xf32> to vector<8x8xf32>
    %77 = vector.extract_strided_slice %74 {offsets = [1, 0, 0], sizes = [1, 8, 8], strides = [1, 1, 1]} : vector<4x8x8xf32> to vector<1x8x8xf32>
    %78 = vector.shape_cast %77 : vector<1x8x8xf32> to vector<8x8xf32>
    %79 = vector.extract_strided_slice %74 {offsets = [2, 0, 0], sizes = [1, 8, 8], strides = [1, 1, 1]} : vector<4x8x8xf32> to vector<1x8x8xf32>
    %80 = vector.shape_cast %79 : vector<1x8x8xf32> to vector<8x8xf32>
    %81 = vector.extract_strided_slice %74 {offsets = [3, 0, 0], sizes = [1, 8, 8], strides = [1, 1, 1]} : vector<4x8x8xf32> to vector<1x8x8xf32>
    %82 = vector.shape_cast %81 : vector<1x8x8xf32> to vector<8x8xf32>
    %83 = tpu.concatenate %76, %78, %80, %82 in 1 : vector<8x8xf32>, vector<8x8xf32>, vector<8x8xf32>, vector<8x8xf32> -> vector<8x32xf32>
    %84 = arith.truncf %83 : vector<8x32xf32> to vector<8x32xbf16>
    %cst_31 = arith.constant dense<0.000000e+00> : vector<8x32xf32>
    %85 = tpu.matmul %84, %24, %cst_31 {dimension_numbers = #tpu.dot_dimension_numbers<[1], [0], [0], [1], [0, 0, 1, 1], [], []>} : vector<8x32xbf16>, vector<32x32xbf16>, vector<8x32xf32> -> vector<8x32xf32>
    %86 = arith.addf %2, %85 : vector<8x32xf32>
    %c0_32 = arith.constant 0 : index
    %c0_33 = arith.constant 0 : index
    %c0_34 = arith.constant 0 : index
    %87 = vector.load %arg10[%c0_32, %c0_33, %c0_34] : memref<2x1x32xf32, #tpu.memory_space<vmem>>, vector<1x1x32xf32>
    %88 = vector.shape_cast %87 : vector<1x1x32xf32> to vector<1x32xf32>
    %89 = arith.mulf %86, %86 : vector<8x32xf32>
    %cst_35 = arith.constant dense<0.000000e+00> : vector<8xf32>
    %90 = vector.multi_reduction <add>, %89, %cst_35 [1] : vector<8x32xf32> to vector<8xf32>
    %91 = vector.shape_cast %90 : vector<8xf32> to vector<8x1xf32>
    %cst_36 = arith.constant 3.200000e+01 : f32
    %92 = vector.broadcast %cst_36 : f32 to vector<8x1xf32>
    %93 = arith.divf %91, %92 : vector<8x1xf32>
    %cst_37 = arith.constant 9.99999997E-7 : f32
    %94 = vector.broadcast %cst_37 : f32 to vector<8x1xf32>
    %95 = arith.addf %93, %94 : vector<8x1xf32>
    %96 = math.rsqrt %95 : vector<8x1xf32>
    %97 = vector.broadcast %96 : vector<8x1xf32> to vector<8x32xf32>
    %98 = arith.mulf %86, %97 : vector<8x32xf32>
    %99 = vector.broadcast %88 : vector<1x32xf32> to vector<8x32xf32>
    %100 = arith.mulf %98, %99 : vector<8x32xf32>
    %c0_38 = arith.constant 0 : index
    %c0_39 = arith.constant 0 : index
    %c0_40 = arith.constant 0 : index
    %101 = vector.load %arg11[%c0_38, %c0_39, %c0_40] : memref<2x32x64xbf16, #tpu.memory_space<vmem>>, vector<1x32x64xbf16>
    %102 = vector.shape_cast %101 : vector<1x32x64xbf16> to vector<32x64xbf16>
    %c0_41 = arith.constant 0 : index
    %c0_42 = arith.constant 0 : index
    %c0_43 = arith.constant 0 : index
    %103 = vector.load %arg12[%c0_41, %c0_42, %c0_43] : memref<2x64x32xbf16, #tpu.memory_space<vmem>>, vector<1x64x32xbf16>
    %104 = vector.shape_cast %103 : vector<1x64x32xbf16> to vector<64x32xbf16>
    %105 = arith.truncf %100 : vector<8x32xf32> to vector<8x32xbf16>
    %cst_44 = arith.constant dense<0.000000e+00> : vector<8x64xf32>
    %106 = tpu.matmul %105, %102, %cst_44 {dimension_numbers = #tpu.dot_dimension_numbers<[1], [0], [0], [1], [0, 0, 1, 1], [], []>} : vector<8x32xbf16>, vector<32x64xbf16>, vector<8x64xf32> -> vector<8x64xf32>
    %cst_45 = arith.constant 0.000000e+00 : f32
    %107 = vector.broadcast %cst_45 : f32 to vector<8x64xf32>
    %108 = arith.maximumf %106, %107 : vector<8x64xf32>
    %109 = arith.truncf %108 : vector<8x64xf32> to vector<8x64xbf16>
    %cst_46 = arith.constant dense<0.000000e+00> : vector<8x32xf32>
    %110 = tpu.matmul %109, %104, %cst_46 {dimension_numbers = #tpu.dot_dimension_numbers<[1], [0], [0], [1], [0, 0, 1, 1], [], []>} : vector<8x64xbf16>, vector<64x32xbf16>, vector<8x32xf32> -> vector<8x32xf32>
    %111 = arith.addf %86, %110 : vector<8x32xf32>
    %c1 = arith.constant 1 : index
    %c0_47 = arith.constant 0 : index
    %c0_48 = arith.constant 0 : index
    %112 = vector.load %arg9[%c1, %c0_47, %c0_48] : memref<2x1x32xf32, #tpu.memory_space<vmem>>, vector<1x1x32xf32>
    %113 = vector.shape_cast %112 : vector<1x1x32xf32> to vector<1x32xf32>
    %114 = arith.mulf %111, %111 : vector<8x32xf32>
    %cst_49 = arith.constant dense<0.000000e+00> : vector<8xf32>
    %115 = vector.multi_reduction <add>, %114, %cst_49 [1] : vector<8x32xf32> to vector<8xf32>
    %116 = vector.shape_cast %115 : vector<8xf32> to vector<8x1xf32>
    %cst_50 = arith.constant 3.200000e+01 : f32
    %117 = vector.broadcast %cst_50 : f32 to vector<8x1xf32>
    %118 = arith.divf %116, %117 : vector<8x1xf32>
    %cst_51 = arith.constant 9.99999997E-7 : f32
    %119 = vector.broadcast %cst_51 : f32 to vector<8x1xf32>
    %120 = arith.addf %118, %119 : vector<8x1xf32>
    %121 = math.rsqrt %120 : vector<8x1xf32>
    %122 = vector.broadcast %121 : vector<8x1xf32> to vector<8x32xf32>
    %123 = arith.mulf %111, %122 : vector<8x32xf32>
    %124 = vector.broadcast %113 : vector<1x32xf32> to vector<8x32xf32>
    %125 = arith.mulf %123, %124 : vector<8x32xf32>
    %c1_52 = arith.constant 1 : index
    %c0_53 = arith.constant 0 : index
    %c0_54 = arith.constant 0 : index
    %126 = vector.load %arg5[%c1_52, %c0_53, %c0_54] : memref<2x32x32xbf16, #tpu.memory_space<vmem>>, vector<1x32x32xbf16>
    %127 = vector.shape_cast %126 : vector<1x32x32xbf16> to vector<32x32xbf16>
    %c1_55 = arith.constant 1 : index
    %c0_56 = arith.constant 0 : index
    %c0_57 = arith.constant 0 : index
    %128 = vector.load %arg6[%c1_55, %c0_56, %c0_57] : memref<2x32x32xbf16, #tpu.memory_space<vmem>>, vector<1x32x32xbf16>
    %129 = vector.shape_cast %128 : vector<1x32x32xbf16> to vector<32x32xbf16>
    %c1_58 = arith.constant 1 : index
    %c0_59 = arith.constant 0 : index
    %c0_60 = arith.constant 0 : index
    %130 = vector.load %arg7[%c1_58, %c0_59, %c0_60] : memref<2x32x32xbf16, #tpu.memory_space<vmem>>, vector<1x32x32xbf16>
    %131 = vector.shape_cast %130 : vector<1x32x32xbf16> to vector<32x32xbf16>
    %c1_61 = arith.constant 1 : index
    %c0_62 = arith.constant 0 : index
    %c0_63 = arith.constant 0 : index
    %132 = vector.load %arg8[%c1_61, %c0_62, %c0_63] : memref<2x32x32xbf16, #tpu.memory_space<vmem>>, vector<1x32x32xbf16>
    %133 = vector.shape_cast %132 : vector<1x32x32xbf16> to vector<32x32xbf16>
    %134 = arith.truncf %125 : vector<8x32xf32> to vector<8x32xbf16>
    %cst_64 = arith.constant dense<0.000000e+00> : vector<8x32xf32>
    %135 = tpu.matmul %134, %127, %cst_64 {dimension_numbers = #tpu.dot_dimension_numbers<[1], [0], [0], [1], [0, 0, 1, 1], [], []>} : vector<8x32xbf16>, vector<32x32xbf16>, vector<8x32xf32> -> vector<8x32xf32>
    %136 = arith.truncf %125 : vector<8x32xf32> to vector<8x32xbf16>
    %cst_65 = arith.constant dense<0.000000e+00> : vector<8x32xf32>
    %137 = tpu.matmul %136, %129, %cst_65 {dimension_numbers = #tpu.dot_dimension_numbers<[1], [0], [0], [1], [0, 0, 1, 1], [], []>} : vector<8x32xbf16>, vector<32x32xbf16>, vector<8x32xf32> -> vector<8x32xf32>
    %138 = arith.truncf %125 : vector<8x32xf32> to vector<8x32xbf16>
    %cst_66 = arith.constant dense<0.000000e+00> : vector<8x32xf32>
    %139 = tpu.matmul %138, %131, %cst_66 {dimension_numbers = #tpu.dot_dimension_numbers<[1], [0], [0], [1], [0, 0, 1, 1], [], []>} : vector<8x32xbf16>, vector<32x32xbf16>, vector<8x32xf32> -> vector<8x32xf32>
    %140 = vector.extract_strided_slice %135 {offsets = [0, 0], sizes = [8, 8], strides = [1, 1]} : vector<8x32xf32> to vector<8x8xf32>
    %141 = vector.extract_strided_slice %135 {offsets = [0, 8], sizes = [8, 8], strides = [1, 1]} : vector<8x32xf32> to vector<8x8xf32>
    %142 = vector.extract_strided_slice %135 {offsets = [0, 16], sizes = [8, 8], strides = [1, 1]} : vector<8x32xf32> to vector<8x8xf32>
    %143 = vector.extract_strided_slice %135 {offsets = [0, 24], sizes = [8, 8], strides = [1, 1]} : vector<8x32xf32> to vector<8x8xf32>
    %144 = vector.shape_cast %140 : vector<8x8xf32> to vector<1x8x8xf32>
    %145 = vector.shape_cast %141 : vector<8x8xf32> to vector<1x8x8xf32>
    %146 = vector.shape_cast %142 : vector<8x8xf32> to vector<1x8x8xf32>
    %147 = vector.shape_cast %143 : vector<8x8xf32> to vector<1x8x8xf32>
    %148 = tpu.concatenate %144, %145, %146, %147 in 0 : vector<1x8x8xf32>, vector<1x8x8xf32>, vector<1x8x8xf32>, vector<1x8x8xf32> -> vector<4x8x8xf32>
    %149 = vector.extract_strided_slice %137 {offsets = [0, 0], sizes = [8, 8], strides = [1, 1]} : vector<8x32xf32> to vector<8x8xf32>
    %150 = vector.extract_strided_slice %137 {offsets = [0, 8], sizes = [8, 8], strides = [1, 1]} : vector<8x32xf32> to vector<8x8xf32>
    %151 = vector.extract_strided_slice %137 {offsets = [0, 16], sizes = [8, 8], strides = [1, 1]} : vector<8x32xf32> to vector<8x8xf32>
    %152 = vector.extract_strided_slice %137 {offsets = [0, 24], sizes = [8, 8], strides = [1, 1]} : vector<8x32xf32> to vector<8x8xf32>
    %153 = vector.shape_cast %149 : vector<8x8xf32> to vector<1x8x8xf32>
    %154 = vector.shape_cast %150 : vector<8x8xf32> to vector<1x8x8xf32>
    %155 = vector.shape_cast %151 : vector<8x8xf32> to vector<1x8x8xf32>
    %156 = vector.shape_cast %152 : vector<8x8xf32> to vector<1x8x8xf32>
    %157 = tpu.concatenate %153, %154, %155, %156 in 0 : vector<1x8x8xf32>, vector<1x8x8xf32>, vector<1x8x8xf32>, vector<1x8x8xf32> -> vector<4x8x8xf32>
    %158 = vector.extract_strided_slice %139 {offsets = [0, 0], sizes = [8, 8], strides = [1, 1]} : vector<8x32xf32> to vector<8x8xf32>
    %159 = vector.extract_strided_slice %139 {offsets = [0, 8], sizes = [8, 8], strides = [1, 1]} : vector<8x32xf32> to vector<8x8xf32>
    %160 = vector.extract_strided_slice %139 {offsets = [0, 16], sizes = [8, 8], strides = [1, 1]} : vector<8x32xf32> to vector<8x8xf32>
    %161 = vector.extract_strided_slice %139 {offsets = [0, 24], sizes = [8, 8], strides = [1, 1]} : vector<8x32xf32> to vector<8x8xf32>
    %162 = vector.shape_cast %158 : vector<8x8xf32> to vector<1x8x8xf32>
    %163 = vector.shape_cast %159 : vector<8x8xf32> to vector<1x8x8xf32>
    %164 = vector.shape_cast %160 : vector<8x8xf32> to vector<1x8x8xf32>
    %165 = vector.shape_cast %161 : vector<8x8xf32> to vector<1x8x8xf32>
    %166 = tpu.concatenate %162, %163, %164, %165 in 0 : vector<1x8x8xf32>, vector<1x8x8xf32>, vector<1x8x8xf32>, vector<1x8x8xf32> -> vector<4x8x8xf32>
    %167 = arith.truncf %148 : vector<4x8x8xf32> to vector<4x8x8xbf16>
    %168 = arith.truncf %157 : vector<4x8x8xf32> to vector<4x8x8xbf16>
    "tpu.trace_start"() <{level = 10 : i32, message = "hqd,hkd->hqk"}> : () -> ()
    %cst_67 = arith.constant dense<0.000000e+00> : vector<4x8x8xf32>
    %169 = tpu.matmul %167, %168, %cst_67 {dimension_numbers = #tpu.dot_dimension_numbers<[2], [2], [1], [1], [0, 0, 0, 1, 1, 1], [0], [0]>} : vector<4x8x8xbf16>, vector<4x8x8xbf16>, vector<4x8x8xf32> -> vector<4x8x8xf32>
    "tpu.trace_stop"() : () -> ()
    %170 = arith.addf %169, %0 : vector<4x8x8xf32>
    %cst_68 = arith.constant dense<0xFF800000> : vector<4x8xf32>
    %171 = vector.multi_reduction <maximumf>, %170, %cst_68 [2] : vector<4x8x8xf32> to vector<4x8xf32>
    %172 = vector.shape_cast %171 : vector<4x8xf32> to vector<4x8x1xf32>
    %173 = vector.broadcast %172 : vector<4x8x1xf32> to vector<4x8x8xf32>
    %174 = arith.subf %170, %173 : vector<4x8x8xf32>
    %175 = math.exp %174 : vector<4x8x8xf32>
    %cst_69 = arith.constant dense<0.000000e+00> : vector<4x8xf32>
    %176 = vector.multi_reduction <add>, %175, %cst_69 [2] : vector<4x8x8xf32> to vector<4x8xf32>
    %177 = vector.shape_cast %176 : vector<4x8xf32> to vector<4x8x1xf32>
    %178 = arith.truncf %175 : vector<4x8x8xf32> to vector<4x8x8xbf16>
    %179 = arith.truncf %166 : vector<4x8x8xf32> to vector<4x8x8xbf16>
    "tpu.trace_start"() <{level = 10 : i32, message = "hqk,hkd->hqd"}> : () -> ()
    %cst_70 = arith.constant dense<0.000000e+00> : vector<4x8x8xf32>
    %180 = tpu.matmul %178, %179, %cst_70 {dimension_numbers = #tpu.dot_dimension_numbers<[2], [1], [1], [2], [0, 0, 0, 1, 1, 2], [0], [0]>} : vector<4x8x8xbf16>, vector<4x8x8xbf16>, vector<4x8x8xf32> -> vector<4x8x8xf32>
    "tpu.trace_stop"() : () -> ()
    %181 = tpu.reciprocal %177 {approx = true} : vector<4x8x1xf32> -> vector<4x8x1xf32>
    %182 = vector.broadcast %181 : vector<4x8x1xf32> to vector<4x8x8xf32>
    %183 = arith.mulf %180, %182 : vector<4x8x8xf32>
    %184 = vector.extract_strided_slice %183 {offsets = [0, 0, 0], sizes = [1, 8, 8], strides = [1, 1, 1]} : vector<4x8x8xf32> to vector<1x8x8xf32>
    %185 = vector.shape_cast %184 : vector<1x8x8xf32> to vector<8x8xf32>
    %186 = vector.extract_strided_slice %183 {offsets = [1, 0, 0], sizes = [1, 8, 8], strides = [1, 1, 1]} : vector<4x8x8xf32> to vector<1x8x8xf32>
    %187 = vector.shape_cast %186 : vector<1x8x8xf32> to vector<8x8xf32>
    %188 = vector.extract_strided_slice %183 {offsets = [2, 0, 0], sizes = [1, 8, 8], strides = [1, 1, 1]} : vector<4x8x8xf32> to vector<1x8x8xf32>
    %189 = vector.shape_cast %188 : vector<1x8x8xf32> to vector<8x8xf32>
    %190 = vector.extract_strided_slice %183 {offsets = [3, 0, 0], sizes = [1, 8, 8], strides = [1, 1, 1]} : vector<4x8x8xf32> to vector<1x8x8xf32>
    %191 = vector.shape_cast %190 : vector<1x8x8xf32> to vector<8x8xf32>
    %192 = tpu.concatenate %185, %187, %189, %191 in 1 : vector<8x8xf32>, vector<8x8xf32>, vector<8x8xf32>, vector<8x8xf32> -> vector<8x32xf32>
    %193 = arith.truncf %192 : vector<8x32xf32> to vector<8x32xbf16>
    %cst_71 = arith.constant dense<0.000000e+00> : vector<8x32xf32>
    %194 = tpu.matmul %193, %133, %cst_71 {dimension_numbers = #tpu.dot_dimension_numbers<[1], [0], [0], [1], [0, 0, 1, 1], [], []>} : vector<8x32xbf16>, vector<32x32xbf16>, vector<8x32xf32> -> vector<8x32xf32>
    %195 = arith.addf %111, %194 : vector<8x32xf32>
    %c1_72 = arith.constant 1 : index
    %c0_73 = arith.constant 0 : index
    %c0_74 = arith.constant 0 : index
    %196 = vector.load %arg10[%c1_72, %c0_73, %c0_74] : memref<2x1x32xf32, #tpu.memory_space<vmem>>, vector<1x1x32xf32>
    %197 = vector.shape_cast %196 : vector<1x1x32xf32> to vector<1x32xf32>
    %198 = arith.mulf %195, %195 : vector<8x32xf32>
    %cst_75 = arith.constant dense<0.000000e+00> : vector<8xf32>
    %199 = vector.multi_reduction <add>, %198, %cst_75 [1] : vector<8x32xf32> to vector<8xf32>
    %200 = vector.shape_cast %199 : vector<8xf32> to vector<8x1xf32>
    %cst_76 = arith.constant 3.200000e+01 : f32
    %201 = vector.broadcast %cst_76 : f32 to vector<8x1xf32>
    %202 = arith.divf %200, %201 : vector<8x1xf32>
    %cst_77 = arith.constant 9.99999997E-7 : f32
    %203 = vector.broadcast %cst_77 : f32 to vector<8x1xf32>
    %204 = arith.addf %202, %203 : vector<8x1xf32>
    %205 = math.rsqrt %204 : vector<8x1xf32>
    %206 = vector.broadcast %205 : vector<8x1xf32> to vector<8x32xf32>
    %207 = arith.mulf %195, %206 : vector<8x32xf32>
    %208 = vector.broadcast %197 : vector<1x32xf32> to vector<8x32xf32>
    %209 = arith.mulf %207, %208 : vector<8x32xf32>
    %c1_78 = arith.constant 1 : index
    %c0_79 = arith.constant 0 : index
    %c0_80 = arith.constant 0 : index
    %210 = vector.load %arg11[%c1_78, %c0_79, %c0_80] : memref<2x32x64xbf16, #tpu.memory_space<vmem>>, vector<1x32x64xbf16>
    %211 = vector.shape_cast %210 : vector<1x32x64xbf16> to vector<32x64xbf16>
    %c1_81 = arith.constant 1 : index
    %c0_82 = arith.constant 0 : index
    %c0_83 = arith.constant 0 : index
    %212 = vector.load %arg12[%c1_81, %c0_82, %c0_83] : memref<2x64x32xbf16, #tpu.memory_space<vmem>>, vector<1x64x32xbf16>
    %213 = vector.shape_cast %212 : vector<1x64x32xbf16> to vector<64x32xbf16>
    %214 = arith.truncf %209 : vector<8x32xf32> to vector<8x32xbf16>
    %cst_84 = arith.constant dense<0.000000e+00> : vector<8x64xf32>
    %215 = tpu.matmul %214, %211, %cst_84 {dimension_numbers = #tpu.dot_dimension_numbers<[1], [0], [0], [1], [0, 0, 1, 1], [], []>} : vector<8x32xbf16>, vector<32x64xbf16>, vector<8x64xf32> -> vector<8x64xf32>
    %cst_85 = arith.constant 0.000000e+00 : f32
    %216 = vector.broadcast %cst_85 : f32 to vector<8x64xf32>
    %217 = arith.maximumf %215, %216 : vector<8x64xf32>
    %218 = arith.truncf %217 : vector<8x64xf32> to vector<8x64xbf16>
    %cst_86 = arith.constant dense<0.000000e+00> : vector<8x32xf32>
    %219 = tpu.matmul %218, %213, %cst_86 {dimension_numbers = #tpu.dot_dimension_numbers<[1], [0], [0], [1], [0, 0, 1, 1], [], []>} : vector<8x64xbf16>, vector<64x32xbf16>, vector<8x32xf32> -> vector<8x32xf32>
    %220 = arith.addf %195, %219 : vector<8x32xf32>
    %c0_87 = arith.constant 0 : index
    %c0_88 = arith.constant 0 : index
    %221 = vector.load %arg13[%c0_87, %c0_88] : memref<1x32xf32, #tpu.memory_space<vmem>>, vector<1x32xf32>
    %222 = arith.mulf %220, %220 : vector<8x32xf32>
    %cst_89 = arith.constant dense<0.000000e+00> : vector<8xf32>
    %223 = vector.multi_reduction <add>, %222, %cst_89 [1] : vector<8x32xf32> to vector<8xf32>
    %224 = vector.shape_cast %223 : vector<8xf32> to vector<8x1xf32>
    %cst_90 = arith.constant 3.200000e+01 : f32
    %225 = vector.broadcast %cst_90 : f32 to vector<8x1xf32>
    %226 = arith.divf %224, %225 : vector<8x1xf32>
    %cst_91 = arith.constant 9.99999997E-7 : f32
    %227 = vector.broadcast %cst_91 : f32 to vector<8x1xf32>
    %228 = arith.addf %226, %227 : vector<8x1xf32>
    %229 = math.rsqrt %228 : vector<8x1xf32>
    %230 = vector.broadcast %229 : vector<8x1xf32> to vector<8x32xf32>
    %231 = arith.mulf %220, %230 : vector<8x32xf32>
    %232 = vector.broadcast %221 : vector<1x32xf32> to vector<8x32xf32>
    %233 = arith.mulf %231, %232 : vector<8x32xf32>
    %c0_92 = arith.constant 0 : index
    %c0_93 = arith.constant 0 : index
    %234 = vector.load %arg2[%c0_92, %c0_93] : memref<8x32xf32, #tpu.memory_space<vmem>>, vector<8x32xf32>
    %c0_94 = arith.constant 0 : index
    %c0_95 = arith.constant 0 : index
    %c0_96 = arith.constant 0 : index
    %235 = vector.load %arg22[%c0_94, %c0_95, %c0_96] : memref<2x1x32xf32, #tpu.memory_space<vmem>>, vector<1x1x32xf32>
    %236 = vector.shape_cast %235 : vector<1x1x32xf32> to vector<1x32xf32>
    %237 = arith.mulf %234, %234 : vector<8x32xf32>
    %cst_97 = arith.constant dense<0.000000e+00> : vector<8xf32>
    %238 = vector.multi_reduction <add>, %237, %cst_97 [1] : vector<8x32xf32> to vector<8xf32>
    %239 = vector.shape_cast %238 : vector<8xf32> to vector<8x1xf32>
    %cst_98 = arith.constant 3.200000e+01 : f32
    %240 = vector.broadcast %cst_98 : f32 to vector<8x1xf32>
    %241 = arith.divf %239, %240 : vector<8x1xf32>
    %cst_99 = arith.constant 9.99999997E-7 : f32
    %242 = vector.broadcast %cst_99 : f32 to vector<8x1xf32>
    %243 = arith.addf %241, %242 : vector<8x1xf32>
    %244 = math.rsqrt %243 : vector<8x1xf32>
    %245 = vector.broadcast %244 : vector<8x1xf32> to vector<8x32xf32>
    %246 = arith.mulf %234, %245 : vector<8x32xf32>
    %247 = vector.broadcast %236 : vector<1x32xf32> to vector<8x32xf32>
    %248 = arith.mulf %246, %247 : vector<8x32xf32>
    %c0_100 = arith.constant 0 : index
    %c0_101 = arith.constant 0 : index
    %c0_102 = arith.constant 0 : index
    %249 = vector.load %arg14[%c0_100, %c0_101, %c0_102] : memref<2x32x32xbf16, #tpu.memory_space<vmem>>, vector<1x32x32xbf16>
    %250 = vector.shape_cast %249 : vector<1x32x32xbf16> to vector<32x32xbf16>
    %c0_103 = arith.constant 0 : index
    %c0_104 = arith.constant 0 : index
    %c0_105 = arith.constant 0 : index
    %251 = vector.load %arg15[%c0_103, %c0_104, %c0_105] : memref<2x32x32xbf16, #tpu.memory_space<vmem>>, vector<1x32x32xbf16>
    %252 = vector.shape_cast %251 : vector<1x32x32xbf16> to vector<32x32xbf16>
    %c0_106 = arith.constant 0 : index
    %c0_107 = arith.constant 0 : index
    %c0_108 = arith.constant 0 : index
    %253 = vector.load %arg16[%c0_106, %c0_107, %c0_108] : memref<2x32x32xbf16, #tpu.memory_space<vmem>>, vector<1x32x32xbf16>
    %254 = vector.shape_cast %253 : vector<1x32x32xbf16> to vector<32x32xbf16>
    %c0_109 = arith.constant 0 : index
    %c0_110 = arith.constant 0 : index
    %c0_111 = arith.constant 0 : index
    %255 = vector.load %arg17[%c0_109, %c0_110, %c0_111] : memref<2x32x32xbf16, #tpu.memory_space<vmem>>, vector<1x32x32xbf16>
    %256 = vector.shape_cast %255 : vector<1x32x32xbf16> to vector<32x32xbf16>
    %257 = arith.truncf %248 : vector<8x32xf32> to vector<8x32xbf16>
    %cst_112 = arith.constant dense<0.000000e+00> : vector<8x32xf32>
    %258 = tpu.matmul %257, %250, %cst_112 {dimension_numbers = #tpu.dot_dimension_numbers<[1], [0], [0], [1], [0, 0, 1, 1], [], []>} : vector<8x32xbf16>, vector<32x32xbf16>, vector<8x32xf32> -> vector<8x32xf32>
    %259 = arith.truncf %248 : vector<8x32xf32> to vector<8x32xbf16>
    %cst_113 = arith.constant dense<0.000000e+00> : vector<8x32xf32>
    %260 = tpu.matmul %259, %252, %cst_113 {dimension_numbers = #tpu.dot_dimension_numbers<[1], [0], [0], [1], [0, 0, 1, 1], [], []>} : vector<8x32xbf16>, vector<32x32xbf16>, vector<8x32xf32> -> vector<8x32xf32>
    %261 = arith.truncf %248 : vector<8x32xf32> to vector<8x32xbf16>
    %cst_114 = arith.constant dense<0.000000e+00> : vector<8x32xf32>
    %262 = tpu.matmul %261, %254, %cst_114 {dimension_numbers = #tpu.dot_dimension_numbers<[1], [0], [0], [1], [0, 0, 1, 1], [], []>} : vector<8x32xbf16>, vector<32x32xbf16>, vector<8x32xf32> -> vector<8x32xf32>
    %263 = vector.extract_strided_slice %258 {offsets = [0, 0], sizes = [8, 8], strides = [1, 1]} : vector<8x32xf32> to vector<8x8xf32>
    %264 = vector.extract_strided_slice %258 {offsets = [0, 8], sizes = [8, 8], strides = [1, 1]} : vector<8x32xf32> to vector<8x8xf32>
    %265 = vector.extract_strided_slice %258 {offsets = [0, 16], sizes = [8, 8], strides = [1, 1]} : vector<8x32xf32> to vector<8x8xf32>
    %266 = vector.extract_strided_slice %258 {offsets = [0, 24], sizes = [8, 8], strides = [1, 1]} : vector<8x32xf32> to vector<8x8xf32>
    %267 = vector.shape_cast %263 : vector<8x8xf32> to vector<1x8x8xf32>
    %268 = vector.shape_cast %264 : vector<8x8xf32> to vector<1x8x8xf32>
    %269 = vector.shape_cast %265 : vector<8x8xf32> to vector<1x8x8xf32>
    %270 = vector.shape_cast %266 : vector<8x8xf32> to vector<1x8x8xf32>
    %271 = tpu.concatenate %267, %268, %269, %270 in 0 : vector<1x8x8xf32>, vector<1x8x8xf32>, vector<1x8x8xf32>, vector<1x8x8xf32> -> vector<4x8x8xf32>
    %272 = vector.extract_strided_slice %260 {offsets = [0, 0], sizes = [8, 8], strides = [1, 1]} : vector<8x32xf32> to vector<8x8xf32>
    %273 = vector.extract_strided_slice %260 {offsets = [0, 8], sizes = [8, 8], strides = [1, 1]} : vector<8x32xf32> to vector<8x8xf32>
    %274 = vector.extract_strided_slice %260 {offsets = [0, 16], sizes = [8, 8], strides = [1, 1]} : vector<8x32xf32> to vector<8x8xf32>
    %275 = vector.extract_strided_slice %260 {offsets = [0, 24], sizes = [8, 8], strides = [1, 1]} : vector<8x32xf32> to vector<8x8xf32>
    %276 = vector.shape_cast %272 : vector<8x8xf32> to vector<1x8x8xf32>
    %277 = vector.shape_cast %273 : vector<8x8xf32> to vector<1x8x8xf32>
    %278 = vector.shape_cast %274 : vector<8x8xf32> to vector<1x8x8xf32>
    %279 = vector.shape_cast %275 : vector<8x8xf32> to vector<1x8x8xf32>
    %280 = tpu.concatenate %276, %277, %278, %279 in 0 : vector<1x8x8xf32>, vector<1x8x8xf32>, vector<1x8x8xf32>, vector<1x8x8xf32> -> vector<4x8x8xf32>
    %281 = vector.extract_strided_slice %262 {offsets = [0, 0], sizes = [8, 8], strides = [1, 1]} : vector<8x32xf32> to vector<8x8xf32>
    %282 = vector.extract_strided_slice %262 {offsets = [0, 8], sizes = [8, 8], strides = [1, 1]} : vector<8x32xf32> to vector<8x8xf32>
    %283 = vector.extract_strided_slice %262 {offsets = [0, 16], sizes = [8, 8], strides = [1, 1]} : vector<8x32xf32> to vector<8x8xf32>
    %284 = vector.extract_strided_slice %262 {offsets = [0, 24], sizes = [8, 8], strides = [1, 1]} : vector<8x32xf32> to vector<8x8xf32>
    %285 = vector.shape_cast %281 : vector<8x8xf32> to vector<1x8x8xf32>
    %286 = vector.shape_cast %282 : vector<8x8xf32> to vector<1x8x8xf32>
    %287 = vector.shape_cast %283 : vector<8x8xf32> to vector<1x8x8xf32>
    %288 = vector.shape_cast %284 : vector<8x8xf32> to vector<1x8x8xf32>
    %289 = tpu.concatenate %285, %286, %287, %288 in 0 : vector<1x8x8xf32>, vector<1x8x8xf32>, vector<1x8x8xf32>, vector<1x8x8xf32> -> vector<4x8x8xf32>
    %290 = arith.truncf %271 : vector<4x8x8xf32> to vector<4x8x8xbf16>
    %291 = arith.truncf %280 : vector<4x8x8xf32> to vector<4x8x8xbf16>
    "tpu.trace_start"() <{level = 10 : i32, message = "hqd,hkd->hqk"}> : () -> ()
    %cst_115 = arith.constant dense<0.000000e+00> : vector<4x8x8xf32>
    %292 = tpu.matmul %290, %291, %cst_115 {dimension_numbers = #tpu.dot_dimension_numbers<[2], [2], [1], [1], [0, 0, 0, 1, 1, 1], [0], [0]>} : vector<4x8x8xbf16>, vector<4x8x8xbf16>, vector<4x8x8xf32> -> vector<4x8x8xf32>
    "tpu.trace_stop"() : () -> ()
    %293 = arith.addf %292, %1 : vector<4x8x8xf32>
    %cst_116 = arith.constant dense<0xFF800000> : vector<4x8xf32>
    %294 = vector.multi_reduction <maximumf>, %293, %cst_116 [2] : vector<4x8x8xf32> to vector<4x8xf32>
    %295 = vector.shape_cast %294 : vector<4x8xf32> to vector<4x8x1xf32>
    %296 = vector.broadcast %295 : vector<4x8x1xf32> to vector<4x8x8xf32>
    %297 = arith.subf %293, %296 : vector<4x8x8xf32>
    %298 = math.exp %297 : vector<4x8x8xf32>
    %cst_117 = arith.constant dense<0.000000e+00> : vector<4x8xf32>
    %299 = vector.multi_reduction <add>, %298, %cst_117 [2] : vector<4x8x8xf32> to vector<4x8xf32>
    %300 = vector.shape_cast %299 : vector<4x8xf32> to vector<4x8x1xf32>
    %301 = arith.truncf %298 : vector<4x8x8xf32> to vector<4x8x8xbf16>
    %302 = arith.truncf %289 : vector<4x8x8xf32> to vector<4x8x8xbf16>
    "tpu.trace_start"() <{level = 10 : i32, message = "hqk,hkd->hqd"}> : () -> ()
    %cst_118 = arith.constant dense<0.000000e+00> : vector<4x8x8xf32>
    %303 = tpu.matmul %301, %302, %cst_118 {dimension_numbers = #tpu.dot_dimension_numbers<[2], [1], [1], [2], [0, 0, 0, 1, 1, 2], [0], [0]>} : vector<4x8x8xbf16>, vector<4x8x8xbf16>, vector<4x8x8xf32> -> vector<4x8x8xf32>
    "tpu.trace_stop"() : () -> ()
    %304 = tpu.reciprocal %300 {approx = true} : vector<4x8x1xf32> -> vector<4x8x1xf32>
    %305 = vector.broadcast %304 : vector<4x8x1xf32> to vector<4x8x8xf32>
    %306 = arith.mulf %303, %305 : vector<4x8x8xf32>
    %307 = vector.extract_strided_slice %306 {offsets = [0, 0, 0], sizes = [1, 8, 8], strides = [1, 1, 1]} : vector<4x8x8xf32> to vector<1x8x8xf32>
    %308 = vector.shape_cast %307 : vector<1x8x8xf32> to vector<8x8xf32>
    %309 = vector.extract_strided_slice %306 {offsets = [1, 0, 0], sizes = [1, 8, 8], strides = [1, 1, 1]} : vector<4x8x8xf32> to vector<1x8x8xf32>
    %310 = vector.shape_cast %309 : vector<1x8x8xf32> to vector<8x8xf32>
    %311 = vector.extract_strided_slice %306 {offsets = [2, 0, 0], sizes = [1, 8, 8], strides = [1, 1, 1]} : vector<4x8x8xf32> to vector<1x8x8xf32>
    %312 = vector.shape_cast %311 : vector<1x8x8xf32> to vector<8x8xf32>
    %313 = vector.extract_strided_slice %306 {offsets = [3, 0, 0], sizes = [1, 8, 8], strides = [1, 1, 1]} : vector<4x8x8xf32> to vector<1x8x8xf32>
    %314 = vector.shape_cast %313 : vector<1x8x8xf32> to vector<8x8xf32>
    %315 = tpu.concatenate %308, %310, %312, %314 in 1 : vector<8x8xf32>, vector<8x8xf32>, vector<8x8xf32>, vector<8x8xf32> -> vector<8x32xf32>
    %316 = arith.truncf %315 : vector<8x32xf32> to vector<8x32xbf16>
    %cst_119 = arith.constant dense<0.000000e+00> : vector<8x32xf32>
    %317 = tpu.matmul %316, %256, %cst_119 {dimension_numbers = #tpu.dot_dimension_numbers<[1], [0], [0], [1], [0, 0, 1, 1], [], []>} : vector<8x32xbf16>, vector<32x32xbf16>, vector<8x32xf32> -> vector<8x32xf32>
    %318 = arith.addf %234, %317 : vector<8x32xf32>
    %c0_120 = arith.constant 0 : index
    %c0_121 = arith.constant 0 : index
    %c0_122 = arith.constant 0 : index
    %319 = vector.load %arg23[%c0_120, %c0_121, %c0_122] : memref<2x1x32xf32, #tpu.memory_space<vmem>>, vector<1x1x32xf32>
    %320 = vector.shape_cast %319 : vector<1x1x32xf32> to vector<1x32xf32>
    %321 = arith.mulf %318, %318 : vector<8x32xf32>
    %cst_123 = arith.constant dense<0.000000e+00> : vector<8xf32>
    %322 = vector.multi_reduction <add>, %321, %cst_123 [1] : vector<8x32xf32> to vector<8xf32>
    %323 = vector.shape_cast %322 : vector<8xf32> to vector<8x1xf32>
    %cst_124 = arith.constant 3.200000e+01 : f32
    %324 = vector.broadcast %cst_124 : f32 to vector<8x1xf32>
    %325 = arith.divf %323, %324 : vector<8x1xf32>
    %cst_125 = arith.constant 9.99999997E-7 : f32
    %326 = vector.broadcast %cst_125 : f32 to vector<8x1xf32>
    %327 = arith.addf %325, %326 : vector<8x1xf32>
    %328 = math.rsqrt %327 : vector<8x1xf32>
    %329 = vector.broadcast %328 : vector<8x1xf32> to vector<8x32xf32>
    %330 = arith.mulf %318, %329 : vector<8x32xf32>
    %331 = vector.broadcast %320 : vector<1x32xf32> to vector<8x32xf32>
    %332 = arith.mulf %330, %331 : vector<8x32xf32>
    %c0_126 = arith.constant 0 : index
    %c0_127 = arith.constant 0 : index
    %c0_128 = arith.constant 0 : index
    %333 = vector.load %arg18[%c0_126, %c0_127, %c0_128] : memref<2x32x32xbf16, #tpu.memory_space<vmem>>, vector<1x32x32xbf16>
    %334 = vector.shape_cast %333 : vector<1x32x32xbf16> to vector<32x32xbf16>
    %c0_129 = arith.constant 0 : index
    %c0_130 = arith.constant 0 : index
    %c0_131 = arith.constant 0 : index
    %335 = vector.load %arg19[%c0_129, %c0_130, %c0_131] : memref<2x32x32xbf16, #tpu.memory_space<vmem>>, vector<1x32x32xbf16>
    %336 = vector.shape_cast %335 : vector<1x32x32xbf16> to vector<32x32xbf16>
    %c0_132 = arith.constant 0 : index
    %c0_133 = arith.constant 0 : index
    %c0_134 = arith.constant 0 : index
    %337 = vector.load %arg20[%c0_132, %c0_133, %c0_134] : memref<2x32x32xbf16, #tpu.memory_space<vmem>>, vector<1x32x32xbf16>
    %338 = vector.shape_cast %337 : vector<1x32x32xbf16> to vector<32x32xbf16>
    %c0_135 = arith.constant 0 : index
    %c0_136 = arith.constant 0 : index
    %c0_137 = arith.constant 0 : index
    %339 = vector.load %arg21[%c0_135, %c0_136, %c0_137] : memref<2x32x32xbf16, #tpu.memory_space<vmem>>, vector<1x32x32xbf16>
    %340 = vector.shape_cast %339 : vector<1x32x32xbf16> to vector<32x32xbf16>
    %341 = arith.truncf %332 : vector<8x32xf32> to vector<8x32xbf16>
    %cst_138 = arith.constant dense<0.000000e+00> : vector<8x32xf32>
    %342 = tpu.matmul %341, %334, %cst_138 {dimension_numbers = #tpu.dot_dimension_numbers<[1], [0], [0], [1], [0, 0, 1, 1], [], []>} : vector<8x32xbf16>, vector<32x32xbf16>, vector<8x32xf32> -> vector<8x32xf32>
    %343 = arith.truncf %233 : vector<8x32xf32> to vector<8x32xbf16>
    %cst_139 = arith.constant dense<0.000000e+00> : vector<8x32xf32>
    %344 = tpu.matmul %343, %336, %cst_139 {dimension_numbers = #tpu.dot_dimension_numbers<[1], [0], [0], [1], [0, 0, 1, 1], [], []>} : vector<8x32xbf16>, vector<32x32xbf16>, vector<8x32xf32> -> vector<8x32xf32>
    %345 = arith.truncf %233 : vector<8x32xf32> to vector<8x32xbf16>
    %cst_140 = arith.constant dense<0.000000e+00> : vector<8x32xf32>
    %346 = tpu.matmul %345, %338, %cst_140 {dimension_numbers = #tpu.dot_dimension_numbers<[1], [0], [0], [1], [0, 0, 1, 1], [], []>} : vector<8x32xbf16>, vector<32x32xbf16>, vector<8x32xf32> -> vector<8x32xf32>
    %347 = vector.extract_strided_slice %342 {offsets = [0, 0], sizes = [8, 8], strides = [1, 1]} : vector<8x32xf32> to vector<8x8xf32>
    %348 = vector.extract_strided_slice %342 {offsets = [0, 8], sizes = [8, 8], strides = [1, 1]} : vector<8x32xf32> to vector<8x8xf32>
    %349 = vector.extract_strided_slice %342 {offsets = [0, 16], sizes = [8, 8], strides = [1, 1]} : vector<8x32xf32> to vector<8x8xf32>
    %350 = vector.extract_strided_slice %342 {offsets = [0, 24], sizes = [8, 8], strides = [1, 1]} : vector<8x32xf32> to vector<8x8xf32>
    %351 = vector.shape_cast %347 : vector<8x8xf32> to vector<1x8x8xf32>
    %352 = vector.shape_cast %348 : vector<8x8xf32> to vector<1x8x8xf32>
    %353 = vector.shape_cast %349 : vector<8x8xf32> to vector<1x8x8xf32>
    %354 = vector.shape_cast %350 : vector<8x8xf32> to vector<1x8x8xf32>
    %355 = tpu.concatenate %351, %352, %353, %354 in 0 : vector<1x8x8xf32>, vector<1x8x8xf32>, vector<1x8x8xf32>, vector<1x8x8xf32> -> vector<4x8x8xf32>
    %356 = vector.extract_strided_slice %344 {offsets = [0, 0], sizes = [8, 8], strides = [1, 1]} : vector<8x32xf32> to vector<8x8xf32>
    %357 = vector.extract_strided_slice %344 {offsets = [0, 8], sizes = [8, 8], strides = [1, 1]} : vector<8x32xf32> to vector<8x8xf32>
    %358 = vector.extract_strided_slice %344 {offsets = [0, 16], sizes = [8, 8], strides = [1, 1]} : vector<8x32xf32> to vector<8x8xf32>
    %359 = vector.extract_strided_slice %344 {offsets = [0, 24], sizes = [8, 8], strides = [1, 1]} : vector<8x32xf32> to vector<8x8xf32>
    %360 = vector.shape_cast %356 : vector<8x8xf32> to vector<1x8x8xf32>
    %361 = vector.shape_cast %357 : vector<8x8xf32> to vector<1x8x8xf32>
    %362 = vector.shape_cast %358 : vector<8x8xf32> to vector<1x8x8xf32>
    %363 = vector.shape_cast %359 : vector<8x8xf32> to vector<1x8x8xf32>
    %364 = tpu.concatenate %360, %361, %362, %363 in 0 : vector<1x8x8xf32>, vector<1x8x8xf32>, vector<1x8x8xf32>, vector<1x8x8xf32> -> vector<4x8x8xf32>
    %365 = vector.extract_strided_slice %346 {offsets = [0, 0], sizes = [8, 8], strides = [1, 1]} : vector<8x32xf32> to vector<8x8xf32>
    %366 = vector.extract_strided_slice %346 {offsets = [0, 8], sizes = [8, 8], strides = [1, 1]} : vector<8x32xf32> to vector<8x8xf32>
    %367 = vector.extract_strided_slice %346 {offsets = [0, 16], sizes = [8, 8], strides = [1, 1]} : vector<8x32xf32> to vector<8x8xf32>
    %368 = vector.extract_strided_slice %346 {offsets = [0, 24], sizes = [8, 8], strides = [1, 1]} : vector<8x32xf32> to vector<8x8xf32>
    %369 = vector.shape_cast %365 : vector<8x8xf32> to vector<1x8x8xf32>
    %370 = vector.shape_cast %366 : vector<8x8xf32> to vector<1x8x8xf32>
    %371 = vector.shape_cast %367 : vector<8x8xf32> to vector<1x8x8xf32>
    %372 = vector.shape_cast %368 : vector<8x8xf32> to vector<1x8x8xf32>
    %373 = tpu.concatenate %369, %370, %371, %372 in 0 : vector<1x8x8xf32>, vector<1x8x8xf32>, vector<1x8x8xf32>, vector<1x8x8xf32> -> vector<4x8x8xf32>
    %374 = arith.truncf %355 : vector<4x8x8xf32> to vector<4x8x8xbf16>
    %375 = arith.truncf %364 : vector<4x8x8xf32> to vector<4x8x8xbf16>
    "tpu.trace_start"() <{level = 10 : i32, message = "hqd,hkd->hqk"}> : () -> ()
    %cst_141 = arith.constant dense<0.000000e+00> : vector<4x8x8xf32>
    %376 = tpu.matmul %374, %375, %cst_141 {dimension_numbers = #tpu.dot_dimension_numbers<[2], [2], [1], [1], [0, 0, 0, 1, 1, 1], [0], [0]>} : vector<4x8x8xbf16>, vector<4x8x8xbf16>, vector<4x8x8xf32> -> vector<4x8x8xf32>
    "tpu.trace_stop"() : () -> ()
    %cst_142 = arith.constant dense<0xFF800000> : vector<4x8xf32>
    %377 = vector.multi_reduction <maximumf>, %376, %cst_142 [2] : vector<4x8x8xf32> to vector<4x8xf32>
    %378 = vector.shape_cast %377 : vector<4x8xf32> to vector<4x8x1xf32>
    %379 = vector.broadcast %378 : vector<4x8x1xf32> to vector<4x8x8xf32>
    %380 = arith.subf %376, %379 : vector<4x8x8xf32>
    %381 = math.exp %380 : vector<4x8x8xf32>
    %cst_143 = arith.constant dense<0.000000e+00> : vector<4x8xf32>
    %382 = vector.multi_reduction <add>, %381, %cst_143 [2] : vector<4x8x8xf32> to vector<4x8xf32>
    %383 = vector.shape_cast %382 : vector<4x8xf32> to vector<4x8x1xf32>
    %384 = arith.truncf %381 : vector<4x8x8xf32> to vector<4x8x8xbf16>
    %385 = arith.truncf %373 : vector<4x8x8xf32> to vector<4x8x8xbf16>
    "tpu.trace_start"() <{level = 10 : i32, message = "hqk,hkd->hqd"}> : () -> ()
    %cst_144 = arith.constant dense<0.000000e+00> : vector<4x8x8xf32>
    %386 = tpu.matmul %384, %385, %cst_144 {dimension_numbers = #tpu.dot_dimension_numbers<[2], [1], [1], [2], [0, 0, 0, 1, 1, 2], [0], [0]>} : vector<4x8x8xbf16>, vector<4x8x8xbf16>, vector<4x8x8xf32> -> vector<4x8x8xf32>
    "tpu.trace_stop"() : () -> ()
    %387 = tpu.reciprocal %383 {approx = true} : vector<4x8x1xf32> -> vector<4x8x1xf32>
    %388 = vector.broadcast %387 : vector<4x8x1xf32> to vector<4x8x8xf32>
    %389 = arith.mulf %386, %388 : vector<4x8x8xf32>
    %390 = vector.extract_strided_slice %389 {offsets = [0, 0, 0], sizes = [1, 8, 8], strides = [1, 1, 1]} : vector<4x8x8xf32> to vector<1x8x8xf32>
    %391 = vector.shape_cast %390 : vector<1x8x8xf32> to vector<8x8xf32>
    %392 = vector.extract_strided_slice %389 {offsets = [1, 0, 0], sizes = [1, 8, 8], strides = [1, 1, 1]} : vector<4x8x8xf32> to vector<1x8x8xf32>
    %393 = vector.shape_cast %392 : vector<1x8x8xf32> to vector<8x8xf32>
    %394 = vector.extract_strided_slice %389 {offsets = [2, 0, 0], sizes = [1, 8, 8], strides = [1, 1, 1]} : vector<4x8x8xf32> to vector<1x8x8xf32>
    %395 = vector.shape_cast %394 : vector<1x8x8xf32> to vector<8x8xf32>
    %396 = vector.extract_strided_slice %389 {offsets = [3, 0, 0], sizes = [1, 8, 8], strides = [1, 1, 1]} : vector<4x8x8xf32> to vector<1x8x8xf32>
    %397 = vector.shape_cast %396 : vector<1x8x8xf32> to vector<8x8xf32>
    %398 = tpu.concatenate %391, %393, %395, %397 in 1 : vector<8x8xf32>, vector<8x8xf32>, vector<8x8xf32>, vector<8x8xf32> -> vector<8x32xf32>
    %399 = arith.truncf %398 : vector<8x32xf32> to vector<8x32xbf16>
    %cst_145 = arith.constant dense<0.000000e+00> : vector<8x32xf32>
    %400 = tpu.matmul %399, %340, %cst_145 {dimension_numbers = #tpu.dot_dimension_numbers<[1], [0], [0], [1], [0, 0, 1, 1], [], []>} : vector<8x32xbf16>, vector<32x32xbf16>, vector<8x32xf32> -> vector<8x32xf32>
    %401 = arith.addf %318, %400 : vector<8x32xf32>
    %c0_146 = arith.constant 0 : index
    %c0_147 = arith.constant 0 : index
    %c0_148 = arith.constant 0 : index
    %402 = vector.load %arg24[%c0_146, %c0_147, %c0_148] : memref<2x1x32xf32, #tpu.memory_space<vmem>>, vector<1x1x32xf32>
    %403 = vector.shape_cast %402 : vector<1x1x32xf32> to vector<1x32xf32>
    %404 = arith.mulf %401, %401 : vector<8x32xf32>
    %cst_149 = arith.constant dense<0.000000e+00> : vector<8xf32>
    %405 = vector.multi_reduction <add>, %404, %cst_149 [1] : vector<8x32xf32> to vector<8xf32>
    %406 = vector.shape_cast %405 : vector<8xf32> to vector<8x1xf32>
    %cst_150 = arith.constant 3.200000e+01 : f32
    %407 = vector.broadcast %cst_150 : f32 to vector<8x1xf32>
    %408 = arith.divf %406, %407 : vector<8x1xf32>
    %cst_151 = arith.constant 9.99999997E-7 : f32
    %409 = vector.broadcast %cst_151 : f32 to vector<8x1xf32>
    %410 = arith.addf %408, %409 : vector<8x1xf32>
    %411 = math.rsqrt %410 : vector<8x1xf32>
    %412 = vector.broadcast %411 : vector<8x1xf32> to vector<8x32xf32>
    %413 = arith.mulf %401, %412 : vector<8x32xf32>
    %414 = vector.broadcast %403 : vector<1x32xf32> to vector<8x32xf32>
    %415 = arith.mulf %413, %414 : vector<8x32xf32>
    %c0_152 = arith.constant 0 : index
    %c0_153 = arith.constant 0 : index
    %c0_154 = arith.constant 0 : index
    %416 = vector.load %arg25[%c0_152, %c0_153, %c0_154] : memref<2x32x64xbf16, #tpu.memory_space<vmem>>, vector<1x32x64xbf16>
    %417 = vector.shape_cast %416 : vector<1x32x64xbf16> to vector<32x64xbf16>
    %c0_155 = arith.constant 0 : index
    %c0_156 = arith.constant 0 : index
    %c0_157 = arith.constant 0 : index
    %418 = vector.load %arg26[%c0_155, %c0_156, %c0_157] : memref<2x64x32xbf16, #tpu.memory_space<vmem>>, vector<1x64x32xbf16>
    %419 = vector.shape_cast %418 : vector<1x64x32xbf16> to vector<64x32xbf16>
    %420 = arith.truncf %415 : vector<8x32xf32> to vector<8x32xbf16>
    %cst_158 = arith.constant dense<0.000000e+00> : vector<8x64xf32>
    %421 = tpu.matmul %420, %417, %cst_158 {dimension_numbers = #tpu.dot_dimension_numbers<[1], [0], [0], [1], [0, 0, 1, 1], [], []>} : vector<8x32xbf16>, vector<32x64xbf16>, vector<8x64xf32> -> vector<8x64xf32>
    %cst_159 = arith.constant 0.000000e+00 : f32
    %422 = vector.broadcast %cst_159 : f32 to vector<8x64xf32>
    %423 = arith.maximumf %421, %422 : vector<8x64xf32>
    %424 = arith.truncf %423 : vector<8x64xf32> to vector<8x64xbf16>
    %cst_160 = arith.constant dense<0.000000e+00> : vector<8x32xf32>
    %425 = tpu.matmul %424, %419, %cst_160 {dimension_numbers = #tpu.dot_dimension_numbers<[1], [0], [0], [1], [0, 0, 1, 1], [], []>} : vector<8x64xbf16>, vector<64x32xbf16>, vector<8x32xf32> -> vector<8x32xf32>
    %426 = arith.addf %401, %425 : vector<8x32xf32>
    %c1_161 = arith.constant 1 : index
    %c0_162 = arith.constant 0 : index
    %c0_163 = arith.constant 0 : index
    %427 = vector.load %arg22[%c1_161, %c0_162, %c0_163] : memref<2x1x32xf32, #tpu.memory_space<vmem>>, vector<1x1x32xf32>
    %428 = vector.shape_cast %427 : vector<1x1x32xf32> to vector<1x32xf32>
    %429 = arith.mulf %426, %426 : vector<8x32xf32>
    %cst_164 = arith.constant dense<0.000000e+00> : vector<8xf32>
    %430 = vector.multi_reduction <add>, %429, %cst_164 [1] : vector<8x32xf32> to vector<8xf32>
    %431 = vector.shape_cast %430 : vector<8xf32> to vector<8x1xf32>
    %cst_165 = arith.constant 3.200000e+01 : f32
    %432 = vector.broadcast %cst_165 : f32 to vector<8x1xf32>
    %433 = arith.divf %431, %432 : vector<8x1xf32>
    %cst_166 = arith.constant 9.99999997E-7 : f32
    %434 = vector.broadcast %cst_166 : f32 to vector<8x1xf32>
    %435 = arith.addf %433, %434 : vector<8x1xf32>
    %436 = math.rsqrt %435 : vector<8x1xf32>
    %437 = vector.broadcast %436 : vector<8x1xf32> to vector<8x32xf32>
    %438 = arith.mulf %426, %437 : vector<8x32xf32>
    %439 = vector.broadcast %428 : vector<1x32xf32> to vector<8x32xf32>
    %440 = arith.mulf %438, %439 : vector<8x32xf32>
    %c1_167 = arith.constant 1 : index
    %c0_168 = arith.constant 0 : index
    %c0_169 = arith.constant 0 : index
    %441 = vector.load %arg14[%c1_167, %c0_168, %c0_169] : memref<2x32x32xbf16, #tpu.memory_space<vmem>>, vector<1x32x32xbf16>
    %442 = vector.shape_cast %441 : vector<1x32x32xbf16> to vector<32x32xbf16>
    %c1_170 = arith.constant 1 : index
    %c0_171 = arith.constant 0 : index
    %c0_172 = arith.constant 0 : index
    %443 = vector.load %arg15[%c1_170, %c0_171, %c0_172] : memref<2x32x32xbf16, #tpu.memory_space<vmem>>, vector<1x32x32xbf16>
    %444 = vector.shape_cast %443 : vector<1x32x32xbf16> to vector<32x32xbf16>
    %c1_173 = arith.constant 1 : index
    %c0_174 = arith.constant 0 : index
    %c0_175 = arith.constant 0 : index
    %445 = vector.load %arg16[%c1_173, %c0_174, %c0_175] : memref<2x32x32xbf16, #tpu.memory_space<vmem>>, vector<1x32x32xbf16>
    %446 = vector.shape_cast %445 : vector<1x32x32xbf16> to vector<32x32xbf16>
    %c1_176 = arith.constant 1 : index
    %c0_177 = arith.constant 0 : index
    %c0_178 = arith.constant 0 : index
    %447 = vector.load %arg17[%c1_176, %c0_177, %c0_178] : memref<2x32x32xbf16, #tpu.memory_space<vmem>>, vector<1x32x32xbf16>
    %448 = vector.shape_cast %447 : vector<1x32x32xbf16> to vector<32x32xbf16>
    %449 = arith.truncf %440 : vector<8x32xf32> to vector<8x32xbf16>
    %cst_179 = arith.constant dense<0.000000e+00> : vector<8x32xf32>
    %450 = tpu.matmul %449, %442, %cst_179 {dimension_numbers = #tpu.dot_dimension_numbers<[1], [0], [0], [1], [0, 0, 1, 1], [], []>} : vector<8x32xbf16>, vector<32x32xbf16>, vector<8x32xf32> -> vector<8x32xf32>
    %451 = arith.truncf %440 : vector<8x32xf32> to vector<8x32xbf16>
    %cst_180 = arith.constant dense<0.000000e+00> : vector<8x32xf32>
    %452 = tpu.matmul %451, %444, %cst_180 {dimension_numbers = #tpu.dot_dimension_numbers<[1], [0], [0], [1], [0, 0, 1, 1], [], []>} : vector<8x32xbf16>, vector<32x32xbf16>, vector<8x32xf32> -> vector<8x32xf32>
    %453 = arith.truncf %440 : vector<8x32xf32> to vector<8x32xbf16>
    %cst_181 = arith.constant dense<0.000000e+00> : vector<8x32xf32>
    %454 = tpu.matmul %453, %446, %cst_181 {dimension_numbers = #tpu.dot_dimension_numbers<[1], [0], [0], [1], [0, 0, 1, 1], [], []>} : vector<8x32xbf16>, vector<32x32xbf16>, vector<8x32xf32> -> vector<8x32xf32>
    %455 = vector.extract_strided_slice %450 {offsets = [0, 0], sizes = [8, 8], strides = [1, 1]} : vector<8x32xf32> to vector<8x8xf32>
    %456 = vector.extract_strided_slice %450 {offsets = [0, 8], sizes = [8, 8], strides = [1, 1]} : vector<8x32xf32> to vector<8x8xf32>
    %457 = vector.extract_strided_slice %450 {offsets = [0, 16], sizes = [8, 8], strides = [1, 1]} : vector<8x32xf32> to vector<8x8xf32>
    %458 = vector.extract_strided_slice %450 {offsets = [0, 24], sizes = [8, 8], strides = [1, 1]} : vector<8x32xf32> to vector<8x8xf32>
    %459 = vector.shape_cast %455 : vector<8x8xf32> to vector<1x8x8xf32>
    %460 = vector.shape_cast %456 : vector<8x8xf32> to vector<1x8x8xf32>
    %461 = vector.shape_cast %457 : vector<8x8xf32> to vector<1x8x8xf32>
    %462 = vector.shape_cast %458 : vector<8x8xf32> to vector<1x8x8xf32>
    %463 = tpu.concatenate %459, %460, %461, %462 in 0 : vector<1x8x8xf32>, vector<1x8x8xf32>, vector<1x8x8xf32>, vector<1x8x8xf32> -> vector<4x8x8xf32>
    %464 = vector.extract_strided_slice %452 {offsets = [0, 0], sizes = [8, 8], strides = [1, 1]} : vector<8x32xf32> to vector<8x8xf32>
    %465 = vector.extract_strided_slice %452 {offsets = [0, 8], sizes = [8, 8], strides = [1, 1]} : vector<8x32xf32> to vector<8x8xf32>
    %466 = vector.extract_strided_slice %452 {offsets = [0, 16], sizes = [8, 8], strides = [1, 1]} : vector<8x32xf32> to vector<8x8xf32>
    %467 = vector.extract_strided_slice %452 {offsets = [0, 24], sizes = [8, 8], strides = [1, 1]} : vector<8x32xf32> to vector<8x8xf32>
    %468 = vector.shape_cast %464 : vector<8x8xf32> to vector<1x8x8xf32>
    %469 = vector.shape_cast %465 : vector<8x8xf32> to vector<1x8x8xf32>
    %470 = vector.shape_cast %466 : vector<8x8xf32> to vector<1x8x8xf32>
    %471 = vector.shape_cast %467 : vector<8x8xf32> to vector<1x8x8xf32>
    %472 = tpu.concatenate %468, %469, %470, %471 in 0 : vector<1x8x8xf32>, vector<1x8x8xf32>, vector<1x8x8xf32>, vector<1x8x8xf32> -> vector<4x8x8xf32>
    %473 = vector.extract_strided_slice %454 {offsets = [0, 0], sizes = [8, 8], strides = [1, 1]} : vector<8x32xf32> to vector<8x8xf32>
    %474 = vector.extract_strided_slice %454 {offsets = [0, 8], sizes = [8, 8], strides = [1, 1]} : vector<8x32xf32> to vector<8x8xf32>
    %475 = vector.extract_strided_slice %454 {offsets = [0, 16], sizes = [8, 8], strides = [1, 1]} : vector<8x32xf32> to vector<8x8xf32>
    %476 = vector.extract_strided_slice %454 {offsets = [0, 24], sizes = [8, 8], strides = [1, 1]} : vector<8x32xf32> to vector<8x8xf32>
    %477 = vector.shape_cast %473 : vector<8x8xf32> to vector<1x8x8xf32>
    %478 = vector.shape_cast %474 : vector<8x8xf32> to vector<1x8x8xf32>
    %479 = vector.shape_cast %475 : vector<8x8xf32> to vector<1x8x8xf32>
    %480 = vector.shape_cast %476 : vector<8x8xf32> to vector<1x8x8xf32>
    %481 = tpu.concatenate %477, %478, %479, %480 in 0 : vector<1x8x8xf32>, vector<1x8x8xf32>, vector<1x8x8xf32>, vector<1x8x8xf32> -> vector<4x8x8xf32>
    %482 = arith.truncf %463 : vector<4x8x8xf32> to vector<4x8x8xbf16>
    %483 = arith.truncf %472 : vector<4x8x8xf32> to vector<4x8x8xbf16>
    "tpu.trace_start"() <{level = 10 : i32, message = "hqd,hkd->hqk"}> : () -> ()
    %cst_182 = arith.constant dense<0.000000e+00> : vector<4x8x8xf32>
    %484 = tpu.matmul %482, %483, %cst_182 {dimension_numbers = #tpu.dot_dimension_numbers<[2], [2], [1], [1], [0, 0, 0, 1, 1, 1], [0], [0]>} : vector<4x8x8xbf16>, vector<4x8x8xbf16>, vector<4x8x8xf32> -> vector<4x8x8xf32>
    "tpu.trace_stop"() : () -> ()
    %485 = arith.addf %484, %1 : vector<4x8x8xf32>
    %cst_183 = arith.constant dense<0xFF800000> : vector<4x8xf32>
    %486 = vector.multi_reduction <maximumf>, %485, %cst_183 [2] : vector<4x8x8xf32> to vector<4x8xf32>
    %487 = vector.shape_cast %486 : vector<4x8xf32> to vector<4x8x1xf32>
    %488 = vector.broadcast %487 : vector<4x8x1xf32> to vector<4x8x8xf32>
    %489 = arith.subf %485, %488 : vector<4x8x8xf32>
    %490 = math.exp %489 : vector<4x8x8xf32>
    %cst_184 = arith.constant dense<0.000000e+00> : vector<4x8xf32>
    %491 = vector.multi_reduction <add>, %490, %cst_184 [2] : vector<4x8x8xf32> to vector<4x8xf32>
    %492 = vector.shape_cast %491 : vector<4x8xf32> to vector<4x8x1xf32>
    %493 = arith.truncf %490 : vector<4x8x8xf32> to vector<4x8x8xbf16>
    %494 = arith.truncf %481 : vector<4x8x8xf32> to vector<4x8x8xbf16>
    "tpu.trace_start"() <{level = 10 : i32, message = "hqk,hkd->hqd"}> : () -> ()
    %cst_185 = arith.constant dense<0.000000e+00> : vector<4x8x8xf32>
    %495 = tpu.matmul %493, %494, %cst_185 {dimension_numbers = #tpu.dot_dimension_numbers<[2], [1], [1], [2], [0, 0, 0, 1, 1, 2], [0], [0]>} : vector<4x8x8xbf16>, vector<4x8x8xbf16>, vector<4x8x8xf32> -> vector<4x8x8xf32>
    "tpu.trace_stop"() : () -> ()
    %496 = tpu.reciprocal %492 {approx = true} : vector<4x8x1xf32> -> vector<4x8x1xf32>
    %497 = vector.broadcast %496 : vector<4x8x1xf32> to vector<4x8x8xf32>
    %498 = arith.mulf %495, %497 : vector<4x8x8xf32>
    %499 = vector.extract_strided_slice %498 {offsets = [0, 0, 0], sizes = [1, 8, 8], strides = [1, 1, 1]} : vector<4x8x8xf32> to vector<1x8x8xf32>
    %500 = vector.shape_cast %499 : vector<1x8x8xf32> to vector<8x8xf32>
    %501 = vector.extract_strided_slice %498 {offsets = [1, 0, 0], sizes = [1, 8, 8], strides = [1, 1, 1]} : vector<4x8x8xf32> to vector<1x8x8xf32>
    %502 = vector.shape_cast %501 : vector<1x8x8xf32> to vector<8x8xf32>
    %503 = vector.extract_strided_slice %498 {offsets = [2, 0, 0], sizes = [1, 8, 8], strides = [1, 1, 1]} : vector<4x8x8xf32> to vector<1x8x8xf32>
    %504 = vector.shape_cast %503 : vector<1x8x8xf32> to vector<8x8xf32>
    %505 = vector.extract_strided_slice %498 {offsets = [3, 0, 0], sizes = [1, 8, 8], strides = [1, 1, 1]} : vector<4x8x8xf32> to vector<1x8x8xf32>
    %506 = vector.shape_cast %505 : vector<1x8x8xf32> to vector<8x8xf32>
    %507 = tpu.concatenate %500, %502, %504, %506 in 1 : vector<8x8xf32>, vector<8x8xf32>, vector<8x8xf32>, vector<8x8xf32> -> vector<8x32xf32>
    %508 = arith.truncf %507 : vector<8x32xf32> to vector<8x32xbf16>
    %cst_186 = arith.constant dense<0.000000e+00> : vector<8x32xf32>
    %509 = tpu.matmul %508, %448, %cst_186 {dimension_numbers = #tpu.dot_dimension_numbers<[1], [0], [0], [1], [0, 0, 1, 1], [], []>} : vector<8x32xbf16>, vector<32x32xbf16>, vector<8x32xf32> -> vector<8x32xf32>
    %510 = arith.addf %426, %509 : vector<8x32xf32>
    %c1_187 = arith.constant 1 : index
    %c0_188 = arith.constant 0 : index
    %c0_189 = arith.constant 0 : index
    %511 = vector.load %arg23[%c1_187, %c0_188, %c0_189] : memref<2x1x32xf32, #tpu.memory_space<vmem>>, vector<1x1x32xf32>
    %512 = vector.shape_cast %511 : vector<1x1x32xf32> to vector<1x32xf32>
    %513 = arith.mulf %510, %510 : vector<8x32xf32>
    %cst_190 = arith.constant dense<0.000000e+00> : vector<8xf32>
    %514 = vector.multi_reduction <add>, %513, %cst_190 [1] : vector<8x32xf32> to vector<8xf32>
    %515 = vector.shape_cast %514 : vector<8xf32> to vector<8x1xf32>
    %cst_191 = arith.constant 3.200000e+01 : f32
    %516 = vector.broadcast %cst_191 : f32 to vector<8x1xf32>
    %517 = arith.divf %515, %516 : vector<8x1xf32>
    %cst_192 = arith.constant 9.99999997E-7 : f32
    %518 = vector.broadcast %cst_192 : f32 to vector<8x1xf32>
    %519 = arith.addf %517, %518 : vector<8x1xf32>
    %520 = math.rsqrt %519 : vector<8x1xf32>
    %521 = vector.broadcast %520 : vector<8x1xf32> to vector<8x32xf32>
    %522 = arith.mulf %510, %521 : vector<8x32xf32>
    %523 = vector.broadcast %512 : vector<1x32xf32> to vector<8x32xf32>
    %524 = arith.mulf %522, %523 : vector<8x32xf32>
    %c1_193 = arith.constant 1 : index
    %c0_194 = arith.constant 0 : index
    %c0_195 = arith.constant 0 : index
    %525 = vector.load %arg18[%c1_193, %c0_194, %c0_195] : memref<2x32x32xbf16, #tpu.memory_space<vmem>>, vector<1x32x32xbf16>
    %526 = vector.shape_cast %525 : vector<1x32x32xbf16> to vector<32x32xbf16>
    %c1_196 = arith.constant 1 : index
    %c0_197 = arith.constant 0 : index
    %c0_198 = arith.constant 0 : index
    %527 = vector.load %arg19[%c1_196, %c0_197, %c0_198] : memref<2x32x32xbf16, #tpu.memory_space<vmem>>, vector<1x32x32xbf16>
    %528 = vector.shape_cast %527 : vector<1x32x32xbf16> to vector<32x32xbf16>
    %c1_199 = arith.constant 1 : index
    %c0_200 = arith.constant 0 : index
    %c0_201 = arith.constant 0 : index
    %529 = vector.load %arg20[%c1_199, %c0_200, %c0_201] : memref<2x32x32xbf16, #tpu.memory_space<vmem>>, vector<1x32x32xbf16>
    %530 = vector.shape_cast %529 : vector<1x32x32xbf16> to vector<32x32xbf16>
    %c1_202 = arith.constant 1 : index
    %c0_203 = arith.constant 0 : index
    %c0_204 = arith.constant 0 : index
    %531 = vector.load %arg21[%c1_202, %c0_203, %c0_204] : memref<2x32x32xbf16, #tpu.memory_space<vmem>>, vector<1x32x32xbf16>
    %532 = vector.shape_cast %531 : vector<1x32x32xbf16> to vector<32x32xbf16>
    %533 = arith.truncf %524 : vector<8x32xf32> to vector<8x32xbf16>
    %cst_205 = arith.constant dense<0.000000e+00> : vector<8x32xf32>
    %534 = tpu.matmul %533, %526, %cst_205 {dimension_numbers = #tpu.dot_dimension_numbers<[1], [0], [0], [1], [0, 0, 1, 1], [], []>} : vector<8x32xbf16>, vector<32x32xbf16>, vector<8x32xf32> -> vector<8x32xf32>
    %535 = arith.truncf %233 : vector<8x32xf32> to vector<8x32xbf16>
    %cst_206 = arith.constant dense<0.000000e+00> : vector<8x32xf32>
    %536 = tpu.matmul %535, %528, %cst_206 {dimension_numbers = #tpu.dot_dimension_numbers<[1], [0], [0], [1], [0, 0, 1, 1], [], []>} : vector<8x32xbf16>, vector<32x32xbf16>, vector<8x32xf32> -> vector<8x32xf32>
    %537 = arith.truncf %233 : vector<8x32xf32> to vector<8x32xbf16>
    %cst_207 = arith.constant dense<0.000000e+00> : vector<8x32xf32>
    %538 = tpu.matmul %537, %530, %cst_207 {dimension_numbers = #tpu.dot_dimension_numbers<[1], [0], [0], [1], [0, 0, 1, 1], [], []>} : vector<8x32xbf16>, vector<32x32xbf16>, vector<8x32xf32> -> vector<8x32xf32>
    %539 = vector.extract_strided_slice %534 {offsets = [0, 0], sizes = [8, 8], strides = [1, 1]} : vector<8x32xf32> to vector<8x8xf32>
    %540 = vector.extract_strided_slice %534 {offsets = [0, 8], sizes = [8, 8], strides = [1, 1]} : vector<8x32xf32> to vector<8x8xf32>
    %541 = vector.extract_strided_slice %534 {offsets = [0, 16], sizes = [8, 8], strides = [1, 1]} : vector<8x32xf32> to vector<8x8xf32>
    %542 = vector.extract_strided_slice %534 {offsets = [0, 24], sizes = [8, 8], strides = [1, 1]} : vector<8x32xf32> to vector<8x8xf32>
    %543 = vector.shape_cast %539 : vector<8x8xf32> to vector<1x8x8xf32>
    %544 = vector.shape_cast %540 : vector<8x8xf32> to vector<1x8x8xf32>
    %545 = vector.shape_cast %541 : vector<8x8xf32> to vector<1x8x8xf32>
    %546 = vector.shape_cast %542 : vector<8x8xf32> to vector<1x8x8xf32>
    %547 = tpu.concatenate %543, %544, %545, %546 in 0 : vector<1x8x8xf32>, vector<1x8x8xf32>, vector<1x8x8xf32>, vector<1x8x8xf32> -> vector<4x8x8xf32>
    %548 = vector.extract_strided_slice %536 {offsets = [0, 0], sizes = [8, 8], strides = [1, 1]} : vector<8x32xf32> to vector<8x8xf32>
    %549 = vector.extract_strided_slice %536 {offsets = [0, 8], sizes = [8, 8], strides = [1, 1]} : vector<8x32xf32> to vector<8x8xf32>
    %550 = vector.extract_strided_slice %536 {offsets = [0, 16], sizes = [8, 8], strides = [1, 1]} : vector<8x32xf32> to vector<8x8xf32>
    %551 = vector.extract_strided_slice %536 {offsets = [0, 24], sizes = [8, 8], strides = [1, 1]} : vector<8x32xf32> to vector<8x8xf32>
    %552 = vector.shape_cast %548 : vector<8x8xf32> to vector<1x8x8xf32>
    %553 = vector.shape_cast %549 : vector<8x8xf32> to vector<1x8x8xf32>
    %554 = vector.shape_cast %550 : vector<8x8xf32> to vector<1x8x8xf32>
    %555 = vector.shape_cast %551 : vector<8x8xf32> to vector<1x8x8xf32>
    %556 = tpu.concatenate %552, %553, %554, %555 in 0 : vector<1x8x8xf32>, vector<1x8x8xf32>, vector<1x8x8xf32>, vector<1x8x8xf32> -> vector<4x8x8xf32>
    %557 = vector.extract_strided_slice %538 {offsets = [0, 0], sizes = [8, 8], strides = [1, 1]} : vector<8x32xf32> to vector<8x8xf32>
    %558 = vector.extract_strided_slice %538 {offsets = [0, 8], sizes = [8, 8], strides = [1, 1]} : vector<8x32xf32> to vector<8x8xf32>
    %559 = vector.extract_strided_slice %538 {offsets = [0, 16], sizes = [8, 8], strides = [1, 1]} : vector<8x32xf32> to vector<8x8xf32>
    %560 = vector.extract_strided_slice %538 {offsets = [0, 24], sizes = [8, 8], strides = [1, 1]} : vector<8x32xf32> to vector<8x8xf32>
    %561 = vector.shape_cast %557 : vector<8x8xf32> to vector<1x8x8xf32>
    %562 = vector.shape_cast %558 : vector<8x8xf32> to vector<1x8x8xf32>
    %563 = vector.shape_cast %559 : vector<8x8xf32> to vector<1x8x8xf32>
    %564 = vector.shape_cast %560 : vector<8x8xf32> to vector<1x8x8xf32>
    %565 = tpu.concatenate %561, %562, %563, %564 in 0 : vector<1x8x8xf32>, vector<1x8x8xf32>, vector<1x8x8xf32>, vector<1x8x8xf32> -> vector<4x8x8xf32>
    %566 = arith.truncf %547 : vector<4x8x8xf32> to vector<4x8x8xbf16>
    %567 = arith.truncf %556 : vector<4x8x8xf32> to vector<4x8x8xbf16>
    "tpu.trace_start"() <{level = 10 : i32, message = "hqd,hkd->hqk"}> : () -> ()
    %cst_208 = arith.constant dense<0.000000e+00> : vector<4x8x8xf32>
    %568 = tpu.matmul %566, %567, %cst_208 {dimension_numbers = #tpu.dot_dimension_numbers<[2], [2], [1], [1], [0, 0, 0, 1, 1, 1], [0], [0]>} : vector<4x8x8xbf16>, vector<4x8x8xbf16>, vector<4x8x8xf32> -> vector<4x8x8xf32>
    "tpu.trace_stop"() : () -> ()
    %cst_209 = arith.constant dense<0xFF800000> : vector<4x8xf32>
    %569 = vector.multi_reduction <maximumf>, %568, %cst_209 [2] : vector<4x8x8xf32> to vector<4x8xf32>
    %570 = vector.shape_cast %569 : vector<4x8xf32> to vector<4x8x1xf32>
    %571 = vector.broadcast %570 : vector<4x8x1xf32> to vector<4x8x8xf32>
    %572 = arith.subf %568, %571 : vector<4x8x8xf32>
    %573 = math.exp %572 : vector<4x8x8xf32>
    %cst_210 = arith.constant dense<0.000000e+00> : vector<4x8xf32>
    %574 = vector.multi_reduction <add>, %573, %cst_210 [2] : vector<4x8x8xf32> to vector<4x8xf32>
    %575 = vector.shape_cast %574 : vector<4x8xf32> to vector<4x8x1xf32>
    %576 = arith.truncf %573 : vector<4x8x8xf32> to vector<4x8x8xbf16>
    %577 = arith.truncf %565 : vector<4x8x8xf32> to vector<4x8x8xbf16>
    "tpu.trace_start"() <{level = 10 : i32, message = "hqk,hkd->hqd"}> : () -> ()
    %cst_211 = arith.constant dense<0.000000e+00> : vector<4x8x8xf32>
    %578 = tpu.matmul %576, %577, %cst_211 {dimension_numbers = #tpu.dot_dimension_numbers<[2], [1], [1], [2], [0, 0, 0, 1, 1, 2], [0], [0]>} : vector<4x8x8xbf16>, vector<4x8x8xbf16>, vector<4x8x8xf32> -> vector<4x8x8xf32>
    "tpu.trace_stop"() : () -> ()
    %579 = tpu.reciprocal %575 {approx = true} : vector<4x8x1xf32> -> vector<4x8x1xf32>
    %580 = vector.broadcast %579 : vector<4x8x1xf32> to vector<4x8x8xf32>
    %581 = arith.mulf %578, %580 : vector<4x8x8xf32>
    %582 = vector.extract_strided_slice %581 {offsets = [0, 0, 0], sizes = [1, 8, 8], strides = [1, 1, 1]} : vector<4x8x8xf32> to vector<1x8x8xf32>
    %583 = vector.shape_cast %582 : vector<1x8x8xf32> to vector<8x8xf32>
    %584 = vector.extract_strided_slice %581 {offsets = [1, 0, 0], sizes = [1, 8, 8], strides = [1, 1, 1]} : vector<4x8x8xf32> to vector<1x8x8xf32>
    %585 = vector.shape_cast %584 : vector<1x8x8xf32> to vector<8x8xf32>
    %586 = vector.extract_strided_slice %581 {offsets = [2, 0, 0], sizes = [1, 8, 8], strides = [1, 1, 1]} : vector<4x8x8xf32> to vector<1x8x8xf32>
    %587 = vector.shape_cast %586 : vector<1x8x8xf32> to vector<8x8xf32>
    %588 = vector.extract_strided_slice %581 {offsets = [3, 0, 0], sizes = [1, 8, 8], strides = [1, 1, 1]} : vector<4x8x8xf32> to vector<1x8x8xf32>
    %589 = vector.shape_cast %588 : vector<1x8x8xf32> to vector<8x8xf32>
    %590 = tpu.concatenate %583, %585, %587, %589 in 1 : vector<8x8xf32>, vector<8x8xf32>, vector<8x8xf32>, vector<8x8xf32> -> vector<8x32xf32>
    %591 = arith.truncf %590 : vector<8x32xf32> to vector<8x32xbf16>
    %cst_212 = arith.constant dense<0.000000e+00> : vector<8x32xf32>
    %592 = tpu.matmul %591, %532, %cst_212 {dimension_numbers = #tpu.dot_dimension_numbers<[1], [0], [0], [1], [0, 0, 1, 1], [], []>} : vector<8x32xbf16>, vector<32x32xbf16>, vector<8x32xf32> -> vector<8x32xf32>
    %593 = arith.addf %510, %592 : vector<8x32xf32>
    %c1_213 = arith.constant 1 : index
    %c0_214 = arith.constant 0 : index
    %c0_215 = arith.constant 0 : index
    %594 = vector.load %arg24[%c1_213, %c0_214, %c0_215] : memref<2x1x32xf32, #tpu.memory_space<vmem>>, vector<1x1x32xf32>
    %595 = vector.shape_cast %594 : vector<1x1x32xf32> to vector<1x32xf32>
    %596 = arith.mulf %593, %593 : vector<8x32xf32>
    %cst_216 = arith.constant dense<0.000000e+00> : vector<8xf32>
    %597 = vector.multi_reduction <add>, %596, %cst_216 [1] : vector<8x32xf32> to vector<8xf32>
    %598 = vector.shape_cast %597 : vector<8xf32> to vector<8x1xf32>
    %cst_217 = arith.constant 3.200000e+01 : f32
    %599 = vector.broadcast %cst_217 : f32 to vector<8x1xf32>
    %600 = arith.divf %598, %599 : vector<8x1xf32>
    %cst_218 = arith.constant 9.99999997E-7 : f32
    %601 = vector.broadcast %cst_218 : f32 to vector<8x1xf32>
    %602 = arith.addf %600, %601 : vector<8x1xf32>
    %603 = math.rsqrt %602 : vector<8x1xf32>
    %604 = vector.broadcast %603 : vector<8x1xf32> to vector<8x32xf32>
    %605 = arith.mulf %593, %604 : vector<8x32xf32>
    %606 = vector.broadcast %595 : vector<1x32xf32> to vector<8x32xf32>
    %607 = arith.mulf %605, %606 : vector<8x32xf32>
    %c1_219 = arith.constant 1 : index
    %c0_220 = arith.constant 0 : index
    %c0_221 = arith.constant 0 : index
    %608 = vector.load %arg25[%c1_219, %c0_220, %c0_221] : memref<2x32x64xbf16, #tpu.memory_space<vmem>>, vector<1x32x64xbf16>
    %609 = vector.shape_cast %608 : vector<1x32x64xbf16> to vector<32x64xbf16>
    %c1_222 = arith.constant 1 : index
    %c0_223 = arith.constant 0 : index
    %c0_224 = arith.constant 0 : index
    %610 = vector.load %arg26[%c1_222, %c0_223, %c0_224] : memref<2x64x32xbf16, #tpu.memory_space<vmem>>, vector<1x64x32xbf16>
    %611 = vector.shape_cast %610 : vector<1x64x32xbf16> to vector<64x32xbf16>
    %612 = arith.truncf %607 : vector<8x32xf32> to vector<8x32xbf16>
    %cst_225 = arith.constant dense<0.000000e+00> : vector<8x64xf32>
    %613 = tpu.matmul %612, %609, %cst_225 {dimension_numbers = #tpu.dot_dimension_numbers<[1], [0], [0], [1], [0, 0, 1, 1], [], []>} : vector<8x32xbf16>, vector<32x64xbf16>, vector<8x64xf32> -> vector<8x64xf32>
    %cst_226 = arith.constant 0.000000e+00 : f32
    %614 = vector.broadcast %cst_226 : f32 to vector<8x64xf32>
    %615 = arith.maximumf %613, %614 : vector<8x64xf32>
    %616 = arith.truncf %615 : vector<8x64xf32> to vector<8x64xbf16>
    %cst_227 = arith.constant dense<0.000000e+00> : vector<8x32xf32>
    %617 = tpu.matmul %616, %611, %cst_227 {dimension_numbers = #tpu.dot_dimension_numbers<[1], [0], [0], [1], [0, 0, 1, 1], [], []>} : vector<8x64xbf16>, vector<64x32xbf16>, vector<8x32xf32> -> vector<8x32xf32>
    %618 = arith.addf %593, %617 : vector<8x32xf32>
    %c0_228 = arith.constant 0 : index
    %c0_229 = arith.constant 0 : index
    %619 = vector.load %arg27[%c0_228, %c0_229] : memref<1x32xf32, #tpu.memory_space<vmem>>, vector<1x32xf32>
    %620 = arith.mulf %618, %618 : vector<8x32xf32>
    %cst_230 = arith.constant dense<0.000000e+00> : vector<8xf32>
    %621 = vector.multi_reduction <add>, %620, %cst_230 [1] : vector<8x32xf32> to vector<8xf32>
    %622 = vector.shape_cast %621 : vector<8xf32> to vector<8x1xf32>
    %cst_231 = arith.constant 3.200000e+01 : f32
    %623 = vector.broadcast %cst_231 : f32 to vector<8x1xf32>
    %624 = arith.divf %622, %623 : vector<8x1xf32>
    %cst_232 = arith.constant 9.99999997E-7 : f32
    %625 = vector.broadcast %cst_232 : f32 to vector<8x1xf32>
    %626 = arith.addf %624, %625 : vector<8x1xf32>
    %627 = math.rsqrt %626 : vector<8x1xf32>
    %628 = vector.broadcast %627 : vector<8x1xf32> to vector<8x32xf32>
    %629 = arith.mulf %618, %628 : vector<8x32xf32>
    %630 = vector.broadcast %619 : vector<1x32xf32> to vector<8x32xf32>
    %631 = arith.mulf %629, %630 : vector<8x32xf32>
    %632 = vector.extract_strided_slice %631 {offsets = [0, 0], sizes = [1, 32], strides = [1, 1]} : vector<8x32xf32> to vector<1x32xf32>
    %633 = vector.extract_strided_slice %631 {offsets = [1, 0], sizes = [1, 32], strides = [1, 1]} : vector<8x32xf32> to vector<1x32xf32>
    %634 = vector.extract_strided_slice %631 {offsets = [2, 0], sizes = [1, 32], strides = [1, 1]} : vector<8x32xf32> to vector<1x32xf32>
    %635 = vector.extract_strided_slice %631 {offsets = [3, 0], sizes = [1, 32], strides = [1, 1]} : vector<8x32xf32> to vector<1x32xf32>
    %636 = tpu.concatenate %632, %633, %634, %635 in 1 : vector<1x32xf32>, vector<1x32xf32>, vector<1x32xf32>, vector<1x32xf32> -> vector<1x128xf32>
    %637 = vector.extract_strided_slice %631 {offsets = [4, 0], sizes = [1, 32], strides = [1, 1]} : vector<8x32xf32> to vector<1x32xf32>
    %638 = vector.extract_strided_slice %631 {offsets = [5, 0], sizes = [1, 32], strides = [1, 1]} : vector<8x32xf32> to vector<1x32xf32>
    %639 = vector.extract_strided_slice %631 {offsets = [6, 0], sizes = [1, 32], strides = [1, 1]} : vector<8x32xf32> to vector<1x32xf32>
    %640 = vector.extract_strided_slice %631 {offsets = [7, 0], sizes = [1, 32], strides = [1, 1]} : vector<8x32xf32> to vector<1x32xf32>
    %641 = tpu.concatenate %637, %638, %639, %640 in 1 : vector<1x32xf32>, vector<1x32xf32>, vector<1x32xf32>, vector<1x32xf32> -> vector<1x128xf32>
    %642 = tpu.concatenate %636, %641 in 0 : vector<1x128xf32>, vector<1x128xf32> -> vector<2x128xf32>
    %643 = vector.shape_cast %642 : vector<2x128xf32> to vector<1x2x128xf32>
    %c0_233 = arith.constant 0 : index
    %c0_234 = arith.constant 0 : index
    %c0_235 = arith.constant 0 : index
    %644 = vector.load %arg28[%c0_233, %c0_234, %c0_235] : memref<1x2x128xf32, #tpu.memory_space<vmem>>, vector<1x2x128xf32>
    tpu.vector_store %arg28[%c0_233, %c0_234, %c0_235], %643 {strides = array<i32>} : memref<1x2x128xf32, #tpu.memory_space<vmem>>, vector<1x2x128xf32>,
    return
  }
  func.func @transform_0(%arg0: i32) -> (i32, i32) {
    %c0_i32 = arith.constant 0 : i32
    %c0_i32_0 = arith.constant 0 : i32
    return %arg0, %c0_i32 : i32, i32
  }
  func.func @transform_1(%arg0: i32) -> (i32, i32) {
    %c0_i32 = arith.constant 0 : i32
    %c0_i32_0 = arith.constant 0 : i32
    return %arg0, %c0_i32 : i32, i32
  }
  func.func @transform_2(%arg0: i32) -> (i32, i32, i32) {
    %c0_i32 = arith.constant 0 : i32
    %c0_i32_0 = arith.constant 0 : i32
    %c0_i32_1 = arith.constant 0 : i32
    %c0_i32_2 = arith.constant 0 : i32
    return %c0_i32, %c0_i32_0, %c0_i32_1 : i32, i32, i32
  }
  func.func @transform_3(%arg0: i32) -> (i32, i32, i32) {
    %c0_i32 = arith.constant 0 : i32
    %c0_i32_0 = arith.constant 0 : i32
    %c0_i32_1 = arith.constant 0 : i32
    %c0_i32_2 = arith.constant 0 : i32
    return %c0_i32, %c0_i32_0, %c0_i32_1 : i32, i32, i32
  }
  func.func @transform_4(%arg0: i32) -> (i32, i32, i32) {
    %c0_i32 = arith.constant 0 : i32
    %c0_i32_0 = arith.constant 0 : i32
    %c0_i32_1 = arith.constant 0 : i32
    %c0_i32_2 = arith.constant 0 : i32
    return %c0_i32, %c0_i32_0, %c0_i32_1 : i32, i32, i32
  }
  func.func @transform_5(%arg0: i32) -> (i32, i32, i32) {
    %c0_i32 = arith.constant 0 : i32
    %c0_i32_0 = arith.constant 0 : i32
    %c0_i32_1 = arith.constant 0 : i32
    %c0_i32_2 = arith.constant 0 : i32
    return %c0_i32, %c0_i32_0, %c0_i32_1 : i32, i32, i32
  }
  func.func @transform_6(%arg0: i32) -> (i32, i32, i32) {
    %c0_i32 = arith.constant 0 : i32
    %c0_i32_0 = arith.constant 0 : i32
    %c0_i32_1 = arith.constant 0 : i32
    %c0_i32_2 = arith.constant 0 : i32
    return %c0_i32, %c0_i32_0, %c0_i32_1 : i32, i32, i32
  }
  func.func @transform_7(%arg0: i32) -> (i32, i32, i32) {
    %c0_i32 = arith.constant 0 : i32
    %c0_i32_0 = arith.constant 0 : i32
    %c0_i32_1 = arith.constant 0 : i32
    %c0_i32_2 = arith.constant 0 : i32
    return %c0_i32, %c0_i32_0, %c0_i32_1 : i32, i32, i32
  }
  func.func @transform_8(%arg0: i32) -> (i32, i32, i32) {
    %c0_i32 = arith.constant 0 : i32
    %c0_i32_0 = arith.constant 0 : i32
    %c0_i32_1 = arith.constant 0 : i32
    %c0_i32_2 = arith.constant 0 : i32
    return %c0_i32, %c0_i32_0, %c0_i32_1 : i32, i32, i32
  }
  func.func @transform_9(%arg0: i32) -> (i32, i32, i32) {
    %c0_i32 = arith.constant 0 : i32
    %c0_i32_0 = arith.constant 0 : i32
    %c0_i32_1 = arith.constant 0 : i32
    %c0_i32_2 = arith.constant 0 : i32
    return %c0_i32, %c0_i32_0, %c0_i32_1 : i32, i32, i32
  }
  func.func @transform_10(%arg0: i32) -> (i32, i32, i32) {
    %c0_i32 = arith.constant 0 : i32
    %c0_i32_0 = arith.constant 0 : i32
    %c0_i32_1 = arith.constant 0 : i32
    %c0_i32_2 = arith.constant 0 : i32
    return %c0_i32, %c0_i32_0, %c0_i32_1 : i32, i32, i32
  }
  func.func @transform_11(%arg0: i32) -> (i32, i32, i32) {
    %c0_i32 = arith.constant 0 : i32
    %c0_i32_0 = arith.constant 0 : i32
    %c0_i32_1 = arith.constant 0 : i32
    %c0_i32_2 = arith.constant 0 : i32
    return %c0_i32, %c0_i32_0, %c0_i32_1 : i32, i32, i32
  }
  func.func @transform_12(%arg0: i32) -> (i32, i32) {
    %c0_i32 = arith.constant 0 : i32
    %c0_i32_0 = arith.constant 0 : i32
    %c0_i32_1 = arith.constant 0 : i32
    return %c0_i32, %c0_i32_0 : i32, i32
  }
  func.func @transform_13(%arg0: i32) -> (i32, i32, i32) {
    %c0_i32 = arith.constant 0 : i32
    %c0_i32_0 = arith.constant 0 : i32
    %c0_i32_1 = arith.constant 0 : i32
    %c0_i32_2 = arith.constant 0 : i32
    return %c0_i32, %c0_i32_0, %c0_i32_1 : i32, i32, i32
  }
  func.func @transform_14(%arg0: i32) -> (i32, i32, i32) {
    %c0_i32 = arith.constant 0 : i32
    %c0_i32_0 = arith.constant 0 : i32
    %c0_i32_1 = arith.constant 0 : i32
    %c0_i32_2 = arith.constant 0 : i32
    return %c0_i32, %c0_i32_0, %c0_i32_1 : i32, i32, i32
  }
  func.func @transform_15(%arg0: i32) -> (i32, i32, i32) {
    %c0_i32 = arith.constant 0 : i32
    %c0_i32_0 = arith.constant 0 : i32
    %c0_i32_1 = arith.constant 0 : i32
    %c0_i32_2 = arith.constant 0 : i32
    return %c0_i32, %c0_i32_0, %c0_i32_1 : i32, i32, i32
  }
  func.func @transform_16(%arg0: i32) -> (i32, i32, i32) {
    %c0_i32 = arith.constant 0 : i32
    %c0_i32_0 = arith.constant 0 : i32
    %c0_i32_1 = arith.constant 0 : i32
    %c0_i32_2 = arith.constant 0 : i32
    return %c0_i32, %c0_i32_0, %c0_i32_1 : i32, i32, i32
  }
  func.func @transform_17(%arg0: i32) -> (i32, i32, i32) {
    %c0_i32 = arith.constant 0 : i32
    %c0_i32_0 = arith.constant 0 : i32
    %c0_i32_1 = arith.constant 0 : i32
    %c0_i32_2 = arith.constant 0 : i32
    return %c0_i32, %c0_i32_0, %c0_i32_1 : i32, i32, i32
  }
  func.func @transform_18(%arg0: i32) -> (i32, i32, i32) {
    %c0_i32 = arith.constant 0 : i32
    %c0_i32_0 = arith.constant 0 : i32
    %c0_i32_1 = arith.constant 0 : i32
    %c0_i32_2 = arith.constant 0 : i32
    return %c0_i32, %c0_i32_0, %c0_i32_1 : i32, i32, i32
  }
  func.func @transform_19(%arg0: i32) -> (i32, i32, i32) {
    %c0_i32 = arith.constant 0 : i32
    %c0_i32_0 = arith.constant 0 : i32
    %c0_i32_1 = arith.constant 0 : i32
    %c0_i32_2 = arith.constant 0 : i32
    return %c0_i32, %c0_i32_0, %c0_i32_1 : i32, i32, i32
  }
  func.func @transform_20(%arg0: i32) -> (i32, i32, i32) {
    %c0_i32 = arith.constant 0 : i32
    %c0_i32_0 = arith.constant 0 : i32
    %c0_i32_1 = arith.constant 0 : i32
    %c0_i32_2 = arith.constant 0 : i32
    return %c0_i32, %c0_i32_0, %c0_i32_1 : i32, i32, i32
  }
  func.func @transform_21(%arg0: i32) -> (i32, i32, i32) {
    %c0_i32 = arith.constant 0 : i32
    %c0_i32_0 = arith.constant 0 : i32
    %c0_i32_1 = arith.constant 0 : i32
    %c0_i32_2 = arith.constant 0 : i32
    return %c0_i32, %c0_i32_0, %c0_i32_1 : i32, i32, i32
  }
  func.func @transform_22(%arg0: i32) -> (i32, i32, i32) {
    %c0_i32 = arith.constant 0 : i32
    %c0_i32_0 = arith.constant 0 : i32
    %c0_i32_1 = arith.constant 0 : i32
    %c0_i32_2 = arith.constant 0 : i32
    return %c0_i32, %c0_i32_0, %c0_i32_1 : i32, i32, i32
  }
  func.func @transform_23(%arg0: i32) -> (i32, i32, i32) {
    %c0_i32 = arith.constant 0 : i32
    %c0_i32_0 = arith.constant 0 : i32
    %c0_i32_1 = arith.constant 0 : i32
    %c0_i32_2 = arith.constant 0 : i32
    return %c0_i32, %c0_i32_0, %c0_i32_1 : i32, i32, i32
  }
  func.func @transform_24(%arg0: i32) -> (i32, i32, i32) {
    %c0_i32 = arith.constant 0 : i32
    %c0_i32_0 = arith.constant 0 : i32
    %c0_i32_1 = arith.constant 0 : i32
    %c0_i32_2 = arith.constant 0 : i32
    return %c0_i32, %c0_i32_0, %c0_i32_1 : i32, i32, i32
  }
  func.func @transform_25(%arg0: i32) -> (i32, i32, i32) {
    %c0_i32 = arith.constant 0 : i32
    %c0_i32_0 = arith.constant 0 : i32
    %c0_i32_1 = arith.constant 0 : i32
    %c0_i32_2 = arith.constant 0 : i32
    return %c0_i32, %c0_i32_0, %c0_i32_1 : i32, i32, i32
  }
  func.func @transform_26(%arg0: i32) -> (i32, i32) {
    %c0_i32 = arith.constant 0 : i32
    %c0_i32_0 = arith.constant 0 : i32
    %c0_i32_1 = arith.constant 0 : i32
    return %c0_i32, %c0_i32_0 : i32, i32
  }
  func.func @transform_27(%arg0: i32) -> (i32, i32, i32) {
    %c0_i32 = arith.constant 0 : i32
    %c0_i32_0 = arith.constant 0 : i32
    %c0_i32_1 = arith.constant 0 : i32
    return %arg0, %c0_i32, %c0_i32_0 : i32, i32, i32
  }
}

</mosaic_0001>

<llo_original>
// kernel: t5_forward.1
$region0: #{t5_forward.1}
  #allocation0 [shape = 'u32[]', space=smem, size = 0x4, offset = 0x4, fixed_abs, tag = 'smem constant byte address 0x4 - core index']
  #allocation1 [shape = 'u32[144,128]{1,0:T(1,128)}', space=vmem, size = 0x12000, scoped, tag = 'internal scratch']
  %s0 = inlined_call_operand.vmem [shape: f32[16,32], index: 0, kind: input, shape index: {}]
  %s1 = inlined_call_operand.vmem [shape: f32[16,32], index: 1, kind: input, shape index: {}]
  %s2 = inlined_call_operand.vmem [shape: f32[4,8,8], index: 2, kind: input, shape index: {}]
  %s3 = inlined_call_operand.vmem [shape: f32[4,8,8], index: 3, kind: input, shape index: {}]
  %s4 = inlined_call_operand.vmem [shape: bf16[2,32,32], index: 4, kind: input, shape index: {}]
  %s5 = inlined_call_operand.vmem [shape: bf16[2,32,32], index: 5, kind: input, shape index: {}]
  %s6 = inlined_call_operand.vmem [shape: bf16[2,32,32], index: 6, kind: input, shape index: {}]
  %s7 = inlined_call_operand.vmem [shape: bf16[2,32,32], index: 7, kind: input, shape index: {}]
  %s8 = inlined_call_operand.vmem [shape: f32[2,1,32], index: 8, kind: input, shape index: {}]
  %s9 = inlined_call_operand.vmem [shape: f32[2,1,32], index: 9, kind: input, shape index: {}]
  %s10 = inlined_call_operand.vmem [shape: bf16[2,32,64], index: 10, kind: input, shape index: {}]
  %s11 = inlined_call_operand.vmem [shape: bf16[2,64,32], index: 11, kind: input, shape index: {}]
  %s12 = inlined_call_operand.vmem [shape: f32[1,32], index: 12, kind: input, shape index: {}]
  %s13 = inlined_call_operand.vmem [shape: bf16[2,32,32], index: 13, kind: input, shape index: {}]
  %s14 = inlined_call_operand.vmem [shape: bf16[2,32,32], index: 14, kind: input, shape index: {}]
  %s15 = inlined_call_operand.vmem [shape: bf16[2,32,32], index: 15, kind: input, shape index: {}]
  %s16 = inlined_call_operand.vmem [shape: bf16[2,32,32], index: 16, kind: input, shape index: {}]
  %s17 = inlined_call_operand.vmem [shape: bf16[2,32,32], index: 17, kind: input, shape index: {}]
  %s18 = inlined_call_operand.vmem [shape: bf16[2,32,32], index: 18, kind: input, shape index: {}]
  %s19 = inlined_call_operand.vmem [shape: bf16[2,32,32], index: 19, kind: input, shape index: {}]
  %s20 = inlined_call_operand.vmem [shape: bf16[2,32,32], index: 20, kind: input, shape index: {}]
  %s21 = inlined_call_operand.vmem [shape: f32[2,1,32], index: 21, kind: input, shape index: {}]
  %s22 = inlined_call_operand.vmem [shape: f32[2,1,32], index: 22, kind: input, shape index: {}]
  %s23 = inlined_call_operand.vmem [shape: f32[2,1,32], index: 23, kind: input, shape index: {}]
  %s24 = inlined_call_operand.vmem [shape: bf16[2,32,64], index: 24, kind: input, shape index: {}]
  %s25 = inlined_call_operand.vmem [shape: bf16[2,64,32], index: 25, kind: input, shape index: {}]
  %s26 = inlined_call_operand.vmem [shape: f32[1,32], index: 26, kind: input, shape index: {}]
  %s27 = inlined_call_operand.vmem [shape: f32[2,2,128], index: 27, kind: output, shape index: {}]
  %s28 = sld [smem:[#allocation0]]
  $region141: #{t5_forward.1} parent=0
    _
  %s30 = ssub.s32 1, %s28
  %s31 = scalar_select 0, %s30, %s28
  loop: start=0, step=1, limit=4
  $region2: #{t5_forward.1} parent=0 // loop_pre_header
    _
  $region3: #{t5_forward.1} parent=0 // loop_header
    %s33 = sphi 0, %s37
    %p34 = scmp.ge.s32.totalorder %s33, 4
    %s43 = sphi 0, %s45
    %s46 = sphi 0, %s43
    %s47 = sphi 0, %s46
    %s63 = sphi 0, %s47
    %s69 = sphi 0, %s71
    %s72 = sphi 0, %s69
    %s73 = sphi 0, %s72
    %s89 = sphi 0, %s73
    %s93 = sphi 0, %s93
    %s95 = sphi 0, %s93
    %s96 = sphi 0, %s95
    %s110 = sphi 0, %s96
    %s114 = sphi 0, %s114
    %s116 = sphi 0, %s114
    %s117 = sphi 0, %s116
    %s131 = sphi 0, %s117
    %s135 = sphi 0, %s135
    %s137 = sphi 0, %s135
    %s138 = sphi 0, %s137
    %s152 = sphi 0, %s138
    %s156 = sphi 0, %s156
    %s158 = sphi 0, %s156
    %s159 = sphi 0, %s158
    %s173 = sphi 0, %s159
    %s177 = sphi 0, %s177
    %s179 = sphi 0, %s177
    %s180 = sphi 0, %s179
    %s194 = sphi 0, %s180
    %s198 = sphi 0, %s198
    %s200 = sphi 0, %s198
    %s201 = sphi 0, %s200
    %s215 = sphi 0, %s201
    %s219 = sphi 0, %s219
    %s221 = sphi 0, %s219
    %s222 = sphi 0, %s221
    %s236 = sphi 0, %s222
    %s240 = sphi 0, %s240
    %s242 = sphi 0, %s240
    %s243 = sphi 0, %s242
    %s257 = sphi 0, %s243
    %s261 = sphi 0, %s261
    %s263 = sphi 0, %s261
    %s264 = sphi 0, %s263
    %s278 = sphi 0, %s264
    %s282 = sphi 0, %s282
    %s284 = sphi 0, %s282
    %s285 = sphi 0, %s284
    %s299 = sphi 0, %s285
    %s303 = sphi 0, %s303
    %s305 = sphi 0, %s303
    %s306 = sphi 0, %s305
    %s320 = sphi 0, %s306
    %s324 = sphi 0, %s324
    %s326 = sphi 0, %s324
    %s327 = sphi 0, %s326
    %s341 = sphi 0, %s327
    %s345 = sphi 0, %s345
    %s347 = sphi 0, %s345
    %s348 = sphi 0, %s347
    %s362 = sphi 0, %s348
    %s366 = sphi 0, %s366
    %s368 = sphi 0, %s366
    %s369 = sphi 0, %s368
    %s383 = sphi 0, %s369
    %s387 = sphi 0, %s387
    %s389 = sphi 0, %s387
    %s390 = sphi 0, %s389
    %s404 = sphi 0, %s390
    %s408 = sphi 0, %s408
    %s410 = sphi 0, %s408
    %s411 = sphi 0, %s410
    %s425 = sphi 0, %s411
    %s429 = sphi 0, %s429
    %s431 = sphi 0, %s429
    %s432 = sphi 0, %s431
    %s446 = sphi 0, %s432
    %s450 = sphi 0, %s450
    %s452 = sphi 0, %s450
    %s453 = sphi 0, %s452
    %s467 = sphi 0, %s453
    %s471 = sphi 0, %s471
    %s473 = sphi 0, %s471
    %s474 = sphi 0, %s473
    %s488 = sphi 0, %s474
    %s492 = sphi 0, %s492
    %s494 = sphi 0, %s492
    %s495 = sphi 0, %s494
    %s509 = sphi 0, %s495
    %s513 = sphi 0, %s513
    %s515 = sphi 0, %s513
    %s516 = sphi 0, %s515
    %s530 = sphi 0, %s516
    %s534 = sphi 0, %s534
    %s536 = sphi 0, %s534
    %s537 = sphi 0, %s536
    %s551 = sphi 0, %s537
    %s555 = sphi 0, %s555
    %s557 = sphi 0, %s555
    %s558 = sphi 0, %s557
    %s572 = sphi 0, %s558
    %s576 = sphi 0, %s576
    %s578 = sphi 0, %s576
    %s579 = sphi 0, %s578
    %s593 = sphi 0, %s579
    %s597 = sphi 0, %s597
    %s599 = sphi 0, %s597
    %s600 = sphi 0, %s599
    %s614 = sphi 0, %s600
    %s620 = sphi 0, %s622
    %s623 = sphi 0, %s620
    %s624 = sphi 0, %s623
    %s640 = sphi 0, %s624
  $region4: #{t5_forward.1} parent=0 // loop_header_branch
    %36 = sbr.rel (%p34) target = $region8
  $region5: #{t5_forward.1} parent=0 // loop_body
    %s38 = ssub.s32 %s33, 1
    %s39 = ssub.s32 %s33, 2
    %s40 = sadd.s32 %s33, 1
    %s41 = ssub.s32 %s33, %s40
    %p42 = scmp.eq.s32.totalorder %s41, 0
    %s44 = sadd.s32 %s43, 1
    %s45 = scalar_select %p42, %s43, %s44
    %p48 = pneg %p42
    %p49 = scmp.eq.s32.totalorder %s33, 1
    %p50 = por %p48, %p49
    %p51 = scmp.ne.s32.totalorder %s43, %s46
    %p52 = scmp.eq.s32.totalorder %s33, 0
    %p53 = por %p51, %p52
    %p54 = scmp.ne.s32.totalorder %s43, %s46
    %p55 = scmp.eq.s32.totalorder %s38, 1
    %p56 = por %p54, %p55
    %p57 = scmp.ne.s32.totalorder %s46, %s47
    %p58 = scmp.eq.s32.totalorder %s38, 0
    %p59 = por %p57, %p58
    %p60 = scmp.ne.s32.totalorder %s46, %s47
    %p61 = scmp.eq.s32.totalorder %s39, 1
    %p62 = por %p60, %p61
    %p64 = scmp.ne.s32.totalorder %s47, %s63
    %p65 = scmp.eq.s32.totalorder %s39, 0
    %p66 = por %p64, %p65
    %s67 = ssub.s32 %s33, %s40
    %p68 = scmp.eq.s32.totalorder %s67, 0
    %s70 = sadd.s32 %s69, 1
    %s71 = scalar_select %p68, %s69, %s70
    %p74 = pneg %p68
    %p75 = scmp.eq.s32.totalorder %s33, 1
    %p76 = por %p74, %p75
    %p77 = scmp.ne.s32.totalorder %s69, %s72
    %p78 = scmp.eq.s32.totalorder %s33, 0
    %p79 = por %p77, %p78
    %p80 = scmp.ne.s32.totalorder %s69, %s72
    %p81 = scmp.eq.s32.totalorder %s38, 1
    %p82 = por %p80, %p81
    %p83 = scmp.ne.s32.totalorder %s72, %s73
    %p84 = scmp.eq.s32.totalorder %s38, 0
    %p85 = por %p83, %p84
    %p86 = scmp.ne.s32.totalorder %s72, %s73
    %p87 = scmp.eq.s32.totalorder %s39, 1
    %p88 = por %p86, %p87
    %p90 = scmp.ne.s32.totalorder %s73, %s89
    %p91 = scmp.eq.s32.totalorder %s39, 0
    %p92 = por %p90, %p91
    %s94 = sadd.s32 %s93, 1
    %p97 = scmp.eq.s32.totalorder %s33, 1
    %p98 = scmp.ne.s32.totalorder %s93, %s95
    %p99 = scmp.eq.s32.totalorder %s33, 0
    %p100 = por %p98, %p99
    %p101 = scmp.ne.s32.totalorder %s93, %s95
    %p102 = scmp.eq.s32.totalorder %s38, 1
    %p103 = por %p101, %p102
    %p104 = scmp.ne.s32.totalorder %s95, %s96
    %p105 = scmp.eq.s32.totalorder %s38, 0
    %p106 = por %p104, %p105
    %p107 = scmp.ne.s32.totalorder %s95, %s96
    %p108 = scmp.eq.s32.totalorder %s39, 1
    %p109 = por %p107, %p108
    %p111 = scmp.ne.s32.totalorder %s96, %s110
    %p112 = scmp.eq.s32.totalorder %s39, 0
    %p113 = por %p111, %p112
    %s115 = sadd.s32 %s114, 1
    %p118 = scmp.eq.s32.totalorder %s33, 1
    %p119 = scmp.ne.s32.totalorder %s114, %s116
    %p120 = scmp.eq.s32.totalorder %s33, 0
    %p121 = por %p119, %p120
    %p122 = scmp.ne.s32.totalorder %s114, %s116
    %p123 = scmp.eq.s32.totalorder %s38, 1
    %p124 = por %p122, %p123
    %p125 = scmp.ne.s32.totalorder %s116, %s117
    %p126 = scmp.eq.s32.totalorder %s38, 0
    %p127 = por %p125, %p126
    %p128 = scmp.ne.s32.totalorder %s116, %s117
    %p129 = scmp.eq.s32.totalorder %s39, 1
    %p130 = por %p128, %p129
    %p132 = scmp.ne.s32.totalorder %s117, %s131
    %p133 = scmp.eq.s32.totalorder %s39, 0
    %p134 = por %p132, %p133
    %s136 = sadd.s32 %s135, 1
    %p139 = scmp.eq.s32.totalorder %s33, 1
    %p140 = scmp.ne.s32.totalorder %s135, %s137
    %p141 = scmp.eq.s32.totalorder %s33, 0
    %p142 = por %p140, %p141
    %p143 = scmp.ne.s32.totalorder %s135, %s137
    %p144 = scmp.eq.s32.totalorder %s38, 1
    %p145 = por %p143, %p144
    %p146 = scmp.ne.s32.totalorder %s137, %s138
    %p147 = scmp.eq.s32.totalorder %s38, 0
    %p148 = por %p146, %p147
    %p149 = scmp.ne.s32.totalorder %s137, %s138
    %p150 = scmp.eq.s32.totalorder %s39, 1
    %p151 = por %p149, %p150
    %p153 = scmp.ne.s32.totalorder %s138, %s152
    %p154 = scmp.eq.s32.totalorder %s39, 0
    %p155 = por %p153, %p154
    %s157 = sadd.s32 %s156, 1
    %p160 = scmp.eq.s32.totalorder %s33, 1
    %p161 = scmp.ne.s32.totalorder %s156, %s158
    %p162 = scmp.eq.s32.totalorder %s33, 0
    %p163 = por %p161, %p162
    %p164 = scmp.ne.s32.totalorder %s156, %s158
    %p165 = scmp.eq.s32.totalorder %s38, 1
    %p166 = por %p164, %p165
    %p167 = scmp.ne.s32.totalorder %s158, %s159
    %p168 = scmp.eq.s32.totalorder %s38, 0
    %p169 = por %p167, %p168
    %p170 = scmp.ne.s32.totalorder %s158, %s159
    %p171 = scmp.eq.s32.totalorder %s39, 1
    %p172 = por %p170, %p171
    %p174 = scmp.ne.s32.totalorder %s159, %s173
    %p175 = scmp.eq.s32.totalorder %s39, 0
    %p176 = por %p174, %p175
    %s178 = sadd.s32 %s177, 1
    %p181 = scmp.eq.s32.totalorder %s33, 1
    %p182 = scmp.ne.s32.totalorder %s177, %s179
    %p183 = scmp.eq.s32.totalorder %s33, 0
    %p184 = por %p182, %p183
    %p185 = scmp.ne.s32.totalorder %s177, %s179
    %p186 = scmp.eq.s32.totalorder %s38, 1
    %p187 = por %p185, %p186
    %p188 = scmp.ne.s32.totalorder %s179, %s180
    %p189 = scmp.eq.s32.totalorder %s38, 0
    %p190 = por %p188, %p189
    %p191 = scmp.ne.s32.totalorder %s179, %s180
    %p192 = scmp.eq.s32.totalorder %s39, 1
    %p193 = por %p191, %p192
    %p195 = scmp.ne.s32.totalorder %s180, %s194
    %p196 = scmp.eq.s32.totalorder %s39, 0
    %p197 = por %p195, %p196
    %s199 = sadd.s32 %s198, 1
    %p202 = scmp.eq.s32.totalorder %s33, 1
    %p203 = scmp.ne.s32.totalorder %s198, %s200
    %p204 = scmp.eq.s32.totalorder %s33, 0
    %p205 = por %p203, %p204
    %p206 = scmp.ne.s32.totalorder %s198, %s200
    %p207 = scmp.eq.s32.totalorder %s38, 1
    %p208 = por %p206, %p207
    %p209 = scmp.ne.s32.totalorder %s200, %s201
    %p210 = scmp.eq.s32.totalorder %s38, 0
    %p211 = por %p209, %p210
    %p212 = scmp.ne.s32.totalorder %s200, %s201
    %p213 = scmp.eq.s32.totalorder %s39, 1
    %p214 = por %p212, %p213
    %p216 = scmp.ne.s32.totalorder %s201, %s215
    %p217 = scmp.eq.s32.totalorder %s39, 0
    %p218 = por %p216, %p217
    %s220 = sadd.s32 %s219, 1
    %p223 = scmp.eq.s32.totalorder %s33, 1
    %p224 = scmp.ne.s32.totalorder %s219, %s221
    %p225 = scmp.eq.s32.totalorder %s33, 0
    %p226 = por %p224, %p225
    %p227 = scmp.ne.s32.totalorder %s219, %s221
    %p228 = scmp.eq.s32.totalorder %s38, 1
    %p229 = por %p227, %p228
    %p230 = scmp.ne.s32.totalorder %s221, %s222
    %p231 = scmp.eq.s32.totalorder %s38, 0
    %p232 = por %p230, %p231
    %p233 = scmp.ne.s32.totalorder %s221, %s222
    %p234 = scmp.eq.s32.totalorder %s39, 1
    %p235 = por %p233, %p234
    %p237 = scmp.ne.s32.totalorder %s222, %s236
    %p238 = scmp.eq.s32.totalorder %s39, 0
    %p239 = por %p237, %p238
    %s241 = sadd.s32 %s240, 1
    %p244 = scmp.eq.s32.totalorder %s33, 1
    %p245 = scmp.ne.s32.totalorder %s240, %s242
    %p246 = scmp.eq.s32.totalorder %s33, 0
    %p247 = por %p245, %p246
    %p248 = scmp.ne.s32.totalorder %s240, %s242
    %p249 = scmp.eq.s32.totalorder %s38, 1
    %p250 = por %p248, %p249
    %p251 = scmp.ne.s32.totalorder %s242, %s243
    %p252 = scmp.eq.s32.totalorder %s38, 0
    %p253 = por %p251, %p252
    %p254 = scmp.ne.s32.totalorder %s242, %s243
    %p255 = scmp.eq.s32.totalorder %s39, 1
    %p256 = por %p254, %p255
    %p258 = scmp.ne.s32.totalorder %s243, %s257
    %p259 = scmp.eq.s32.totalorder %s39, 0
    %p260 = por %p258, %p259
    %s262 = sadd.s32 %s261, 1
    %p265 = scmp.eq.s32.totalorder %s33, 1
    %p266 = scmp.ne.s32.totalorder %s261, %s263
    %p267 = scmp.eq.s32.totalorder %s33, 0
    %p268 = por %p266, %p267
    %p269 = scmp.ne.s32.totalorder %s261, %s263
    %p270 = scmp.eq.s32.totalorder %s38, 1
    %p271 = por %p269, %p270
    %p272 = scmp.ne.s32.totalorder %s263, %s264
    %p273 = scmp.eq.s32.totalorder %s38, 0
    %p274 = por %p272, %p273
    %p275 = scmp.ne.s32.totalorder %s263, %s264
    %p276 = scmp.eq.s32.totalorder %s39, 1
    %p277 = por %p275, %p276
    %p279 = scmp.ne.s32.totalorder %s264, %s278
    %p280 = scmp.eq.s32.totalorder %s39, 0
    %p281 = por %p279, %p280
    %s283 = sadd.s32 %s282, 1
    %p286 = scmp.eq.s32.totalorder %s33, 1
    %p287 = scmp.ne.s32.totalorder %s282, %s284
    %p288 = scmp.eq.s32.totalorder %s33, 0
    %p289 = por %p287, %p288
    %p290 = scmp.ne.s32.totalorder %s282, %s284
    %p291 = scmp.eq.s32.totalorder %s38, 1
    %p292 = por %p290, %p291
    %p293 = scmp.ne.s32.totalorder %s284, %s285
    %p294 = scmp.eq.s32.totalorder %s38, 0
    %p295 = por %p293, %p294
    %p296 = scmp.ne.s32.totalorder %s284, %s285
    %p297 = scmp.eq.s32.totalorder %s39, 1
    %p298 = por %p296, %p297
    %p300 = scmp.ne.s32.totalorder %s285, %s299
    %p301 = scmp.eq.s32.totalorder %s39, 0
    %p302 = por %p300, %p301
    %s304 = sadd.s32 %s303, 1
    %p307 = scmp.eq.s32.totalorder %s33, 1
    %p308 = scmp.ne.s32.totalorder %s303, %s305
    %p309 = scmp.eq.s32.totalorder %s33, 0
    %p310 = por %p308, %p309
    %p311 = scmp.ne.s32.totalorder %s303, %s305
    %p312 = scmp.eq.s32.totalorder %s38, 1
    %p313 = por %p311, %p312
    %p314 = scmp.ne.s32.totalorder %s305, %s306
    %p315 = scmp.eq.s32.totalorder %s38, 0
    %p316 = por %p314, %p315
    %p317 = scmp.ne.s32.totalorder %s305, %s306
    %p318 = scmp.eq.s32.totalorder %s39, 1
    %p319 = por %p317, %p318
    %p321 = scmp.ne.s32.totalorder %s306, %s320
    %p322 = scmp.eq.s32.totalorder %s39, 0
    %p323 = por %p321, %p322
    %s325 = sadd.s32 %s324, 1
    %p328 = scmp.eq.s32.totalorder %s33, 1
    %p329 = scmp.ne.s32.totalorder %s324, %s326
    %p330 = scmp.eq.s32.totalorder %s33, 0
    %p331 = por %p329, %p330
    %p332 = scmp.ne.s32.totalorder %s324, %s326
    %p333 = scmp.eq.s32.totalorder %s38, 1
    %p334 = por %p332, %p333
    %p335 = scmp.ne.s32.totalorder %s326, %s327
    %p336 = scmp.eq.s32.totalorder %s38, 0
    %p337 = por %p335, %p336
    %p338 = scmp.ne.s32.totalorder %s326, %s327
    %p339 = scmp.eq.s32.totalorder %s39, 1
    %p340 = por %p338, %p339
    %p342 = scmp.ne.s32.totalorder %s327, %s341
    %p343 = scmp.eq.s32.totalorder %s39, 0
    %p344 = por %p342, %p343
    %s346 = sadd.s32 %s345, 1
    %p349 = scmp.eq.s32.totalorder %s33, 1
    %p350 = scmp.ne.s32.totalorder %s345, %s347
    %p351 = scmp.eq.s32.totalorder %s33, 0
    %p352 = por %p350, %p351
    %p353 = scmp.ne.s32.totalorder %s345, %s347
    %p354 = scmp.eq.s32.totalorder %s38, 1
    %p355 = por %p353, %p354
    %p356 = scmp.ne.s32.totalorder %s347, %s348
    %p357 = scmp.eq.s32.totalorder %s38, 0
    %p358 = por %p356, %p357
    %p359 = scmp.ne.s32.totalorder %s347, %s348
    %p360 = scmp.eq.s32.totalorder %s39, 1
    %p361 = por %p359, %p360
    %p363 = scmp.ne.s32.totalorder %s348, %s362
    %p364 = scmp.eq.s32.totalorder %s39, 0
    %p365 = por %p363, %p364
    %s367 = sadd.s32 %s366, 1
    %p370 = scmp.eq.s32.totalorder %s33, 1
    %p371 = scmp.ne.s32.totalorder %s366, %s368
    %p372 = scmp.eq.s32.totalorder %s33, 0
    %p373 = por %p371, %p372
    %p374 = scmp.ne.s32.totalorder %s366, %s368
    %p375 = scmp.eq.s32.totalorder %s38, 1
    %p376 = por %p374, %p375
    %p377 = scmp.ne.s32.totalorder %s368, %s369
    %p378 = scmp.eq.s32.totalorder %s38, 0
    %p379 = por %p377, %p378
    %p380 = scmp.ne.s32.totalorder %s368, %s369
    %p381 = scmp.eq.s32.totalorder %s39, 1
    %p382 = por %p380, %p381
    %p384 = scmp.ne.s32.totalorder %s369, %s383
    %p385 = scmp.eq.s32.totalorder %s39, 0
    %p386 = por %p384, %p385
    %s388 = sadd.s32 %s387, 1
    %p391 = scmp.eq.s32.totalorder %s33, 1
    %p392 = scmp.ne.s32.totalorder %s387, %s389
    %p393 = scmp.eq.s32.totalorder %s33, 0
    %p394 = por %p392, %p393
    %p395 = scmp.ne.s32.totalorder %s387, %s389
    %p396 = scmp.eq.s32.totalorder %s38, 1
    %p397 = por %p395, %p396
    %p398 = scmp.ne.s32.totalorder %s389, %s390
    %p399 = scmp.eq.s32.totalorder %s38, 0
    %p400 = por %p398, %p399
    %p401 = scmp.ne.s32.totalorder %s389, %s390
    %p402 = scmp.eq.s32.totalorder %s39, 1
    %p403 = por %p401, %p402
    %p405 = scmp.ne.s32.totalorder %s390, %s404
    %p406 = scmp.eq.s32.totalorder %s39, 0
    %p407 = por %p405, %p406
    %s409 = sadd.s32 %s408, 1
    %p412 = scmp.eq.s32.totalorder %s33, 1
    %p413 = scmp.ne.s32.totalorder %s408, %s410
    %p414 = scmp.eq.s32.totalorder %s33, 0
    %p415 = por %p413, %p414
    %p416 = scmp.ne.s32.totalorder %s408, %s410
    %p417 = scmp.eq.s32.totalorder %s38, 1
    %p418 = por %p416, %p417
    %p419 = scmp.ne.s32.totalorder %s410, %s411
    %p420 = scmp.eq.s32.totalorder %s38, 0
    %p421 = por %p419, %p420
    %p422 = scmp.ne.s32.totalorder %s410, %s411
    %p423 = scmp.eq.s32.totalorder %s39, 1
    %p424 = por %p422, %p423
    %p426 = scmp.ne.s32.totalorder %s411, %s425
    %p427 = scmp.eq.s32.totalorder %s39, 0
    %p428 = por %p426, %p427
    %s430 = sadd.s32 %s429, 1
    %p433 = scmp.eq.s32.totalorder %s33, 1
    %p434 = scmp.ne.s32.totalorder %s429, %s431
    %p435 = scmp.eq.s32.totalorder %s33, 0
    %p436 = por %p434, %p435
    %p437 = scmp.ne.s32.totalorder %s429, %s431
    %p438 = scmp.eq.s32.totalorder %s38, 1
    %p439 = por %p437, %p438
    %p440 = scmp.ne.s32.totalorder %s431, %s432
    %p441 = scmp.eq.s32.totalorder %s38, 0
    %p442 = por %p440, %p441
    %p443 = scmp.ne.s32.totalorder %s431, %s432
    %p444 = scmp.eq.s32.totalorder %s39, 1
    %p445 = por %p443, %p444
    %p447 = scmp.ne.s32.totalorder %s432, %s446
    %p448 = scmp.eq.s32.totalorder %s39, 0
    %p449 = por %p447, %p448
    %s451 = sadd.s32 %s450, 1
    %p454 = scmp.eq.s32.totalorder %s33, 1
    %p455 = scmp.ne.s32.totalorder %s450, %s452
    %p456 = scmp.eq.s32.totalorder %s33, 0
    %p457 = por %p455, %p456
    %p458 = scmp.ne.s32.totalorder %s450, %s452
    %p459 = scmp.eq.s32.totalorder %s38, 1
    %p460 = por %p458, %p459
    %p461 = scmp.ne.s32.totalorder %s452, %s453
    %p462 = scmp.eq.s32.totalorder %s38, 0
    %p463 = por %p461, %p462
    %p464 = scmp.ne.s32.totalorder %s452, %s453
    %p465 = scmp.eq.s32.totalorder %s39, 1
    %p466 = por %p464, %p465
    %p468 = scmp.ne.s32.totalorder %s453, %s467
    %p469 = scmp.eq.s32.totalorder %s39, 0
    %p470 = por %p468, %p469
    %s472 = sadd.s32 %s471, 1
    %p475 = scmp.eq.s32.totalorder %s33, 1
    %p476 = scmp.ne.s32.totalorder %s471, %s473
    %p477 = scmp.eq.s32.totalorder %s33, 0
    %p478 = por %p476, %p477
    %p479 = scmp.ne.s32.totalorder %s471, %s473
    %p480 = scmp.eq.s32.totalorder %s38, 1
    %p481 = por %p479, %p480
    %p482 = scmp.ne.s32.totalorder %s473, %s474
    %p483 = scmp.eq.s32.totalorder %s38, 0
    %p484 = por %p482, %p483
    %p485 = scmp.ne.s32.totalorder %s473, %s474
    %p486 = scmp.eq.s32.totalorder %s39, 1
    %p487 = por %p485, %p486
    %p489 = scmp.ne.s32.totalorder %s474, %s488
    %p490 = scmp.eq.s32.totalorder %s39, 0
    %p491 = por %p489, %p490
    %s493 = sadd.s32 %s492, 1
    %p496 = scmp.eq.s32.totalorder %s33, 1
    %p497 = scmp.ne.s32.totalorder %s492, %s494
    %p498 = scmp.eq.s32.totalorder %s33, 0
    %p499 = por %p497, %p498
    %p500 = scmp.ne.s32.totalorder %s492, %s494
    %p501 = scmp.eq.s32.totalorder %s38, 1
    %p502 = por %p500, %p501
    %p503 = scmp.ne.s32.totalorder %s494, %s495
    %p504 = scmp.eq.s32.totalorder %s38, 0
    %p505 = por %p503, %p504
    %p506 = scmp.ne.s32.totalorder %s494, %s495
    %p507 = scmp.eq.s32.totalorder %s39, 1
    %p508 = por %p506, %p507
    %p510 = scmp.ne.s32.totalorder %s495, %s509
    %p511 = scmp.eq.s32.totalorder %s39, 0
    %p512 = por %p510, %p511
    %s514 = sadd.s32 %s513, 1
    %p517 = scmp.eq.s32.totalorder %s33, 1
    %p518 = scmp.ne.s32.totalorder %s513, %s515
    %p519 = scmp.eq.s32.totalorder %s33, 0
    %p520 = por %p518, %p519
    %p521 = scmp.ne.s32.totalorder %s513, %s515
    %p522 = scmp.eq.s32.totalorder %s38, 1
    %p523 = por %p521, %p522
    %p524 = scmp.ne.s32.totalorder %s515, %s516
    %p525 = scmp.eq.s32.totalorder %s38, 0
    %p526 = por %p524, %p525
    %p527 = scmp.ne.s32.totalorder %s515, %s516
    %p528 = scmp.eq.s32.totalorder %s39, 1
    %p529 = por %p527, %p528
    %p531 = scmp.ne.s32.totalorder %s516, %s530
    %p532 = scmp.eq.s32.totalorder %s39, 0
    %p533 = por %p531, %p532
    %s535 = sadd.s32 %s534, 1
    %p538 = scmp.eq.s32.totalorder %s33, 1
    %p539 = scmp.ne.s32.totalorder %s534, %s536
    %p540 = scmp.eq.s32.totalorder %s33, 0
    %p541 = por %p539, %p540
    %p542 = scmp.ne.s32.totalorder %s534, %s536
    %p543 = scmp.eq.s32.totalorder %s38, 1
    %p544 = por %p542, %p543
    %p545 = scmp.ne.s32.totalorder %s536, %s537
    %p546 = scmp.eq.s32.totalorder %s38, 0
    %p547 = por %p545, %p546
    %p548 = scmp.ne.s32.totalorder %s536, %s537
    %p549 = scmp.eq.s32.totalorder %s39, 1
    %p550 = por %p548, %p549
    %p552 = scmp.ne.s32.totalorder %s537, %s551
    %p553 = scmp.eq.s32.totalorder %s39, 0
    %p554 = por %p552, %p553
    %s556 = sadd.s32 %s555, 1
    %p559 = scmp.eq.s32.totalorder %s33, 1
    %p560 = scmp.ne.s32.totalorder %s555, %s557
    %p561 = scmp.eq.s32.totalorder %s33, 0
    %p562 = por %p560, %p561
    %p563 = scmp.ne.s32.totalorder %s555, %s557
    %p564 = scmp.eq.s32.totalorder %s38, 1
    %p565 = por %p563, %p564
    %p566 = scmp.ne.s32.totalorder %s557, %s558
    %p567 = scmp.eq.s32.totalorder %s38, 0
    %p568 = por %p566, %p567
    %p569 = scmp.ne.s32.totalorder %s557, %s558
    %p570 = scmp.eq.s32.totalorder %s39, 1
    %p571 = por %p569, %p570
    %p573 = scmp.ne.s32.totalorder %s558, %s572
    %p574 = scmp.eq.s32.totalorder %s39, 0
    %p575 = por %p573, %p574
    %s577 = sadd.s32 %s576, 1
    %p580 = scmp.eq.s32.totalorder %s33, 1
    %p581 = scmp.ne.s32.totalorder %s576, %s578
    %p582 = scmp.eq.s32.totalorder %s33, 0
    %p583 = por %p581, %p582
    %p584 = scmp.ne.s32.totalorder %s576, %s578
    %p585 = scmp.eq.s32.totalorder %s38, 1
    %p586 = por %p584, %p585
    %p587 = scmp.ne.s32.totalorder %s578, %s579
    %p588 = scmp.eq.s32.totalorder %s38, 0
    %p589 = por %p587, %p588
    %p590 = scmp.ne.s32.totalorder %s578, %s579
    %p591 = scmp.eq.s32.totalorder %s39, 1
    %p592 = por %p590, %p591
    %p594 = scmp.ne.s32.totalorder %s579, %s593
    %p595 = scmp.eq.s32.totalorder %s39, 0
    %p596 = por %p594, %p595
    %s598 = sadd.s32 %s597, 1
    %p601 = scmp.eq.s32.totalorder %s33, 1
    %p602 = scmp.ne.s32.totalorder %s597, %s599
    %p603 = scmp.eq.s32.totalorder %s33, 0
    %p604 = por %p602, %p603
    %p605 = scmp.ne.s32.totalorder %s597, %s599
    %p606 = scmp.eq.s32.totalorder %s38, 1
    %p607 = por %p605, %p606
    %p608 = scmp.ne.s32.totalorder %s599, %s600
    %p609 = scmp.eq.s32.totalorder %s38, 0
    %p610 = por %p608, %p609
    %p611 = scmp.ne.s32.totalorder %s599, %s600
    %p612 = scmp.eq.s32.totalorder %s39, 1
    %p613 = por %p611, %p612
    %p615 = scmp.ne.s32.totalorder %s600, %s614
    %p616 = scmp.eq.s32.totalorder %s39, 0
    %p617 = por %p615, %p616
    %s618 = ssub.s32 %s33, %s40
    %p619 = scmp.eq.s32.totalorder %s618, 0
    %s621 = sadd.s32 %s620, 1
    %s622 = scalar_select %p619, %s620, %s621
    %p625 = pneg %p619
    %p626 = scmp.eq.s32.totalorder %s33, 1
    %p627 = por %p625, %p626
    %p628 = scmp.ne.s32.totalorder %s620, %s623
    %p629 = scmp.eq.s32.totalorder %s33, 0
    %p630 = por %p628, %p629
    %p631 = scmp.ne.s32.totalorder %s620, %s623
    %p632 = scmp.eq.s32.totalorder %s38, 1
    %p633 = por %p631, %p632
    %p634 = scmp.ne.s32.totalorder %s623, %s624
    %p635 = scmp.eq.s32.totalorder %s38, 0
    %p636 = por %p634, %p635
    %p637 = scmp.ne.s32.totalorder %s623, %s624
    %p638 = scmp.eq.s32.totalorder %s39, 1
    %p639 = por %p637, %p638
    %p641 = scmp.ne.s32.totalorder %s624, %s640
    %p642 = scmp.eq.s32.totalorder %s39, 0
    %p643 = por %p641, %p642
    %p644 = scmp.le.s32.totalorder 1, %s33
    %p645 = scmp.lt.s32.totalorder %s33, 3
    %p646 = pnand %p644, %p645
    %p647 = pneg %p646
    // Predicated region
    $region9: #{t5_forward.1} parent=5 // pred_check
      _
    $region10: #{t5_forward.1} parent=5 // pred_check_branch
      %649 = sbr.rel (%p646) target = $region12
    $region11: #{t5_forward.1} parent=5 // pred_region
      %s650 = ssub.s32 %s33, 1
      // Predicated region
      $region13: #{t5_forward.1} parent=11 // pred_check
        %p651 = pneg %p106
      $region14: #{t5_forward.1} parent=11 // pred_check_branch
        %653 = sbr.rel (%p651) target = $region16
      $region15: #{t5_forward.1} parent=11 // pred_region
        _
      $region16: #{t5_forward.1} parent=11 // pred_fallthru
        _
      // Predicated region
      $region17: #{t5_forward.1} parent=11 // pred_check
        %p654 = pneg %p127
      $region18: #{t5_forward.1} parent=11 // pred_check_branch
        %656 = sbr.rel (%p654) target = $region20
      $region19: #{t5_forward.1} parent=11 // pred_region
        _
      $region20: #{t5_forward.1} parent=11 // pred_fallthru
        _
      // Predicated region
      $region21: #{t5_forward.1} parent=11 // pred_check
        %p657 = pneg %p148
      $region22: #{t5_forward.1} parent=11 // pred_check_branch
        %659 = sbr.rel (%p657) target = $region24
      $region23: #{t5_forward.1} parent=11 // pred_region
        _
      $region24: #{t5_forward.1} parent=11 // pred_fallthru
        _
      // Predicated region
      $region25: #{t5_forward.1} parent=11 // pred_check
        %p660 = pneg %p169
      $region26: #{t5_forward.1} parent=11 // pred_check_branch
        %662 = sbr.rel (%p660) target = $region28
      $region27: #{t5_forward.1} parent=11 // pred_region
        _
      $region28: #{t5_forward.1} parent=11 // pred_fallthru
        _
      // Predicated region
      $region29: #{t5_forward.1} parent=11 // pred_check
        %p663 = pneg %p190
      $region30: #{t5_forward.1} parent=11 // pred_check_branch
        %665 = sbr.rel (%p663) target = $region32
      $region31: #{t5_forward.1} parent=11 // pred_region
        _
      $region32: #{t5_forward.1} parent=11 // pred_fallthru
        _
      // Predicated region
      $region33: #{t5_forward.1} parent=11 // pred_check
        %p666 = pneg %p211
      $region34: #{t5_forward.1} parent=11 // pred_check_branch
        %668 = sbr.rel (%p666) target = $region36
      $region35: #{t5_forward.1} parent=11 // pred_region
        _
      $region36: #{t5_forward.1} parent=11 // pred_fallthru
        _
      // Predicated region
      $region37: #{t5_forward.1} parent=11 // pred_check
        %p669 = pneg %p232
      $region38: #{t5_forward.1} parent=11 // pred_check_branch
        %671 = sbr.rel (%p669) target = $region40
      $region39: #{t5_forward.1} parent=11 // pred_region
        _
      $region40: #{t5_forward.1} parent=11 // pred_fallthru
        _
      // Predicated region
      $region41: #{t5_forward.1} parent=11 // pred_check
        %p672 = pneg %p253
      $region42: #{t5_forward.1} parent=11 // pred_check_branch
        %674 = sbr.rel (%p672) target = $region44
      $region43: #{t5_forward.1} parent=11 // pred_region
        _
      $region44: #{t5_forward.1} parent=11 // pred_fallthru
        _
      // Predicated region
      $region45: #{t5_forward.1} parent=11 // pred_check
        %p675 = pneg %p274
      $region46: #{t5_forward.1} parent=11 // pred_check_branch
        %677 = sbr.rel (%p675) target = $region48
      $region47: #{t5_forward.1} parent=11 // pred_region
        _
      $region48: #{t5_forward.1} parent=11 // pred_fallthru
        _
      // Predicated region
      $region49: #{t5_forward.1} parent=11 // pred_check
        %p678 = pneg %p295
      $region50: #{t5_forward.1} parent=11 // pred_check_branch
        %680 = sbr.rel (%p678) target = $region52
      $region51: #{t5_forward.1} parent=11 // pred_region
        _
      $region52: #{t5_forward.1} parent=11 // pred_fallthru
        _
      // Predicated region
      $region53: #{t5_forward.1} parent=11 // pred_check
        %p681 = pneg %p316
      $region54: #{t5_forward.1} parent=11 // pred_check_branch
        %683 = sbr.rel (%p681) target = $region56
      $region55: #{t5_forward.1} parent=11 // pred_region
        _
      $region56: #{t5_forward.1} parent=11 // pred_fallthru
        _
      // Predicated region
      $region57: #{t5_forward.1} parent=11 // pred_check
        %p684 = pneg %p337
      $region58: #{t5_forward.1} parent=11 // pred_check_branch
        %686 = sbr.rel (%p684) target = $region60
      $region59: #{t5_forward.1} parent=11 // pred_region
        _
      $region60: #{t5_forward.1} parent=11 // pred_fallthru
        _
      // Predicated region
      $region61: #{t5_forward.1} parent=11 // pred_check
        %p687 = pneg %p358
      $region62: #{t5_forward.1} parent=11 // pred_check_branch
        %689 = sbr.rel (%p687) target = $region64
      $region63: #{t5_forward.1} parent=11 // pred_region
        _
      $region64: #{t5_forward.1} parent=11 // pred_fallthru
        _
      // Predicated region
      $region65: #{t5_forward.1} parent=11 // pred_check
        %p690 = pneg %p379
      $region66: #{t5_forward.1} parent=11 // pred_check_branch
        %692 = sbr.rel (%p690) target = $region68
      $region67: #{t5_forward.1} parent=11 // pred_region
        _
      $region68: #{t5_forward.1} parent=11 // pred_fallthru
        _
      // Predicated region
      $region69: #{t5_forward.1} parent=11 // pred_check
        %p693 = pneg %p400
      $region70: #{t5_forward.1} parent=11 // pred_check_branch
        %695 = sbr.rel (%p693) target = $region72
      $region71: #{t5_forward.1} parent=11 // pred_region
        _
      $region72: #{t5_forward.1} parent=11 // pred_fallthru
        _
      // Predicated region
      $region73: #{t5_forward.1} parent=11 // pred_check
        %p696 = pneg %p421
      $region74: #{t5_forward.1} parent=11 // pred_check_branch
        %698 = sbr.rel (%p696) target = $region76
      $region75: #{t5_forward.1} parent=11 // pred_region
        _
      $region76: #{t5_forward.1} parent=11 // pred_fallthru
        _
      // Predicated region
      $region77: #{t5_forward.1} parent=11 // pred_check
        %p699 = pneg %p442
      $region78: #{t5_forward.1} parent=11 // pred_check_branch
        %701 = sbr.rel (%p699) target = $region80
      $region79: #{t5_forward.1} parent=11 // pred_region
        _
      $region80: #{t5_forward.1} parent=11 // pred_fallthru
        _
      // Predicated region
      $region81: #{t5_forward.1} parent=11 // pred_check
        %p702 = pneg %p463
      $region82: #{t5_forward.1} parent=11 // pred_check_branch
        %704 = sbr.rel (%p702) target = $region84
      $region83: #{t5_forward.1} parent=11 // pred_region
        _
      $region84: #{t5_forward.1} parent=11 // pred_fallthru
        _
      // Predicated region
      $region85: #{t5_forward.1} parent=11 // pred_check
        %p705 = pneg %p484
      $region86: #{t5_forward.1} parent=11 // pred_check_branch
        %707 = sbr.rel (%p705) target = $region88
      $region87: #{t5_forward.1} parent=11 // pred_region
        _
      $region88: #{t5_forward.1} parent=11 // pred_fallthru
        _
      // Predicated region
      $region89: #{t5_forward.1} parent=11 // pred_check
        %p708 = pneg %p505
      $region90: #{t5_forward.1} parent=11 // pred_check_branch
        %710 = sbr.rel (%p708) target = $region92
      $region91: #{t5_forward.1} parent=11 // pred_region
        _
      $region92: #{t5_forward.1} parent=11 // pred_fallthru
        _
      // Predicated region
      $region93: #{t5_forward.1} parent=11 // pred_check
        %p711 = pneg %p526
      $region94: #{t5_forward.1} parent=11 // pred_check_branch
        %713 = sbr.rel (%p711) target = $region96
      $region95: #{t5_forward.1} parent=11 // pred_region
        _
      $region96: #{t5_forward.1} parent=11 // pred_fallthru
        _
      // Predicated region
      $region97: #{t5_forward.1} parent=11 // pred_check
        %p714 = pneg %p547
      $region98: #{t5_forward.1} parent=11 // pred_check_branch
        %716 = sbr.rel (%p714) target = $region100
      $region99: #{t5_forward.1} parent=11 // pred_region
        _
      $region100: #{t5_forward.1} parent=11 // pred_fallthru
        _
      // Predicated region
      $region101: #{t5_forward.1} parent=11 // pred_check
        %p717 = pneg %p568
      $region102: #{t5_forward.1} parent=11 // pred_check_branch
        %719 = sbr.rel (%p717) target = $region104
      $region103: #{t5_forward.1} parent=11 // pred_region
        _
      $region104: #{t5_forward.1} parent=11 // pred_fallthru
        _
      // Predicated region
      $region105: #{t5_forward.1} parent=11 // pred_check
        %p720 = pneg %p589
      $region106: #{t5_forward.1} parent=11 // pred_check_branch
        %722 = sbr.rel (%p720) target = $region108
      $region107: #{t5_forward.1} parent=11 // pred_region
        _
      $region108: #{t5_forward.1} parent=11 // pred_fallthru
        _
      // Predicated region
      $region109: #{t5_forward.1} parent=11 // pred_check
        %p723 = pneg %p610
      $region110: #{t5_forward.1} parent=11 // pred_check_branch
        %725 = sbr.rel (%p723) target = $region112
      $region111: #{t5_forward.1} parent=11 // pred_region
        _
      $region112: #{t5_forward.1} parent=11 // pred_fallthru
        _
    $region12: #{t5_forward.1} parent=5 // pred_fallthru
      _
    %p726 = scmp.lt.s32.totalorder %s33, 2
    // Predicated region
    $region113: #{t5_forward.1} parent=5 // pred_check
      %p727 = pneg %p726
    $region114: #{t5_forward.1} parent=5 // pred_check_branch
      %729 = sbr.rel (%p727) target = $region116
    $region115: #{t5_forward.1} parent=5 // pred_region
      // Predicated region
      $region117: #{t5_forward.1} parent=115 // pred_check
        %p730 = pneg %p53
      $region118: #{t5_forward.1} parent=115 // pred_check_branch
        %732 = sbr.rel (%p730) target = $region120
      $region119: #{t5_forward.1} parent=115 // pred_region
        %p733 = scmp.lt.s32.totalorder %s33, 1
        %s734 = scalar_select %p733, %s33, 1
        %s735 = smul.addr %s734, 8
        %s736 = scalar_lea.vmem %s0, %s735
      $region120: #{t5_forward.1} parent=115 // pred_fallthru
        _
      // Predicated region
      $region121: #{t5_forward.1} parent=115 // pred_check
        %p737 = pneg %p79
      $region122: #{t5_forward.1} parent=115 // pred_check_branch
        %739 = sbr.rel (%p737) target = $region124
      $region123: #{t5_forward.1} parent=115 // pred_region
        %p740 = scmp.lt.s32.totalorder %s33, 1
        %s741 = scalar_select %p740, %s33, 1
        %s742 = smul.addr %s741, 8
        %s743 = scalar_lea.vmem %s1, %s742
      $region124: #{t5_forward.1} parent=115 // pred_fallthru
        _
    $region116: #{t5_forward.1} parent=5 // pred_fallthru
      _
    %p744 = scmp.le.s32.totalorder 1, %s33
    %p745 = scmp.lt.s32.totalorder %s33, 3
    %p746 = pnand %p744, %p745
    %p747 = pneg %p746
    // Predicated region
    $region125: #{t5_forward.1} parent=5 // pred_check
      _
    $region126: #{t5_forward.1} parent=5 // pred_check_branch
      %749 = sbr.rel (%p746) target = $region128
    $region127: #{t5_forward.1} parent=5 // pred_region
      %s750 = ssub.s32 %s33, 1
      %p751 = scmp.lt.s32.totalorder %s38, 1
      %s752 = scalar_select %p751, %s38, 1
      %s753 = smul.addr %s752, 8
      %s754 = scalar_lea.vmem %s0, %s753
      %p755 = pneg %p59
      %p756 = pneg %p56
      %p757 = scmp.lt.s32.totalorder %s38, 1
      %s758 = scalar_select %p757, %s38, 1
      %s759 = smul.addr %s758, 8
      %s760 = scalar_lea.vmem %s1, %s759
      %p761 = pneg %p85
      %p762 = pneg %p82
      %p763 = pneg %p106
      %p764 = pneg %p103
      %p765 = pneg %p127
      %p766 = pneg %p124
      %p767 = pneg %p148
      %p768 = pneg %p145
      %p769 = pneg %p169
      %p770 = pneg %p166
      %p771 = pneg %p190
      %p772 = pneg %p187
      %p773 = pneg %p211
      %p774 = pneg %p208
      %p775 = pneg %p232
      %p776 = pneg %p229
      %p777 = pneg %p253
      %p778 = pneg %p250
      %p779 = pneg %p274
      %p780 = pneg %p271
      %p781 = pneg %p295
      %p782 = pneg %p292
      %p783 = pneg %p316
      %p784 = pneg %p313
      %p785 = pneg %p337
      %p786 = pneg %p334
      %p787 = pneg %p358
      %p788 = pneg %p355
      %p789 = pneg %p379
      %p790 = pneg %p376
      %p791 = pneg %p400
      %p792 = pneg %p397
      %p793 = pneg %p421
      %p794 = pneg %p418
      %p795 = pneg %p442
      %p796 = pneg %p439
      %p797 = pneg %p463
      %p798 = pneg %p460
      %p799 = pneg %p484
      %p800 = pneg %p481
      %p801 = pneg %p505
      %p802 = pneg %p502
      %p803 = pneg %p526
      %p804 = pneg %p523
      %p805 = pneg %p547
      %p806 = pneg %p544
      %p807 = pneg %p568
      %p808 = pneg %p565
      %p809 = pneg %p589
      %p810 = pneg %p586
      %p811 = pneg %p610
      %p812 = pneg %p607
      %p813 = pneg %p636
      %p814 = pneg %p633
      %p815 = scmp.lt.s32.totalorder %s38, 1
      %s816 = scalar_select %p815, %s38, 1
      %s817 = smul.addr %s816, 2
      %s818 = scalar_lea.vmem %s27, %s817
      %p819 = scmp.lt.s32.totalorder %s38, 1
      %s820 = scalar_select %p819, %s38, 1
      %s821 = smul.addr %s820, 8
      %s822 = scalar_lea.vmem %s0, %s821
      %p823 = scmp.lt.s32.totalorder %s38, 1
      %s824 = scalar_select %p823, %s38, 1
      %s825 = smul.addr %s824, 8
      %s826 = scalar_lea.vmem %s1, %s825
      %p827 = scmp.lt.s32.totalorder %s38, 1
      %s828 = scalar_select %p827, %s38, 1
      %s829 = smul.addr %s828, 2
      %s830 = scalar_lea.vmem %s27, %s829
      %v832 = vld [vmem:[%s2] sm:$0xff]
      %v833 = vld [vmem:[%s2 + $0x8] sm:$0xff]
      %v834 = vld [vmem:[%s2 + $0x10] sm:$0xff]
      %v835 = vld [vmem:[%s2 + $0x18] sm:$0xff]
      %v836 = vld [vmem:[%s3] sm:$0xff]
      %v837 = vld [vmem:[%s3 + $0x8] sm:$0xff]
      %v838 = vld [vmem:[%s3 + $0x10] sm:$0xff]
      %v839 = vld [vmem:[%s3 + $0x18] sm:$0xff]
      %v840 = vld [vmem:[%s822] sm:$0xff]
      %v841 = vld [vmem:[%s8] sm:$0x1]
      %v842 = vmul.f32 %v840, %v840
      %vm843 = vcmask 261120
      %v844 = vsel %vm843, %v842, 0.0
      %845 = vadd.xlane.f32.xlu0 %v844
      %v846 = vpop.xlane.xlu0 %845
      %v847 = vrcp.pop 32.0
      %v848 = vmul.f32 %v846, %v847
      %v849 = vadd.f32 %v848, 1e-06
      %v850 = vrsqrt.pop %v849
      %v851 = vmul.f32 %v840, %v850
      %v853 = vlaneseq
      %v854 = vshrl.u32 %v853, 7
      %v855 = vsub.s32 0, %v854
      %v856 = vrot.slane %v841, %v855
      %v858 = vmul.f32 %v851, %v856
      %v859 = vld [vmem:[%s4] sm:$0xf]
      %v860 = vld [vmem:[%s4 + $0x4] sm:$0xf]
      %v861 = vld [vmem:[%s4 + $0x8] sm:$0xf]
      %v862 = vld [vmem:[%s4 + $0xc] sm:$0xf]
      %v863 = vld [vmem:[%s5] sm:$0xf]
      %v864 = vld [vmem:[%s5 + $0x4] sm:$0xf]
      %v865 = vld [vmem:[%s5 + $0x8] sm:$0xf]
      %v866 = vld [vmem:[%s5 + $0xc] sm:$0xf]
      %v867 = vld [vmem:[%s6] sm:$0xf]
      %v868 = vld [vmem:[%s6 + $0x4] sm:$0xf]
      %v869 = vld [vmem:[%s6 + $0x8] sm:$0xf]
      %v870 = vld [vmem:[%s6 + $0xc] sm:$0xf]
      %v871 = vld [vmem:[%s7] sm:$0xf]
      %v872 = vld [vmem:[%s7 + $0x4] sm:$0xf]
      %v873 = vld [vmem:[%s7 + $0x8] sm:$0xf]
      %v874 = vld [vmem:[%s7 + $0xc] sm:$0xf]
      %v875 = vpack.c.bf16 %v858, %v858
      %v880 = vunpack.c.l.b16 %v859
      %v881 = vunpack.c.l.b16 %v860
      %v882 = vunpack.c.l.b16 %v861
      %v883 = vunpack.c.l.b16 %v862
      %v884 = vpack.c.b16 %v881, %v880
      %v885 = vpack.c.b16 %v883, %v882
      %v889 = vsel %vm843, %v875, 0
      %891 = vmatprep.subr.bf16.mxu0 0
      %892 = vmatpush1.bf16.msra.mxu0 %v884
      %893 = vmatprep.subr.bf16.mxu0 0
      %894 = vmatpush1.bf16.msra.mxu0 %v885
      %895 = vmatprep.subr.bf16.mxu0 0
      %896 = vmatpush1.bf16.msra.mxu0 0
      %897 = vmatprep.subr.bf16.mxu0 0
      %898 = vmatpush1.bf16.msra.mxu0 0
      %899 = vmatprep.subr.bf16.mxu0 0
      %900 = vmatpush1.bf16.msra.mxu0 0
      %901 = vmatprep.subr.bf16.mxu0 0
      %902 = vmatpush1.bf16.msra.mxu0 0
      %903 = vmatprep.subr.bf16.mxu0 0
      %904 = vmatpush1.bf16.msra.mxu0 0
      %905 = vmatprep.subr.bf16.mxu0 0
      %906 = vmatpush1.bf16.msra.mxu0 0
      %907 = vmatprep.subr.bf16.mxu0 0
      %908 = vmatpush1.bf16.msra.mxu0 0
      %909 = vmatprep.subr.bf16.mxu0 0
      %910 = vmatpush1.bf16.msra.mxu0 0
      %911 = vmatprep.subr.bf16.mxu0 0
      %912 = vmatpush1.bf16.msra.mxu0 0
      %913 = vmatprep.subr.bf16.mxu0 0
      %914 = vmatpush1.bf16.msra.mxu0 0
      %915 = vmatprep.subr.bf16.mxu0 0
      %916 = vmatpush1.bf16.msra.mxu0 0
      %917 = vmatprep.subr.bf16.mxu0 0
      %918 = vmatpush1.bf16.msra.mxu0 0
      %919 = vmatprep.subr.bf16.mxu0 0
      %920 = vmatpush1.bf16.msra.mxu0 0
      %921 = vmatprep.subr.bf16.mxu0 0
      %922 = vmatpush1.bf16.msra.mxu0 0
      %923 = vmatprep.mubr.bf16.mxu0 0
      %924 = vmatmul.mubr.bf16.gmra.mrb[0].mxu0 %v889
      %v925 = vpop.f32.mrb[0].mxu0
      %v926 = vadd.f32 0.0, %v925
      %v927 = vpop.f32.mrb[0].mxu0
      %v928 = vpop.f32.mrb[0].mxu0
      %v929 = vpop.f32.mrb[0].mxu0
      %930 = vdwg.mxu0
      %v935 = vunpack.c.l.b16 %v863
      %v936 = vunpack.c.l.b16 %v864
      %v937 = vunpack.c.l.b16 %v865
      %v938 = vunpack.c.l.b16 %v866
      %v939 = vpack.c.b16 %v936, %v935
      %v940 = vpack.c.b16 %v938, %v937
      %943 = vmatprep.subr.bf16.mxu0 0
      %944 = vmatpush1.bf16.msra.mxu0 %v939
      %945 = vmatprep.subr.bf16.mxu0 0
      %946 = vmatpush1.bf16.msra.mxu0 %v940
      %947 = vmatprep.subr.bf16.mxu0 0
      %948 = vmatpush1.bf16.msra.mxu0 0
      %949 = vmatprep.subr.bf16.mxu0 0
      %950 = vmatpush1.bf16.msra.mxu0 0
      %951 = vmatprep.subr.bf16.mxu0 0
      %952 = vmatpush1.bf16.msra.mxu0 0
      %953 = vmatprep.subr.bf16.mxu0 0
      %954 = vmatpush1.bf16.msra.mxu0 0
      %955 = vmatprep.subr.bf16.mxu0 0
      %956 = vmatpush1.bf16.msra.mxu0 0
      %957 = vmatprep.subr.bf16.mxu0 0
      %958 = vmatpush1.bf16.msra.mxu0 0
      %959 = vmatprep.subr.bf16.mxu0 0
      %960 = vmatpush1.bf16.msra.mxu0 0
      %961 = vmatprep.subr.bf16.mxu0 0
      %962 = vmatpush1.bf16.msra.mxu0 0
      %963 = vmatprep.subr.bf16.mxu0 0
      %964 = vmatpush1.bf16.msra.mxu0 0
      %965 = vmatprep.subr.bf16.mxu0 0
      %966 = vmatpush1.bf16.msra.mxu0 0
      %967 = vmatprep.subr.bf16.mxu0 0
      %968 = vmatpush1.bf16.msra.mxu0 0
      %969 = vmatprep.subr.bf16.mxu0 0
      %970 = vmatpush1.bf16.msra.mxu0 0
      %971 = vmatprep.subr.bf16.mxu0 0
      %972 = vmatpush1.bf16.msra.mxu0 0
      %973 = vmatprep.subr.bf16.mxu0 0
      %974 = vmatpush1.bf16.msra.mxu0 0
      %975 = vmatprep.mubr.bf16.mxu0 0
      %976 = vmatmul.mubr.bf16.gmra.mrb[0].mxu0 %v889
      %v977 = vpop.f32.mrb[0].mxu0
      %v978 = vadd.f32 0.0, %v977
      %v979 = vpop.f32.mrb[0].mxu0
      %v980 = vpop.f32.mrb[0].mxu0
      %v981 = vpop.f32.mrb[0].mxu0
      %982 = vdwg.mxu0
      %v987 = vunpack.c.l.b16 %v867
      %v988 = vunpack.c.l.b16 %v868
      %v989 = vunpack.c.l.b16 %v869
      %v990 = vunpack.c.l.b16 %v870
      %v991 = vpack.c.b16 %v988, %v987
      %v992 = vpack.c.b16 %v990, %v989
      %995 = vmatprep.subr.bf16.mxu0 0
      %996 = vmatpush1.bf16.msra.mxu0 %v991
      %997 = vmatprep.subr.bf16.mxu0 0
      %998 = vmatpush1.bf16.msra.mxu0 %v992
      %999 = vmatprep.subr.bf16.mxu0 0
      %1000 = vmatpush1.bf16.msra.mxu0 0
      %1001 = vmatprep.subr.bf16.mxu0 0
      %1002 = vmatpush1.bf16.msra.mxu0 0
      %1003 = vmatprep.subr.bf16.mxu0 0
      %1004 = vmatpush1.bf16.msra.mxu0 0
      %1005 = vmatprep.subr.bf16.mxu0 0
      %1006 = vmatpush1.bf16.msra.mxu0 0
      %1007 = vmatprep.subr.bf16.mxu0 0
      %1008 = vmatpush1.bf16.msra.mxu0 0
      %1009 = vmatprep.subr.bf16.mxu0 0
      %1010 = vmatpush1.bf16.msra.mxu0 0
      %1011 = vmatprep.subr.bf16.mxu0 0
      %1012 = vmatpush1.bf16.msra.mxu0 0
      %1013 = vmatprep.subr.bf16.mxu0 0
      %1014 = vmatpush1.bf16.msra.mxu0 0
      %1015 = vmatprep.subr.bf16.mxu0 0
      %1016 = vmatpush1.bf16.msra.mxu0 0
      %1017 = vmatprep.subr.bf16.mxu0 0
      %1018 = vmatpush1.bf16.msra.mxu0 0
      %1019 = vmatprep.subr.bf16.mxu0 0
      %1020 = vmatpush1.bf16.msra.mxu0 0
      %1021 = vmatprep.subr.bf16.mxu0 0
      %1022 = vmatpush1.bf16.msra.mxu0 0
      %1023 = vmatprep.subr.bf16.mxu0 0
      %1024 = vmatpush1.bf16.msra.mxu0 0
      %1025 = vmatprep.subr.bf16.mxu0 0
      %1026 = vmatpush1.bf16.msra.mxu0 0
      %1027 = vmatprep.mubr.bf16.mxu0 0
      %1028 = vmatmul.mubr.bf16.gmra.mrb[0].mxu0 %v889
      %v1029 = vpop.f32.mrb[0].mxu0
      %v1030 = vadd.f32 0.0, %v1029
      %v1031 = vpop.f32.mrb[0].mxu0
      %v1032 = vpop.f32.mrb[0].mxu0
      %v1033 = vpop.f32.mrb[0].mxu0
      %1034 = vdwg.mxu0
      %1036 = vrot.lane.b32.xlu0 %v926, 120
      %v1037 = vpop.permute.xlu0 %1036
      %1039 = vrot.lane.b32.xlu0 %v926, 112
      %v1040 = vpop.permute.xlu0 %1039
      %1042 = vrot.lane.b32.xlu0 %v926, 104
      %v1043 = vpop.permute.xlu0 %1042
      %1046 = vrot.lane.b32.xlu0 %v978, 120
      %v1047 = vpop.permute.xlu0 %1046
      %1049 = vrot.lane.b32.xlu0 %v978, 112
      %v1050 = vpop.permute.xlu0 %1049
      %1052 = vrot.lane.b32.xlu0 %v978, 104
      %v1053 = vpop.permute.xlu0 %1052
      %1056 = vrot.lane.b32.xlu0 %v1030, 120
      %v1057 = vpop.permute.xlu0 %1056
      %1059 = vrot.lane.b32.xlu0 %v1030, 112
      %v1060 = vpop.permute.xlu0 %1059
      %1062 = vrot.lane.b32.xlu0 %v1030, 104
      %v1063 = vpop.permute.xlu0 %1062
      %v1065 = vpack.c.bf16 %v926, %v926
      %v1066 = vpack.c.bf16 %v1037, %v1037
      %v1067 = vpack.c.bf16 %v1040, %v1040
      %v1068 = vpack.c.bf16 %v1043, %v1043
      %v1069 = vpack.c.bf16 %v978, %v978
      %v1070 = vpack.c.bf16 %v1047, %v1047
      %v1071 = vpack.c.bf16 %v1050, %v1050
      %v1072 = vpack.c.bf16 %v1053, %v1053
      %vm1073 = vcmask 64512
      %v1075 = vsel %vm1073, %v1065, 0
      %v1078 = vsel %vm1073, %v1069, 0
      %1080 = vmatprep.subr.bf16.mxu0 0
      %1081 = vmatpush1.bf16.xpose.msra.mxu0 %v1078
      %1082 = vmatprep.subr.bf16.mxu0 0
      %1083 = vmatpush1.bf16.xpose.msra.mxu0 0
      %1084 = vmatprep.subr.bf16.mxu0 0
      %1085 = vmatpush1.bf16.xpose.msra.mxu0 0
      %1086 = vmatprep.subr.bf16.mxu0 0
      %1087 = vmatpush1.bf16.xpose.msra.mxu0 0
      %1088 = vmatprep.subr.bf16.mxu0 0
      %1089 = vmatpush1.bf16.xpose.msra.mxu0 0
      %1090 = vmatprep.subr.bf16.mxu0 0
      %1091 = vmatpush1.bf16.xpose.msra.mxu0 0
      %1092 = vmatprep.subr.bf16.mxu0 0
      %1093 = vmatpush1.bf16.xpose.msra.mxu0 0
      %1094 = vmatprep.subr.bf16.mxu0 0
      %1095 = vmatpush1.bf16.xpose.msra.mxu0 0
      %1096 = vmatprep.subr.bf16.mxu0 0
      %1097 = vmatpush1.bf16.xpose.msra.mxu0 0
      %1098 = vmatprep.subr.bf16.mxu0 0
      %1099 = vmatpush1.bf16.xpose.msra.mxu0 0
      %1100 = vmatprep.subr.bf16.mxu0 0
      %1101 = vmatpush1.bf16.xpose.msra.mxu0 0
      %1102 = vmatprep.subr.bf16.mxu0 0
      %1103 = vmatpush1.bf16.xpose.msra.mxu0 0
      %1104 = vmatprep.subr.bf16.mxu0 0
      %1105 = vmatpush1.bf16.xpose.msra.mxu0 0
      %1106 = vmatprep.subr.bf16.mxu0 0
      %1107 = vmatpush1.bf16.xpose.msra.mxu0 0
      %1108 = vmatprep.subr.bf16.mxu0 0
      %1109 = vmatpush1.bf16.xpose.msra.mxu0 0
      %1110 = vmatprep.subr.bf16.mxu0 0
      %1111 = vmatpush1.bf16.xpose.msra.mxu0 0
      %1112 = vmatprep.mubr.bf16.mxu0 0
      %1113 = vmatmul.mubr.bf16.gmra.mrb[0].mxu0 %v1075
      %v1114 = vpop.f32.mrb[0].mxu0
      %v1115 = vadd.f32 %v832, %v1114
      %v1116 = vpop.f32.mrb[0].mxu0
      %v1117 = vpop.f32.mrb[0].mxu0
      %v1118 = vpop.f32.mrb[0].mxu0
      %1119 = vdwg.mxu0
      %v1121 = vsel %vm1073, %v1066, 0
      %v1124 = vsel %vm1073, %v1070, 0
      %1126 = vmatprep.subr.bf16.mxu0 0
      %1127 = vmatpush1.bf16.xpose.msra.mxu0 %v1124
      %1128 = vmatprep.subr.bf16.mxu0 0
      %1129 = vmatpush1.bf16.xpose.msra.mxu0 0
      %1130 = vmatprep.subr.bf16.mxu0 0
      %1131 = vmatpush1.bf16.xpose.msra.mxu0 0
      %1132 = vmatprep.subr.bf16.mxu0 0
      %1133 = vmatpush1.bf16.xpose.msra.mxu0 0
      %1134 = vmatprep.subr.bf16.mxu0 0
      %1135 = vmatpush1.bf16.xpose.msra.mxu0 0
      %1136 = vmatprep.subr.bf16.mxu0 0
      %1137 = vmatpush1.bf16.xpose.msra.mxu0 0
      %1138 = vmatprep.subr.bf16.mxu0 0
      %1139 = vmatpush1.bf16.xpose.msra.mxu0 0
      %1140 = vmatprep.subr.bf16.mxu0 0
      %1141 = vmatpush1.bf16.xpose.msra.mxu0 0
      %1142 = vmatprep.subr.bf16.mxu0 0
      %1143 = vmatpush1.bf16.xpose.msra.mxu0 0
      %1144 = vmatprep.subr.bf16.mxu0 0
      %1145 = vmatpush1.bf16.xpose.msra.mxu0 0
      %1146 = vmatprep.subr.bf16.mxu0 0
      %1147 = vmatpush1.bf16.xpose.msra.mxu0 0
      %1148 = vmatprep.subr.bf16.mxu0 0
      %1149 = vmatpush1.bf16.xpose.msra.mxu0 0
      %1150 = vmatprep.subr.bf16.mxu0 0
      %1151 = vmatpush1.bf16.xpose.msra.mxu0 0
      %1152 = vmatprep.subr.bf16.mxu0 0
      %1153 = vmatpush1.bf16.xpose.msra.mxu0 0
      %1154 = vmatprep.subr.bf16.mxu0 0
      %1155 = vmatpush1.bf16.xpose.msra.mxu0 0
      %1156 = vmatprep.subr.bf16.mxu0 0
      %1157 = vmatpush1.bf16.xpose.msra.mxu0 0
      %1158 = vmatprep.mubr.bf16.mxu0 0
      %1159 = vmatmul.mubr.bf16.gmra.mrb[0].mxu0 %v1121
      %v1160 = vpop.f32.mrb[0].mxu0
      %v1161 = vadd.f32 %v833, %v1160
      %v1162 = vpop.f32.mrb[0].mxu0
      %v1163 = vpop.f32.mrb[0].mxu0
      %v1164 = vpop.f32.mrb[0].mxu0
      %1165 = vdwg.mxu0
      %v1167 = vsel %vm1073, %v1067, 0
      %v1170 = vsel %vm1073, %v1071, 0
      %1172 = vmatprep.subr.bf16.mxu0 0
      %1173 = vmatpush1.bf16.xpose.msra.mxu0 %v1170
      %1174 = vmatprep.subr.bf16.mxu0 0
      %1175 = vmatpush1.bf16.xpose.msra.mxu0 0
      %1176 = vmatprep.subr.bf16.mxu0 0
      %1177 = vmatpush1.bf16.xpose.msra.mxu0 0
      %1178 = vmatprep.subr.bf16.mxu0 0
      %1179 = vmatpush1.bf16.xpose.msra.mxu0 0
      %1180 = vmatprep.subr.bf16.mxu0 0
      %1181 = vmatpush1.bf16.xpose.msra.mxu0 0
      %1182 = vmatprep.subr.bf16.mxu0 0
      %1183 = vmatpush1.bf16.xpose.msra.mxu0 0
      %1184 = vmatprep.subr.bf16.mxu0 0
      %1185 = vmatpush1.bf16.xpose.msra.mxu0 0
      %1186 = vmatprep.subr.bf16.mxu0 0
      %1187 = vmatpush1.bf16.xpose.msra.mxu0 0
      %1188 = vmatprep.subr.bf16.mxu0 0
      %1189 = vmatpush1.bf16.xpose.msra.mxu0 0
      %1190 = vmatprep.subr.bf16.mxu0 0
      %1191 = vmatpush1.bf16.xpose.msra.mxu0 0
      %1192 = vmatprep.subr.bf16.mxu0 0
      %1193 = vmatpush1.bf16.xpose.msra.mxu0 0
      %1194 = vmatprep.subr.bf16.mxu0 0
      %1195 = vmatpush1.bf16.xpose.msra.mxu0 0
      %1196 = vmatprep.subr.bf16.mxu0 0
      %1197 = vmatpush1.bf16.xpose.msra.mxu0 0
      %1198 = vmatprep.subr.bf16.mxu0 0
      %1199 = vmatpush1.bf16.xpose.msra.mxu0 0
      %1200 = vmatprep.subr.bf16.mxu0 0
      %1201 = vmatpush1.bf16.xpose.msra.mxu0 0
      %1202 = vmatprep.subr.bf16.mxu0 0
      %1203 = vmatpush1.bf16.xpose.msra.mxu0 0
      %1204 = vmatprep.mubr.bf16.mxu0 0
      %1205 = vmatmul.mubr.bf16.gmra.mrb[0].mxu0 %v1167
      %v1206 = vpop.f32.mrb[0].mxu0
      %v1207 = vadd.f32 %v834, %v1206
      %v1208 = vpop.f32.mrb[0].mxu0
      %v1209 = vpop.f32.mrb[0].mxu0
      %v1210 = vpop.f32.mrb[0].mxu0
      %1211 = vdwg.mxu0
      %v1213 = vsel %vm1073, %v1068, 0
      %v1216 = vsel %vm1073, %v1072, 0
      %1218 = vmatprep.subr.bf16.mxu0 0
      %1219 = vmatpush1.bf16.xpose.msra.mxu0 %v1216
      %1220 = vmatprep.subr.bf16.mxu0 0
      %1221 = vmatpush1.bf16.xpose.msra.mxu0 0
      %1222 = vmatprep.subr.bf16.mxu0 0
      %1223 = vmatpush1.bf16.xpose.msra.mxu0 0
      %1224 = vmatprep.subr.bf16.mxu0 0
      %1225 = vmatpush1.bf16.xpose.msra.mxu0 0
      %1226 = vmatprep.subr.bf16.mxu0 0
      %1227 = vmatpush1.bf16.xpose.msra.mxu0 0
      %1228 = vmatprep.subr.bf16.mxu0 0
      %1229 = vmatpush1.bf16.xpose.msra.mxu0 0
      %1230 = vmatprep.subr.bf16.mxu0 0
      %1231 = vmatpush1.bf16.xpose.msra.mxu0 0
      %1232 = vmatprep.subr.bf16.mxu0 0
      %1233 = vmatpush1.bf16.xpose.msra.mxu0 0
      %1234 = vmatprep.subr.bf16.mxu0 0
      %1235 = vmatpush1.bf16.xpose.msra.mxu0 0
      %1236 = vmatprep.subr.bf16.mxu0 0
      %1237 = vmatpush1.bf16.xpose.msra.mxu0 0
      %1238 = vmatprep.subr.bf16.mxu0 0
      %1239 = vmatpush1.bf16.xpose.msra.mxu0 0
      %1240 = vmatprep.subr.bf16.mxu0 0
      %1241 = vmatpush1.bf16.xpose.msra.mxu0 0
      %1242 = vmatprep.subr.bf16.mxu0 0
      %1243 = vmatpush1.bf16.xpose.msra.mxu0 0
      %1244 = vmatprep.subr.bf16.mxu0 0
      %1245 = vmatpush1.bf16.xpose.msra.mxu0 0
      %1246 = vmatprep.subr.bf16.mxu0 0
      %1247 = vmatpush1.bf16.xpose.msra.mxu0 0
      %1248 = vmatprep.subr.bf16.mxu0 0
      %1249 = vmatpush1.bf16.xpose.msra.mxu0 0
      %1250 = vmatprep.mubr.bf16.mxu0 0
      %1251 = vmatmul.mubr.bf16.gmra.mrb[0].mxu0 %v1213
      %v1252 = vpop.f32.mrb[0].mxu0
      %v1253 = vadd.f32 %v835, %v1252
      %v1254 = vpop.f32.mrb[0].mxu0
      %v1255 = vpop.f32.mrb[0].mxu0
      %v1256 = vpop.f32.mrb[0].mxu0
      %1257 = vdwg.mxu0
      %v1258 = vsel %vm1073, %v1115, -inf
      %1259 = vmax.xlane.f32.xlu0 %v1258
      %v1260 = vpop.xlane.xlu0 %1259
      %v1261 = vsel %vm1073, %v1161, -inf
      %1262 = vmax.xlane.f32.xlu0 %v1261
      %v1263 = vpop.xlane.xlu0 %1262
      %v1264 = vsel %vm1073, %v1207, -inf
      %1265 = vmax.xlane.f32.xlu0 %v1264
      %v1266 = vpop.xlane.xlu0 %1265
      %v1267 = vsel %vm1073, %v1253, -inf
      %1268 = vmax.xlane.f32.xlu0 %v1267
      %v1269 = vpop.xlane.xlu0 %1268
      %v1270 = vsub.f32 %v1115, %v1260
      %v1271 = vsub.f32 %v1161, %v1263
      %v1272 = vsub.f32 %v1207, %v1266
      %v1273 = vsub.f32 %v1253, %v1269
      %v1274 = vmul.f32 %v1270, 1.442695
      %v1275 = vpow.pop %v1274
      %v1276 = vmul.f32 %v1271, 1.442695
      %v1277 = vpow.pop %v1276
      %v1278 = vmul.f32 %v1272, 1.442695
      %v1279 = vpow.pop %v1278
      %v1280 = vmul.f32 %v1273, 1.442695
      %v1281 = vpow.pop %v1280
      %v1282 = vsel %vm1073, %v1275, 0.0
      %1283 = vadd.xlane.f32.xlu0 %v1282
      %v1284 = vpop.xlane.xlu0 %1283
      %v1285 = vsel %vm1073, %v1277, 0.0
      %1286 = vadd.xlane.f32.xlu0 %v1285
      %v1287 = vpop.xlane.xlu0 %1286
      %v1288 = vsel %vm1073, %v1279, 0.0
      %1289 = vadd.xlane.f32.xlu0 %v1288
      %v1290 = vpop.xlane.xlu0 %1289
      %v1291 = vsel %vm1073, %v1281, 0.0
      %1292 = vadd.xlane.f32.xlu0 %v1291
      %v1293 = vpop.xlane.xlu0 %1292
      %v1294 = vpack.c.bf16 %v1275, %v1275
      %v1295 = vpack.c.bf16 %v1277, %v1277
      %v1296 = vpack.c.bf16 %v1279, %v1279
      %v1297 = vpack.c.bf16 %v1281, %v1281
      %v1298 = vpack.c.bf16 %v1030, %v1030
      %v1299 = vpack.c.bf16 %v1057, %v1057
      %v1300 = vpack.c.bf16 %v1060, %v1060
      %v1301 = vpack.c.bf16 %v1063, %v1063
      %v1303 = vsel %vm1073, %v1294, 0
      %vm1305 = vcmask 1043456
      %v1307 = vsel %vm1305, %v1298, 0
      %1309 = vmatprep.subr.bf16.mxu0 0
      %1310 = vmatpush1.bf16.msra.mxu0 %v1307
      %1311 = vmatprep.subr.bf16.mxu0 0
      %1312 = vmatpush1.bf16.msra.mxu0 0
      %1313 = vmatprep.subr.bf16.mxu0 0
      %1314 = vmatpush1.bf16.msra.mxu0 0
      %1315 = vmatprep.subr.bf16.mxu0 0
      %1316 = vmatpush1.bf16.msra.mxu0 0
      %1317 = vmatprep.subr.bf16.mxu0 0
      %1318 = vmatpush1.bf16.msra.mxu0 0
      %1319 = vmatprep.subr.bf16.mxu0 0
      %1320 = vmatpush1.bf16.msra.mxu0 0
      %1321 = vmatprep.subr.bf16.mxu0 0
      %1322 = vmatpush1.bf16.msra.mxu0 0
      %1323 = vmatprep.subr.bf16.mxu0 0
      %1324 = vmatpush1.bf16.msra.mxu0 0
      %1325 = vmatprep.subr.bf16.mxu0 0
      %1326 = vmatpush1.bf16.msra.mxu0 0
      %1327 = vmatprep.subr.bf16.mxu0 0
      %1328 = vmatpush1.bf16.msra.mxu0 0
      %1329 = vmatprep.subr.bf16.mxu0 0
      %1330 = vmatpush1.bf16.msra.mxu0 0
      %1331 = vmatprep.subr.bf16.mxu0 0
      %1332 = vmatpush1.bf16.msra.mxu0 0
      %1333 = vmatprep.subr.bf16.mxu0 0
      %1334 = vmatpush1.bf16.msra.mxu0 0
      %1335 = vmatprep.subr.bf16.mxu0 0
      %1336 = vmatpush1.bf16.msra.mxu0 0
      %1337 = vmatprep.subr.bf16.mxu0 0
      %1338 = vmatpush1.bf16.msra.mxu0 0
      %1339 = vmatprep.subr.bf16.mxu0 0
      %1340 = vmatpush1.bf16.msra.mxu0 0
      %1341 = vmatprep.mubr.bf16.mxu0 0
      %1342 = vmatmul.mubr.bf16.gmra.mrb[0].mxu0 %v1303
      %v1343 = vpop.f32.mrb[0].mxu0
      %v1344 = vadd.f32 0.0, %v1343
      %v1345 = vpop.f32.mrb[0].mxu0
      %v1346 = vpop.f32.mrb[0].mxu0
      %v1347 = vpop.f32.mrb[0].mxu0
      %1348 = vdwg.mxu0
      %v1350 = vsel %vm1073, %v1295, 0
      %v1353 = vsel %vm1305, %v1299, 0
      %1355 = vmatprep.subr.bf16.mxu0 0
      %1356 = vmatpush1.bf16.msra.mxu0 %v1353
      %1357 = vmatprep.subr.bf16.mxu0 0
      %1358 = vmatpush1.bf16.msra.mxu0 0
      %1359 = vmatprep.subr.bf16.mxu0 0
      %1360 = vmatpush1.bf16.msra.mxu0 0
      %1361 = vmatprep.subr.bf16.mxu0 0
      %1362 = vmatpush1.bf16.msra.mxu0 0
      %1363 = vmatprep.subr.bf16.mxu0 0
      %1364 = vmatpush1.bf16.msra.mxu0 0
      %1365 = vmatprep.subr.bf16.mxu0 0
      %1366 = vmatpush1.bf16.msra.mxu0 0
      %1367 = vmatprep.subr.bf16.mxu0 0
      %1368 = vmatpush1.bf16.msra.mxu0 0
      %1369 = vmatprep.subr.bf16.mxu0 0
      %1370 = vmatpush1.bf16.msra.mxu0 0
      %1371 = vmatprep.subr.bf16.mxu0 0
      %1372 = vmatpush1.bf16.msra.mxu0 0
      %1373 = vmatprep.subr.bf16.mxu0 0
      %1374 = vmatpush1.bf16.msra.mxu0 0
      %1375 = vmatprep.subr.bf16.mxu0 0
      %1376 = vmatpush1.bf16.msra.mxu0 0
      %1377 = vmatprep.subr.bf16.mxu0 0
      %1378 = vmatpush1.bf16.msra.mxu0 0
      %1379 = vmatprep.subr.bf16.mxu0 0
      %1380 = vmatpush1.bf16.msra.mxu0 0
      %1381 = vmatprep.subr.bf16.mxu0 0
      %1382 = vmatpush1.bf16.msra.mxu0 0
      %1383 = vmatprep.subr.bf16.mxu0 0
      %1384 = vmatpush1.bf16.msra.mxu0 0
      %1385 = vmatprep.subr.bf16.mxu0 0
      %1386 = vmatpush1.bf16.msra.mxu0 0
      %1387 = vmatprep.mubr.bf16.mxu0 0
      %1388 = vmatmul.mubr.bf16.gmra.mrb[0].mxu0 %v1350
      %v1389 = vpop.f32.mrb[0].mxu0
      %v1390 = vadd.f32 0.0, %v1389
      %v1391 = vpop.f32.mrb[0].mxu0
      %v1392 = vpop.f32.mrb[0].mxu0
      %v1393 = vpop.f32.mrb[0].mxu0
      %1394 = vdwg.mxu0
      %v1396 = vsel %vm1073, %v1296, 0
      %v1399 = vsel %vm1305, %v1300, 0
      %1401 = vmatprep.subr.bf16.mxu0 0
      %1402 = vmatpush1.bf16.msra.mxu0 %v1399
      %1403 = vmatprep.subr.bf16.mxu0 0
      %1404 = vmatpush1.bf16.msra.mxu0 0
      %1405 = vmatprep.subr.bf16.mxu0 0
      %1406 = vmatpush1.bf16.msra.mxu0 0
      %1407 = vmatprep.subr.bf16.mxu0 0
      %1408 = vmatpush1.bf16.msra.mxu0 0
      %1409 = vmatprep.subr.bf16.mxu0 0
      %1410 = vmatpush1.bf16.msra.mxu0 0
      %1411 = vmatprep.subr.bf16.mxu0 0
      %1412 = vmatpush1.bf16.msra.mxu0 0
      %1413 = vmatprep.subr.bf16.mxu0 0
      %1414 = vmatpush1.bf16.msra.mxu0 0
      %1415 = vmatprep.subr.bf16.mxu0 0
      %1416 = vmatpush1.bf16.msra.mxu0 0
      %1417 = vmatprep.subr.bf16.mxu0 0
      %1418 = vmatpush1.bf16.msra.mxu0 0
      %1419 = vmatprep.subr.bf16.mxu0 0
      %1420 = vmatpush1.bf16.msra.mxu0 0
      %1421 = vmatprep.subr.bf16.mxu0 0
      %1422 = vmatpush1.bf16.msra.mxu0 0
      %1423 = vmatprep.subr.bf16.mxu0 0
      %1424 = vmatpush1.bf16.msra.mxu0 0
      %1425 = vmatprep.subr.bf16.mxu0 0
      %1426 = vmatpush1.bf16.msra.mxu0 0
      %1427 = vmatprep.subr.bf16.mxu0 0
      %1428 = vmatpush1.bf16.msra.mxu0 0
      %1429 = vmatprep.subr.bf16.mxu0 0
      %1430 = vmatpush1.bf16.msra.mxu0 0
      %1431 = vmatprep.subr.bf16.mxu0 0
      %1432 = vmatpush1.bf16.msra.mxu0 0
      %1433 = vmatprep.mubr.bf16.mxu0 0
      %1434 = vmatmul.mubr.bf16.gmra.mrb[0].mxu0 %v1396
      %v1435 = vpop.f32.mrb[0].mxu0
      %v1436 = vadd.f32 0.0, %v1435
      %v1437 = vpop.f32.mrb[0].mxu0
      %v1438 = vpop.f32.mrb[0].mxu0
      %v1439 = vpop.f32.mrb[0].mxu0
      %1440 = vdwg.mxu0
      %v1442 = vsel %vm1073, %v1297, 0
      %v1445 = vsel %vm1305, %v1301, 0
      %1447 = vmatprep.subr.bf16.mxu0 0
      %1448 = vmatpush1.bf16.msra.mxu0 %v1445
      %1449 = vmatprep.subr.bf16.mxu0 0
      %1450 = vmatpush1.bf16.msra.mxu0 0
      %1451 = vmatprep.subr.bf16.mxu0 0
      %1452 = vmatpush1.bf16.msra.mxu0 0
      %1453 = vmatprep.subr.bf16.mxu0 0
      %1454 = vmatpush1.bf16.msra.mxu0 0
      %1455 = vmatprep.subr.bf16.mxu0 0
      %1456 = vmatpush1.bf16.msra.mxu0 0
      %1457 = vmatprep.subr.bf16.mxu0 0
      %1458 = vmatpush1.bf16.msra.mxu0 0
      %1459 = vmatprep.subr.bf16.mxu0 0
      %1460 = vmatpush1.bf16.msra.mxu0 0
      %1461 = vmatprep.subr.bf16.mxu0 0
      %1462 = vmatpush1.bf16.msra.mxu0 0
      %1463 = vmatprep.subr.bf16.mxu0 0
      %1464 = vmatpush1.bf16.msra.mxu0 0
      %1465 = vmatprep.subr.bf16.mxu0 0
      %1466 = vmatpush1.bf16.msra.mxu0 0
      %1467 = vmatprep.subr.bf16.mxu0 0
      %1468 = vmatpush1.bf16.msra.mxu0 0
      %1469 = vmatprep.subr.bf16.mxu0 0
      %1470 = vmatpush1.bf16.msra.mxu0 0
      %1471 = vmatprep.subr.bf16.mxu0 0
      %1472 = vmatpush1.bf16.msra.mxu0 0
      %1473 = vmatprep.subr.bf16.mxu0 0
      %1474 = vmatpush1.bf16.msra.mxu0 0
      %1475 = vmatprep.subr.bf16.mxu0 0
      %1476 = vmatpush1.bf16.msra.mxu0 0
      %1477 = vmatprep.subr.bf16.mxu0 0
      %1478 = vmatpush1.bf16.msra.mxu0 0
      %1479 = vmatprep.mubr.bf16.mxu0 0
      %1480 = vmatmul.mubr.bf16.gmra.mrb[0].mxu0 %v1442
      %v1481 = vpop.f32.mrb[0].mxu0
      %v1482 = vadd.f32 0.0, %v1481
      %v1483 = vpop.f32.mrb[0].mxu0
      %v1484 = vpop.f32.mrb[0].mxu0
      %v1485 = vpop.f32.mrb[0].mxu0
      %1486 = vdwg.mxu0
      %v1487 = vrcp.pop %v1284
      %v1488 = vrcp.pop %v1287
      %v1489 = vrcp.pop %v1290
      %v1490 = vrcp.pop %v1293
      %v1491 = vmul.f32 %v1344, %v1487
      %v1492 = vmul.f32 %v1390, %v1488
      %v1493 = vmul.f32 %v1436, %v1489
      %v1494 = vmul.f32 %v1482, %v1490
      %1496 = vrot.lane.b32.xlu0 %v1492, 8
      %v1497 = vpop.permute.xlu0 %1496
      %1500 = vrot.lane.b32.xlu0 %v1493, 16
      %v1501 = vpop.permute.xlu0 %1500
      %1504 = vrot.lane.b32.xlu0 %v1494, 24
      %v1505 = vpop.permute.xlu0 %1504
      %v1507 = vsel %vm1073, %v1491, %v1497
      %vm1508 = vcmask 130048
      %v1509 = vsel %vm1508, %v1507, %v1501
      %vm1510 = vcmask 195584
      %v1511 = vsel %vm1510, %v1509, %v1505
      %v1512 = vpack.c.bf16 %v1511, %v1511
      %v1517 = vunpack.c.l.b16 %v871
      %v1518 = vunpack.c.l.b16 %v872
      %v1519 = vunpack.c.l.b16 %v873
      %v1520 = vunpack.c.l.b16 %v874
      %v1521 = vpack.c.b16 %v1518, %v1517
      %v1522 = vpack.c.b16 %v1520, %v1519
      %v1526 = vsel %vm843, %v1512, 0
      %1528 = vmatprep.subr.bf16.mxu0 0
      %1529 = vmatpush1.bf16.msra.mxu0 %v1521
      %1530 = vmatprep.subr.bf16.mxu0 0
      %1531 = vmatpush1.bf16.msra.mxu0 %v1522
      %1532 = vmatprep.subr.bf16.mxu0 0
      %1533 = vmatpush1.bf16.msra.mxu0 0
      %1534 = vmatprep.subr.bf16.mxu0 0
      %1535 = vmatpush1.bf16.msra.mxu0 0
      %1536 = vmatprep.subr.bf16.mxu0 0
      %1537 = vmatpush1.bf16.msra.mxu0 0
      %1538 = vmatprep.subr.bf16.mxu0 0
      %1539 = vmatpush1.bf16.msra.mxu0 0
      %1540 = vmatprep.subr.bf16.mxu0 0
      %1541 = vmatpush1.bf16.msra.mxu0 0
      %1542 = vmatprep.subr.bf16.mxu0 0
      %1543 = vmatpush1.bf16.msra.mxu0 0
      %1544 = vmatprep.subr.bf16.mxu0 0
      %1545 = vmatpush1.bf16.msra.mxu0 0
      %1546 = vmatprep.subr.bf16.mxu0 0
      %1547 = vmatpush1.bf16.msra.mxu0 0
      %1548 = vmatprep.subr.bf16.mxu0 0
      %1549 = vmatpush1.bf16.msra.mxu0 0
      %1550 = vmatprep.subr.bf16.mxu0 0
      %1551 = vmatpush1.bf16.msra.mxu0 0
      %1552 = vmatprep.subr.bf16.mxu0 0
      %1553 = vmatpush1.bf16.msra.mxu0 0
      %1554 = vmatprep.subr.bf16.mxu0 0
      %1555 = vmatpush1.bf16.msra.mxu0 0
      %1556 = vmatprep.subr.bf16.mxu0 0
      %1557 = vmatpush1.bf16.msra.mxu0 0
      %1558 = vmatprep.subr.bf16.mxu0 0
      %1559 = vmatpush1.bf16.msra.mxu0 0
      %1560 = vmatprep.mubr.bf16.mxu0 0
      %1561 = vmatmul.mubr.bf16.gmra.mrb[0].mxu0 %v1526
      %v1562 = vpop.f32.mrb[0].mxu0
      %v1563 = vadd.f32 0.0, %v1562
      %v1564 = vpop.f32.mrb[0].mxu0
      %v1565 = vpop.f32.mrb[0].mxu0
      %v1566 = vpop.f32.mrb[0].mxu0
      %1567 = vdwg.mxu0
      %v1568 = vadd.f32 %v840, %v1563
      %v1569 = vld [vmem:[%s9] sm:$0x1]
      %v1570 = vmul.f32 %v1568, %v1568
      %v1571 = vsel %vm843, %v1570, 0.0
      %1572 = vadd.xlane.f32.xlu0 %v1571
      %v1573 = vpop.xlane.xlu0 %1572
      %v1574 = vmul.f32 %v1573, %v847
      %v1575 = vadd.f32 %v1574, 1e-06
      %v1576 = vrsqrt.pop %v1575
      %v1577 = vmul.f32 %v1568, %v1576
      %v1579 = vlaneseq
      %v1580 = vshrl.u32 %v1579, 7
      %v1581 = vsub.s32 0, %v1580
      %v1582 = vrot.slane %v1569, %v1581
      %v1584 = vmul.f32 %v1577, %v1582
      %v1585 = vld [vmem:[%s10] sm:$0xf]
      %v1586 = vld [vmem:[%s10 + $0x4] sm:$0xf]
      %v1587 = vld [vmem:[%s10 + $0x8] sm:$0xf]
      %v1588 = vld [vmem:[%s10 + $0xc] sm:$0xf]
      %v1589 = vld [vmem:[%s11] sm:$0xf]
      %v1590 = vld [vmem:[%s11 + $0x4] sm:$0xf]
      %v1591 = vld [vmem:[%s11 + $0x8] sm:$0xf]
      %v1592 = vld [vmem:[%s11 + $0xc] sm:$0xf]
      %v1593 = vld [vmem:[%s11 + $0x10] sm:$0xf]
      %v1594 = vld [vmem:[%s11 + $0x14] sm:$0xf]
      %v1595 = vld [vmem:[%s11 + $0x18] sm:$0xf]
      %v1596 = vld [vmem:[%s11 + $0x1c] sm:$0xf]
      %v1597 = vpack.c.bf16 %v1584, %v1584
      %v1602 = vunpack.c.l.b16 %v1585
      %v1603 = vunpack.c.l.b16 %v1586
      %v1604 = vunpack.c.l.b16 %v1587
      %v1605 = vunpack.c.l.b16 %v1588
      %v1606 = vpack.c.b16 %v1603, %v1602
      %v1607 = vpack.c.b16 %v1605, %v1604
      %v1611 = vsel %vm843, %v1597, 0
      %1613 = vmatprep.subr.bf16.mxu0 0
      %1614 = vmatpush1.bf16.msra.mxu0 %v1606
      %1615 = vmatprep.subr.bf16.mxu0 0
      %1616 = vmatpush1.bf16.msra.mxu0 %v1607
      %1617 = vmatprep.subr.bf16.mxu0 0
      %1618 = vmatpush1.bf16.msra.mxu0 0
      %1619 = vmatprep.subr.bf16.mxu0 0
      %1620 = vmatpush1.bf16.msra.mxu0 0
      %1621 = vmatprep.subr.bf16.mxu0 0
      %1622 = vmatpush1.bf16.msra.mxu0 0
      %1623 = vmatprep.subr.bf16.mxu0 0
      %1624 = vmatpush1.bf16.msra.mxu0 0
      %1625 = vmatprep.subr.bf16.mxu0 0
      %1626 = vmatpush1.bf16.msra.mxu0 0
      %1627 = vmatprep.subr.bf16.mxu0 0
      %1628 = vmatpush1.bf16.msra.mxu0 0
      %1629 = vmatprep.subr.bf16.mxu0 0
      %1630 = vmatpush1.bf16.msra.mxu0 0
      %1631 = vmatprep.subr.bf16.mxu0 0
      %1632 = vmatpush1.bf16.msra.mxu0 0
      %1633 = vmatprep.subr.bf16.mxu0 0
      %1634 = vmatpush1.bf16.msra.mxu0 0
      %1635 = vmatprep.subr.bf16.mxu0 0
      %1636 = vmatpush1.bf16.msra.mxu0 0
      %1637 = vmatprep.subr.bf16.mxu0 0
      %1638 = vmatpush1.bf16.msra.mxu0 0
      %1639 = vmatprep.subr.bf16.mxu0 0
      %1640 = vmatpush1.bf16.msra.mxu0 0
      %1641 = vmatprep.subr.bf16.mxu0 0
      %1642 = vmatpush1.bf16.msra.mxu0 0
      %1643 = vmatprep.subr.bf16.mxu0 0
      %1644 = vmatpush1.bf16.msra.mxu0 0
      %1645 = vmatprep.mubr.bf16.mxu0 0
      %1646 = vmatmul.mubr.bf16.gmra.mrb[0].mxu0 %v1611
      %v1647 = vpop.f32.mrb[0].mxu0
      %v1648 = vadd.f32 0.0, %v1647
      %v1649 = vpop.f32.mrb[0].mxu0
      %v1650 = vpop.f32.mrb[0].mxu0
      %v1651 = vpop.f32.mrb[0].mxu0
      %1652 = vdwg.mxu0
      %v1653 = vmax.f32 %v1648, 0.0
      %v1654 = vpack.c.bf16 %v1653, %v1653
      %v1663 = vunpack.c.l.b16 %v1589
      %v1664 = vunpack.c.l.b16 %v1590
      %v1665 = vunpack.c.l.b16 %v1591
      %v1666 = vunpack.c.l.b16 %v1592
      %v1667 = vunpack.c.l.b16 %v1593
      %v1668 = vunpack.c.l.b16 %v1594
      %v1669 = vunpack.c.l.b16 %v1595
      %v1670 = vunpack.c.l.b16 %v1596
      %v1671 = vpack.c.b16 %v1664, %v1663
      %v1672 = vpack.c.b16 %v1666, %v1665
      %v1673 = vpack.c.b16 %v1668, %v1667
      %v1674 = vpack.c.b16 %v1670, %v1669
      %vm1679 = vcmask 523264
      %v1681 = vsel %vm1679, %v1654, 0
      %1683 = vmatprep.subr.bf16.mxu0 0
      %1684 = vmatpush1.bf16.msra.mxu0 %v1671
      %1685 = vmatprep.subr.bf16.mxu0 0
      %1686 = vmatpush1.bf16.msra.mxu0 %v1672
      %1687 = vmatprep.subr.bf16.mxu0 0
      %1688 = vmatpush1.bf16.msra.mxu0 %v1673
      %1689 = vmatprep.subr.bf16.mxu0 0
      %1690 = vmatpush1.bf16.msra.mxu0 %v1674
      %1691 = vmatprep.subr.bf16.mxu0 0
      %1692 = vmatpush1.bf16.msra.mxu0 0
      %1693 = vmatprep.subr.bf16.mxu0 0
      %1694 = vmatpush1.bf16.msra.mxu0 0
      %1695 = vmatprep.subr.bf16.mxu0 0
      %1696 = vmatpush1.bf16.msra.mxu0 0
      %1697 = vmatprep.subr.bf16.mxu0 0
      %1698 = vmatpush1.bf16.msra.mxu0 0
      %1699 = vmatprep.subr.bf16.mxu0 0
      %1700 = vmatpush1.bf16.msra.mxu0 0
      %1701 = vmatprep.subr.bf16.mxu0 0
      %1702 = vmatpush1.bf16.msra.mxu0 0
      %1703 = vmatprep.subr.bf16.mxu0 0
      %1704 = vmatpush1.bf16.msra.mxu0 0
      %1705 = vmatprep.subr.bf16.mxu0 0
      %1706 = vmatpush1.bf16.msra.mxu0 0
      %1707 = vmatprep.subr.bf16.mxu0 0
      %1708 = vmatpush1.bf16.msra.mxu0 0
      %1709 = vmatprep.subr.bf16.mxu0 0
      %1710 = vmatpush1.bf16.msra.mxu0 0
      %1711 = vmatprep.subr.bf16.mxu0 0
      %1712 = vmatpush1.bf16.msra.mxu0 0
      %1713 = vmatprep.subr.bf16.mxu0 0
      %1714 = vmatpush1.bf16.msra.mxu0 0
      %1715 = vmatprep.mubr.bf16.mxu0 0
      %1716 = vmatmul.mubr.bf16.gmra.mrb[0].mxu0 %v1681
      %v1717 = vpop.f32.mrb[0].mxu0
      %v1718 = vadd.f32 0.0, %v1717
      %v1719 = vpop.f32.mrb[0].mxu0
      %v1720 = vpop.f32.mrb[0].mxu0
      %v1721 = vpop.f32.mrb[0].mxu0
      %1722 = vdwg.mxu0
      %v1723 = vadd.f32 %v1568, %v1718
      %s1724 = scalar_lea.vmem %s8, 1
      %v1725 = vld [vmem:[%s1724] sm:$0x1]
      %v1726 = vmul.f32 %v1723, %v1723
      %v1727 = vsel %vm843, %v1726, 0.0
      %1728 = vadd.xlane.f32.xlu0 %v1727
      %v1729 = vpop.xlane.xlu0 %1728
      %v1730 = vmul.f32 %v1729, %v847
      %v1731 = vadd.f32 %v1730, 1e-06
      %v1732 = vrsqrt.pop %v1731
      %v1733 = vmul.f32 %v1723, %v1732
      %v1735 = vlaneseq
      %v1736 = vshrl.u32 %v1735, 7
      %v1737 = vsub.s32 0, %v1736
      %v1738 = vrot.slane %v1725, %v1737
      %v1740 = vmul.f32 %v1733, %v1738
      %s1741 = scalar_lea.vmem %s4, 16
      %v1742 = vld [vmem:[%s1741] sm:$0xf]
      %v1743 = vld [vmem:[%s1741 + $0x4] sm:$0xf]
      %v1744 = vld [vmem:[%s1741 + $0x8] sm:$0xf]
      %v1745 = vld [vmem:[%s1741 + $0xc] sm:$0xf]
      %s1746 = scalar_lea.vmem %s5, 16
      %v1747 = vld [vmem:[%s1746] sm:$0xf]
      %v1748 = vld [vmem:[%s1746 + $0x4] sm:$0xf]
      %v1749 = vld [vmem:[%s1746 + $0x8] sm:$0xf]
      %v1750 = vld [vmem:[%s1746 + $0xc] sm:$0xf]
      %s1751 = scalar_lea.vmem %s6, 16
      %v1752 = vld [vmem:[%s1751] sm:$0xf]
      %v1753 = vld [vmem:[%s1751 + $0x4] sm:$0xf]
      %v1754 = vld [vmem:[%s1751 + $0x8] sm:$0xf]
      %v1755 = vld [vmem:[%s1751 + $0xc] sm:$0xf]
      %s1756 = scalar_lea.vmem %s7, 16
      %v1757 = vld [vmem:[%s1756] sm:$0xf]
      %v1758 = vld [vmem:[%s1756 + $0x4] sm:$0xf]
      %v1759 = vld [vmem:[%s1756 + $0x8] sm:$0xf]
      %v1760 = vld [vmem:[%s1756 + $0xc] sm:$0xf]
      %v1761 = vpack.c.bf16 %v1740, %v1740
      %v1766 = vunpack.c.l.b16 %v1742
      %v1767 = vunpack.c.l.b16 %v1743
      %v1768 = vunpack.c.l.b16 %v1744
      %v1769 = vunpack.c.l.b16 %v1745
      %v1770 = vpack.c.b16 %v1767, %v1766
      %v1771 = vpack.c.b16 %v1769, %v1768
      %v1775 = vsel %vm843, %v1761, 0
      %1777 = vmatprep.subr.bf16.mxu0 0
      %1778 = vmatpush1.bf16.msra.mxu0 %v1770
      %1779 = vmatprep.subr.bf16.mxu0 0
      %1780 = vmatpush1.bf16.msra.mxu0 %v1771
      %1781 = vmatprep.subr.bf16.mxu0 0
      %1782 = vmatpush1.bf16.msra.mxu0 0
      %1783 = vmatprep.subr.bf16.mxu0 0
      %1784 = vmatpush1.bf16.msra.mxu0 0
      %1785 = vmatprep.subr.bf16.mxu0 0
      %1786 = vmatpush1.bf16.msra.mxu0 0
      %1787 = vmatprep.subr.bf16.mxu0 0
      %1788 = vmatpush1.bf16.msra.mxu0 0
      %1789 = vmatprep.subr.bf16.mxu0 0
      %1790 = vmatpush1.bf16.msra.mxu0 0
      %1791 = vmatprep.subr.bf16.mxu0 0
      %1792 = vmatpush1.bf16.msra.mxu0 0
      %1793 = vmatprep.subr.bf16.mxu0 0
      %1794 = vmatpush1.bf16.msra.mxu0 0
      %1795 = vmatprep.subr.bf16.mxu0 0
      %1796 = vmatpush1.bf16.msra.mxu0 0
      %1797 = vmatprep.subr.bf16.mxu0 0
      %1798 = vmatpush1.bf16.msra.mxu0 0
      %1799 = vmatprep.subr.bf16.mxu0 0
      %1800 = vmatpush1.bf16.msra.mxu0 0
      %1801 = vmatprep.subr.bf16.mxu0 0
      %1802 = vmatpush1.bf16.msra.mxu0 0
      %1803 = vmatprep.subr.bf16.mxu0 0
      %1804 = vmatpush1.bf16.msra.mxu0 0
      %1805 = vmatprep.subr.bf16.mxu0 0
      %1806 = vmatpush1.bf16.msra.mxu0 0
      %1807 = vmatprep.subr.bf16.mxu0 0
      %1808 = vmatpush1.bf16.msra.mxu0 0
      %1809 = vmatprep.mubr.bf16.mxu0 0
      %1810 = vmatmul.mubr.bf16.gmra.mrb[0].mxu0 %v1775
      %v1811 = vpop.f32.mrb[0].mxu0
      %v1812 = vadd.f32 0.0, %v1811
      %v1813 = vpop.f32.mrb[0].mxu0
      %v1814 = vpop.f32.mrb[0].mxu0
      %v1815 = vpop.f32.mrb[0].mxu0
      %1816 = vdwg.mxu0
      %v1821 = vunpack.c.l.b16 %v1747
      %v1822 = vunpack.c.l.b16 %v1748
      %v1823 = vunpack.c.l.b16 %v1749
      %v1824 = vunpack.c.l.b16 %v1750
      %v1825 = vpack.c.b16 %v1822, %v1821
      %v1826 = vpack.c.b16 %v1824, %v1823
      %1829 = vmatprep.subr.bf16.mxu0 0
      %1830 = vmatpush1.bf16.msra.mxu0 %v1825
      %1831 = vmatprep.subr.bf16.mxu0 0
      %1832 = vmatpush1.bf16.msra.mxu0 %v1826
      %1833 = vmatprep.subr.bf16.mxu0 0
      %1834 = vmatpush1.bf16.msra.mxu0 0
      %1835 = vmatprep.subr.bf16.mxu0 0
      %1836 = vmatpush1.bf16.msra.mxu0 0
      %1837 = vmatprep.subr.bf16.mxu0 0
      %1838 = vmatpush1.bf16.msra.mxu0 0
      %1839 = vmatprep.subr.bf16.mxu0 0
      %1840 = vmatpush1.bf16.msra.mxu0 0
      %1841 = vmatprep.subr.bf16.mxu0 0
      %1842 = vmatpush1.bf16.msra.mxu0 0
      %1843 = vmatprep.subr.bf16.mxu0 0
      %1844 = vmatpush1.bf16.msra.mxu0 0
      %1845 = vmatprep.subr.bf16.mxu0 0
      %1846 = vmatpush1.bf16.msra.mxu0 0
      %1847 = vmatprep.subr.bf16.mxu0 0
      %1848 = vmatpush1.bf16.msra.mxu0 0
      %1849 = vmatprep.subr.bf16.mxu0 0
      %1850 = vmatpush1.bf16.msra.mxu0 0
      %1851 = vmatprep.subr.bf16.mxu0 0
      %1852 = vmatpush1.bf16.msra.mxu0 0
      %1853 = vmatprep.subr.bf16.mxu0 0
      %1854 = vmatpush1.bf16.msra.mxu0 0
      %1855 = vmatprep.subr.bf16.mxu0 0
      %1856 = vmatpush1.bf16.msra.mxu0 0
      %1857 = vmatprep.subr.bf16.mxu0 0
      %1858 = vmatpush1.bf16.msra.mxu0 0
      %1859 = vmatprep.subr.bf16.mxu0 0
      %1860 = vmatpush1.bf16.msra.mxu0 0
      %1861 = vmatprep.mubr.bf16.mxu0 0
      %1862 = vmatmul.mubr.bf16.gmra.mrb[0].mxu0 %v1775
      %v1863 = vpop.f32.mrb[0].mxu0
      %v1864 = vadd.f32 0.0, %v1863
      %v1865 = vpop.f32.mrb[0].mxu0
      %v1866 = vpop.f32.mrb[0].mxu0
      %v1867 = vpop.f32.mrb[0].mxu0
      %1868 = vdwg.mxu0
      %v1873 = vunpack.c.l.b16 %v1752
      %v1874 = vunpack.c.l.b16 %v1753
      %v1875 = vunpack.c.l.b16 %v1754
      %v1876 = vunpack.c.l.b16 %v1755
      %v1877 = vpack.c.b16 %v1874, %v1873
      %v1878 = vpack.c.b16 %v1876, %v1875
      %1881 = vmatprep.subr.bf16.mxu0 0
      %1882 = vmatpush1.bf16.msra.mxu0 %v1877
      %1883 = vmatprep.subr.bf16.mxu0 0
      %1884 = vmatpush1.bf16.msra.mxu0 %v1878
      %1885 = vmatprep.subr.bf16.mxu0 0
      %1886 = vmatpush1.bf16.msra.mxu0 0
      %1887 = vmatprep.subr.bf16.mxu0 0
      %1888 = vmatpush1.bf16.msra.mxu0 0
      %1889 = vmatprep.subr.bf16.mxu0 0
      %1890 = vmatpush1.bf16.msra.mxu0 0
      %1891 = vmatprep.subr.bf16.mxu0 0
      %1892 = vmatpush1.bf16.msra.mxu0 0
      %1893 = vmatprep.subr.bf16.mxu0 0
      %1894 = vmatpush1.bf16.msra.mxu0 0
      %1895 = vmatprep.subr.bf16.mxu0 0
      %1896 = vmatpush1.bf16.msra.mxu0 0
      %1897 = vmatprep.subr.bf16.mxu0 0
      %1898 = vmatpush1.bf16.msra.mxu0 0
      %1899 = vmatprep.subr.bf16.mxu0 0
      %1900 = vmatpush1.bf16.msra.mxu0 0
      %1901 = vmatprep.subr.bf16.mxu0 0
      %1902 = vmatpush1.bf16.msra.mxu0 0
      %1903 = vmatprep.subr.bf16.mxu0 0
      %1904 = vmatpush1.bf16.msra.mxu0 0
      %1905 = vmatprep.subr.bf16.mxu0 0
      %1906 = vmatpush1.bf16.msra.mxu0 0
      %1907 = vmatprep.subr.bf16.mxu0 0
      %1908 = vmatpush1.bf16.msra.mxu0 0
      %1909 = vmatprep.subr.bf16.mxu0 0
      %1910 = vmatpush1.bf16.msra.mxu0 0
      %1911 = vmatprep.subr.bf16.mxu0 0
      %1912 = vmatpush1.bf16.msra.mxu0 0
      %1913 = vmatprep.mubr.bf16.mxu0 0
      %1914 = vmatmul.mubr.bf16.gmra.mrb[0].mxu0 %v1775
      %v1915 = vpop.f32.mrb[0].mxu0
      %v1916 = vadd.f32 0.0, %v1915
      %v1917 = vpop.f32.mrb[0].mxu0
      %v1918 = vpop.f32.mrb[0].mxu0
      %v1919 = vpop.f32.mrb[0].mxu0
      %1920 = vdwg.mxu0
      %1922 = vrot.lane.b32.xlu0 %v1812, 120
      %v1923 = vpop.permute.xlu0 %1922
      %1925 = vrot.lane.b32.xlu0 %v1812, 112
      %v1926 = vpop.permute.xlu0 %1925
      %1928 = vrot.lane.b32.xlu0 %v1812, 104
      %v1929 = vpop.permute.xlu0 %1928
      %1932 = vrot.lane.b32.xlu0 %v1864, 120
      %v1933 = vpop.permute.xlu0 %1932
      %1935 = vrot.lane.b32.xlu0 %v1864, 112
      %v1936 = vpop.permute.xlu0 %1935
      %1938 = vrot.lane.b32.xlu0 %v1864, 104
      %v1939 = vpop.permute.xlu0 %1938
      %1942 = vrot.lane.b32.xlu0 %v1916, 120
      %v1943 = vpop.permute.xlu0 %1942
      %1945 = vrot.lane.b32.xlu0 %v1916, 112
      %v1946 = vpop.permute.xlu0 %1945
      %1948 = vrot.lane.b32.xlu0 %v1916, 104
      %v1949 = vpop.permute.xlu0 %1948
      %v1951 = vpack.c.bf16 %v1812, %v1812
      %v1952 = vpack.c.bf16 %v1923, %v1923
      %v1953 = vpack.c.bf16 %v1926, %v1926
      %v1954 = vpack.c.bf16 %v1929, %v1929
      %v1955 = vpack.c.bf16 %v1864, %v1864
      %v1956 = vpack.c.bf16 %v1933, %v1933
      %v1957 = vpack.c.bf16 %v1936, %v1936
      %v1958 = vpack.c.bf16 %v1939, %v1939
      %v1960 = vsel %vm1073, %v1951, 0
      %v1963 = vsel %vm1073, %v1955, 0
      %1965 = vmatprep.subr.bf16.mxu0 0
      %1966 = vmatpush1.bf16.xpose.msra.mxu0 %v1963
      %1967 = vmatprep.subr.bf16.mxu0 0
      %1968 = vmatpush1.bf16.xpose.msra.mxu0 0
      %1969 = vmatprep.subr.bf16.mxu0 0
      %1970 = vmatpush1.bf16.xpose.msra.mxu0 0
      %1971 = vmatprep.subr.bf16.mxu0 0
      %1972 = vmatpush1.bf16.xpose.msra.mxu0 0
      %1973 = vmatprep.subr.bf16.mxu0 0
      %1974 = vmatpush1.bf16.xpose.msra.mxu0 0
      %1975 = vmatprep.subr.bf16.mxu0 0
      %1976 = vmatpush1.bf16.xpose.msra.mxu0 0
      %1977 = vmatprep.subr.bf16.mxu0 0
      %1978 = vmatpush1.bf16.xpose.msra.mxu0 0
      %1979 = vmatprep.subr.bf16.mxu0 0
      %1980 = vmatpush1.bf16.xpose.msra.mxu0 0
      %1981 = vmatprep.subr.bf16.mxu0 0
      %1982 = vmatpush1.bf16.xpose.msra.mxu0 0
      %1983 = vmatprep.subr.bf16.mxu0 0
      %1984 = vmatpush1.bf16.xpose.msra.mxu0 0
      %1985 = vmatprep.subr.bf16.mxu0 0
      %1986 = vmatpush1.bf16.xpose.msra.mxu0 0
      %1987 = vmatprep.subr.bf16.mxu0 0
      %1988 = vmatpush1.bf16.xpose.msra.mxu0 0
      %1989 = vmatprep.subr.bf16.mxu0 0
      %1990 = vmatpush1.bf16.xpose.msra.mxu0 0
      %1991 = vmatprep.subr.bf16.mxu0 0
      %1992 = vmatpush1.bf16.xpose.msra.mxu0 0
      %1993 = vmatprep.subr.bf16.mxu0 0
      %1994 = vmatpush1.bf16.xpose.msra.mxu0 0
      %1995 = vmatprep.subr.bf16.mxu0 0
      %1996 = vmatpush1.bf16.xpose.msra.mxu0 0
      %1997 = vmatprep.mubr.bf16.mxu0 0
      %1998 = vmatmul.mubr.bf16.gmra.mrb[0].mxu0 %v1960
      %v1999 = vpop.f32.mrb[0].mxu0
      %v2000 = vadd.f32 %v832, %v1999
      %v2001 = vpop.f32.mrb[0].mxu0
      %v2002 = vpop.f32.mrb[0].mxu0
      %v2003 = vpop.f32.mrb[0].mxu0
      %2004 = vdwg.mxu0
      %v2006 = vsel %vm1073, %v1952, 0
      %v2009 = vsel %vm1073, %v1956, 0
      %2011 = vmatprep.subr.bf16.mxu0 0
      %2012 = vmatpush1.bf16.xpose.msra.mxu0 %v2009
      %2013 = vmatprep.subr.bf16.mxu0 0
      %2014 = vmatpush1.bf16.xpose.msra.mxu0 0
      %2015 = vmatprep.subr.bf16.mxu0 0
      %2016 = vmatpush1.bf16.xpose.msra.mxu0 0
      %2017 = vmatprep.subr.bf16.mxu0 0
      %2018 = vmatpush1.bf16.xpose.msra.mxu0 0
      %2019 = vmatprep.subr.bf16.mxu0 0
      %2020 = vmatpush1.bf16.xpose.msra.mxu0 0
      %2021 = vmatprep.subr.bf16.mxu0 0
      %2022 = vmatpush1.bf16.xpose.msra.mxu0 0
      %2023 = vmatprep.subr.bf16.mxu0 0
      %2024 = vmatpush1.bf16.xpose.msra.mxu0 0
      %2025 = vmatprep.subr.bf16.mxu0 0
      %2026 = vmatpush1.bf16.xpose.msra.mxu0 0
      %2027 = vmatprep.subr.bf16.mxu0 0
      %2028 = vmatpush1.bf16.xpose.msra.mxu0 0
      %2029 = vmatprep.subr.bf16.mxu0 0
      %2030 = vmatpush1.bf16.xpose.msra.mxu0 0
      %2031 = vmatprep.subr.bf16.mxu0 0
      %2032 = vmatpush1.bf16.xpose.msra.mxu0 0
      %2033 = vmatprep.subr.bf16.mxu0 0
      %2034 = vmatpush1.bf16.xpose.msra.mxu0 0
      %2035 = vmatprep.subr.bf16.mxu0 0
      %2036 = vmatpush1.bf16.xpose.msra.mxu0 0
      %2037 = vmatprep.subr.bf16.mxu0 0
      %2038 = vmatpush1.bf16.xpose.msra.mxu0 0
      %2039 = vmatprep.subr.bf16.mxu0 0
      %2040 = vmatpush1.bf16.xpose.msra.mxu0 0
      %2041 = vmatprep.subr.bf16.mxu0 0
      %2042 = vmatpush1.bf16.xpose.msra.mxu0 0
      %2043 = vmatprep.mubr.bf16.mxu0 0
      %2044 = vmatmul.mubr.bf16.gmra.mrb[0].mxu0 %v2006
      %v2045 = vpop.f32.mrb[0].mxu0
      %v2046 = vadd.f32 %v833, %v2045
      %v2047 = vpop.f32.mrb[0].mxu0
      %v2048 = vpop.f32.mrb[0].mxu0
      %v2049 = vpop.f32.mrb[0].mxu0
      %2050 = vdwg.mxu0
      %v2052 = vsel %vm1073, %v1953, 0
      %v2055 = vsel %vm1073, %v1957, 0
      %2057 = vmatprep.subr.bf16.mxu0 0
      %2058 = vmatpush1.bf16.xpose.msra.mxu0 %v2055
      %2059 = vmatprep.subr.bf16.mxu0 0
      %2060 = vmatpush1.bf16.xpose.msra.mxu0 0
      %2061 = vmatprep.subr.bf16.mxu0 0
      %2062 = vmatpush1.bf16.xpose.msra.mxu0 0
      %2063 = vmatprep.subr.bf16.mxu0 0
      %2064 = vmatpush1.bf16.xpose.msra.mxu0 0
      %2065 = vmatprep.subr.bf16.mxu0 0
      %2066 = vmatpush1.bf16.xpose.msra.mxu0 0
      %2067 = vmatprep.subr.bf16.mxu0 0
      %2068 = vmatpush1.bf16.xpose.msra.mxu0 0
      %2069 = vmatprep.subr.bf16.mxu0 0
      %2070 = vmatpush1.bf16.xpose.msra.mxu0 0
      %2071 = vmatprep.subr.bf16.mxu0 0
      %2072 = vmatpush1.bf16.xpose.msra.mxu0 0
      %2073 = vmatprep.subr.bf16.mxu0 0
      %2074 = vmatpush1.bf16.xpose.msra.mxu0 0
      %2075 = vmatprep.subr.bf16.mxu0 0
      %2076 = vmatpush1.bf16.xpose.msra.mxu0 0
      %2077 = vmatprep.subr.bf16.mxu0 0
      %2078 = vmatpush1.bf16.xpose.msra.mxu0 0
      %2079 = vmatprep.subr.bf16.mxu0 0
      %2080 = vmatpush1.bf16.xpose.msra.mxu0 0
      %2081 = vmatprep.subr.bf16.mxu0 0
      %2082 = vmatpush1.bf16.xpose.msra.mxu0 0
      %2083 = vmatprep.subr.bf16.mxu0 0
      %2084 = vmatpush1.bf16.xpose.msra.mxu0 0
      %2085 = vmatprep.subr.bf16.mxu0 0
      %2086 = vmatpush1.bf16.xpose.msra.mxu0 0
      %2087 = vmatprep.subr.bf16.mxu0 0
      %2088 = vmatpush1.bf16.xpose.msra.mxu0 0
      %2089 = vmatprep.mubr.bf16.mxu0 0
      %2090 = vmatmul.mubr.bf16.gmra.mrb[0].mxu0 %v2052
      %v2091 = vpop.f32.mrb[0].mxu0
      %v2092 = vadd.f32 %v834, %v2091
      %v2093 = vpop.f32.mrb[0].mxu0
      %v2094 = vpop.f32.mrb[0].mxu0
      %v2095 = vpop.f32.mrb[0].mxu0
      %2096 = vdwg.mxu0
      %v2098 = vsel %vm1073, %v1954, 0
      %v2101 = vsel %vm1073, %v1958, 0
      %2103 = vmatprep.subr.bf16.mxu0 0
      %2104 = vmatpush1.bf16.xpose.msra.mxu0 %v2101
      %2105 = vmatprep.subr.bf16.mxu0 0
      %2106 = vmatpush1.bf16.xpose.msra.mxu0 0
      %2107 = vmatprep.subr.bf16.mxu0 0
      %2108 = vmatpush1.bf16.xpose.msra.mxu0 0
      %2109 = vmatprep.subr.bf16.mxu0 0
      %2110 = vmatpush1.bf16.xpose.msra.mxu0 0
      %2111 = vmatprep.subr.bf16.mxu0 0
      %2112 = vmatpush1.bf16.xpose.msra.mxu0 0
      %2113 = vmatprep.subr.bf16.mxu0 0
      %2114 = vmatpush1.bf16.xpose.msra.mxu0 0
      %2115 = vmatprep.subr.bf16.mxu0 0
      %2116 = vmatpush1.bf16.xpose.msra.mxu0 0
      %2117 = vmatprep.subr.bf16.mxu0 0
      %2118 = vmatpush1.bf16.xpose.msra.mxu0 0
      %2119 = vmatprep.subr.bf16.mxu0 0
      %2120 = vmatpush1.bf16.xpose.msra.mxu0 0
      %2121 = vmatprep.subr.bf16.mxu0 0
      %2122 = vmatpush1.bf16.xpose.msra.mxu0 0
      %2123 = vmatprep.subr.bf16.mxu0 0
      %2124 = vmatpush1.bf16.xpose.msra.mxu0 0
      %2125 = vmatprep.subr.bf16.mxu0 0
      %2126 = vmatpush1.bf16.xpose.msra.mxu0 0
      %2127 = vmatprep.subr.bf16.mxu0 0
      %2128 = vmatpush1.bf16.xpose.msra.mxu0 0
      %2129 = vmatprep.subr.bf16.mxu0 0
      %2130 = vmatpush1.bf16.xpose.msra.mxu0 0
      %2131 = vmatprep.subr.bf16.mxu0 0
      %2132 = vmatpush1.bf16.xpose.msra.mxu0 0
      %2133 = vmatprep.subr.bf16.mxu0 0
      %2134 = vmatpush1.bf16.xpose.msra.mxu0 0
      %2135 = vmatprep.mubr.bf16.mxu0 0
      %2136 = vmatmul.mubr.bf16.gmra.mrb[0].mxu0 %v2098
      %v2137 = vpop.f32.mrb[0].mxu0
      %v2138 = vadd.f32 %v835, %v2137
      %v2139 = vpop.f32.mrb[0].mxu0
      %v2140 = vpop.f32.mrb[0].mxu0
      %v2141 = vpop.f32.mrb[0].mxu0
      %2142 = vdwg.mxu0
      %v2143 = vsel %vm1073, %v2000, -inf
      %2144 = vmax.xlane.f32.xlu0 %v2143
      %v2145 = vpop.xlane.xlu0 %2144
      %v2146 = vsel %vm1073, %v2046, -inf
      %2147 = vmax.xlane.f32.xlu0 %v2146
      %v2148 = vpop.xlane.xlu0 %2147
      %v2149 = vsel %vm1073, %v2092, -inf
      %2150 = vmax.xlane.f32.xlu0 %v2149
      %v2151 = vpop.xlane.xlu0 %2150
      %v2152 = vsel %vm1073, %v2138, -inf
      %2153 = vmax.xlane.f32.xlu0 %v2152
      %v2154 = vpop.xlane.xlu0 %2153
      %v2155 = vsub.f32 %v2000, %v2145
      %v2156 = vsub.f32 %v2046, %v2148
      %v2157 = vsub.f32 %v2092, %v2151
      %v2158 = vsub.f32 %v2138, %v2154
      %v2159 = vmul.f32 %v2155, 1.442695
      %v2160 = vpow.pop %v2159
      %v2161 = vmul.f32 %v2156, 1.442695
      %v2162 = vpow.pop %v2161
      %v2163 = vmul.f32 %v2157, 1.442695
      %v2164 = vpow.pop %v2163
      %v2165 = vmul.f32 %v2158, 1.442695
      %v2166 = vpow.pop %v2165
      %v2167 = vsel %vm1073, %v2160, 0.0
      %2168 = vadd.xlane.f32.xlu0 %v2167
      %v2169 = vpop.xlane.xlu0 %2168
      %v2170 = vsel %vm1073, %v2162, 0.0
      %2171 = vadd.xlane.f32.xlu0 %v2170
      %v2172 = vpop.xlane.xlu0 %2171
      %v2173 = vsel %vm1073, %v2164, 0.0
      %2174 = vadd.xlane.f32.xlu0 %v2173
      %v2175 = vpop.xlane.xlu0 %2174
      %v2176 = vsel %vm1073, %v2166, 0.0
      %2177 = vadd.xlane.f32.xlu0 %v2176
      %v2178 = vpop.xlane.xlu0 %2177
      %v2179 = vpack.c.bf16 %v2160, %v2160
      %v2180 = vpack.c.bf16 %v2162, %v2162
      %v2181 = vpack.c.bf16 %v2164, %v2164
      %v2182 = vpack.c.bf16 %v2166, %v2166
      %v2183 = vpack.c.bf16 %v1916, %v1916
      %v2184 = vpack.c.bf16 %v1943, %v1943
      %v2185 = vpack.c.bf16 %v1946, %v1946
      %v2186 = vpack.c.bf16 %v1949, %v1949
      %v2188 = vsel %vm1073, %v2179, 0
      %v2191 = vsel %vm1305, %v2183, 0
      %2193 = vmatprep.subr.bf16.mxu0 0
      %2194 = vmatpush1.bf16.msra.mxu0 %v2191
      %2195 = vmatprep.subr.bf16.mxu0 0
      %2196 = vmatpush1.bf16.msra.mxu0 0
      %2197 = vmatprep.subr.bf16.mxu0 0
      %2198 = vmatpush1.bf16.msra.mxu0 0
      %2199 = vmatprep.subr.bf16.mxu0 0
      %2200 = vmatpush1.bf16.msra.mxu0 0
      %2201 = vmatprep.subr.bf16.mxu0 0
      %2202 = vmatpush1.bf16.msra.mxu0 0
      %2203 = vmatprep.subr.bf16.mxu0 0
      %2204 = vmatpush1.bf16.msra.mxu0 0
      %2205 = vmatprep.subr.bf16.mxu0 0
      %2206 = vmatpush1.bf16.msra.mxu0 0
      %2207 = vmatprep.subr.bf16.mxu0 0
      %2208 = vmatpush1.bf16.msra.mxu0 0
      %2209 = vmatprep.subr.bf16.mxu0 0
      %2210 = vmatpush1.bf16.msra.mxu0 0
      %2211 = vmatprep.subr.bf16.mxu0 0
      %2212 = vmatpush1.bf16.msra.mxu0 0
      %2213 = vmatprep.subr.bf16.mxu0 0
      %2214 = vmatpush1.bf16.msra.mxu0 0
      %2215 = vmatprep.subr.bf16.mxu0 0
      %2216 = vmatpush1.bf16.msra.mxu0 0
      %2217 = vmatprep.subr.bf16.mxu0 0
      %2218 = vmatpush1.bf16.msra.mxu0 0
      %2219 = vmatprep.subr.bf16.mxu0 0
      %2220 = vmatpush1.bf16.msra.mxu0 0
      %2221 = vmatprep.subr.bf16.mxu0 0
      %2222 = vmatpush1.bf16.msra.mxu0 0
      %2223 = vmatprep.subr.bf16.mxu0 0
      %2224 = vmatpush1.bf16.msra.mxu0 0
      %2225 = vmatprep.mubr.bf16.mxu0 0
      %2226 = vmatmul.mubr.bf16.gmra.mrb[0].mxu0 %v2188
      %v2227 = vpop.f32.mrb[0].mxu0
      %v2228 = vadd.f32 0.0, %v2227
      %v2229 = vpop.f32.mrb[0].mxu0
      %v2230 = vpop.f32.mrb[0].mxu0
      %v2231 = vpop.f32.mrb[0].mxu0
      %2232 = vdwg.mxu0
      %v2234 = vsel %vm1073, %v2180, 0
      %v2237 = vsel %vm1305, %v2184, 0
      %2239 = vmatprep.subr.bf16.mxu0 0
      %2240 = vmatpush1.bf16.msra.mxu0 %v2237
      %2241 = vmatprep.subr.bf16.mxu0 0
      %2242 = vmatpush1.bf16.msra.mxu0 0
      %2243 = vmatprep.subr.bf16.mxu0 0
      %2244 = vmatpush1.bf16.msra.mxu0 0
      %2245 = vmatprep.subr.bf16.mxu0 0
      %2246 = vmatpush1.bf16.msra.mxu0 0
      %2247 = vmatprep.subr.bf16.mxu0 0
      %2248 = vmatpush1.bf16.msra.mxu0 0
      %2249 = vmatprep.subr.bf16.mxu0 0
      %2250 = vmatpush1.bf16.msra.mxu0 0
      %2251 = vmatprep.subr.bf16.mxu0 0
      %2252 = vmatpush1.bf16.msra.mxu0 0
      %2253 = vmatprep.subr.bf16.mxu0 0
      %2254 = vmatpush1.bf16.msra.mxu0 0
      %2255 = vmatprep.subr.bf16.mxu0 0
      %2256 = vmatpush1.bf16.msra.mxu0 0
      %2257 = vmatprep.subr.bf16.mxu0 0
      %2258 = vmatpush1.bf16.msra.mxu0 0
      %2259 = vmatprep.subr.bf16.mxu0 0
      %2260 = vmatpush1.bf16.msra.mxu0 0
      %2261 = vmatprep.subr.bf16.mxu0 0
      %2262 = vmatpush1.bf16.msra.mxu0 0
      %2263 = vmatprep.subr.bf16.mxu0 0
      %2264 = vmatpush1.bf16.msra.mxu0 0
      %2265 = vmatprep.subr.bf16.mxu0 0
      %2266 = vmatpush1.bf16.msra.mxu0 0
      %2267 = vmatprep.subr.bf16.mxu0 0
      %2268 = vmatpush1.bf16.msra.mxu0 0
      %2269 = vmatprep.subr.bf16.mxu0 0
      %2270 = vmatpush1.bf16.msra.mxu0 0
      %2271 = vmatprep.mubr.bf16.mxu0 0
      %2272 = vmatmul.mubr.bf16.gmra.mrb[0].mxu0 %v2234
      %v2273 = vpop.f32.mrb[0].mxu0
      %v2274 = vadd.f32 0.0, %v2273
      %v2275 = vpop.f32.mrb[0].mxu0
      %v2276 = vpop.f32.mrb[0].mxu0
      %v2277 = vpop.f32.mrb[0].mxu0
      %2278 = vdwg.mxu0
      %v2280 = vsel %vm1073, %v2181, 0
      %v2283 = vsel %vm1305, %v2185, 0
      %2285 = vmatprep.subr.bf16.mxu0 0
      %2286 = vmatpush1.bf16.msra.mxu0 %v2283
      %2287 = vmatprep.subr.bf16.mxu0 0
      %2288 = vmatpush1.bf16.msra.mxu0 0
      %2289 = vmatprep.subr.bf16.mxu0 0
      %2290 = vmatpush1.bf16.msra.mxu0 0
      %2291 = vmatprep.subr.bf16.mxu0 0
      %2292 = vmatpush1.bf16.msra.mxu0 0
      %2293 = vmatprep.subr.bf16.mxu0 0
      %2294 = vmatpush1.bf16.msra.mxu0 0
      %2295 = vmatprep.subr.bf16.mxu0 0
      %2296 = vmatpush1.bf16.msra.mxu0 0
      %2297 = vmatprep.subr.bf16.mxu0 0
      %2298 = vmatpush1.bf16.msra.mxu0 0
      %2299 = vmatprep.subr.bf16.mxu0 0
      %2300 = vmatpush1.bf16.msra.mxu0 0
      %2301 = vmatprep.subr.bf16.mxu0 0
      %2302 = vmatpush1.bf16.msra.mxu0 0
      %2303 = vmatprep.subr.bf16.mxu0 0
      %2304 = vmatpush1.bf16.msra.mxu0 0
      %2305 = vmatprep.subr.bf16.mxu0 0
      %2306 = vmatpush1.bf16.msra.mxu0 0
      %2307 = vmatprep.subr.bf16.mxu0 0
      %2308 = vmatpush1.bf16.msra.mxu0 0
      %2309 = vmatprep.subr.bf16.mxu0 0
      %2310 = vmatpush1.bf16.msra.mxu0 0
      %2311 = vmatprep.subr.bf16.mxu0 0
      %2312 = vmatpush1.bf16.msra.mxu0 0
      %2313 = vmatprep.subr.bf16.mxu0 0
      %2314 = vmatpush1.bf16.msra.mxu0 0
      %2315 = vmatprep.subr.bf16.mxu0 0
      %2316 = vmatpush1.bf16.msra.mxu0 0
      %2317 = vmatprep.mubr.bf16.mxu0 0
      %2318 = vmatmul.mubr.bf16.gmra.mrb[0].mxu0 %v2280
      %v2319 = vpop.f32.mrb[0].mxu0
      %v2320 = vadd.f32 0.0, %v2319
      %v2321 = vpop.f32.mrb[0].mxu0
      %v2322 = vpop.f32.mrb[0].mxu0
      %v2323 = vpop.f32.mrb[0].mxu0
      %2324 = vdwg.mxu0
      %v2326 = vsel %vm1073, %v2182, 0
      %v2329 = vsel %vm1305, %v2186, 0
      %2331 = vmatprep.subr.bf16.mxu0 0
      %2332 = vmatpush1.bf16.msra.mxu0 %v2329
      %2333 = vmatprep.subr.bf16.mxu0 0
      %2334 = vmatpush1.bf16.msra.mxu0 0
      %2335 = vmatprep.subr.bf16.mxu0 0
      %2336 = vmatpush1.bf16.msra.mxu0 0
      %2337 = vmatprep.subr.bf16.mxu0 0
      %2338 = vmatpush1.bf16.msra.mxu0 0
      %2339 = vmatprep.subr.bf16.mxu0 0
      %2340 = vmatpush1.bf16.msra.mxu0 0
      %2341 = vmatprep.subr.bf16.mxu0 0
      %2342 = vmatpush1.bf16.msra.mxu0 0
      %2343 = vmatprep.subr.bf16.mxu0 0
      %2344 = vmatpush1.bf16.msra.mxu0 0
      %2345 = vmatprep.subr.bf16.mxu0 0
      %2346 = vmatpush1.bf16.msra.mxu0 0
      %2347 = vmatprep.subr.bf16.mxu0 0
      %2348 = vmatpush1.bf16.msra.mxu0 0
      %2349 = vmatprep.subr.bf16.mxu0 0
      %2350 = vmatpush1.bf16.msra.mxu0 0
      %2351 = vmatprep.subr.bf16.mxu0 0
      %2352 = vmatpush1.bf16.msra.mxu0 0
      %2353 = vmatprep.subr.bf16.mxu0 0
      %2354 = vmatpush1.bf16.msra.mxu0 0
      %2355 = vmatprep.subr.bf16.mxu0 0
      %2356 = vmatpush1.bf16.msra.mxu0 0
      %2357 = vmatprep.subr.bf16.mxu0 0
      %2358 = vmatpush1.bf16.msra.mxu0 0
      %2359 = vmatprep.subr.bf16.mxu0 0
      %2360 = vmatpush1.bf16.msra.mxu0 0
      %2361 = vmatprep.subr.bf16.mxu0 0
      %2362 = vmatpush1.bf16.msra.mxu0 0
      %2363 = vmatprep.mubr.bf16.mxu0 0
      %2364 = vmatmul.mubr.bf16.gmra.mrb[0].mxu0 %v2326
      %v2365 = vpop.f32.mrb[0].mxu0
      %v2366 = vadd.f32 0.0, %v2365
      %v2367 = vpop.f32.mrb[0].mxu0
      %v2368 = vpop.f32.mrb[0].mxu0
      %v2369 = vpop.f32.mrb[0].mxu0
      %2370 = vdwg.mxu0
      %v2371 = vrcp.pop %v2169
      %v2372 = vrcp.pop %v2172
      %v2373 = vrcp.pop %v2175
      %v2374 = vrcp.pop %v2178
      %v2375 = vmul.f32 %v2228, %v2371
      %v2376 = vmul.f32 %v2274, %v2372
      %v2377 = vmul.f32 %v2320, %v2373
      %v2378 = vmul.f32 %v2366, %v2374
      %2380 = vrot.lane.b32.xlu0 %v2376, 8
      %v2381 = vpop.permute.xlu0 %2380
      %2384 = vrot.lane.b32.xlu0 %v2377, 16
      %v2385 = vpop.permute.xlu0 %2384
      %2388 = vrot.lane.b32.xlu0 %v2378, 24
      %v2389 = vpop.permute.xlu0 %2388
      %v2391 = vsel %vm1073, %v2375, %v2381
      %v2392 = vsel %vm1508, %v2391, %v2385
      %v2393 = vsel %vm1510, %v2392, %v2389
      %v2394 = vpack.c.bf16 %v2393, %v2393
      %v2399 = vunpack.c.l.b16 %v1757
      %v2400 = vunpack.c.l.b16 %v1758
      %v2401 = vunpack.c.l.b16 %v1759
      %v2402 = vunpack.c.l.b16 %v1760
      %v2403 = vpack.c.b16 %v2400, %v2399
      %v2404 = vpack.c.b16 %v2402, %v2401
      %v2408 = vsel %vm843, %v2394, 0
      %2410 = vmatprep.subr.bf16.mxu0 0
      %2411 = vmatpush1.bf16.msra.mxu0 %v2403
      %2412 = vmatprep.subr.bf16.mxu0 0
      %2413 = vmatpush1.bf16.msra.mxu0 %v2404
      %2414 = vmatprep.subr.bf16.mxu0 0
      %2415 = vmatpush1.bf16.msra.mxu0 0
      %2416 = vmatprep.subr.bf16.mxu0 0
      %2417 = vmatpush1.bf16.msra.mxu0 0
      %2418 = vmatprep.subr.bf16.mxu0 0
      %2419 = vmatpush1.bf16.msra.mxu0 0
      %2420 = vmatprep.subr.bf16.mxu0 0
      %2421 = vmatpush1.bf16.msra.mxu0 0
      %2422 = vmatprep.subr.bf16.mxu0 0
      %2423 = vmatpush1.bf16.msra.mxu0 0
      %2424 = vmatprep.subr.bf16.mxu0 0
      %2425 = vmatpush1.bf16.msra.mxu0 0
      %2426 = vmatprep.subr.bf16.mxu0 0
      %2427 = vmatpush1.bf16.msra.mxu0 0
      %2428 = vmatprep.subr.bf16.mxu0 0
      %2429 = vmatpush1.bf16.msra.mxu0 0
      %2430 = vmatprep.subr.bf16.mxu0 0
      %2431 = vmatpush1.bf16.msra.mxu0 0
      %2432 = vmatprep.subr.bf16.mxu0 0
      %2433 = vmatpush1.bf16.msra.mxu0 0
      %2434 = vmatprep.subr.bf16.mxu0 0
      %2435 = vmatpush1.bf16.msra.mxu0 0
      %2436 = vmatprep.subr.bf16.mxu0 0
      %2437 = vmatpush1.bf16.msra.mxu0 0
      %2438 = vmatprep.subr.bf16.mxu0 0
      %2439 = vmatpush1.bf16.msra.mxu0 0
      %2440 = vmatprep.subr.bf16.mxu0 0
      %2441 = vmatpush1.bf16.msra.mxu0 0
      %2442 = vmatprep.mubr.bf16.mxu0 0
      %2443 = vmatmul.mubr.bf16.gmra.mrb[0].mxu0 %v2408
      %v2444 = vpop.f32.mrb[0].mxu0
      %v2445 = vadd.f32 0.0, %v2444
      %v2446 = vpop.f32.mrb[0].mxu0
      %v2447 = vpop.f32.mrb[0].mxu0
      %v2448 = vpop.f32.mrb[0].mxu0
      %2449 = vdwg.mxu0
      %v2450 = vadd.f32 %v1723, %v2445
      %s2451 = scalar_lea.vmem %s9, 1
      %v2452 = vld [vmem:[%s2451] sm:$0x1]
      %v2453 = vmul.f32 %v2450, %v2450
      %v2454 = vsel %vm843, %v2453, 0.0
      %2455 = vadd.xlane.f32.xlu0 %v2454
      %v2456 = vpop.xlane.xlu0 %2455
      %v2457 = vmul.f32 %v2456, %v847
      %v2458 = vadd.f32 %v2457, 1e-06
      %v2459 = vrsqrt.pop %v2458
      %v2460 = vmul.f32 %v2450, %v2459
      %v2462 = vlaneseq
      %v2463 = vshrl.u32 %v2462, 7
      %v2464 = vsub.s32 0, %v2463
      %v2465 = vrot.slane %v2452, %v2464
      %v2467 = vmul.f32 %v2460, %v2465
      %s2468 = scalar_lea.vmem %s10, 16
      %v2469 = vld [vmem:[%s2468] sm:$0xf]
      %v2470 = vld [vmem:[%s2468 + $0x4] sm:$0xf]
      %v2471 = vld [vmem:[%s2468 + $0x8] sm:$0xf]
      %v2472 = vld [vmem:[%s2468 + $0xc] sm:$0xf]
      %s2473 = scalar_lea.vmem %s11, 32
      %v2474 = vld [vmem:[%s2473] sm:$0xf]
      %v2475 = vld [vmem:[%s2473 + $0x4] sm:$0xf]
      %v2476 = vld [vmem:[%s2473 + $0x8] sm:$0xf]
      %v2477 = vld [vmem:[%s2473 + $0xc] sm:$0xf]
      %v2478 = vld [vmem:[%s2473 + $0x10] sm:$0xf]
      %v2479 = vld [vmem:[%s2473 + $0x14] sm:$0xf]
      %v2480 = vld [vmem:[%s2473 + $0x18] sm:$0xf]
      %v2481 = vld [vmem:[%s2473 + $0x1c] sm:$0xf]
      %v2482 = vpack.c.bf16 %v2467, %v2467
      %v2487 = vunpack.c.l.b16 %v2469
      %v2488 = vunpack.c.l.b16 %v2470
      %v2489 = vunpack.c.l.b16 %v2471
      %v2490 = vunpack.c.l.b16 %v2472
      %v2491 = vpack.c.b16 %v2488, %v2487
      %v2492 = vpack.c.b16 %v2490, %v2489
      %v2496 = vsel %vm843, %v2482, 0
      %2498 = vmatprep.subr.bf16.mxu0 0
      %2499 = vmatpush1.bf16.msra.mxu0 %v2491
      %2500 = vmatprep.subr.bf16.mxu0 0
      %2501 = vmatpush1.bf16.msra.mxu0 %v2492
      %2502 = vmatprep.subr.bf16.mxu0 0
      %2503 = vmatpush1.bf16.msra.mxu0 0
      %2504 = vmatprep.subr.bf16.mxu0 0
      %2505 = vmatpush1.bf16.msra.mxu0 0
      %2506 = vmatprep.subr.bf16.mxu0 0
      %2507 = vmatpush1.bf16.msra.mxu0 0
      %2508 = vmatprep.subr.bf16.mxu0 0
      %2509 = vmatpush1.bf16.msra.mxu0 0
      %2510 = vmatprep.subr.bf16.mxu0 0
      %2511 = vmatpush1.bf16.msra.mxu0 0
      %2512 = vmatprep.subr.bf16.mxu0 0
      %2513 = vmatpush1.bf16.msra.mxu0 0
      %2514 = vmatprep.subr.bf16.mxu0 0
      %2515 = vmatpush1.bf16.msra.mxu0 0
      %2516 = vmatprep.subr.bf16.mxu0 0
      %2517 = vmatpush1.bf16.msra.mxu0 0
      %2518 = vmatprep.subr.bf16.mxu0 0
      %2519 = vmatpush1.bf16.msra.mxu0 0
      %2520 = vmatprep.subr.bf16.mxu0 0
      %2521 = vmatpush1.bf16.msra.mxu0 0
      %2522 = vmatprep.subr.bf16.mxu0 0
      %2523 = vmatpush1.bf16.msra.mxu0 0
      %2524 = vmatprep.subr.bf16.mxu0 0
      %2525 = vmatpush1.bf16.msra.mxu0 0
      %2526 = vmatprep.subr.bf16.mxu0 0
      %2527 = vmatpush1.bf16.msra.mxu0 0
      %2528 = vmatprep.subr.bf16.mxu0 0
      %2529 = vmatpush1.bf16.msra.mxu0 0
      %2530 = vmatprep.mubr.bf16.mxu0 0
      %2531 = vmatmul.mubr.bf16.gmra.mrb[0].mxu0 %v2496
      %v2532 = vpop.f32.mrb[0].mxu0
      %v2533 = vadd.f32 0.0, %v2532
      %v2534 = vpop.f32.mrb[0].mxu0
      %v2535 = vpop.f32.mrb[0].mxu0
      %v2536 = vpop.f32.mrb[0].mxu0
      %2537 = vdwg.mxu0
      %v2538 = vmax.f32 %v2533, 0.0
      %v2539 = vpack.c.bf16 %v2538, %v2538
      %v2548 = vunpack.c.l.b16 %v2474
      %v2549 = vunpack.c.l.b16 %v2475
      %v2550 = vunpack.c.l.b16 %v2476
      %v2551 = vunpack.c.l.b16 %v2477
      %v2552 = vunpack.c.l.b16 %v2478
      %v2553 = vunpack.c.l.b16 %v2479
      %v2554 = vunpack.c.l.b16 %v2480
      %v2555 = vunpack.c.l.b16 %v2481
      %v2556 = vpack.c.b16 %v2549, %v2548
      %v2557 = vpack.c.b16 %v2551, %v2550
      %v2558 = vpack.c.b16 %v2553, %v2552
      %v2559 = vpack.c.b16 %v2555, %v2554
      %v2565 = vsel %vm1679, %v2539, 0
      %2567 = vmatprep.subr.bf16.mxu0 0
      %2568 = vmatpush1.bf16.msra.mxu0 %v2556
      %2569 = vmatprep.subr.bf16.mxu0 0
      %2570 = vmatpush1.bf16.msra.mxu0 %v2557
      %2571 = vmatprep.subr.bf16.mxu0 0
      %2572 = vmatpush1.bf16.msra.mxu0 %v2558
      %2573 = vmatprep.subr.bf16.mxu0 0
      %2574 = vmatpush1.bf16.msra.mxu0 %v2559
      %2575 = vmatprep.subr.bf16.mxu0 0
      %2576 = vmatpush1.bf16.msra.mxu0 0
      %2577 = vmatprep.subr.bf16.mxu0 0
      %2578 = vmatpush1.bf16.msra.mxu0 0
      %2579 = vmatprep.subr.bf16.mxu0 0
      %2580 = vmatpush1.bf16.msra.mxu0 0
      %2581 = vmatprep.subr.bf16.mxu0 0
      %2582 = vmatpush1.bf16.msra.mxu0 0
      %2583 = vmatprep.subr.bf16.mxu0 0
      %2584 = vmatpush1.bf16.msra.mxu0 0
      %2585 = vmatprep.subr.bf16.mxu0 0
      %2586 = vmatpush1.bf16.msra.mxu0 0
      %2587 = vmatprep.subr.bf16.mxu0 0
      %2588 = vmatpush1.bf16.msra.mxu0 0
      %2589 = vmatprep.subr.bf16.mxu0 0
      %2590 = vmatpush1.bf16.msra.mxu0 0
      %2591 = vmatprep.subr.bf16.mxu0 0
      %2592 = vmatpush1.bf16.msra.mxu0 0
      %2593 = vmatprep.subr.bf16.mxu0 0
      %2594 = vmatpush1.bf16.msra.mxu0 0
      %2595 = vmatprep.subr.bf16.mxu0 0
      %2596 = vmatpush1.bf16.msra.mxu0 0
      %2597 = vmatprep.subr.bf16.mxu0 0
      %2598 = vmatpush1.bf16.msra.mxu0 0
      %2599 = vmatprep.mubr.bf16.mxu0 0
      %2600 = vmatmul.mubr.bf16.gmra.mrb[0].mxu0 %v2565
      %v2601 = vpop.f32.mrb[0].mxu0
      %v2602 = vadd.f32 0.0, %v2601
      %v2603 = vpop.f32.mrb[0].mxu0
      %v2604 = vpop.f32.mrb[0].mxu0
      %v2605 = vpop.f32.mrb[0].mxu0
      %2606 = vdwg.mxu0
      %v2607 = vadd.f32 %v2450, %v2602
      %v2608 = vld [vmem:[%s12] sm:$0x1]
      %v2609 = vmul.f32 %v2607, %v2607
      %v2610 = vsel %vm843, %v2609, 0.0
      %2611 = vadd.xlane.f32.xlu0 %v2610
      %v2612 = vpop.xlane.xlu0 %2611
      %v2613 = vmul.f32 %v2612, %v847
      %v2614 = vadd.f32 %v2613, 1e-06
      %v2615 = vrsqrt.pop %v2614
      %v2616 = vmul.f32 %v2607, %v2615
      %v2618 = vlaneseq
      %v2619 = vshrl.u32 %v2618, 7
      %v2620 = vsub.s32 0, %v2619
      %v2621 = vrot.slane %v2608, %v2620
      %v2623 = vmul.f32 %v2616, %v2621
      %v2624 = vld [vmem:[%s826] sm:$0xff]
      %v2625 = vld [vmem:[%s21] sm:$0x1]
      %v2626 = vmul.f32 %v2624, %v2624
      %v2627 = vsel %vm843, %v2626, 0.0
      %2628 = vadd.xlane.f32.xlu0 %v2627
      %v2629 = vpop.xlane.xlu0 %2628
      %v2630 = vmul.f32 %v2629, %v847
      %v2631 = vadd.f32 %v2630, 1e-06
      %v2632 = vrsqrt.pop %v2631
      %v2633 = vmul.f32 %v2624, %v2632
      %v2635 = vlaneseq
      %v2636 = vshrl.u32 %v2635, 7
      %v2637 = vsub.s32 0, %v2636
      %v2638 = vrot.slane %v2625, %v2637
      %v2640 = vmul.f32 %v2633, %v2638
      %v2641 = vld [vmem:[%s13] sm:$0xf]
      %v2642 = vld [vmem:[%s13 + $0x4] sm:$0xf]
      %v2643 = vld [vmem:[%s13 + $0x8] sm:$0xf]
      %v2644 = vld [vmem:[%s13 + $0xc] sm:$0xf]
      %v2645 = vld [vmem:[%s14] sm:$0xf]
      %v2646 = vld [vmem:[%s14 + $0x4] sm:$0xf]
      %v2647 = vld [vmem:[%s14 + $0x8] sm:$0xf]
      %v2648 = vld [vmem:[%s14 + $0xc] sm:$0xf]
      %v2649 = vld [vmem:[%s15] sm:$0xf]
      %v2650 = vld [vmem:[%s15 + $0x4] sm:$0xf]
      %v2651 = vld [vmem:[%s15 + $0x8] sm:$0xf]
      %v2652 = vld [vmem:[%s15 + $0xc] sm:$0xf]
      %v2653 = vld [vmem:[%s16] sm:$0xf]
      %v2654 = vld [vmem:[%s16 + $0x4] sm:$0xf]
      %v2655 = vld [vmem:[%s16 + $0x8] sm:$0xf]
      %v2656 = vld [vmem:[%s16 + $0xc] sm:$0xf]
      %v2657 = vpack.c.bf16 %v2640, %v2640
      %v2662 = vunpack.c.l.b16 %v2641
      %v2663 = vunpack.c.l.b16 %v2642
      %v2664 = vunpack.c.l.b16 %v2643
      %v2665 = vunpack.c.l.b16 %v2644
      %v2666 = vpack.c.b16 %v2663, %v2662
      %v2667 = vpack.c.b16 %v2665, %v2664
      %v2671 = vsel %vm843, %v2657, 0
      %2673 = vmatprep.subr.bf16.mxu0 0
      %2674 = vmatpush1.bf16.msra.mxu0 %v2666
      %2675 = vmatprep.subr.bf16.mxu0 0
      %2676 = vmatpush1.bf16.msra.mxu0 %v2667
      %2677 = vmatprep.subr.bf16.mxu0 0
      %2678 = vmatpush1.bf16.msra.mxu0 0
      %2679 = vmatprep.subr.bf16.mxu0 0
      %2680 = vmatpush1.bf16.msra.mxu0 0
      %2681 = vmatprep.subr.bf16.mxu0 0
      %2682 = vmatpush1.bf16.msra.mxu0 0
      %2683 = vmatprep.subr.bf16.mxu0 0
      %2684 = vmatpush1.bf16.msra.mxu0 0
      %2685 = vmatprep.subr.bf16.mxu0 0
      %2686 = vmatpush1.bf16.msra.mxu0 0
      %2687 = vmatprep.subr.bf16.mxu0 0
      %2688 = vmatpush1.bf16.msra.mxu0 0
      %2689 = vmatprep.subr.bf16.mxu0 0
      %2690 = vmatpush1.bf16.msra.mxu0 0
      %2691 = vmatprep.subr.bf16.mxu0 0
      %2692 = vmatpush1.bf16.msra.mxu0 0
      %2693 = vmatprep.subr.bf16.mxu0 0
      %2694 = vmatpush1.bf16.msra.mxu0 0
      %2695 = vmatprep.subr.bf16.mxu0 0
      %2696 = vmatpush1.bf16.msra.mxu0 0
      %2697 = vmatprep.subr.bf16.mxu0 0
      %2698 = vmatpush1.bf16.msra.mxu0 0
      %2699 = vmatprep.subr.bf16.mxu0 0
      %2700 = vmatpush1.bf16.msra.mxu0 0
      %2701 = vmatprep.subr.bf16.mxu0 0
      %2702 = vmatpush1.bf16.msra.mxu0 0
      %2703 = vmatprep.subr.bf16.mxu0 0
      %2704 = vmatpush1.bf16.msra.mxu0 0
      %2705 = vmatprep.mubr.bf16.mxu0 0
      %2706 = vmatmul.mubr.bf16.gmra.mrb[0].mxu0 %v2671
      %v2707 = vpop.f32.mrb[0].mxu0
      %v2708 = vadd.f32 0.0, %v2707
      %v2709 = vpop.f32.mrb[0].mxu0
      %v2710 = vpop.f32.mrb[0].mxu0
      %v2711 = vpop.f32.mrb[0].mxu0
      %2712 = vdwg.mxu0
      %v2717 = vunpack.c.l.b16 %v2645
      %v2718 = vunpack.c.l.b16 %v2646
      %v2719 = vunpack.c.l.b16 %v2647
      %v2720 = vunpack.c.l.b16 %v2648
      %v2721 = vpack.c.b16 %v2718, %v2717
      %v2722 = vpack.c.b16 %v2720, %v2719
      %2725 = vmatprep.subr.bf16.mxu0 0
      %2726 = vmatpush1.bf16.msra.mxu0 %v2721
      %2727 = vmatprep.subr.bf16.mxu0 0
      %2728 = vmatpush1.bf16.msra.mxu0 %v2722
      %2729 = vmatprep.subr.bf16.mxu0 0
      %2730 = vmatpush1.bf16.msra.mxu0 0
      %2731 = vmatprep.subr.bf16.mxu0 0
      %2732 = vmatpush1.bf16.msra.mxu0 0
      %2733 = vmatprep.subr.bf16.mxu0 0
      %2734 = vmatpush1.bf16.msra.mxu0 0
      %2735 = vmatprep.subr.bf16.mxu0 0
      %2736 = vmatpush1.bf16.msra.mxu0 0
      %2737 = vmatprep.subr.bf16.mxu0 0
      %2738 = vmatpush1.bf16.msra.mxu0 0
      %2739 = vmatprep.subr.bf16.mxu0 0
      %2740 = vmatpush1.bf16.msra.mxu0 0
      %2741 = vmatprep.subr.bf16.mxu0 0
      %2742 = vmatpush1.bf16.msra.mxu0 0
      %2743 = vmatprep.subr.bf16.mxu0 0
      %2744 = vmatpush1.bf16.msra.mxu0 0
      %2745 = vmatprep.subr.bf16.mxu0 0
      %2746 = vmatpush1.bf16.msra.mxu0 0
      %2747 = vmatprep.subr.bf16.mxu0 0
      %2748 = vmatpush1.bf16.msra.mxu0 0
      %2749 = vmatprep.subr.bf16.mxu0 0
      %2750 = vmatpush1.bf16.msra.mxu0 0
      %2751 = vmatprep.subr.bf16.mxu0 0
      %2752 = vmatpush1.bf16.msra.mxu0 0
      %2753 = vmatprep.subr.bf16.mxu0 0
      %2754 = vmatpush1.bf16.msra.mxu0 0
      %2755 = vmatprep.subr.bf16.mxu0 0
      %2756 = vmatpush1.bf16.msra.mxu0 0
      %2757 = vmatprep.mubr.bf16.mxu0 0
      %2758 = vmatmul.mubr.bf16.gmra.mrb[0].mxu0 %v2671
      %v2759 = vpop.f32.mrb[0].mxu0
      %v2760 = vadd.f32 0.0, %v2759
      %v2761 = vpop.f32.mrb[0].mxu0
      %v2762 = vpop.f32.mrb[0].mxu0
      %v2763 = vpop.f32.mrb[0].mxu0
      %2764 = vdwg.mxu0
      %v2769 = vunpack.c.l.b16 %v2649
      %v2770 = vunpack.c.l.b16 %v2650
      %v2771 = vunpack.c.l.b16 %v2651
      %v2772 = vunpack.c.l.b16 %v2652
      %v2773 = vpack.c.b16 %v2770, %v2769
      %v2774 = vpack.c.b16 %v2772, %v2771
      %2777 = vmatprep.subr.bf16.mxu0 0
      %2778 = vmatpush1.bf16.msra.mxu0 %v2773
      %2779 = vmatprep.subr.bf16.mxu0 0
      %2780 = vmatpush1.bf16.msra.mxu0 %v2774
      %2781 = vmatprep.subr.bf16.mxu0 0
      %2782 = vmatpush1.bf16.msra.mxu0 0
      %2783 = vmatprep.subr.bf16.mxu0 0
      %2784 = vmatpush1.bf16.msra.mxu0 0
      %2785 = vmatprep.subr.bf16.mxu0 0
      %2786 = vmatpush1.bf16.msra.mxu0 0
      %2787 = vmatprep.subr.bf16.mxu0 0
      %2788 = vmatpush1.bf16.msra.mxu0 0
      %2789 = vmatprep.subr.bf16.mxu0 0
      %2790 = vmatpush1.bf16.msra.mxu0 0
      %2791 = vmatprep.subr.bf16.mxu0 0
      %2792 = vmatpush1.bf16.msra.mxu0 0
      %2793 = vmatprep.subr.bf16.mxu0 0
      %2794 = vmatpush1.bf16.msra.mxu0 0
      %2795 = vmatprep.subr.bf16.mxu0 0
      %2796 = vmatpush1.bf16.msra.mxu0 0
      %2797 = vmatprep.subr.bf16.mxu0 0
      %2798 = vmatpush1.bf16.msra.mxu0 0
      %2799 = vmatprep.subr.bf16.mxu0 0
      %2800 = vmatpush1.bf16.msra.mxu0 0
      %2801 = vmatprep.subr.bf16.mxu0 0
      %2802 = vmatpush1.bf16.msra.mxu0 0
      %2803 = vmatprep.subr.bf16.mxu0 0
      %2804 = vmatpush1.bf16.msra.mxu0 0
      %2805 = vmatprep.subr.bf16.mxu0 0
      %2806 = vmatpush1.bf16.msra.mxu0 0
      %2807 = vmatprep.subr.bf16.mxu0 0
      %2808 = vmatpush1.bf16.msra.mxu0 0
      %2809 = vmatprep.mubr.bf16.mxu0 0
      %2810 = vmatmul.mubr.bf16.gmra.mrb[0].mxu0 %v2671
      %v2811 = vpop.f32.mrb[0].mxu0
      %v2812 = vadd.f32 0.0, %v2811
      %v2813 = vpop.f32.mrb[0].mxu0
      %v2814 = vpop.f32.mrb[0].mxu0
      %v2815 = vpop.f32.mrb[0].mxu0
      %2816 = vdwg.mxu0
      %2818 = vrot.lane.b32.xlu0 %v2708, 120
      %v2819 = vpop.permute.xlu0 %2818
      %2821 = vrot.lane.b32.xlu0 %v2708, 112
      %v2822 = vpop.permute.xlu0 %2821
      %2824 = vrot.lane.b32.xlu0 %v2708, 104
      %v2825 = vpop.permute.xlu0 %2824
      %2828 = vrot.lane.b32.xlu0 %v2760, 120
      %v2829 = vpop.permute.xlu0 %2828
      %2831 = vrot.lane.b32.xlu0 %v2760, 112
      %v2832 = vpop.permute.xlu0 %2831
      %2834 = vrot.lane.b32.xlu0 %v2760, 104
      %v2835 = vpop.permute.xlu0 %2834
      %2838 = vrot.lane.b32.xlu0 %v2812, 120
      %v2839 = vpop.permute.xlu0 %2838
      %2841 = vrot.lane.b32.xlu0 %v2812, 112
      %v2842 = vpop.permute.xlu0 %2841
      %2844 = vrot.lane.b32.xlu0 %v2812, 104
      %v2845 = vpop.permute.xlu0 %2844
      %v2847 = vpack.c.bf16 %v2708, %v2708
      %v2848 = vpack.c.bf16 %v2819, %v2819
      %v2849 = vpack.c.bf16 %v2822, %v2822
      %v2850 = vpack.c.bf16 %v2825, %v2825
      %v2851 = vpack.c.bf16 %v2760, %v2760
      %v2852 = vpack.c.bf16 %v2829, %v2829
      %v2853 = vpack.c.bf16 %v2832, %v2832
      %v2854 = vpack.c.bf16 %v2835, %v2835
      %v2856 = vsel %vm1073, %v2847, 0
      %v2859 = vsel %vm1073, %v2851, 0
      %2861 = vmatprep.subr.bf16.mxu0 0
      %2862 = vmatpush1.bf16.xpose.msra.mxu0 %v2859
      %2863 = vmatprep.subr.bf16.mxu0 0
      %2864 = vmatpush1.bf16.xpose.msra.mxu0 0
      %2865 = vmatprep.subr.bf16.mxu0 0
      %2866 = vmatpush1.bf16.xpose.msra.mxu0 0
      %2867 = vmatprep.subr.bf16.mxu0 0
      %2868 = vmatpush1.bf16.xpose.msra.mxu0 0
      %2869 = vmatprep.subr.bf16.mxu0 0
      %2870 = vmatpush1.bf16.xpose.msra.mxu0 0
      %2871 = vmatprep.subr.bf16.mxu0 0
      %2872 = vmatpush1.bf16.xpose.msra.mxu0 0
      %2873 = vmatprep.subr.bf16.mxu0 0
      %2874 = vmatpush1.bf16.xpose.msra.mxu0 0
      %2875 = vmatprep.subr.bf16.mxu0 0
      %2876 = vmatpush1.bf16.xpose.msra.mxu0 0
      %2877 = vmatprep.subr.bf16.mxu0 0
      %2878 = vmatpush1.bf16.xpose.msra.mxu0 0
      %2879 = vmatprep.subr.bf16.mxu0 0
      %2880 = vmatpush1.bf16.xpose.msra.mxu0 0
      %2881 = vmatprep.subr.bf16.mxu0 0
      %2882 = vmatpush1.bf16.xpose.msra.mxu0 0
      %2883 = vmatprep.subr.bf16.mxu0 0
      %2884 = vmatpush1.bf16.xpose.msra.mxu0 0
      %2885 = vmatprep.subr.bf16.mxu0 0
      %2886 = vmatpush1.bf16.xpose.msra.mxu0 0
      %2887 = vmatprep.subr.bf16.mxu0 0
      %2888 = vmatpush1.bf16.xpose.msra.mxu0 0
      %2889 = vmatprep.subr.bf16.mxu0 0
      %2890 = vmatpush1.bf16.xpose.msra.mxu0 0
      %2891 = vmatprep.subr.bf16.mxu0 0
      %2892 = vmatpush1.bf16.xpose.msra.mxu0 0
      %2893 = vmatprep.mubr.bf16.mxu0 0
      %2894 = vmatmul.mubr.bf16.gmra.mrb[0].mxu0 %v2856
      %v2895 = vpop.f32.mrb[0].mxu0
      %v2896 = vadd.f32 %v836, %v2895
      %v2897 = vpop.f32.mrb[0].mxu0
      %v2898 = vpop.f32.mrb[0].mxu0
      %v2899 = vpop.f32.mrb[0].mxu0
      %2900 = vdwg.mxu0
      %v2902 = vsel %vm1073, %v2848, 0
      %v2905 = vsel %vm1073, %v2852, 0
      %2907 = vmatprep.subr.bf16.mxu0 0
      %2908 = vmatpush1.bf16.xpose.msra.mxu0 %v2905
      %2909 = vmatprep.subr.bf16.mxu0 0
      %2910 = vmatpush1.bf16.xpose.msra.mxu0 0
      %2911 = vmatprep.subr.bf16.mxu0 0
      %2912 = vmatpush1.bf16.xpose.msra.mxu0 0
      %2913 = vmatprep.subr.bf16.mxu0 0
      %2914 = vmatpush1.bf16.xpose.msra.mxu0 0
      %2915 = vmatprep.subr.bf16.mxu0 0
      %2916 = vmatpush1.bf16.xpose.msra.mxu0 0
      %2917 = vmatprep.subr.bf16.mxu0 0
      %2918 = vmatpush1.bf16.xpose.msra.mxu0 0
      %2919 = vmatprep.subr.bf16.mxu0 0
      %2920 = vmatpush1.bf16.xpose.msra.mxu0 0
      %2921 = vmatprep.subr.bf16.mxu0 0
      %2922 = vmatpush1.bf16.xpose.msra.mxu0 0
      %2923 = vmatprep.subr.bf16.mxu0 0
      %2924 = vmatpush1.bf16.xpose.msra.mxu0 0
      %2925 = vmatprep.subr.bf16.mxu0 0
      %2926 = vmatpush1.bf16.xpose.msra.mxu0 0
      %2927 = vmatprep.subr.bf16.mxu0 0
      %2928 = vmatpush1.bf16.xpose.msra.mxu0 0
      %2929 = vmatprep.subr.bf16.mxu0 0
      %2930 = vmatpush1.bf16.xpose.msra.mxu0 0
      %2931 = vmatprep.subr.bf16.mxu0 0
      %2932 = vmatpush1.bf16.xpose.msra.mxu0 0
      %2933 = vmatprep.subr.bf16.mxu0 0
      %2934 = vmatpush1.bf16.xpose.msra.mxu0 0
      %2935 = vmatprep.subr.bf16.mxu0 0
      %2936 = vmatpush1.bf16.xpose.msra.mxu0 0
      %2937 = vmatprep.subr.bf16.mxu0 0
      %2938 = vmatpush1.bf16.xpose.msra.mxu0 0
      %2939 = vmatprep.mubr.bf16.mxu0 0
      %2940 = vmatmul.mubr.bf16.gmra.mrb[0].mxu0 %v2902
      %v2941 = vpop.f32.mrb[0].mxu0
      %v2942 = vadd.f32 %v837, %v2941
      %v2943 = vpop.f32.mrb[0].mxu0
      %v2944 = vpop.f32.mrb[0].mxu0
      %v2945 = vpop.f32.mrb[0].mxu0
      %2946 = vdwg.mxu0
      %v2948 = vsel %vm1073, %v2849, 0
      %v2951 = vsel %vm1073, %v2853, 0
      %2953 = vmatprep.subr.bf16.mxu0 0
      %2954 = vmatpush1.bf16.xpose.msra.mxu0 %v2951
      %2955 = vmatprep.subr.bf16.mxu0 0
      %2956 = vmatpush1.bf16.xpose.msra.mxu0 0
      %2957 = vmatprep.subr.bf16.mxu0 0
      %2958 = vmatpush1.bf16.xpose.msra.mxu0 0
      %2959 = vmatprep.subr.bf16.mxu0 0
      %2960 = vmatpush1.bf16.xpose.msra.mxu0 0
      %2961 = vmatprep.subr.bf16.mxu0 0
      %2962 = vmatpush1.bf16.xpose.msra.mxu0 0
      %2963 = vmatprep.subr.bf16.mxu0 0
      %2964 = vmatpush1.bf16.xpose.msra.mxu0 0
      %2965 = vmatprep.subr.bf16.mxu0 0
      %2966 = vmatpush1.bf16.xpose.msra.mxu0 0
      %2967 = vmatprep.subr.bf16.mxu0 0
      %2968 = vmatpush1.bf16.xpose.msra.mxu0 0
      %2969 = vmatprep.subr.bf16.mxu0 0
      %2970 = vmatpush1.bf16.xpose.msra.mxu0 0
      %2971 = vmatprep.subr.bf16.mxu0 0
      %2972 = vmatpush1.bf16.xpose.msra.mxu0 0
      %2973 = vmatprep.subr.bf16.mxu0 0
      %2974 = vmatpush1.bf16.xpose.msra.mxu0 0
      %2975 = vmatprep.subr.bf16.mxu0 0
      %2976 = vmatpush1.bf16.xpose.msra.mxu0 0
      %2977 = vmatprep.subr.bf16.mxu0 0
      %2978 = vmatpush1.bf16.xpose.msra.mxu0 0
      %2979 = vmatprep.subr.bf16.mxu0 0
      %2980 = vmatpush1.bf16.xpose.msra.mxu0 0
      %2981 = vmatprep.subr.bf16.mxu0 0
      %2982 = vmatpush1.bf16.xpose.msra.mxu0 0
      %2983 = vmatprep.subr.bf16.mxu0 0
      %2984 = vmatpush1.bf16.xpose.msra.mxu0 0
      %2985 = vmatprep.mubr.bf16.mxu0 0
      %2986 = vmatmul.mubr.bf16.gmra.mrb[0].mxu0 %v2948
      %v2987 = vpop.f32.mrb[0].mxu0
      %v2988 = vadd.f32 %v838, %v2987
      %v2989 = vpop.f32.mrb[0].mxu0
      %v2990 = vpop.f32.mrb[0].mxu0
      %v2991 = vpop.f32.mrb[0].mxu0
      %2992 = vdwg.mxu0
      %v2994 = vsel %vm1073, %v2850, 0
      %v2997 = vsel %vm1073, %v2854, 0
      %2999 = vmatprep.subr.bf16.mxu0 0
      %3000 = vmatpush1.bf16.xpose.msra.mxu0 %v2997
      %3001 = vmatprep.subr.bf16.mxu0 0
      %3002 = vmatpush1.bf16.xpose.msra.mxu0 0
      %3003 = vmatprep.subr.bf16.mxu0 0
      %3004 = vmatpush1.bf16.xpose.msra.mxu0 0
      %3005 = vmatprep.subr.bf16.mxu0 0
      %3006 = vmatpush1.bf16.xpose.msra.mxu0 0
      %3007 = vmatprep.subr.bf16.mxu0 0
      %3008 = vmatpush1.bf16.xpose.msra.mxu0 0
      %3009 = vmatprep.subr.bf16.mxu0 0
      %3010 = vmatpush1.bf16.xpose.msra.mxu0 0
      %3011 = vmatprep.subr.bf16.mxu0 0
      %3012 = vmatpush1.bf16.xpose.msra.mxu0 0
      %3013 = vmatprep.subr.bf16.mxu0 0
      %3014 = vmatpush1.bf16.xpose.msra.mxu0 0
      %3015 = vmatprep.subr.bf16.mxu0 0
      %3016 = vmatpush1.bf16.xpose.msra.mxu0 0
      %3017 = vmatprep.subr.bf16.mxu0 0
      %3018 = vmatpush1.bf16.xpose.msra.mxu0 0
      %3019 = vmatprep.subr.bf16.mxu0 0
      %3020 = vmatpush1.bf16.xpose.msra.mxu0 0
      %3021 = vmatprep.subr.bf16.mxu0 0
      %3022 = vmatpush1.bf16.xpose.msra.mxu0 0
      %3023 = vmatprep.subr.bf16.mxu0 0
      %3024 = vmatpush1.bf16.xpose.msra.mxu0 0
      %3025 = vmatprep.subr.bf16.mxu0 0
      %3026 = vmatpush1.bf16.xpose.msra.mxu0 0
      %3027 = vmatprep.subr.bf16.mxu0 0
      %3028 = vmatpush1.bf16.xpose.msra.mxu0 0
      %3029 = vmatprep.subr.bf16.mxu0 0
      %3030 = vmatpush1.bf16.xpose.msra.mxu0 0
      %3031 = vmatprep.mubr.bf16.mxu0 0
      %3032 = vmatmul.mubr.bf16.gmra.mrb[0].mxu0 %v2994
      %v3033 = vpop.f32.mrb[0].mxu0
      %v3034 = vadd.f32 %v839, %v3033
      %v3035 = vpop.f32.mrb[0].mxu0
      %v3036 = vpop.f32.mrb[0].mxu0
      %v3037 = vpop.f32.mrb[0].mxu0
      %3038 = vdwg.mxu0
      %v3039 = vsel %vm1073, %v2896, -inf
      %3040 = vmax.xlane.f32.xlu0 %v3039
      %v3041 = vpop.xlane.xlu0 %3040
      %v3042 = vsel %vm1073, %v2942, -inf
      %3043 = vmax.xlane.f32.xlu0 %v3042
      %v3044 = vpop.xlane.xlu0 %3043
      %v3045 = vsel %vm1073, %v2988, -inf
      %3046 = vmax.xlane.f32.xlu0 %v3045
      %v3047 = vpop.xlane.xlu0 %3046
      %v3048 = vsel %vm1073, %v3034, -inf
      %3049 = vmax.xlane.f32.xlu0 %v3048
      %v3050 = vpop.xlane.xlu0 %3049
      %v3051 = vsub.f32 %v2896, %v3041
      %v3052 = vsub.f32 %v2942, %v3044
      %v3053 = vsub.f32 %v2988, %v3047
      %v3054 = vsub.f32 %v3034, %v3050
      %v3055 = vmul.f32 %v3051, 1.442695
      %v3056 = vpow.pop %v3055
      %v3057 = vmul.f32 %v3052, 1.442695
      %v3058 = vpow.pop %v3057
      %v3059 = vmul.f32 %v3053, 1.442695
      %v3060 = vpow.pop %v3059
      %v3061 = vmul.f32 %v3054, 1.442695
      %v3062 = vpow.pop %v3061
      %v3063 = vsel %vm1073, %v3056, 0.0
      %3064 = vadd.xlane.f32.xlu0 %v3063
      %v3065 = vpop.xlane.xlu0 %3064
      %v3066 = vsel %vm1073, %v3058, 0.0
      %3067 = vadd.xlane.f32.xlu0 %v3066
      %v3068 = vpop.xlane.xlu0 %3067
      %v3069 = vsel %vm1073, %v3060, 0.0
      %3070 = vadd.xlane.f32.xlu0 %v3069
      %v3071 = vpop.xlane.xlu0 %3070
      %v3072 = vsel %vm1073, %v3062, 0.0
      %3073 = vadd.xlane.f32.xlu0 %v3072
      %v3074 = vpop.xlane.xlu0 %3073
      %v3075 = vpack.c.bf16 %v3056, %v3056
      %v3076 = vpack.c.bf16 %v3058, %v3058
      %v3077 = vpack.c.bf16 %v3060, %v3060
      %v3078 = vpack.c.bf16 %v3062, %v3062
      %v3079 = vpack.c.bf16 %v2812, %v2812
      %v3080 = vpack.c.bf16 %v2839, %v2839
      %v3081 = vpack.c.bf16 %v2842, %v2842
      %v3082 = vpack.c.bf16 %v2845, %v2845
      %v3084 = vsel %vm1073, %v3075, 0
      %v3087 = vsel %vm1305, %v3079, 0
      %3089 = vmatprep.subr.bf16.mxu0 0
      %3090 = vmatpush1.bf16.msra.mxu0 %v3087
      %3091 = vmatprep.subr.bf16.mxu0 0
      %3092 = vmatpush1.bf16.msra.mxu0 0
      %3093 = vmatprep.subr.bf16.mxu0 0
      %3094 = vmatpush1.bf16.msra.mxu0 0
      %3095 = vmatprep.subr.bf16.mxu0 0
      %3096 = vmatpush1.bf16.msra.mxu0 0
      %3097 = vmatprep.subr.bf16.mxu0 0
      %3098 = vmatpush1.bf16.msra.mxu0 0
      %3099 = vmatprep.subr.bf16.mxu0 0
      %3100 = vmatpush1.bf16.msra.mxu0 0
      %3101 = vmatprep.subr.bf16.mxu0 0
      %3102 = vmatpush1.bf16.msra.mxu0 0
      %3103 = vmatprep.subr.bf16.mxu0 0
      %3104 = vmatpush1.bf16.msra.mxu0 0
      %3105 = vmatprep.subr.bf16.mxu0 0
      %3106 = vmatpush1.bf16.msra.mxu0 0
      %3107 = vmatprep.subr.bf16.mxu0 0
      %3108 = vmatpush1.bf16.msra.mxu0 0
      %3109 = vmatprep.subr.bf16.mxu0 0
      %3110 = vmatpush1.bf16.msra.mxu0 0
      %3111 = vmatprep.subr.bf16.mxu0 0
      %3112 = vmatpush1.bf16.msra.mxu0 0
      %3113 = vmatprep.subr.bf16.mxu0 0
      %3114 = vmatpush1.bf16.msra.mxu0 0
      %3115 = vmatprep.subr.bf16.mxu0 0
      %3116 = vmatpush1.bf16.msra.mxu0 0
      %3117 = vmatprep.subr.bf16.mxu0 0
      %3118 = vmatpush1.bf16.msra.mxu0 0
      %3119 = vmatprep.subr.bf16.mxu0 0
      %3120 = vmatpush1.bf16.msra.mxu0 0
      %3121 = vmatprep.mubr.bf16.mxu0 0
      %3122 = vmatmul.mubr.bf16.gmra.mrb[0].mxu0 %v3084
      %v3123 = vpop.f32.mrb[0].mxu0
      %v3124 = vadd.f32 0.0, %v3123
      %v3125 = vpop.f32.mrb[0].mxu0
      %v3126 = vpop.f32.mrb[0].mxu0
      %v3127 = vpop.f32.mrb[0].mxu0
      %3128 = vdwg.mxu0
      %v3130 = vsel %vm1073, %v3076, 0
      %v3133 = vsel %vm1305, %v3080, 0
      %3135 = vmatprep.subr.bf16.mxu0 0
      %3136 = vmatpush1.bf16.msra.mxu0 %v3133
      %3137 = vmatprep.subr.bf16.mxu0 0
      %3138 = vmatpush1.bf16.msra.mxu0 0
      %3139 = vmatprep.subr.bf16.mxu0 0
      %3140 = vmatpush1.bf16.msra.mxu0 0
      %3141 = vmatprep.subr.bf16.mxu0 0
      %3142 = vmatpush1.bf16.msra.mxu0 0
      %3143 = vmatprep.subr.bf16.mxu0 0
      %3144 = vmatpush1.bf16.msra.mxu0 0
      %3145 = vmatprep.subr.bf16.mxu0 0
      %3146 = vmatpush1.bf16.msra.mxu0 0
      %3147 = vmatprep.subr.bf16.mxu0 0
      %3148 = vmatpush1.bf16.msra.mxu0 0
      %3149 = vmatprep.subr.bf16.mxu0 0
      %3150 = vmatpush1.bf16.msra.mxu0 0
      %3151 = vmatprep.subr.bf16.mxu0 0
      %3152 = vmatpush1.bf16.msra.mxu0 0
      %3153 = vmatprep.subr.bf16.mxu0 0
      %3154 = vmatpush1.bf16.msra.mxu0 0
      %3155 = vmatprep.subr.bf16.mxu0 0
      %3156 = vmatpush1.bf16.msra.mxu0 0
      %3157 = vmatprep.subr.bf16.mxu0 0
      %3158 = vmatpush1.bf16.msra.mxu0 0
      %3159 = vmatprep.subr.bf16.mxu0 0
      %3160 = vmatpush1.bf16.msra.mxu0 0
      %3161 = vmatprep.subr.bf16.mxu0 0
      %3162 = vmatpush1.bf16.msra.mxu0 0
      %3163 = vmatprep.subr.bf16.mxu0 0
      %3164 = vmatpush1.bf16.msra.mxu0 0
      %3165 = vmatprep.subr.bf16.mxu0 0
      %3166 = vmatpush1.bf16.msra.mxu0 0
      %3167 = vmatprep.mubr.bf16.mxu0 0
      %3168 = vmatmul.mubr.bf16.gmra.mrb[0].mxu0 %v3130
      %v3169 = vpop.f32.mrb[0].mxu0
      %v3170 = vadd.f32 0.0, %v3169
      %v3171 = vpop.f32.mrb[0].mxu0
      %v3172 = vpop.f32.mrb[0].mxu0
      %v3173 = vpop.f32.mrb[0].mxu0
      %3174 = vdwg.mxu0
      %v3176 = vsel %vm1073, %v3077, 0
      %v3179 = vsel %vm1305, %v3081, 0
      %3181 = vmatprep.subr.bf16.mxu0 0
      %3182 = vmatpush1.bf16.msra.mxu0 %v3179
      %3183 = vmatprep.subr.bf16.mxu0 0
      %3184 = vmatpush1.bf16.msra.mxu0 0
      %3185 = vmatprep.subr.bf16.mxu0 0
      %3186 = vmatpush1.bf16.msra.mxu0 0
      %3187 = vmatprep.subr.bf16.mxu0 0
      %3188 = vmatpush1.bf16.msra.mxu0 0
      %3189 = vmatprep.subr.bf16.mxu0 0
      %3190 = vmatpush1.bf16.msra.mxu0 0
      %3191 = vmatprep.subr.bf16.mxu0 0
      %3192 = vmatpush1.bf16.msra.mxu0 0
      %3193 = vmatprep.subr.bf16.mxu0 0
      %3194 = vmatpush1.bf16.msra.mxu0 0
      %3195 = vmatprep.subr.bf16.mxu0 0
      %3196 = vmatpush1.bf16.msra.mxu0 0
      %3197 = vmatprep.subr.bf16.mxu0 0
      %3198 = vmatpush1.bf16.msra.mxu0 0
      %3199 = vmatprep.subr.bf16.mxu0 0
      %3200 = vmatpush1.bf16.msra.mxu0 0
      %3201 = vmatprep.subr.bf16.mxu0 0
      %3202 = vmatpush1.bf16.msra.mxu0 0
      %3203 = vmatprep.subr.bf16.mxu0 0
      %3204 = vmatpush1.bf16.msra.mxu0 0
      %3205 = vmatprep.subr.bf16.mxu0 0
      %3206 = vmatpush1.bf16.msra.mxu0 0
      %3207 = vmatprep.subr.bf16.mxu0 0
      %3208 = vmatpush1.bf16.msra.mxu0 0
      %3209 = vmatprep.subr.bf16.mxu0 0
      %3210 = vmatpush1.bf16.msra.mxu0 0
      %3211 = vmatprep.subr.bf16.mxu0 0
      %3212 = vmatpush1.bf16.msra.mxu0 0
      %3213 = vmatprep.mubr.bf16.mxu0 0
      %3214 = vmatmul.mubr.bf16.gmra.mrb[0].mxu0 %v3176
      %v3215 = vpop.f32.mrb[0].mxu0
      %v3216 = vadd.f32 0.0, %v3215
      %v3217 = vpop.f32.mrb[0].mxu0
      %v3218 = vpop.f32.mrb[0].mxu0
      %v3219 = vpop.f32.mrb[0].mxu0
      %3220 = vdwg.mxu0
      %v3222 = vsel %vm1073, %v3078, 0
      %v3225 = vsel %vm1305, %v3082, 0
      %3227 = vmatprep.subr.bf16.mxu0 0
      %3228 = vmatpush1.bf16.msra.mxu0 %v3225
      %3229 = vmatprep.subr.bf16.mxu0 0
      %3230 = vmatpush1.bf16.msra.mxu0 0
      %3231 = vmatprep.subr.bf16.mxu0 0
      %3232 = vmatpush1.bf16.msra.mxu0 0
      %3233 = vmatprep.subr.bf16.mxu0 0
      %3234 = vmatpush1.bf16.msra.mxu0 0
      %3235 = vmatprep.subr.bf16.mxu0 0
      %3236 = vmatpush1.bf16.msra.mxu0 0
      %3237 = vmatprep.subr.bf16.mxu0 0
      %3238 = vmatpush1.bf16.msra.mxu0 0
      %3239 = vmatprep.subr.bf16.mxu0 0
      %3240 = vmatpush1.bf16.msra.mxu0 0
      %3241 = vmatprep.subr.bf16.mxu0 0
      %3242 = vmatpush1.bf16.msra.mxu0 0
      %3243 = vmatprep.subr.bf16.mxu0 0
      %3244 = vmatpush1.bf16.msra.mxu0 0
      %3245 = vmatprep.subr.bf16.mxu0 0
      %3246 = vmatpush1.bf16.msra.mxu0 0
      %3247 = vmatprep.subr.bf16.mxu0 0
      %3248 = vmatpush1.bf16.msra.mxu0 0
      %3249 = vmatprep.subr.bf16.mxu0 0
      %3250 = vmatpush1.bf16.msra.mxu0 0
      %3251 = vmatprep.subr.bf16.mxu0 0
      %3252 = vmatpush1.bf16.msra.mxu0 0
      %3253 = vmatprep.subr.bf16.mxu0 0
      %3254 = vmatpush1.bf16.msra.mxu0 0
      %3255 = vmatprep.subr.bf16.mxu0 0
      %3256 = vmatpush1.bf16.msra.mxu0 0
      %3257 = vmatprep.subr.bf16.mxu0 0
      %3258 = vmatpush1.bf16.msra.mxu0 0
      %3259 = vmatprep.mubr.bf16.mxu0 0
      %3260 = vmatmul.mubr.bf16.gmra.mrb[0].mxu0 %v3222
      %v3261 = vpop.f32.mrb[0].mxu0
      %v3262 = vadd.f32 0.0, %v3261
      %v3263 = vpop.f32.mrb[0].mxu0
      %v3264 = vpop.f32.mrb[0].mxu0
      %v3265 = vpop.f32.mrb[0].mxu0
      %3266 = vdwg.mxu0
      %v3267 = vrcp.pop %v3065
      %v3268 = vrcp.pop %v3068
      %v3269 = vrcp.pop %v3071
      %v3270 = vrcp.pop %v3074
      %v3271 = vmul.f32 %v3124, %v3267
      %v3272 = vmul.f32 %v3170, %v3268
      %v3273 = vmul.f32 %v3216, %v3269
      %v3274 = vmul.f32 %v3262, %v3270
      %3276 = vrot.lane.b32.xlu0 %v3272, 8
      %v3277 = vpop.permute.xlu0 %3276
      %3280 = vrot.lane.b32.xlu0 %v3273, 16
      %v3281 = vpop.permute.xlu0 %3280
      %3284 = vrot.lane.b32.xlu0 %v3274, 24
      %v3285 = vpop.permute.xlu0 %3284
      %v3287 = vsel %vm1073, %v3271, %v3277
      %v3288 = vsel %vm1508, %v3287, %v3281
      %v3289 = vsel %vm1510, %v3288, %v3285
      %v3290 = vpack.c.bf16 %v3289, %v3289
      %v3295 = vunpack.c.l.b16 %v2653
      %v3296 = vunpack.c.l.b16 %v2654
      %v3297 = vunpack.c.l.b16 %v2655
      %v3298 = vunpack.c.l.b16 %v2656
      %v3299 = vpack.c.b16 %v3296, %v3295
      %v3300 = vpack.c.b16 %v3298, %v3297
      %v3304 = vsel %vm843, %v3290, 0
      %3306 = vmatprep.subr.bf16.mxu0 0
      %3307 = vmatpush1.bf16.msra.mxu0 %v3299
      %3308 = vmatprep.subr.bf16.mxu0 0
      %3309 = vmatpush1.bf16.msra.mxu0 %v3300
      %3310 = vmatprep.subr.bf16.mxu0 0
      %3311 = vmatpush1.bf16.msra.mxu0 0
      %3312 = vmatprep.subr.bf16.mxu0 0
      %3313 = vmatpush1.bf16.msra.mxu0 0
      %3314 = vmatprep.subr.bf16.mxu0 0
      %3315 = vmatpush1.bf16.msra.mxu0 0
      %3316 = vmatprep.subr.bf16.mxu0 0
      %3317 = vmatpush1.bf16.msra.mxu0 0
      %3318 = vmatprep.subr.bf16.mxu0 0
      %3319 = vmatpush1.bf16.msra.mxu0 0
      %3320 = vmatprep.subr.bf16.mxu0 0
      %3321 = vmatpush1.bf16.msra.mxu0 0
      %3322 = vmatprep.subr.bf16.mxu0 0
      %3323 = vmatpush1.bf16.msra.mxu0 0
      %3324 = vmatprep.subr.bf16.mxu0 0
      %3325 = vmatpush1.bf16.msra.mxu0 0
      %3326 = vmatprep.subr.bf16.mxu0 0
      %3327 = vmatpush1.bf16.msra.mxu0 0
      %3328 = vmatprep.subr.bf16.mxu0 0
      %3329 = vmatpush1.bf16.msra.mxu0 0
      %3330 = vmatprep.subr.bf16.mxu0 0
      %3331 = vmatpush1.bf16.msra.mxu0 0
      %3332 = vmatprep.subr.bf16.mxu0 0
      %3333 = vmatpush1.bf16.msra.mxu0 0
      %3334 = vmatprep.subr.bf16.mxu0 0
      %3335 = vmatpush1.bf16.msra.mxu0 0
      %3336 = vmatprep.subr.bf16.mxu0 0
      %3337 = vmatpush1.bf16.msra.mxu0 0
      %3338 = vmatprep.mubr.bf16.mxu0 0
      %3339 = vmatmul.mubr.bf16.gmra.mrb[0].mxu0 %v3304
      %v3340 = vpop.f32.mrb[0].mxu0
      %v3341 = vadd.f32 0.0, %v3340
      %v3342 = vpop.f32.mrb[0].mxu0
      %v3343 = vpop.f32.mrb[0].mxu0
      %v3344 = vpop.f32.mrb[0].mxu0
      %3345 = vdwg.mxu0
      %v3346 = vadd.f32 %v2624, %v3341
      %v3347 = vld [vmem:[%s22] sm:$0x1]
      %v3348 = vmul.f32 %v3346, %v3346
      %v3349 = vsel %vm843, %v3348, 0.0
      %3350 = vadd.xlane.f32.xlu0 %v3349
      %v3351 = vpop.xlane.xlu0 %3350
      %v3352 = vmul.f32 %v3351, %v847
      %v3353 = vadd.f32 %v3352, 1e-06
      %v3354 = vrsqrt.pop %v3353
      %v3355 = vmul.f32 %v3346, %v3354
      %v3357 = vlaneseq
      %v3358 = vshrl.u32 %v3357, 7
      %v3359 = vsub.s32 0, %v3358
      %v3360 = vrot.slane %v3347, %v3359
      %v3362 = vmul.f32 %v3355, %v3360
      %v3363 = vld [vmem:[%s17] sm:$0xf]
      %v3364 = vld [vmem:[%s17 + $0x4] sm:$0xf]
      %v3365 = vld [vmem:[%s17 + $0x8] sm:$0xf]
      %v3366 = vld [vmem:[%s17 + $0xc] sm:$0xf]
      %v3367 = vld [vmem:[%s18] sm:$0xf]
      %v3368 = vld [vmem:[%s18 + $0x4] sm:$0xf]
      %v3369 = vld [vmem:[%s18 + $0x8] sm:$0xf]
      %v3370 = vld [vmem:[%s18 + $0xc] sm:$0xf]
      %v3371 = vld [vmem:[%s19] sm:$0xf]
      %v3372 = vld [vmem:[%s19 + $0x4] sm:$0xf]
      %v3373 = vld [vmem:[%s19 + $0x8] sm:$0xf]
      %v3374 = vld [vmem:[%s19 + $0xc] sm:$0xf]
      %v3375 = vld [vmem:[%s20] sm:$0xf]
      %v3376 = vld [vmem:[%s20 + $0x4] sm:$0xf]
      %v3377 = vld [vmem:[%s20 + $0x8] sm:$0xf]
      %v3378 = vld [vmem:[%s20 + $0xc] sm:$0xf]
      %v3379 = vpack.c.bf16 %v3362, %v3362
      %v3384 = vunpack.c.l.b16 %v3363
      %v3385 = vunpack.c.l.b16 %v3364
      %v3386 = vunpack.c.l.b16 %v3365
      %v3387 = vunpack.c.l.b16 %v3366
      %v3388 = vpack.c.b16 %v3385, %v3384
      %v3389 = vpack.c.b16 %v3387, %v3386
      %v3393 = vsel %vm843, %v3379, 0
      %3395 = vmatprep.subr.bf16.mxu0 0
      %3396 = vmatpush1.bf16.msra.mxu0 %v3388
      %3397 = vmatprep.subr.bf16.mxu0 0
      %3398 = vmatpush1.bf16.msra.mxu0 %v3389
      %3399 = vmatprep.subr.bf16.mxu0 0
      %3400 = vmatpush1.bf16.msra.mxu0 0
      %3401 = vmatprep.subr.bf16.mxu0 0
      %3402 = vmatpush1.bf16.msra.mxu0 0
      %3403 = vmatprep.subr.bf16.mxu0 0
      %3404 = vmatpush1.bf16.msra.mxu0 0
      %3405 = vmatprep.subr.bf16.mxu0 0
      %3406 = vmatpush1.bf16.msra.mxu0 0
      %3407 = vmatprep.subr.bf16.mxu0 0
      %3408 = vmatpush1.bf16.msra.mxu0 0
      %3409 = vmatprep.subr.bf16.mxu0 0
      %3410 = vmatpush1.bf16.msra.mxu0 0
      %3411 = vmatprep.subr.bf16.mxu0 0
      %3412 = vmatpush1.bf16.msra.mxu0 0
      %3413 = vmatprep.subr.bf16.mxu0 0
      %3414 = vmatpush1.bf16.msra.mxu0 0
      %3415 = vmatprep.subr.bf16.mxu0 0
      %3416 = vmatpush1.bf16.msra.mxu0 0
      %3417 = vmatprep.subr.bf16.mxu0 0
      %3418 = vmatpush1.bf16.msra.mxu0 0
      %3419 = vmatprep.subr.bf16.mxu0 0
      %3420 = vmatpush1.bf16.msra.mxu0 0
      %3421 = vmatprep.subr.bf16.mxu0 0
      %3422 = vmatpush1.bf16.msra.mxu0 0
      %3423 = vmatprep.subr.bf16.mxu0 0
      %3424 = vmatpush1.bf16.msra.mxu0 0
      %3425 = vmatprep.subr.bf16.mxu0 0
      %3426 = vmatpush1.bf16.msra.mxu0 0
      %3427 = vmatprep.mubr.bf16.mxu0 0
      %3428 = vmatmul.mubr.bf16.gmra.mrb[0].mxu0 %v3393
      %v3429 = vpop.f32.mrb[0].mxu0
      %v3430 = vadd.f32 0.0, %v3429
      %v3431 = vpop.f32.mrb[0].mxu0
      %v3432 = vpop.f32.mrb[0].mxu0
      %v3433 = vpop.f32.mrb[0].mxu0
      %3434 = vdwg.mxu0
      %v3435 = vpack.c.bf16 %v2623, %v2623
      %v3440 = vunpack.c.l.b16 %v3367
      %v3441 = vunpack.c.l.b16 %v3368
      %v3442 = vunpack.c.l.b16 %v3369
      %v3443 = vunpack.c.l.b16 %v3370
      %v3444 = vpack.c.b16 %v3441, %v3440
      %v3445 = vpack.c.b16 %v3443, %v3442
      %v3449 = vsel %vm843, %v3435, 0
      %3451 = vmatprep.subr.bf16.mxu0 0
      %3452 = vmatpush1.bf16.msra.mxu0 %v3444
      %3453 = vmatprep.subr.bf16.mxu0 0
      %3454 = vmatpush1.bf16.msra.mxu0 %v3445
      %3455 = vmatprep.subr.bf16.mxu0 0
      %3456 = vmatpush1.bf16.msra.mxu0 0
      %3457 = vmatprep.subr.bf16.mxu0 0
      %3458 = vmatpush1.bf16.msra.mxu0 0
      %3459 = vmatprep.subr.bf16.mxu0 0
      %3460 = vmatpush1.bf16.msra.mxu0 0
      %3461 = vmatprep.subr.bf16.mxu0 0
      %3462 = vmatpush1.bf16.msra.mxu0 0
      %3463 = vmatprep.subr.bf16.mxu0 0
      %3464 = vmatpush1.bf16.msra.mxu0 0
      %3465 = vmatprep.subr.bf16.mxu0 0
      %3466 = vmatpush1.bf16.msra.mxu0 0
      %3467 = vmatprep.subr.bf16.mxu0 0
      %3468 = vmatpush1.bf16.msra.mxu0 0
      %3469 = vmatprep.subr.bf16.mxu0 0
      %3470 = vmatpush1.bf16.msra.mxu0 0
      %3471 = vmatprep.subr.bf16.mxu0 0
      %3472 = vmatpush1.bf16.msra.mxu0 0
      %3473 = vmatprep.subr.bf16.mxu0 0
      %3474 = vmatpush1.bf16.msra.mxu0 0
      %3475 = vmatprep.subr.bf16.mxu0 0
      %3476 = vmatpush1.bf16.msra.mxu0 0
      %3477 = vmatprep.subr.bf16.mxu0 0
      %3478 = vmatpush1.bf16.msra.mxu0 0
      %3479 = vmatprep.subr.bf16.mxu0 0
      %3480 = vmatpush1.bf16.msra.mxu0 0
      %3481 = vmatprep.subr.bf16.mxu0 0
      %3482 = vmatpush1.bf16.msra.mxu0 0
      %3483 = vmatprep.mubr.bf16.mxu0 0
      %3484 = vmatmul.mubr.bf16.gmra.mrb[0].mxu0 %v3449
      %v3485 = vpop.f32.mrb[0].mxu0
      %v3486 = vadd.f32 0.0, %v3485
      %v3487 = vpop.f32.mrb[0].mxu0
      %v3488 = vpop.f32.mrb[0].mxu0
      %v3489 = vpop.f32.mrb[0].mxu0
      %3490 = vdwg.mxu0
      %v3495 = vunpack.c.l.b16 %v3371
      %v3496 = vunpack.c.l.b16 %v3372
      %v3497 = vunpack.c.l.b16 %v3373
      %v3498 = vunpack.c.l.b16 %v3374
      %v3499 = vpack.c.b16 %v3496, %v3495
      %v3500 = vpack.c.b16 %v3498, %v3497
      %3503 = vmatprep.subr.bf16.mxu0 0
      %3504 = vmatpush1.bf16.msra.mxu0 %v3499
      %3505 = vmatprep.subr.bf16.mxu0 0
      %3506 = vmatpush1.bf16.msra.mxu0 %v3500
      %3507 = vmatprep.subr.bf16.mxu0 0
      %3508 = vmatpush1.bf16.msra.mxu0 0
      %3509 = vmatprep.subr.bf16.mxu0 0
      %3510 = vmatpush1.bf16.msra.mxu0 0
      %3511 = vmatprep.subr.bf16.mxu0 0
      %3512 = vmatpush1.bf16.msra.mxu0 0
      %3513 = vmatprep.subr.bf16.mxu0 0
      %3514 = vmatpush1.bf16.msra.mxu0 0
      %3515 = vmatprep.subr.bf16.mxu0 0
      %3516 = vmatpush1.bf16.msra.mxu0 0
      %3517 = vmatprep.subr.bf16.mxu0 0
      %3518 = vmatpush1.bf16.msra.mxu0 0
      %3519 = vmatprep.subr.bf16.mxu0 0
      %3520 = vmatpush1.bf16.msra.mxu0 0
      %3521 = vmatprep.subr.bf16.mxu0 0
      %3522 = vmatpush1.bf16.msra.mxu0 0
      %3523 = vmatprep.subr.bf16.mxu0 0
      %3524 = vmatpush1.bf16.msra.mxu0 0
      %3525 = vmatprep.subr.bf16.mxu0 0
      %3526 = vmatpush1.bf16.msra.mxu0 0
      %3527 = vmatprep.subr.bf16.mxu0 0
      %3528 = vmatpush1.bf16.msra.mxu0 0
      %3529 = vmatprep.subr.bf16.mxu0 0
      %3530 = vmatpush1.bf16.msra.mxu0 0
      %3531 = vmatprep.subr.bf16.mxu0 0
      %3532 = vmatpush1.bf16.msra.mxu0 0
      %3533 = vmatprep.subr.bf16.mxu0 0
      %3534 = vmatpush1.bf16.msra.mxu0 0
      %3535 = vmatprep.mubr.bf16.mxu0 0
      %3536 = vmatmul.mubr.bf16.gmra.mrb[0].mxu0 %v3449
      %v3537 = vpop.f32.mrb[0].mxu0
      %v3538 = vadd.f32 0.0, %v3537
      %v3539 = vpop.f32.mrb[0].mxu0
      %v3540 = vpop.f32.mrb[0].mxu0
      %v3541 = vpop.f32.mrb[0].mxu0
      %3542 = vdwg.mxu0
      %3544 = vrot.lane.b32.xlu0 %v3430, 120
      %v3545 = vpop.permute.xlu0 %3544
      %3547 = vrot.lane.b32.xlu0 %v3430, 112
      %v3548 = vpop.permute.xlu0 %3547
      %3550 = vrot.lane.b32.xlu0 %v3430, 104
      %v3551 = vpop.permute.xlu0 %3550
      %3554 = vrot.lane.b32.xlu0 %v3486, 120
      %v3555 = vpop.permute.xlu0 %3554
      %3557 = vrot.lane.b32.xlu0 %v3486, 112
      %v3558 = vpop.permute.xlu0 %3557
      %3560 = vrot.lane.b32.xlu0 %v3486, 104
      %v3561 = vpop.permute.xlu0 %3560
      %3564 = vrot.lane.b32.xlu0 %v3538, 120
      %v3565 = vpop.permute.xlu0 %3564
      %3567 = vrot.lane.b32.xlu0 %v3538, 112
      %v3568 = vpop.permute.xlu0 %3567
      %3570 = vrot.lane.b32.xlu0 %v3538, 104
      %v3571 = vpop.permute.xlu0 %3570
      %v3573 = vpack.c.bf16 %v3430, %v3430
      %v3574 = vpack.c.bf16 %v3545, %v3545
      %v3575 = vpack.c.bf16 %v3548, %v3548
      %v3576 = vpack.c.bf16 %v3551, %v3551
      %v3577 = vpack.c.bf16 %v3486, %v3486
      %v3578 = vpack.c.bf16 %v3555, %v3555
      %v3579 = vpack.c.bf16 %v3558, %v3558
      %v3580 = vpack.c.bf16 %v3561, %v3561
      %v3582 = vsel %vm1073, %v3573, 0
      %v3585 = vsel %vm1073, %v3577, 0
      %3587 = vmatprep.subr.bf16.mxu0 0
      %3588 = vmatpush1.bf16.xpose.msra.mxu0 %v3585
      %3589 = vmatprep.subr.bf16.mxu0 0
      %3590 = vmatpush1.bf16.xpose.msra.mxu0 0
      %3591 = vmatprep.subr.bf16.mxu0 0
      %3592 = vmatpush1.bf16.xpose.msra.mxu0 0
      %3593 = vmatprep.subr.bf16.mxu0 0
      %3594 = vmatpush1.bf16.xpose.msra.mxu0 0
      %3595 = vmatprep.subr.bf16.mxu0 0
      %3596 = vmatpush1.bf16.xpose.msra.mxu0 0
      %3597 = vmatprep.subr.bf16.mxu0 0
      %3598 = vmatpush1.bf16.xpose.msra.mxu0 0
      %3599 = vmatprep.subr.bf16.mxu0 0
      %3600 = vmatpush1.bf16.xpose.msra.mxu0 0
      %3601 = vmatprep.subr.bf16.mxu0 0
      %3602 = vmatpush1.bf16.xpose.msra.mxu0 0
      %3603 = vmatprep.subr.bf16.mxu0 0
      %3604 = vmatpush1.bf16.xpose.msra.mxu0 0
      %3605 = vmatprep.subr.bf16.mxu0 0
      %3606 = vmatpush1.bf16.xpose.msra.mxu0 0
      %3607 = vmatprep.subr.bf16.mxu0 0
      %3608 = vmatpush1.bf16.xpose.msra.mxu0 0
      %3609 = vmatprep.subr.bf16.mxu0 0
      %3610 = vmatpush1.bf16.xpose.msra.mxu0 0
      %3611 = vmatprep.subr.bf16.mxu0 0
      %3612 = vmatpush1.bf16.xpose.msra.mxu0 0
      %3613 = vmatprep.subr.bf16.mxu0 0
      %3614 = vmatpush1.bf16.xpose.msra.mxu0 0
      %3615 = vmatprep.subr.bf16.mxu0 0
      %3616 = vmatpush1.bf16.xpose.msra.mxu0 0
      %3617 = vmatprep.subr.bf16.mxu0 0
      %3618 = vmatpush1.bf16.xpose.msra.mxu0 0
      %3619 = vmatprep.mubr.bf16.mxu0 0
      %3620 = vmatmul.mubr.bf16.gmra.mrb[0].mxu0 %v3582
      %v3621 = vpop.f32.mrb[0].mxu0
      %v3622 = vadd.f32 0.0, %v3621
      %v3623 = vpop.f32.mrb[0].mxu0
      %v3624 = vpop.f32.mrb[0].mxu0
      %v3625 = vpop.f32.mrb[0].mxu0
      %3626 = vdwg.mxu0
      %v3628 = vsel %vm1073, %v3574, 0
      %v3631 = vsel %vm1073, %v3578, 0
      %3633 = vmatprep.subr.bf16.mxu0 0
      %3634 = vmatpush1.bf16.xpose.msra.mxu0 %v3631
      %3635 = vmatprep.subr.bf16.mxu0 0
      %3636 = vmatpush1.bf16.xpose.msra.mxu0 0
      %3637 = vmatprep.subr.bf16.mxu0 0
      %3638 = vmatpush1.bf16.xpose.msra.mxu0 0
      %3639 = vmatprep.subr.bf16.mxu0 0
      %3640 = vmatpush1.bf16.xpose.msra.mxu0 0
      %3641 = vmatprep.subr.bf16.mxu0 0
      %3642 = vmatpush1.bf16.xpose.msra.mxu0 0
      %3643 = vmatprep.subr.bf16.mxu0 0
      %3644 = vmatpush1.bf16.xpose.msra.mxu0 0
      %3645 = vmatprep.subr.bf16.mxu0 0
      %3646 = vmatpush1.bf16.xpose.msra.mxu0 0
      %3647 = vmatprep.subr.bf16.mxu0 0
      %3648 = vmatpush1.bf16.xpose.msra.mxu0 0
      %3649 = vmatprep.subr.bf16.mxu0 0
      %3650 = vmatpush1.bf16.xpose.msra.mxu0 0
      %3651 = vmatprep.subr.bf16.mxu0 0
      %3652 = vmatpush1.bf16.xpose.msra.mxu0 0
      %3653 = vmatprep.subr.bf16.mxu0 0
      %3654 = vmatpush1.bf16.xpose.msra.mxu0 0
      %3655 = vmatprep.subr.bf16.mxu0 0
      %3656 = vmatpush1.bf16.xpose.msra.mxu0 0
      %3657 = vmatprep.subr.bf16.mxu0 0
      %3658 = vmatpush1.bf16.xpose.msra.mxu0 0
      %3659 = vmatprep.subr.bf16.mxu0 0
      %3660 = vmatpush1.bf16.xpose.msra.mxu0 0
      %3661 = vmatprep.subr.bf16.mxu0 0
      %3662 = vmatpush1.bf16.xpose.msra.mxu0 0
      %3663 = vmatprep.subr.bf16.mxu0 0
      %3664 = vmatpush1.bf16.xpose.msra.mxu0 0
      %3665 = vmatprep.mubr.bf16.mxu0 0
      %3666 = vmatmul.mubr.bf16.gmra.mrb[0].mxu0 %v3628
      %v3667 = vpop.f32.mrb[0].mxu0
      %v3668 = vadd.f32 0.0, %v3667
      %v3669 = vpop.f32.mrb[0].mxu0
      %v3670 = vpop.f32.mrb[0].mxu0
      %v3671 = vpop.f32.mrb[0].mxu0
      %3672 = vdwg.mxu0
      %v3674 = vsel %vm1073, %v3575, 0
      %v3677 = vsel %vm1073, %v3579, 0
      %3679 = vmatprep.subr.bf16.mxu0 0
      %3680 = vmatpush1.bf16.xpose.msra.mxu0 %v3677
      %3681 = vmatprep.subr.bf16.mxu0 0
      %3682 = vmatpush1.bf16.xpose.msra.mxu0 0
      %3683 = vmatprep.subr.bf16.mxu0 0
      %3684 = vmatpush1.bf16.xpose.msra.mxu0 0
      %3685 = vmatprep.subr.bf16.mxu0 0
      %3686 = vmatpush1.bf16.xpose.msra.mxu0 0
      %3687 = vmatprep.subr.bf16.mxu0 0
      %3688 = vmatpush1.bf16.xpose.msra.mxu0 0
      %3689 = vmatprep.subr.bf16.mxu0 0
      %3690 = vmatpush1.bf16.xpose.msra.mxu0 0
      %3691 = vmatprep.subr.bf16.mxu0 0
      %3692 = vmatpush1.bf16.xpose.msra.mxu0 0
      %3693 = vmatprep.subr.bf16.mxu0 0
      %3694 = vmatpush1.bf16.xpose.msra.mxu0 0
      %3695 = vmatprep.subr.bf16.mxu0 0
      %3696 = vmatpush1.bf16.xpose.msra.mxu0 0
      %3697 = vmatprep.subr.bf16.mxu0 0
      %3698 = vmatpush1.bf16.xpose.msra.mxu0 0
      %3699 = vmatprep.subr.bf16.mxu0 0
      %3700 = vmatpush1.bf16.xpose.msra.mxu0 0
      %3701 = vmatprep.subr.bf16.mxu0 0
      %3702 = vmatpush1.bf16.xpose.msra.mxu0 0
      %3703 = vmatprep.subr.bf16.mxu0 0
      %3704 = vmatpush1.bf16.xpose.msra.mxu0 0
      %3705 = vmatprep.subr.bf16.mxu0 0
      %3706 = vmatpush1.bf16.xpose.msra.mxu0 0
      %3707 = vmatprep.subr.bf16.mxu0 0
      %3708 = vmatpush1.bf16.xpose.msra.mxu0 0
      %3709 = vmatprep.subr.bf16.mxu0 0
      %3710 = vmatpush1.bf16.xpose.msra.mxu0 0
      %3711 = vmatprep.mubr.bf16.mxu0 0
      %3712 = vmatmul.mubr.bf16.gmra.mrb[0].mxu0 %v3674
      %v3713 = vpop.f32.mrb[0].mxu0
      %v3714 = vadd.f32 0.0, %v3713
      %v3715 = vpop.f32.mrb[0].mxu0
      %v3716 = vpop.f32.mrb[0].mxu0
      %v3717 = vpop.f32.mrb[0].mxu0
      %3718 = vdwg.mxu0
      %v3720 = vsel %vm1073, %v3576, 0
      %v3723 = vsel %vm1073, %v3580, 0
      %3725 = vmatprep.subr.bf16.mxu0 0
      %3726 = vmatpush1.bf16.xpose.msra.mxu0 %v3723
      %3727 = vmatprep.subr.bf16.mxu0 0
      %3728 = vmatpush1.bf16.xpose.msra.mxu0 0
      %3729 = vmatprep.subr.bf16.mxu0 0
      %3730 = vmatpush1.bf16.xpose.msra.mxu0 0
      %3731 = vmatprep.subr.bf16.mxu0 0
      %3732 = vmatpush1.bf16.xpose.msra.mxu0 0
      %3733 = vmatprep.subr.bf16.mxu0 0
      %3734 = vmatpush1.bf16.xpose.msra.mxu0 0
      %3735 = vmatprep.subr.bf16.mxu0 0
      %3736 = vmatpush1.bf16.xpose.msra.mxu0 0
      %3737 = vmatprep.subr.bf16.mxu0 0
      %3738 = vmatpush1.bf16.xpose.msra.mxu0 0
      %3739 = vmatprep.subr.bf16.mxu0 0
      %3740 = vmatpush1.bf16.xpose.msra.mxu0 0
      %3741 = vmatprep.subr.bf16.mxu0 0
      %3742 = vmatpush1.bf16.xpose.msra.mxu0 0
      %3743 = vmatprep.subr.bf16.mxu0 0
      %3744 = vmatpush1.bf16.xpose.msra.mxu0 0
      %3745 = vmatprep.subr.bf16.mxu0 0
      %3746 = vmatpush1.bf16.xpose.msra.mxu0 0
      %3747 = vmatprep.subr.bf16.mxu0 0
      %3748 = vmatpush1.bf16.xpose.msra.mxu0 0
      %3749 = vmatprep.subr.bf16.mxu0 0
      %3750 = vmatpush1.bf16.xpose.msra.mxu0 0
      %3751 = vmatprep.subr.bf16.mxu0 0
      %3752 = vmatpush1.bf16.xpose.msra.mxu0 0
      %3753 = vmatprep.subr.bf16.mxu0 0
      %3754 = vmatpush1.bf16.xpose.msra.mxu0 0
      %3755 = vmatprep.subr.bf16.mxu0 0
      %3756 = vmatpush1.bf16.xpose.msra.mxu0 0
      %3757 = vmatprep.mubr.bf16.mxu0 0
      %3758 = vmatmul.mubr.bf16.gmra.mrb[0].mxu0 %v3720
      %v3759 = vpop.f32.mrb[0].mxu0
      %v3760 = vadd.f32 0.0, %v3759
      %v3761 = vpop.f32.mrb[0].mxu0
      %v3762 = vpop.f32.mrb[0].mxu0
      %v3763 = vpop.f32.mrb[0].mxu0
      %3764 = vdwg.mxu0
      %v3765 = vsel %vm1073, %v3622, -inf
      %3766 = vmax.xlane.f32.xlu0 %v3765
      %v3767 = vpop.xlane.xlu0 %3766
      %v3768 = vsel %vm1073, %v3668, -inf
      %3769 = vmax.xlane.f32.xlu0 %v3768
      %v3770 = vpop.xlane.xlu0 %3769
      %v3771 = vsel %vm1073, %v3714, -inf
      %3772 = vmax.xlane.f32.xlu0 %v3771
      %v3773 = vpop.xlane.xlu0 %3772
      %v3774 = vsel %vm1073, %v3760, -inf
      %3775 = vmax.xlane.f32.xlu0 %v3774
      %v3776 = vpop.xlane.xlu0 %3775
      %v3777 = vsub.f32 %v3622, %v3767
      %v3778 = vsub.f32 %v3668, %v3770
      %v3779 = vsub.f32 %v3714, %v3773
      %v3780 = vsub.f32 %v3760, %v3776
      %v3781 = vmul.f32 %v3777, 1.442695
      %v3782 = vpow.pop %v3781
      %v3783 = vmul.f32 %v3778, 1.442695
      %v3784 = vpow.pop %v3783
      %v3785 = vmul.f32 %v3779, 1.442695
      %v3786 = vpow.pop %v3785
      %v3787 = vmul.f32 %v3780, 1.442695
      %v3788 = vpow.pop %v3787
      %v3789 = vsel %vm1073, %v3782, 0.0
      %3790 = vadd.xlane.f32.xlu0 %v3789
      %v3791 = vpop.xlane.xlu0 %3790
      %v3792 = vsel %vm1073, %v3784, 0.0
      %3793 = vadd.xlane.f32.xlu0 %v3792
      %v3794 = vpop.xlane.xlu0 %3793
      %v3795 = vsel %vm1073, %v3786, 0.0
      %3796 = vadd.xlane.f32.xlu0 %v3795
      %v3797 = vpop.xlane.xlu0 %3796
      %v3798 = vsel %vm1073, %v3788, 0.0
      %3799 = vadd.xlane.f32.xlu0 %v3798
      %v3800 = vpop.xlane.xlu0 %3799
      %v3801 = vpack.c.bf16 %v3782, %v3782
      %v3802 = vpack.c.bf16 %v3784, %v3784
      %v3803 = vpack.c.bf16 %v3786, %v3786
      %v3804 = vpack.c.bf16 %v3788, %v3788
      %v3805 = vpack.c.bf16 %v3538, %v3538
      %v3806 = vpack.c.bf16 %v3565, %v3565
      %v3807 = vpack.c.bf16 %v3568, %v3568
      %v3808 = vpack.c.bf16 %v3571, %v3571
      %v3810 = vsel %vm1073, %v3801, 0
      %v3813 = vsel %vm1305, %v3805, 0
      %3815 = vmatprep.subr.bf16.mxu0 0
      %3816 = vmatpush1.bf16.msra.mxu0 %v3813
      %3817 = vmatprep.subr.bf16.mxu0 0
      %3818 = vmatpush1.bf16.msra.mxu0 0
      %3819 = vmatprep.subr.bf16.mxu0 0
      %3820 = vmatpush1.bf16.msra.mxu0 0
      %3821 = vmatprep.subr.bf16.mxu0 0
      %3822 = vmatpush1.bf16.msra.mxu0 0
      %3823 = vmatprep.subr.bf16.mxu0 0
      %3824 = vmatpush1.bf16.msra.mxu0 0
      %3825 = vmatprep.subr.bf16.mxu0 0
      %3826 = vmatpush1.bf16.msra.mxu0 0
      %3827 = vmatprep.subr.bf16.mxu0 0
      %3828 = vmatpush1.bf16.msra.mxu0 0
      %3829 = vmatprep.subr.bf16.mxu0 0
      %3830 = vmatpush1.bf16.msra.mxu0 0
      %3831 = vmatprep.subr.bf16.mxu0 0
      %3832 = vmatpush1.bf16.msra.mxu0 0
      %3833 = vmatprep.subr.bf16.mxu0 0
      %3834 = vmatpush1.bf16.msra.mxu0 0
      %3835 = vmatprep.subr.bf16.mxu0 0
      %3836 = vmatpush1.bf16.msra.mxu0 0
      %3837 = vmatprep.subr.bf16.mxu0 0
      %3838 = vmatpush1.bf16.msra.mxu0 0
      %3839 = vmatprep.subr.bf16.mxu0 0
      %3840 = vmatpush1.bf16.msra.mxu0 0
      %3841 = vmatprep.subr.bf16.mxu0 0
      %3842 = vmatpush1.bf16.msra.mxu0 0
      %3843 = vmatprep.subr.bf16.mxu0 0
      %3844 = vmatpush1.bf16.msra.mxu0 0
      %3845 = vmatprep.subr.bf16.mxu0 0
      %3846 = vmatpush1.bf16.msra.mxu0 0
      %3847 = vmatprep.mubr.bf16.mxu0 0
      %3848 = vmatmul.mubr.bf16.gmra.mrb[0].mxu0 %v3810
      %v3849 = vpop.f32.mrb[0].mxu0
      %v3850 = vadd.f32 0.0, %v3849
      %v3851 = vpop.f32.mrb[0].mxu0
      %v3852 = vpop.f32.mrb[0].mxu0
      %v3853 = vpop.f32.mrb[0].mxu0
      %3854 = vdwg.mxu0
      %v3856 = vsel %vm1073, %v3802, 0
      %v3859 = vsel %vm1305, %v3806, 0
      %3861 = vmatprep.subr.bf16.mxu0 0
      %3862 = vmatpush1.bf16.msra.mxu0 %v3859
      %3863 = vmatprep.subr.bf16.mxu0 0
      %3864 = vmatpush1.bf16.msra.mxu0 0
      %3865 = vmatprep.subr.bf16.mxu0 0
      %3866 = vmatpush1.bf16.msra.mxu0 0
      %3867 = vmatprep.subr.bf16.mxu0 0
      %3868 = vmatpush1.bf16.msra.mxu0 0
      %3869 = vmatprep.subr.bf16.mxu0 0
      %3870 = vmatpush1.bf16.msra.mxu0 0
      %3871 = vmatprep.subr.bf16.mxu0 0
      %3872 = vmatpush1.bf16.msra.mxu0 0
      %3873 = vmatprep.subr.bf16.mxu0 0
      %3874 = vmatpush1.bf16.msra.mxu0 0
      %3875 = vmatprep.subr.bf16.mxu0 0
      %3876 = vmatpush1.bf16.msra.mxu0 0
      %3877 = vmatprep.subr.bf16.mxu0 0
      %3878 = vmatpush1.bf16.msra.mxu0 0
      %3879 = vmatprep.subr.bf16.mxu0 0
      %3880 = vmatpush1.bf16.msra.mxu0 0
      %3881 = vmatprep.subr.bf16.mxu0 0
      %3882 = vmatpush1.bf16.msra.mxu0 0
      %3883 = vmatprep.subr.bf16.mxu0 0
      %3884 = vmatpush1.bf16.msra.mxu0 0
      %3885 = vmatprep.subr.bf16.mxu0 0
      %3886 = vmatpush1.bf16.msra.mxu0 0
      %3887 = vmatprep.subr.bf16.mxu0 0
      %3888 = vmatpush1.bf16.msra.mxu0 0
      %3889 = vmatprep.subr.bf16.mxu0 0
      %3890 = vmatpush1.bf16.msra.mxu0 0
      %3891 = vmatprep.subr.bf16.mxu0 0
      %3892 = vmatpush1.bf16.msra.mxu0 0
      %3893 = vmatprep.mubr.bf16.mxu0 0
      %3894 = vmatmul.mubr.bf16.gmra.mrb[0].mxu0 %v3856
      %v3895 = vpop.f32.mrb[0].mxu0
      %v3896 = vadd.f32 0.0, %v3895
      %v3897 = vpop.f32.mrb[0].mxu0
      %v3898 = vpop.f32.mrb[0].mxu0
      %v3899 = vpop.f32.mrb[0].mxu0
      %3900 = vdwg.mxu0
      %v3902 = vsel %vm1073, %v3803, 0
      %v3905 = vsel %vm1305, %v3807, 0
      %3907 = vmatprep.subr.bf16.mxu0 0
      %3908 = vmatpush1.bf16.msra.mxu0 %v3905
      %3909 = vmatprep.subr.bf16.mxu0 0
      %3910 = vmatpush1.bf16.msra.mxu0 0
      %3911 = vmatprep.subr.bf16.mxu0 0
      %3912 = vmatpush1.bf16.msra.mxu0 0
      %3913 = vmatprep.subr.bf16.mxu0 0
      %3914 = vmatpush1.bf16.msra.mxu0 0
      %3915 = vmatprep.subr.bf16.mxu0 0
      %3916 = vmatpush1.bf16.msra.mxu0 0
      %3917 = vmatprep.subr.bf16.mxu0 0
      %3918 = vmatpush1.bf16.msra.mxu0 0
      %3919 = vmatprep.subr.bf16.mxu0 0
      %3920 = vmatpush1.bf16.msra.mxu0 0
      %3921 = vmatprep.subr.bf16.mxu0 0
      %3922 = vmatpush1.bf16.msra.mxu0 0
      %3923 = vmatprep.subr.bf16.mxu0 0
      %3924 = vmatpush1.bf16.msra.mxu0 0
      %3925 = vmatprep.subr.bf16.mxu0 0
      %3926 = vmatpush1.bf16.msra.mxu0 0
      %3927 = vmatprep.subr.bf16.mxu0 0
      %3928 = vmatpush1.bf16.msra.mxu0 0
      %3929 = vmatprep.subr.bf16.mxu0 0
      %3930 = vmatpush1.bf16.msra.mxu0 0
      %3931 = vmatprep.subr.bf16.mxu0 0
      %3932 = vmatpush1.bf16.msra.mxu0 0
      %3933 = vmatprep.subr.bf16.mxu0 0
      %3934 = vmatpush1.bf16.msra.mxu0 0
      %3935 = vmatprep.subr.bf16.mxu0 0
      %3936 = vmatpush1.bf16.msra.mxu0 0
      %3937 = vmatprep.subr.bf16.mxu0 0
      %3938 = vmatpush1.bf16.msra.mxu0 0
      %3939 = vmatprep.mubr.bf16.mxu0 0
      %3940 = vmatmul.mubr.bf16.gmra.mrb[0].mxu0 %v3902
      %v3941 = vpop.f32.mrb[0].mxu0
      %v3942 = vadd.f32 0.0, %v3941
      %v3943 = vpop.f32.mrb[0].mxu0
      %v3944 = vpop.f32.mrb[0].mxu0
      %v3945 = vpop.f32.mrb[0].mxu0
      %3946 = vdwg.mxu0
      %v3948 = vsel %vm1073, %v3804, 0
      %v3951 = vsel %vm1305, %v3808, 0
      %3953 = vmatprep.subr.bf16.mxu0 0
      %3954 = vmatpush1.bf16.msra.mxu0 %v3951
      %3955 = vmatprep.subr.bf16.mxu0 0
      %3956 = vmatpush1.bf16.msra.mxu0 0
      %3957 = vmatprep.subr.bf16.mxu0 0
      %3958 = vmatpush1.bf16.msra.mxu0 0
      %3959 = vmatprep.subr.bf16.mxu0 0
      %3960 = vmatpush1.bf16.msra.mxu0 0
      %3961 = vmatprep.subr.bf16.mxu0 0
      %3962 = vmatpush1.bf16.msra.mxu0 0
      %3963 = vmatprep.subr.bf16.mxu0 0
      %3964 = vmatpush1.bf16.msra.mxu0 0
      %3965 = vmatprep.subr.bf16.mxu0 0
      %3966 = vmatpush1.bf16.msra.mxu0 0
      %3967 = vmatprep.subr.bf16.mxu0 0
      %3968 = vmatpush1.bf16.msra.mxu0 0
      %3969 = vmatprep.subr.bf16.mxu0 0
      %3970 = vmatpush1.bf16.msra.mxu0 0
      %3971 = vmatprep.subr.bf16.mxu0 0
      %3972 = vmatpush1.bf16.msra.mxu0 0
      %3973 = vmatprep.subr.bf16.mxu0 0
      %3974 = vmatpush1.bf16.msra.mxu0 0
      %3975 = vmatprep.subr.bf16.mxu0 0
      %3976 = vmatpush1.bf16.msra.mxu0 0
      %3977 = vmatprep.subr.bf16.mxu0 0
      %3978 = vmatpush1.bf16.msra.mxu0 0
      %3979 = vmatprep.subr.bf16.mxu0 0
      %3980 = vmatpush1.bf16.msra.mxu0 0
      %3981 = vmatprep.subr.bf16.mxu0 0
      %3982 = vmatpush1.bf16.msra.mxu0 0
      %3983 = vmatprep.subr.bf16.mxu0 0
      %3984 = vmatpush1.bf16.msra.mxu0 0
      %3985 = vmatprep.mubr.bf16.mxu0 0
      %3986 = vmatmul.mubr.bf16.gmra.mrb[0].mxu0 %v3948
      %v3987 = vpop.f32.mrb[0].mxu0
      %v3988 = vadd.f32 0.0, %v3987
      %v3989 = vpop.f32.mrb[0].mxu0
      %v3990 = vpop.f32.mrb[0].mxu0
      %v3991 = vpop.f32.mrb[0].mxu0
      %3992 = vdwg.mxu0
      %v3993 = vrcp.pop %v3791
      %v3994 = vrcp.pop %v3794
      %v3995 = vrcp.pop %v3797
      %v3996 = vrcp.pop %v3800
      %v3997 = vmul.f32 %v3850, %v3993
      %v3998 = vmul.f32 %v3896, %v3994
      %v3999 = vmul.f32 %v3942, %v3995
      %v4000 = vmul.f32 %v3988, %v3996
      %4002 = vrot.lane.b32.xlu0 %v3998, 8
      %v4003 = vpop.permute.xlu0 %4002
      %4006 = vrot.lane.b32.xlu0 %v3999, 16
      %v4007 = vpop.permute.xlu0 %4006
      %4010 = vrot.lane.b32.xlu0 %v4000, 24
      %v4011 = vpop.permute.xlu0 %4010
      %v4013 = vsel %vm1073, %v3997, %v4003
      %v4014 = vsel %vm1508, %v4013, %v4007
      %v4015 = vsel %vm1510, %v4014, %v4011
      %v4016 = vpack.c.bf16 %v4015, %v4015
      %v4021 = vunpack.c.l.b16 %v3375
      %v4022 = vunpack.c.l.b16 %v3376
      %v4023 = vunpack.c.l.b16 %v3377
      %v4024 = vunpack.c.l.b16 %v3378
      %v4025 = vpack.c.b16 %v4022, %v4021
      %v4026 = vpack.c.b16 %v4024, %v4023
      %v4030 = vsel %vm843, %v4016, 0
      %4032 = vmatprep.subr.bf16.mxu0 0
      %4033 = vmatpush1.bf16.msra.mxu0 %v4025
      %4034 = vmatprep.subr.bf16.mxu0 0
      %4035 = vmatpush1.bf16.msra.mxu0 %v4026
      %4036 = vmatprep.subr.bf16.mxu0 0
      %4037 = vmatpush1.bf16.msra.mxu0 0
      %4038 = vmatprep.subr.bf16.mxu0 0
      %4039 = vmatpush1.bf16.msra.mxu0 0
      %4040 = vmatprep.subr.bf16.mxu0 0
      %4041 = vmatpush1.bf16.msra.mxu0 0
      %4042 = vmatprep.subr.bf16.mxu0 0
      %4043 = vmatpush1.bf16.msra.mxu0 0
      %4044 = vmatprep.subr.bf16.mxu0 0
      %4045 = vmatpush1.bf16.msra.mxu0 0
      %4046 = vmatprep.subr.bf16.mxu0 0
      %4047 = vmatpush1.bf16.msra.mxu0 0
      %4048 = vmatprep.subr.bf16.mxu0 0
      %4049 = vmatpush1.bf16.msra.mxu0 0
      %4050 = vmatprep.subr.bf16.mxu0 0
      %4051 = vmatpush1.bf16.msra.mxu0 0
      %4052 = vmatprep.subr.bf16.mxu0 0
      %4053 = vmatpush1.bf16.msra.mxu0 0
      %4054 = vmatprep.subr.bf16.mxu0 0
      %4055 = vmatpush1.bf16.msra.mxu0 0
      %4056 = vmatprep.subr.bf16.mxu0 0
      %4057 = vmatpush1.bf16.msra.mxu0 0
      %4058 = vmatprep.subr.bf16.mxu0 0
      %4059 = vmatpush1.bf16.msra.mxu0 0
      %4060 = vmatprep.subr.bf16.mxu0 0
      %4061 = vmatpush1.bf16.msra.mxu0 0
      %4062 = vmatprep.subr.bf16.mxu0 0
      %4063 = vmatpush1.bf16.msra.mxu0 0
      %4064 = vmatprep.mubr.bf16.mxu0 0
      %4065 = vmatmul.mubr.bf16.gmra.mrb[0].mxu0 %v4030
      %v4066 = vpop.f32.mrb[0].mxu0
      %v4067 = vadd.f32 0.0, %v4066
      %v4068 = vpop.f32.mrb[0].mxu0
      %v4069 = vpop.f32.mrb[0].mxu0
      %v4070 = vpop.f32.mrb[0].mxu0
      %4071 = vdwg.mxu0
      %v4072 = vadd.f32 %v3346, %v4067
      %v4073 = vld [vmem:[%s23] sm:$0x1]
      %v4074 = vmul.f32 %v4072, %v4072
      %v4075 = vsel %vm843, %v4074, 0.0
      %4076 = vadd.xlane.f32.xlu0 %v4075
      %v4077 = vpop.xlane.xlu0 %4076
      %v4078 = vmul.f32 %v4077, %v847
      %v4079 = vadd.f32 %v4078, 1e-06
      %v4080 = vrsqrt.pop %v4079
      %v4081 = vmul.f32 %v4072, %v4080
      %v4083 = vlaneseq
      %v4084 = vshrl.u32 %v4083, 7
      %v4085 = vsub.s32 0, %v4084
      %v4086 = vrot.slane %v4073, %v4085
      %v4088 = vmul.f32 %v4081, %v4086
      %v4089 = vld [vmem:[%s24] sm:$0xf]
      %v4090 = vld [vmem:[%s24 + $0x4] sm:$0xf]
      %v4091 = vld [vmem:[%s24 + $0x8] sm:$0xf]
      %v4092 = vld [vmem:[%s24 + $0xc] sm:$0xf]
      %v4093 = vld [vmem:[%s25] sm:$0xf]
      %v4094 = vld [vmem:[%s25 + $0x4] sm:$0xf]
      %v4095 = vld [vmem:[%s25 + $0x8] sm:$0xf]
      %v4096 = vld [vmem:[%s25 + $0xc] sm:$0xf]
      %v4097 = vld [vmem:[%s25 + $0x10] sm:$0xf]
      %v4098 = vld [vmem:[%s25 + $0x14] sm:$0xf]
      %v4099 = vld [vmem:[%s25 + $0x18] sm:$0xf]
      %v4100 = vld [vmem:[%s25 + $0x1c] sm:$0xf]
      %v4101 = vpack.c.bf16 %v4088, %v4088
      %v4106 = vunpack.c.l.b16 %v4089
      %v4107 = vunpack.c.l.b16 %v4090
      %v4108 = vunpack.c.l.b16 %v4091
      %v4109 = vunpack.c.l.b16 %v4092
      %v4110 = vpack.c.b16 %v4107, %v4106
      %v4111 = vpack.c.b16 %v4109, %v4108
      %v4115 = vsel %vm843, %v4101, 0
      %4117 = vmatprep.subr.bf16.mxu0 0
      %4118 = vmatpush1.bf16.msra.mxu0 %v4110
      %4119 = vmatprep.subr.bf16.mxu0 0
      %4120 = vmatpush1.bf16.msra.mxu0 %v4111
      %4121 = vmatprep.subr.bf16.mxu0 0
      %4122 = vmatpush1.bf16.msra.mxu0 0
      %4123 = vmatprep.subr.bf16.mxu0 0
      %4124 = vmatpush1.bf16.msra.mxu0 0
      %4125 = vmatprep.subr.bf16.mxu0 0
      %4126 = vmatpush1.bf16.msra.mxu0 0
      %4127 = vmatprep.subr.bf16.mxu0 0
      %4128 = vmatpush1.bf16.msra.mxu0 0
      %4129 = vmatprep.subr.bf16.mxu0 0
      %4130 = vmatpush1.bf16.msra.mxu0 0
      %4131 = vmatprep.subr.bf16.mxu0 0
      %4132 = vmatpush1.bf16.msra.mxu0 0
      %4133 = vmatprep.subr.bf16.mxu0 0
      %4134 = vmatpush1.bf16.msra.mxu0 0
      %4135 = vmatprep.subr.bf16.mxu0 0
      %4136 = vmatpush1.bf16.msra.mxu0 0
      %4137 = vmatprep.subr.bf16.mxu0 0
      %4138 = vmatpush1.bf16.msra.mxu0 0
      %4139 = vmatprep.subr.bf16.mxu0 0
      %4140 = vmatpush1.bf16.msra.mxu0 0
      %4141 = vmatprep.subr.bf16.mxu0 0
      %4142 = vmatpush1.bf16.msra.mxu0 0
      %4143 = vmatprep.subr.bf16.mxu0 0
      %4144 = vmatpush1.bf16.msra.mxu0 0
      %4145 = vmatprep.subr.bf16.mxu0 0
      %4146 = vmatpush1.bf16.msra.mxu0 0
      %4147 = vmatprep.subr.bf16.mxu0 0
      %4148 = vmatpush1.bf16.msra.mxu0 0
      %4149 = vmatprep.mubr.bf16.mxu0 0
      %4150 = vmatmul.mubr.bf16.gmra.mrb[0].mxu0 %v4115
      %v4151 = vpop.f32.mrb[0].mxu0
      %v4152 = vadd.f32 0.0, %v4151
      %v4153 = vpop.f32.mrb[0].mxu0
      %v4154 = vpop.f32.mrb[0].mxu0
      %v4155 = vpop.f32.mrb[0].mxu0
      %4156 = vdwg.mxu0
      %v4157 = vmax.f32 %v4152, 0.0
      %v4158 = vpack.c.bf16 %v4157, %v4157
      %v4167 = vunpack.c.l.b16 %v4093
      %v4168 = vunpack.c.l.b16 %v4094
      %v4169 = vunpack.c.l.b16 %v4095
      %v4170 = vunpack.c.l.b16 %v4096
      %v4171 = vunpack.c.l.b16 %v4097
      %v4172 = vunpack.c.l.b16 %v4098
      %v4173 = vunpack.c.l.b16 %v4099
      %v4174 = vunpack.c.l.b16 %v4100
      %v4175 = vpack.c.b16 %v4168, %v4167
      %v4176 = vpack.c.b16 %v4170, %v4169
      %v4177 = vpack.c.b16 %v4172, %v4171
      %v4178 = vpack.c.b16 %v4174, %v4173
      %v4184 = vsel %vm1679, %v4158, 0
      %4186 = vmatprep.subr.bf16.mxu0 0
      %4187 = vmatpush1.bf16.msra.mxu0 %v4175
      %4188 = vmatprep.subr.bf16.mxu0 0
      %4189 = vmatpush1.bf16.msra.mxu0 %v4176
      %4190 = vmatprep.subr.bf16.mxu0 0
      %4191 = vmatpush1.bf16.msra.mxu0 %v4177
      %4192 = vmatprep.subr.bf16.mxu0 0
      %4193 = vmatpush1.bf16.msra.mxu0 %v4178
      %4194 = vmatprep.subr.bf16.mxu0 0
      %4195 = vmatpush1.bf16.msra.mxu0 0
      %4196 = vmatprep.subr.bf16.mxu0 0
      %4197 = vmatpush1.bf16.msra.mxu0 0
      %4198 = vmatprep.subr.bf16.mxu0 0
      %4199 = vmatpush1.bf16.msra.mxu0 0
      %4200 = vmatprep.subr.bf16.mxu0 0
      %4201 = vmatpush1.bf16.msra.mxu0 0
      %4202 = vmatprep.subr.bf16.mxu0 0
      %4203 = vmatpush1.bf16.msra.mxu0 0
      %4204 = vmatprep.subr.bf16.mxu0 0
      %4205 = vmatpush1.bf16.msra.mxu0 0
      %4206 = vmatprep.subr.bf16.mxu0 0
      %4207 = vmatpush1.bf16.msra.mxu0 0
      %4208 = vmatprep.subr.bf16.mxu0 0
      %4209 = vmatpush1.bf16.msra.mxu0 0
      %4210 = vmatprep.subr.bf16.mxu0 0
      %4211 = vmatpush1.bf16.msra.mxu0 0
      %4212 = vmatprep.subr.bf16.mxu0 0
      %4213 = vmatpush1.bf16.msra.mxu0 0
      %4214 = vmatprep.subr.bf16.mxu0 0
      %4215 = vmatpush1.bf16.msra.mxu0 0
      %4216 = vmatprep.subr.bf16.mxu0 0
      %4217 = vmatpush1.bf16.msra.mxu0 0
      %4218 = vmatprep.mubr.bf16.mxu0 0
      %4219 = vmatmul.mubr.bf16.gmra.mrb[0].mxu0 %v4184
      %v4220 = vpop.f32.mrb[0].mxu0
      %v4221 = vadd.f32 0.0, %v4220
      %v4222 = vpop.f32.mrb[0].mxu0
      %v4223 = vpop.f32.mrb[0].mxu0
      %v4224 = vpop.f32.mrb[0].mxu0
      %4225 = vdwg.mxu0
      %v4226 = vadd.f32 %v4072, %v4221
      %s4227 = scalar_lea.vmem %s21, 1
      %v4228 = vld [vmem:[%s4227] sm:$0x1]
      %v4229 = vmul.f32 %v4226, %v4226
      %v4230 = vsel %vm843, %v4229, 0.0
      %4231 = vadd.xlane.f32.xlu0 %v4230
      %v4232 = vpop.xlane.xlu0 %4231
      %v4233 = vmul.f32 %v4232, %v847
      %v4234 = vadd.f32 %v4233, 1e-06
      %v4235 = vrsqrt.pop %v4234
      %v4236 = vmul.f32 %v4226, %v4235
      %v4238 = vlaneseq
      %v4239 = vshrl.u32 %v4238, 7
      %v4240 = vsub.s32 0, %v4239
      %v4241 = vrot.slane %v4228, %v4240
      %v4243 = vmul.f32 %v4236, %v4241
      %s4244 = scalar_lea.vmem %s13, 16
      %v4245 = vld [vmem:[%s4244] sm:$0xf]
      %v4246 = vld [vmem:[%s4244 + $0x4] sm:$0xf]
      %v4247 = vld [vmem:[%s4244 + $0x8] sm:$0xf]
      %v4248 = vld [vmem:[%s4244 + $0xc] sm:$0xf]
      %s4249 = scalar_lea.vmem %s14, 16
      %v4250 = vld [vmem:[%s4249] sm:$0xf]
      %v4251 = vld [vmem:[%s4249 + $0x4] sm:$0xf]
      %v4252 = vld [vmem:[%s4249 + $0x8] sm:$0xf]
      %v4253 = vld [vmem:[%s4249 + $0xc] sm:$0xf]
      %s4254 = scalar_lea.vmem %s15, 16
      %v4255 = vld [vmem:[%s4254] sm:$0xf]
      %v4256 = vld [vmem:[%s4254 + $0x4] sm:$0xf]
      %v4257 = vld [vmem:[%s4254 + $0x8] sm:$0xf]
      %v4258 = vld [vmem:[%s4254 + $0xc] sm:$0xf]
      %s4259 = scalar_lea.vmem %s16, 16
      %v4260 = vld [vmem:[%s4259] sm:$0xf]
      %v4261 = vld [vmem:[%s4259 + $0x4] sm:$0xf]
      %v4262 = vld [vmem:[%s4259 + $0x8] sm:$0xf]
      %v4263 = vld [vmem:[%s4259 + $0xc] sm:$0xf]
      %v4264 = vpack.c.bf16 %v4243, %v4243
      %v4269 = vunpack.c.l.b16 %v4245
      %v4270 = vunpack.c.l.b16 %v4246
      %v4271 = vunpack.c.l.b16 %v4247
      %v4272 = vunpack.c.l.b16 %v4248
      %v4273 = vpack.c.b16 %v4270, %v4269
      %v4274 = vpack.c.b16 %v4272, %v4271
      %v4278 = vsel %vm843, %v4264, 0
      %4280 = vmatprep.subr.bf16.mxu0 0
      %4281 = vmatpush1.bf16.msra.mxu0 %v4273
      %4282 = vmatprep.subr.bf16.mxu0 0
      %4283 = vmatpush1.bf16.msra.mxu0 %v4274
      %4284 = vmatprep.subr.bf16.mxu0 0
      %4285 = vmatpush1.bf16.msra.mxu0 0
      %4286 = vmatprep.subr.bf16.mxu0 0
      %4287 = vmatpush1.bf16.msra.mxu0 0
      %4288 = vmatprep.subr.bf16.mxu0 0
      %4289 = vmatpush1.bf16.msra.mxu0 0
      %4290 = vmatprep.subr.bf16.mxu0 0
      %4291 = vmatpush1.bf16.msra.mxu0 0
      %4292 = vmatprep.subr.bf16.mxu0 0
      %4293 = vmatpush1.bf16.msra.mxu0 0
      %4294 = vmatprep.subr.bf16.mxu0 0
      %4295 = vmatpush1.bf16.msra.mxu0 0
      %4296 = vmatprep.subr.bf16.mxu0 0
      %4297 = vmatpush1.bf16.msra.mxu0 0
      %4298 = vmatprep.subr.bf16.mxu0 0
      %4299 = vmatpush1.bf16.msra.mxu0 0
      %4300 = vmatprep.subr.bf16.mxu0 0
      %4301 = vmatpush1.bf16.msra.mxu0 0
      %4302 = vmatprep.subr.bf16.mxu0 0
      %4303 = vmatpush1.bf16.msra.mxu0 0
      %4304 = vmatprep.subr.bf16.mxu0 0
      %4305 = vmatpush1.bf16.msra.mxu0 0
      %4306 = vmatprep.subr.bf16.mxu0 0
      %4307 = vmatpush1.bf16.msra.mxu0 0
      %4308 = vmatprep.subr.bf16.mxu0 0
      %4309 = vmatpush1.bf16.msra.mxu0 0
      %4310 = vmatprep.subr.bf16.mxu0 0
      %4311 = vmatpush1.bf16.msra.mxu0 0
      %4312 = vmatprep.mubr.bf16.mxu0 0
      %4313 = vmatmul.mubr.bf16.gmra.mrb[0].mxu0 %v4278
      %v4314 = vpop.f32.mrb[0].mxu0
      %v4315 = vadd.f32 0.0, %v4314
      %v4316 = vpop.f32.mrb[0].mxu0
      %v4317 = vpop.f32.mrb[0].mxu0
      %v4318 = vpop.f32.mrb[0].mxu0
      %4319 = vdwg.mxu0
      %v4324 = vunpack.c.l.b16 %v4250
      %v4325 = vunpack.c.l.b16 %v4251
      %v4326 = vunpack.c.l.b16 %v4252
      %v4327 = vunpack.c.l.b16 %v4253
      %v4328 = vpack.c.b16 %v4325, %v4324
      %v4329 = vpack.c.b16 %v4327, %v4326
      %4332 = vmatprep.subr.bf16.mxu0 0
      %4333 = vmatpush1.bf16.msra.mxu0 %v4328
      %4334 = vmatprep.subr.bf16.mxu0 0
      %4335 = vmatpush1.bf16.msra.mxu0 %v4329
      %4336 = vmatprep.subr.bf16.mxu0 0
      %4337 = vmatpush1.bf16.msra.mxu0 0
      %4338 = vmatprep.subr.bf16.mxu0 0
      %4339 = vmatpush1.bf16.msra.mxu0 0
      %4340 = vmatprep.subr.bf16.mxu0 0
      %4341 = vmatpush1.bf16.msra.mxu0 0
      %4342 = vmatprep.subr.bf16.mxu0 0
      %4343 = vmatpush1.bf16.msra.mxu0 0
      %4344 = vmatprep.subr.bf16.mxu0 0
      %4345 = vmatpush1.bf16.msra.mxu0 0
      %4346 = vmatprep.subr.bf16.mxu0 0
      %4347 = vmatpush1.bf16.msra.mxu0 0
      %4348 = vmatprep.subr.bf16.mxu0 0
      %4349 = vmatpush1.bf16.msra.mxu0 0
      %4350 = vmatprep.subr.bf16.mxu0 0
      %4351 = vmatpush1.bf16.msra.mxu0 0
      %4352 = vmatprep.subr.bf16.mxu0 0
      %4353 = vmatpush1.bf16.msra.mxu0 0
      %4354 = vmatprep.subr.bf16.mxu0 0
      %4355 = vmatpush1.bf16.msra.mxu0 0
      %4356 = vmatprep.subr.bf16.mxu0 0
      %4357 = vmatpush1.bf16.msra.mxu0 0
      %4358 = vmatprep.subr.bf16.mxu0 0
      %4359 = vmatpush1.bf16.msra.mxu0 0
      %4360 = vmatprep.subr.bf16.mxu0 0
      %4361 = vmatpush1.bf16.msra.mxu0 0
      %4362 = vmatprep.subr.bf16.mxu0 0
      %4363 = vmatpush1.bf16.msra.mxu0 0
      %4364 = vmatprep.mubr.bf16.mxu0 0
      %4365 = vmatmul.mubr.bf16.gmra.mrb[0].mxu0 %v4278
      %v4366 = vpop.f32.mrb[0].mxu0
      %v4367 = vadd.f32 0.0, %v4366
      %v4368 = vpop.f32.mrb[0].mxu0
      %v4369 = vpop.f32.mrb[0].mxu0
      %v4370 = vpop.f32.mrb[0].mxu0
      %4371 = vdwg.mxu0
      %v4376 = vunpack.c.l.b16 %v4255
      %v4377 = vunpack.c.l.b16 %v4256
      %v4378 = vunpack.c.l.b16 %v4257
      %v4379 = vunpack.c.l.b16 %v4258
      %v4380 = vpack.c.b16 %v4377, %v4376
      %v4381 = vpack.c.b16 %v4379, %v4378
      %4384 = vmatprep.subr.bf16.mxu0 0
      %4385 = vmatpush1.bf16.msra.mxu0 %v4380
      %4386 = vmatprep.subr.bf16.mxu0 0
      %4387 = vmatpush1.bf16.msra.mxu0 %v4381
      %4388 = vmatprep.subr.bf16.mxu0 0
      %4389 = vmatpush1.bf16.msra.mxu0 0
      %4390 = vmatprep.subr.bf16.mxu0 0
      %4391 = vmatpush1.bf16.msra.mxu0 0
      %4392 = vmatprep.subr.bf16.mxu0 0
      %4393 = vmatpush1.bf16.msra.mxu0 0
      %4394 = vmatprep.subr.bf16.mxu0 0
      %4395 = vmatpush1.bf16.msra.mxu0 0
      %4396 = vmatprep.subr.bf16.mxu0 0
      %4397 = vmatpush1.bf16.msra.mxu0 0
      %4398 = vmatprep.subr.bf16.mxu0 0
      %4399 = vmatpush1.bf16.msra.mxu0 0
      %4400 = vmatprep.subr.bf16.mxu0 0
      %4401 = vmatpush1.bf16.msra.mxu0 0
      %4402 = vmatprep.subr.bf16.mxu0 0
      %4403 = vmatpush1.bf16.msra.mxu0 0
      %4404 = vmatprep.subr.bf16.mxu0 0
      %4405 = vmatpush1.bf16.msra.mxu0 0
      %4406 = vmatprep.subr.bf16.mxu0 0
      %4407 = vmatpush1.bf16.msra.mxu0 0
      %4408 = vmatprep.subr.bf16.mxu0 0
      %4409 = vmatpush1.bf16.msra.mxu0 0
      %4410 = vmatprep.subr.bf16.mxu0 0
      %4411 = vmatpush1.bf16.msra.mxu0 0
      %4412 = vmatprep.subr.bf16.mxu0 0
      %4413 = vmatpush1.bf16.msra.mxu0 0
      %4414 = vmatprep.subr.bf16.mxu0 0
      %4415 = vmatpush1.bf16.msra.mxu0 0
      %4416 = vmatprep.mubr.bf16.mxu0 0
      %4417 = vmatmul.mubr.bf16.gmra.mrb[0].mxu0 %v4278
      %v4418 = vpop.f32.mrb[0].mxu0
      %v4419 = vadd.f32 0.0, %v4418
      %v4420 = vpop.f32.mrb[0].mxu0
      %v4421 = vpop.f32.mrb[0].mxu0
      %v4422 = vpop.f32.mrb[0].mxu0
      %4423 = vdwg.mxu0
      %4425 = vrot.lane.b32.xlu0 %v4315, 120
      %v4426 = vpop.permute.xlu0 %4425
      %4428 = vrot.lane.b32.xlu0 %v4315, 112
      %v4429 = vpop.permute.xlu0 %4428
      %4431 = vrot.lane.b32.xlu0 %v4315, 104
      %v4432 = vpop.permute.xlu0 %4431
      %4435 = vrot.lane.b32.xlu0 %v4367, 120
      %v4436 = vpop.permute.xlu0 %4435
      %4438 = vrot.lane.b32.xlu0 %v4367, 112
      %v4439 = vpop.permute.xlu0 %4438
      %4441 = vrot.lane.b32.xlu0 %v4367, 104
      %v4442 = vpop.permute.xlu0 %4441
      %4445 = vrot.lane.b32.xlu0 %v4419, 120
      %v4446 = vpop.permute.xlu0 %4445
      %4448 = vrot.lane.b32.xlu0 %v4419, 112
      %v4449 = vpop.permute.xlu0 %4448
      %4451 = vrot.lane.b32.xlu0 %v4419, 104
      %v4452 = vpop.permute.xlu0 %4451
      %v4454 = vpack.c.bf16 %v4315, %v4315
      %v4455 = vpack.c.bf16 %v4426, %v4426
      %v4456 = vpack.c.bf16 %v4429, %v4429
      %v4457 = vpack.c.bf16 %v4432, %v4432
      %v4458 = vpack.c.bf16 %v4367, %v4367
      %v4459 = vpack.c.bf16 %v4436, %v4436
      %v4460 = vpack.c.bf16 %v4439, %v4439
      %v4461 = vpack.c.bf16 %v4442, %v4442
      %v4463 = vsel %vm1073, %v4454, 0
      %v4466 = vsel %vm1073, %v4458, 0
      %4468 = vmatprep.subr.bf16.mxu0 0
      %4469 = vmatpush1.bf16.xpose.msra.mxu0 %v4466
      %4470 = vmatprep.subr.bf16.mxu0 0
      %4471 = vmatpush1.bf16.xpose.msra.mxu0 0
      %4472 = vmatprep.subr.bf16.mxu0 0
      %4473 = vmatpush1.bf16.xpose.msra.mxu0 0
      %4474 = vmatprep.subr.bf16.mxu0 0
      %4475 = vmatpush1.bf16.xpose.msra.mxu0 0
      %4476 = vmatprep.subr.bf16.mxu0 0
      %4477 = vmatpush1.bf16.xpose.msra.mxu0 0
      %4478 = vmatprep.subr.bf16.mxu0 0
      %4479 = vmatpush1.bf16.xpose.msra.mxu0 0
      %4480 = vmatprep.subr.bf16.mxu0 0
      %4481 = vmatpush1.bf16.xpose.msra.mxu0 0
      %4482 = vmatprep.subr.bf16.mxu0 0
      %4483 = vmatpush1.bf16.xpose.msra.mxu0 0
      %4484 = vmatprep.subr.bf16.mxu0 0
      %4485 = vmatpush1.bf16.xpose.msra.mxu0 0
      %4486 = vmatprep.subr.bf16.mxu0 0
      %4487 = vmatpush1.bf16.xpose.msra.mxu0 0
      %4488 = vmatprep.subr.bf16.mxu0 0
      %4489 = vmatpush1.bf16.xpose.msra.mxu0 0
      %4490 = vmatprep.subr.bf16.mxu0 0
      %4491 = vmatpush1.bf16.xpose.msra.mxu0 0
      %4492 = vmatprep.subr.bf16.mxu0 0
      %4493 = vmatpush1.bf16.xpose.msra.mxu0 0
      %4494 = vmatprep.subr.bf16.mxu0 0
      %4495 = vmatpush1.bf16.xpose.msra.mxu0 0
      %4496 = vmatprep.subr.bf16.mxu0 0
      %4497 = vmatpush1.bf16.xpose.msra.mxu0 0
      %4498 = vmatprep.subr.bf16.mxu0 0
      %4499 = vmatpush1.bf16.xpose.msra.mxu0 0
      %4500 = vmatprep.mubr.bf16.mxu0 0
      %4501 = vmatmul.mubr.bf16.gmra.mrb[0].mxu0 %v4463
      %v4502 = vpop.f32.mrb[0].mxu0
      %v4503 = vadd.f32 %v836, %v4502
      %v4504 = vpop.f32.mrb[0].mxu0
      %v4505 = vpop.f32.mrb[0].mxu0
      %v4506 = vpop.f32.mrb[0].mxu0
      %4507 = vdwg.mxu0
      %v4509 = vsel %vm1073, %v4455, 0
      %v4512 = vsel %vm1073, %v4459, 0
      %4514 = vmatprep.subr.bf16.mxu0 0
      %4515 = vmatpush1.bf16.xpose.msra.mxu0 %v4512
      %4516 = vmatprep.subr.bf16.mxu0 0
      %4517 = vmatpush1.bf16.xpose.msra.mxu0 0
      %4518 = vmatprep.subr.bf16.mxu0 0
      %4519 = vmatpush1.bf16.xpose.msra.mxu0 0
      %4520 = vmatprep.subr.bf16.mxu0 0
      %4521 = vmatpush1.bf16.xpose.msra.mxu0 0
      %4522 = vmatprep.subr.bf16.mxu0 0
      %4523 = vmatpush1.bf16.xpose.msra.mxu0 0
      %4524 = vmatprep.subr.bf16.mxu0 0
      %4525 = vmatpush1.bf16.xpose.msra.mxu0 0
      %4526 = vmatprep.subr.bf16.mxu0 0
      %4527 = vmatpush1.bf16.xpose.msra.mxu0 0
      %4528 = vmatprep.subr.bf16.mxu0 0
      %4529 = vmatpush1.bf16.xpose.msra.mxu0 0
      %4530 = vmatprep.subr.bf16.mxu0 0
      %4531 = vmatpush1.bf16.xpose.msra.mxu0 0
      %4532 = vmatprep.subr.bf16.mxu0 0
      %4533 = vmatpush1.bf16.xpose.msra.mxu0 0
      %4534 = vmatprep.subr.bf16.mxu0 0
      %4535 = vmatpush1.bf16.xpose.msra.mxu0 0
      %4536 = vmatprep.subr.bf16.mxu0 0
      %4537 = vmatpush1.bf16.xpose.msra.mxu0 0
      %4538 = vmatprep.subr.bf16.mxu0 0
      %4539 = vmatpush1.bf16.xpose.msra.mxu0 0
      %4540 = vmatprep.subr.bf16.mxu0 0
      %4541 = vmatpush1.bf16.xpose.msra.mxu0 0
      %4542 = vmatprep.subr.bf16.mxu0 0
      %4543 = vmatpush1.bf16.xpose.msra.mxu0 0
      %4544 = vmatprep.subr.bf16.mxu0 0
      %4545 = vmatpush1.bf16.xpose.msra.mxu0 0
      %4546 = vmatprep.mubr.bf16.mxu0 0
      %4547 = vmatmul.mubr.bf16.gmra.mrb[0].mxu0 %v4509
      %v4548 = vpop.f32.mrb[0].mxu0
      %v4549 = vadd.f32 %v837, %v4548
      %v4550 = vpop.f32.mrb[0].mxu0
      %v4551 = vpop.f32.mrb[0].mxu0
      %v4552 = vpop.f32.mrb[0].mxu0
      %4553 = vdwg.mxu0
      %v4555 = vsel %vm1073, %v4456, 0
      %v4558 = vsel %vm1073, %v4460, 0
      %4560 = vmatprep.subr.bf16.mxu0 0
      %4561 = vmatpush1.bf16.xpose.msra.mxu0 %v4558
      %4562 = vmatprep.subr.bf16.mxu0 0
      %4563 = vmatpush1.bf16.xpose.msra.mxu0 0
      %4564 = vmatprep.subr.bf16.mxu0 0
      %4565 = vmatpush1.bf16.xpose.msra.mxu0 0
      %4566 = vmatprep.subr.bf16.mxu0 0
      %4567 = vmatpush1.bf16.xpose.msra.mxu0 0
      %4568 = vmatprep.subr.bf16.mxu0 0
      %4569 = vmatpush1.bf16.xpose.msra.mxu0 0
      %4570 = vmatprep.subr.bf16.mxu0 0
      %4571 = vmatpush1.bf16.xpose.msra.mxu0 0
      %4572 = vmatprep.subr.bf16.mxu0 0
      %4573 = vmatpush1.bf16.xpose.msra.mxu0 0
      %4574 = vmatprep.subr.bf16.mxu0 0
      %4575 = vmatpush1.bf16.xpose.msra.mxu0 0
      %4576 = vmatprep.subr.bf16.mxu0 0
      %4577 = vmatpush1.bf16.xpose.msra.mxu0 0
      %4578 = vmatprep.subr.bf16.mxu0 0
      %4579 = vmatpush1.bf16.xpose.msra.mxu0 0
      %4580 = vmatprep.subr.bf16.mxu0 0
      %4581 = vmatpush1.bf16.xpose.msra.mxu0 0
      %4582 = vmatprep.subr.bf16.mxu0 0
      %4583 = vmatpush1.bf16.xpose.msra.mxu0 0
      %4584 = vmatprep.subr.bf16.mxu0 0
      %4585 = vmatpush1.bf16.xpose.msra.mxu0 0
      %4586 = vmatprep.subr.bf16.mxu0 0
      %4587 = vmatpush1.bf16.xpose.msra.mxu0 0
      %4588 = vmatprep.subr.bf16.mxu0 0
      %4589 = vmatpush1.bf16.xpose.msra.mxu0 0
      %4590 = vmatprep.subr.bf16.mxu0 0
      %4591 = vmatpush1.bf16.xpose.msra.mxu0 0
      %4592 = vmatprep.mubr.bf16.mxu0 0
      %4593 = vmatmul.mubr.bf16.gmra.mrb[0].mxu0 %v4555
      %v4594 = vpop.f32.mrb[0].mxu0
      %v4595 = vadd.f32 %v838, %v4594
      %v4596 = vpop.f32.mrb[0].mxu0
      %v4597 = vpop.f32.mrb[0].mxu0
      %v4598 = vpop.f32.mrb[0].mxu0
      %4599 = vdwg.mxu0
      %v4601 = vsel %vm1073, %v4457, 0
      %v4604 = vsel %vm1073, %v4461, 0
      %4606 = vmatprep.subr.bf16.mxu0 0
      %4607 = vmatpush1.bf16.xpose.msra.mxu0 %v4604
      %4608 = vmatprep.subr.bf16.mxu0 0
      %4609 = vmatpush1.bf16.xpose.msra.mxu0 0
      %4610 = vmatprep.subr.bf16.mxu0 0
      %4611 = vmatpush1.bf16.xpose.msra.mxu0 0
      %4612 = vmatprep.subr.bf16.mxu0 0
      %4613 = vmatpush1.bf16.xpose.msra.mxu0 0
      %4614 = vmatprep.subr.bf16.mxu0 0
      %4615 = vmatpush1.bf16.xpose.msra.mxu0 0
      %4616 = vmatprep.subr.bf16.mxu0 0
      %4617 = vmatpush1.bf16.xpose.msra.mxu0 0
      %4618 = vmatprep.subr.bf16.mxu0 0
      %4619 = vmatpush1.bf16.xpose.msra.mxu0 0
      %4620 = vmatprep.subr.bf16.mxu0 0
      %4621 = vmatpush1.bf16.xpose.msra.mxu0 0
      %4622 = vmatprep.subr.bf16.mxu0 0
      %4623 = vmatpush1.bf16.xpose.msra.mxu0 0
      %4624 = vmatprep.subr.bf16.mxu0 0
      %4625 = vmatpush1.bf16.xpose.msra.mxu0 0
      %4626 = vmatprep.subr.bf16.mxu0 0
      %4627 = vmatpush1.bf16.xpose.msra.mxu0 0
      %4628 = vmatprep.subr.bf16.mxu0 0
      %4629 = vmatpush1.bf16.xpose.msra.mxu0 0
      %4630 = vmatprep.subr.bf16.mxu0 0
      %4631 = vmatpush1.bf16.xpose.msra.mxu0 0
      %4632 = vmatprep.subr.bf16.mxu0 0
      %4633 = vmatpush1.bf16.xpose.msra.mxu0 0
      %4634 = vmatprep.subr.bf16.mxu0 0
      %4635 = vmatpush1.bf16.xpose.msra.mxu0 0
      %4636 = vmatprep.subr.bf16.mxu0 0
      %4637 = vmatpush1.bf16.xpose.msra.mxu0 0
      %4638 = vmatprep.mubr.bf16.mxu0 0
      %4639 = vmatmul.mubr.bf16.gmra.mrb[0].mxu0 %v4601
      %v4640 = vpop.f32.mrb[0].mxu0
      %v4641 = vadd.f32 %v839, %v4640
      %v4642 = vpop.f32.mrb[0].mxu0
      %v4643 = vpop.f32.mrb[0].mxu0
      %v4644 = vpop.f32.mrb[0].mxu0
      %4645 = vdwg.mxu0
      %v4646 = vsel %vm1073, %v4503, -inf
      %4647 = vmax.xlane.f32.xlu0 %v4646
      %v4648 = vpop.xlane.xlu0 %4647
      %v4649 = vsel %vm1073, %v4549, -inf
      %4650 = vmax.xlane.f32.xlu0 %v4649
      %v4651 = vpop.xlane.xlu0 %4650
      %v4652 = vsel %vm1073, %v4595, -inf
      %4653 = vmax.xlane.f32.xlu0 %v4652
      %v4654 = vpop.xlane.xlu0 %4653
      %v4655 = vsel %vm1073, %v4641, -inf
      %4656 = vmax.xlane.f32.xlu0 %v4655
      %v4657 = vpop.xlane.xlu0 %4656
      %v4658 = vsub.f32 %v4503, %v4648
      %v4659 = vsub.f32 %v4549, %v4651
      %v4660 = vsub.f32 %v4595, %v4654
      %v4661 = vsub.f32 %v4641, %v4657
      %v4662 = vmul.f32 %v4658, 1.442695
      %v4663 = vpow.pop %v4662
      %v4664 = vmul.f32 %v4659, 1.442695
      %v4665 = vpow.pop %v4664
      %v4666 = vmul.f32 %v4660, 1.442695
      %v4667 = vpow.pop %v4666
      %v4668 = vmul.f32 %v4661, 1.442695
      %v4669 = vpow.pop %v4668
      %v4670 = vsel %vm1073, %v4663, 0.0
      %4671 = vadd.xlane.f32.xlu0 %v4670
      %v4672 = vpop.xlane.xlu0 %4671
      %v4673 = vsel %vm1073, %v4665, 0.0
      %4674 = vadd.xlane.f32.xlu0 %v4673
      %v4675 = vpop.xlane.xlu0 %4674
      %v4676 = vsel %vm1073, %v4667, 0.0
      %4677 = vadd.xlane.f32.xlu0 %v4676
      %v4678 = vpop.xlane.xlu0 %4677
      %v4679 = vsel %vm1073, %v4669, 0.0
      %4680 = vadd.xlane.f32.xlu0 %v4679
      %v4681 = vpop.xlane.xlu0 %4680
      %v4682 = vpack.c.bf16 %v4663, %v4663
      %v4683 = vpack.c.bf16 %v4665, %v4665
      %v4684 = vpack.c.bf16 %v4667, %v4667
      %v4685 = vpack.c.bf16 %v4669, %v4669
      %v4686 = vpack.c.bf16 %v4419, %v4419
      %v4687 = vpack.c.bf16 %v4446, %v4446
      %v4688 = vpack.c.bf16 %v4449, %v4449
      %v4689 = vpack.c.bf16 %v4452, %v4452
      %v4691 = vsel %vm1073, %v4682, 0
      %v4694 = vsel %vm1305, %v4686, 0
      %4696 = vmatprep.subr.bf16.mxu0 0
      %4697 = vmatpush1.bf16.msra.mxu0 %v4694
      %4698 = vmatprep.subr.bf16.mxu0 0
      %4699 = vmatpush1.bf16.msra.mxu0 0
      %4700 = vmatprep.subr.bf16.mxu0 0
      %4701 = vmatpush1.bf16.msra.mxu0 0
      %4702 = vmatprep.subr.bf16.mxu0 0
      %4703 = vmatpush1.bf16.msra.mxu0 0
      %4704 = vmatprep.subr.bf16.mxu0 0
      %4705 = vmatpush1.bf16.msra.mxu0 0
      %4706 = vmatprep.subr.bf16.mxu0 0
      %4707 = vmatpush1.bf16.msra.mxu0 0
      %4708 = vmatprep.subr.bf16.mxu0 0
      %4709 = vmatpush1.bf16.msra.mxu0 0
      %4710 = vmatprep.subr.bf16.mxu0 0
      %4711 = vmatpush1.bf16.msra.mxu0 0
      %4712 = vmatprep.subr.bf16.mxu0 0
      %4713 = vmatpush1.bf16.msra.mxu0 0
      %4714 = vmatprep.subr.bf16.mxu0 0
      %4715 = vmatpush1.bf16.msra.mxu0 0
      %4716 = vmatprep.subr.bf16.mxu0 0
      %4717 = vmatpush1.bf16.msra.mxu0 0
      %4718 = vmatprep.subr.bf16.mxu0 0
      %4719 = vmatpush1.bf16.msra.mxu0 0
      %4720 = vmatprep.subr.bf16.mxu0 0
      %4721 = vmatpush1.bf16.msra.mxu0 0
      %4722 = vmatprep.subr.bf16.mxu0 0
      %4723 = vmatpush1.bf16.msra.mxu0 0
      %4724 = vmatprep.subr.bf16.mxu0 0
      %4725 = vmatpush1.bf16.msra.mxu0 0
      %4726 = vmatprep.subr.bf16.mxu0 0
      %4727 = vmatpush1.bf16.msra.mxu0 0
      %4728 = vmatprep.mubr.bf16.mxu0 0
      %4729 = vmatmul.mubr.bf16.gmra.mrb[0].mxu0 %v4691
      %v4730 = vpop.f32.mrb[0].mxu0
      %v4731 = vadd.f32 0.0, %v4730
      %v4732 = vpop.f32.mrb[0].mxu0
      %v4733 = vpop.f32.mrb[0].mxu0
      %v4734 = vpop.f32.mrb[0].mxu0
      %4735 = vdwg.mxu0
      %v4737 = vsel %vm1073, %v4683, 0
      %v4740 = vsel %vm1305, %v4687, 0
      %4742 = vmatprep.subr.bf16.mxu0 0
      %4743 = vmatpush1.bf16.msra.mxu0 %v4740
      %4744 = vmatprep.subr.bf16.mxu0 0
      %4745 = vmatpush1.bf16.msra.mxu0 0
      %4746 = vmatprep.subr.bf16.mxu0 0
      %4747 = vmatpush1.bf16.msra.mxu0 0
      %4748 = vmatprep.subr.bf16.mxu0 0
      %4749 = vmatpush1.bf16.msra.mxu0 0
      %4750 = vmatprep.subr.bf16.mxu0 0
      %4751 = vmatpush1.bf16.msra.mxu0 0
      %4752 = vmatprep.subr.bf16.mxu0 0
      %4753 = vmatpush1.bf16.msra.mxu0 0
      %4754 = vmatprep.subr.bf16.mxu0 0
      %4755 = vmatpush1.bf16.msra.mxu0 0
      %4756 = vmatprep.subr.bf16.mxu0 0
      %4757 = vmatpush1.bf16.msra.mxu0 0
      %4758 = vmatprep.subr.bf16.mxu0 0
      %4759 = vmatpush1.bf16.msra.mxu0 0
      %4760 = vmatprep.subr.bf16.mxu0 0
      %4761 = vmatpush1.bf16.msra.mxu0 0
      %4762 = vmatprep.subr.bf16.mxu0 0
      %4763 = vmatpush1.bf16.msra.mxu0 0
      %4764 = vmatprep.subr.bf16.mxu0 0
      %4765 = vmatpush1.bf16.msra.mxu0 0
      %4766 = vmatprep.subr.bf16.mxu0 0
      %4767 = vmatpush1.bf16.msra.mxu0 0
      %4768 = vmatprep.subr.bf16.mxu0 0
      %4769 = vmatpush1.bf16.msra.mxu0 0
      %4770 = vmatprep.subr.bf16.mxu0 0
      %4771 = vmatpush1.bf16.msra.mxu0 0
      %4772 = vmatprep.subr.bf16.mxu0 0
      %4773 = vmatpush1.bf16.msra.mxu0 0
      %4774 = vmatprep.mubr.bf16.mxu0 0
      %4775 = vmatmul.mubr.bf16.gmra.mrb[0].mxu0 %v4737
      %v4776 = vpop.f32.mrb[0].mxu0
      %v4777 = vadd.f32 0.0, %v4776
      %v4778 = vpop.f32.mrb[0].mxu0
      %v4779 = vpop.f32.mrb[0].mxu0
      %v4780 = vpop.f32.mrb[0].mxu0
      %4781 = vdwg.mxu0
      %v4783 = vsel %vm1073, %v4684, 0
      %v4786 = vsel %vm1305, %v4688, 0
      %4788 = vmatprep.subr.bf16.mxu0 0
      %4789 = vmatpush1.bf16.msra.mxu0 %v4786
      %4790 = vmatprep.subr.bf16.mxu0 0
      %4791 = vmatpush1.bf16.msra.mxu0 0
      %4792 = vmatprep.subr.bf16.mxu0 0
      %4793 = vmatpush1.bf16.msra.mxu0 0
      %4794 = vmatprep.subr.bf16.mxu0 0
      %4795 = vmatpush1.bf16.msra.mxu0 0
      %4796 = vmatprep.subr.bf16.mxu0 0
      %4797 = vmatpush1.bf16.msra.mxu0 0
      %4798 = vmatprep.subr.bf16.mxu0 0
      %4799 = vmatpush1.bf16.msra.mxu0 0
      %4800 = vmatprep.subr.bf16.mxu0 0
      %4801 = vmatpush1.bf16.msra.mxu0 0
      %4802 = vmatprep.subr.bf16.mxu0 0
      %4803 = vmatpush1.bf16.msra.mxu0 0
      %4804 = vmatprep.subr.bf16.mxu0 0
      %4805 = vmatpush1.bf16.msra.mxu0 0
      %4806 = vmatprep.subr.bf16.mxu0 0
      %4807 = vmatpush1.bf16.msra.mxu0 0
      %4808 = vmatprep.subr.bf16.mxu0 0
      %4809 = vmatpush1.bf16.msra.mxu0 0
      %4810 = vmatprep.subr.bf16.mxu0 0
      %4811 = vmatpush1.bf16.msra.mxu0 0
      %4812 = vmatprep.subr.bf16.mxu0 0
      %4813 = vmatpush1.bf16.msra.mxu0 0
      %4814 = vmatprep.subr.bf16.mxu0 0
      %4815 = vmatpush1.bf16.msra.mxu0 0
      %4816 = vmatprep.subr.bf16.mxu0 0
      %4817 = vmatpush1.bf16.msra.mxu0 0
      %4818 = vmatprep.subr.bf16.mxu0 0
      %4819 = vmatpush1.bf16.msra.mxu0 0
      %4820 = vmatprep.mubr.bf16.mxu0 0
      %4821 = vmatmul.mubr.bf16.gmra.mrb[0].mxu0 %v4783
      %v4822 = vpop.f32.mrb[0].mxu0
      %v4823 = vadd.f32 0.0, %v4822
      %v4824 = vpop.f32.mrb[0].mxu0
      %v4825 = vpop.f32.mrb[0].mxu0
      %v4826 = vpop.f32.mrb[0].mxu0
      %4827 = vdwg.mxu0
      %v4829 = vsel %vm1073, %v4685, 0
      %v4832 = vsel %vm1305, %v4689, 0
      %4834 = vmatprep.subr.bf16.mxu0 0
      %4835 = vmatpush1.bf16.msra.mxu0 %v4832
      %4836 = vmatprep.subr.bf16.mxu0 0
      %4837 = vmatpush1.bf16.msra.mxu0 0
      %4838 = vmatprep.subr.bf16.mxu0 0
      %4839 = vmatpush1.bf16.msra.mxu0 0
      %4840 = vmatprep.subr.bf16.mxu0 0
      %4841 = vmatpush1.bf16.msra.mxu0 0
      %4842 = vmatprep.subr.bf16.mxu0 0
      %4843 = vmatpush1.bf16.msra.mxu0 0
      %4844 = vmatprep.subr.bf16.mxu0 0
      %4845 = vmatpush1.bf16.msra.mxu0 0
      %4846 = vmatprep.subr.bf16.mxu0 0
      %4847 = vmatpush1.bf16.msra.mxu0 0
      %4848 = vmatprep.subr.bf16.mxu0 0
      %4849 = vmatpush1.bf16.msra.mxu0 0
      %4850 = vmatprep.subr.bf16.mxu0 0
      %4851 = vmatpush1.bf16.msra.mxu0 0
      %4852 = vmatprep.subr.bf16.mxu0 0
      %4853 = vmatpush1.bf16.msra.mxu0 0
      %4854 = vmatprep.subr.bf16.mxu0 0
      %4855 = vmatpush1.bf16.msra.mxu0 0
      %4856 = vmatprep.subr.bf16.mxu0 0
      %4857 = vmatpush1.bf16.msra.mxu0 0
      %4858 = vmatprep.subr.bf16.mxu0 0
      %4859 = vmatpush1.bf16.msra.mxu0 0
      %4860 = vmatprep.subr.bf16.mxu0 0
      %4861 = vmatpush1.bf16.msra.mxu0 0
      %4862 = vmatprep.subr.bf16.mxu0 0
      %4863 = vmatpush1.bf16.msra.mxu0 0
      %4864 = vmatprep.subr.bf16.mxu0 0
      %4865 = vmatpush1.bf16.msra.mxu0 0
      %4866 = vmatprep.mubr.bf16.mxu0 0
      %4867 = vmatmul.mubr.bf16.gmra.mrb[0].mxu0 %v4829
      %v4868 = vpop.f32.mrb[0].mxu0
      %v4869 = vadd.f32 0.0, %v4868
      %v4870 = vpop.f32.mrb[0].mxu0
      %v4871 = vpop.f32.mrb[0].mxu0
      %v4872 = vpop.f32.mrb[0].mxu0
      %4873 = vdwg.mxu0
      %v4874 = vrcp.pop %v4672
      %v4875 = vrcp.pop %v4675
      %v4876 = vrcp.pop %v4678
      %v4877 = vrcp.pop %v4681
      %v4878 = vmul.f32 %v4731, %v4874
      %v4879 = vmul.f32 %v4777, %v4875
      %v4880 = vmul.f32 %v4823, %v4876
      %v4881 = vmul.f32 %v4869, %v4877
      %4883 = vrot.lane.b32.xlu0 %v4879, 8
      %v4884 = vpop.permute.xlu0 %4883
      %4887 = vrot.lane.b32.xlu0 %v4880, 16
      %v4888 = vpop.permute.xlu0 %4887
      %4891 = vrot.lane.b32.xlu0 %v4881, 24
      %v4892 = vpop.permute.xlu0 %4891
      %v4894 = vsel %vm1073, %v4878, %v4884
      %v4895 = vsel %vm1508, %v4894, %v4888
      %v4896 = vsel %vm1510, %v4895, %v4892
      %v4897 = vpack.c.bf16 %v4896, %v4896
      %v4902 = vunpack.c.l.b16 %v4260
      %v4903 = vunpack.c.l.b16 %v4261
      %v4904 = vunpack.c.l.b16 %v4262
      %v4905 = vunpack.c.l.b16 %v4263
      %v4906 = vpack.c.b16 %v4903, %v4902
      %v4907 = vpack.c.b16 %v4905, %v4904
      %v4911 = vsel %vm843, %v4897, 0
      %4913 = vmatprep.subr.bf16.mxu0 0
      %4914 = vmatpush1.bf16.msra.mxu0 %v4906
      %4915 = vmatprep.subr.bf16.mxu0 0
      %4916 = vmatpush1.bf16.msra.mxu0 %v4907
      %4917 = vmatprep.subr.bf16.mxu0 0
      %4918 = vmatpush1.bf16.msra.mxu0 0
      %4919 = vmatprep.subr.bf16.mxu0 0
      %4920 = vmatpush1.bf16.msra.mxu0 0
      %4921 = vmatprep.subr.bf16.mxu0 0
      %4922 = vmatpush1.bf16.msra.mxu0 0
      %4923 = vmatprep.subr.bf16.mxu0 0
      %4924 = vmatpush1.bf16.msra.mxu0 0
      %4925 = vmatprep.subr.bf16.mxu0 0
      %4926 = vmatpush1.bf16.msra.mxu0 0
      %4927 = vmatprep.subr.bf16.mxu0 0
      %4928 = vmatpush1.bf16.msra.mxu0 0
      %4929 = vmatprep.subr.bf16.mxu0 0
      %4930 = vmatpush1.bf16.msra.mxu0 0
      %4931 = vmatprep.subr.bf16.mxu0 0
      %4932 = vmatpush1.bf16.msra.mxu0 0
      %4933 = vmatprep.subr.bf16.mxu0 0
      %4934 = vmatpush1.bf16.msra.mxu0 0
      %4935 = vmatprep.subr.bf16.mxu0 0
      %4936 = vmatpush1.bf16.msra.mxu0 0
      %4937 = vmatprep.subr.bf16.mxu0 0
      %4938 = vmatpush1.bf16.msra.mxu0 0
      %4939 = vmatprep.subr.bf16.mxu0 0
      %4940 = vmatpush1.bf16.msra.mxu0 0
      %4941 = vmatprep.subr.bf16.mxu0 0
      %4942 = vmatpush1.bf16.msra.mxu0 0
      %4943 = vmatprep.subr.bf16.mxu0 0
      %4944 = vmatpush1.bf16.msra.mxu0 0
      %4945 = vmatprep.mubr.bf16.mxu0 0
      %4946 = vmatmul.mubr.bf16.gmra.mrb[0].mxu0 %v4911
      %v4947 = vpop.f32.mrb[0].mxu0
      %v4948 = vadd.f32 0.0, %v4947
      %v4949 = vpop.f32.mrb[0].mxu0
      %v4950 = vpop.f32.mrb[0].mxu0
      %v4951 = vpop.f32.mrb[0].mxu0
      %4952 = vdwg.mxu0
      %v4953 = vadd.f32 %v4226, %v4948
      %s4954 = scalar_lea.vmem %s22, 1
      %v4955 = vld [vmem:[%s4954] sm:$0x1]
      %v4956 = vmul.f32 %v4953, %v4953
      %v4957 = vsel %vm843, %v4956, 0.0
      %4958 = vadd.xlane.f32.xlu0 %v4957
      %v4959 = vpop.xlane.xlu0 %4958
      %v4960 = vmul.f32 %v4959, %v847
      %v4961 = vadd.f32 %v4960, 1e-06
      %v4962 = vrsqrt.pop %v4961
      %v4963 = vmul.f32 %v4953, %v4962
      %v4965 = vlaneseq
      %v4966 = vshrl.u32 %v4965, 7
      %v4967 = vsub.s32 0, %v4966
      %v4968 = vrot.slane %v4955, %v4967
      %v4970 = vmul.f32 %v4963, %v4968
      %s4971 = scalar_lea.vmem %s17, 16
      %v4972 = vld [vmem:[%s4971] sm:$0xf]
      %v4973 = vld [vmem:[%s4971 + $0x4] sm:$0xf]
      %v4974 = vld [vmem:[%s4971 + $0x8] sm:$0xf]
      %v4975 = vld [vmem:[%s4971 + $0xc] sm:$0xf]
      %s4976 = scalar_lea.vmem %s18, 16
      %v4977 = vld [vmem:[%s4976] sm:$0xf]
      %v4978 = vld [vmem:[%s4976 + $0x4] sm:$0xf]
      %v4979 = vld [vmem:[%s4976 + $0x8] sm:$0xf]
      %v4980 = vld [vmem:[%s4976 + $0xc] sm:$0xf]
      %s4981 = scalar_lea.vmem %s19, 16
      %v4982 = vld [vmem:[%s4981] sm:$0xf]
      %v4983 = vld [vmem:[%s4981 + $0x4] sm:$0xf]
      %v4984 = vld [vmem:[%s4981 + $0x8] sm:$0xf]
      %v4985 = vld [vmem:[%s4981 + $0xc] sm:$0xf]
      %s4986 = scalar_lea.vmem %s20, 16
      %v4987 = vld [vmem:[%s4986] sm:$0xf]
      %v4988 = vld [vmem:[%s4986 + $0x4] sm:$0xf]
      %v4989 = vld [vmem:[%s4986 + $0x8] sm:$0xf]
      %v4990 = vld [vmem:[%s4986 + $0xc] sm:$0xf]
      %v4991 = vpack.c.bf16 %v4970, %v4970
      %v4996 = vunpack.c.l.b16 %v4972
      %v4997 = vunpack.c.l.b16 %v4973
      %v4998 = vunpack.c.l.b16 %v4974
      %v4999 = vunpack.c.l.b16 %v4975
      %v5000 = vpack.c.b16 %v4997, %v4996
      %v5001 = vpack.c.b16 %v4999, %v4998
      %v5005 = vsel %vm843, %v4991, 0
      %5007 = vmatprep.subr.bf16.mxu0 0
      %5008 = vmatpush1.bf16.msra.mxu0 %v5000
      %5009 = vmatprep.subr.bf16.mxu0 0
      %5010 = vmatpush1.bf16.msra.mxu0 %v5001
      %5011 = vmatprep.subr.bf16.mxu0 0
      %5012 = vmatpush1.bf16.msra.mxu0 0
      %5013 = vmatprep.subr.bf16.mxu0 0
      %5014 = vmatpush1.bf16.msra.mxu0 0
      %5015 = vmatprep.subr.bf16.mxu0 0
      %5016 = vmatpush1.bf16.msra.mxu0 0
      %5017 = vmatprep.subr.bf16.mxu0 0
      %5018 = vmatpush1.bf16.msra.mxu0 0
      %5019 = vmatprep.subr.bf16.mxu0 0
      %5020 = vmatpush1.bf16.msra.mxu0 0
      %5021 = vmatprep.subr.bf16.mxu0 0
      %5022 = vmatpush1.bf16.msra.mxu0 0
      %5023 = vmatprep.subr.bf16.mxu0 0
      %5024 = vmatpush1.bf16.msra.mxu0 0
      %5025 = vmatprep.subr.bf16.mxu0 0
      %5026 = vmatpush1.bf16.msra.mxu0 0
      %5027 = vmatprep.subr.bf16.mxu0 0
      %5028 = vmatpush1.bf16.msra.mxu0 0
      %5029 = vmatprep.subr.bf16.mxu0 0
      %5030 = vmatpush1.bf16.msra.mxu0 0
      %5031 = vmatprep.subr.bf16.mxu0 0
      %5032 = vmatpush1.bf16.msra.mxu0 0
      %5033 = vmatprep.subr.bf16.mxu0 0
      %5034 = vmatpush1.bf16.msra.mxu0 0
      %5035 = vmatprep.subr.bf16.mxu0 0
      %5036 = vmatpush1.bf16.msra.mxu0 0
      %5037 = vmatprep.subr.bf16.mxu0 0
      %5038 = vmatpush1.bf16.msra.mxu0 0
      %5039 = vmatprep.mubr.bf16.mxu0 0
      %5040 = vmatmul.mubr.bf16.gmra.mrb[0].mxu0 %v5005
      %v5041 = vpop.f32.mrb[0].mxu0
      %v5042 = vadd.f32 0.0, %v5041
      %v5043 = vpop.f32.mrb[0].mxu0
      %v5044 = vpop.f32.mrb[0].mxu0
      %v5045 = vpop.f32.mrb[0].mxu0
      %5046 = vdwg.mxu0
      %v5051 = vunpack.c.l.b16 %v4977
      %v5052 = vunpack.c.l.b16 %v4978
      %v5053 = vunpack.c.l.b16 %v4979
      %v5054 = vunpack.c.l.b16 %v4980
      %v5055 = vpack.c.b16 %v5052, %v5051
      %v5056 = vpack.c.b16 %v5054, %v5053
      %5059 = vmatprep.subr.bf16.mxu0 0
      %5060 = vmatpush1.bf16.msra.mxu0 %v5055
      %5061 = vmatprep.subr.bf16.mxu0 0
      %5062 = vmatpush1.bf16.msra.mxu0 %v5056
      %5063 = vmatprep.subr.bf16.mxu0 0
      %5064 = vmatpush1.bf16.msra.mxu0 0
      %5065 = vmatprep.subr.bf16.mxu0 0
      %5066 = vmatpush1.bf16.msra.mxu0 0
      %5067 = vmatprep.subr.bf16.mxu0 0
      %5068 = vmatpush1.bf16.msra.mxu0 0
      %5069 = vmatprep.subr.bf16.mxu0 0
      %5070 = vmatpush1.bf16.msra.mxu0 0
      %5071 = vmatprep.subr.bf16.mxu0 0
      %5072 = vmatpush1.bf16.msra.mxu0 0
      %5073 = vmatprep.subr.bf16.mxu0 0
      %5074 = vmatpush1.bf16.msra.mxu0 0
      %5075 = vmatprep.subr.bf16.mxu0 0
      %5076 = vmatpush1.bf16.msra.mxu0 0
      %5077 = vmatprep.subr.bf16.mxu0 0
      %5078 = vmatpush1.bf16.msra.mxu0 0
      %5079 = vmatprep.subr.bf16.mxu0 0
      %5080 = vmatpush1.bf16.msra.mxu0 0
      %5081 = vmatprep.subr.bf16.mxu0 0
      %5082 = vmatpush1.bf16.msra.mxu0 0
      %5083 = vmatprep.subr.bf16.mxu0 0
      %5084 = vmatpush1.bf16.msra.mxu0 0
      %5085 = vmatprep.subr.bf16.mxu0 0
      %5086 = vmatpush1.bf16.msra.mxu0 0
      %5087 = vmatprep.subr.bf16.mxu0 0
      %5088 = vmatpush1.bf16.msra.mxu0 0
      %5089 = vmatprep.subr.bf16.mxu0 0
      %5090 = vmatpush1.bf16.msra.mxu0 0
      %5091 = vmatprep.mubr.bf16.mxu0 0
      %5092 = vmatmul.mubr.bf16.gmra.mrb[0].mxu0 %v3449
      %v5093 = vpop.f32.mrb[0].mxu0
      %v5094 = vadd.f32 0.0, %v5093
      %v5095 = vpop.f32.mrb[0].mxu0
      %v5096 = vpop.f32.mrb[0].mxu0
      %v5097 = vpop.f32.mrb[0].mxu0
      %5098 = vdwg.mxu0
      %v5103 = vunpack.c.l.b16 %v4982
      %v5104 = vunpack.c.l.b16 %v4983
      %v5105 = vunpack.c.l.b16 %v4984
      %v5106 = vunpack.c.l.b16 %v4985
      %v5107 = vpack.c.b16 %v5104, %v5103
      %v5108 = vpack.c.b16 %v5106, %v5105
      %5111 = vmatprep.subr.bf16.mxu0 0
      %5112 = vmatpush1.bf16.msra.mxu0 %v5107
      %5113 = vmatprep.subr.bf16.mxu0 0
      %5114 = vmatpush1.bf16.msra.mxu0 %v5108
      %5115 = vmatprep.subr.bf16.mxu0 0
      %5116 = vmatpush1.bf16.msra.mxu0 0
      %5117 = vmatprep.subr.bf16.mxu0 0
      %5118 = vmatpush1.bf16.msra.mxu0 0
      %5119 = vmatprep.subr.bf16.mxu0 0
      %5120 = vmatpush1.bf16.msra.mxu0 0
      %5121 = vmatprep.subr.bf16.mxu0 0
      %5122 = vmatpush1.bf16.msra.mxu0 0
      %5123 = vmatprep.subr.bf16.mxu0 0
      %5124 = vmatpush1.bf16.msra.mxu0 0
      %5125 = vmatprep.subr.bf16.mxu0 0
      %5126 = vmatpush1.bf16.msra.mxu0 0
      %5127 = vmatprep.subr.bf16.mxu0 0
      %5128 = vmatpush1.bf16.msra.mxu0 0
      %5129 = vmatprep.subr.bf16.mxu0 0
      %5130 = vmatpush1.bf16.msra.mxu0 0
      %5131 = vmatprep.subr.bf16.mxu0 0
      %5132 = vmatpush1.bf16.msra.mxu0 0
      %5133 = vmatprep.subr.bf16.mxu0 0
      %5134 = vmatpush1.bf16.msra.mxu0 0
      %5135 = vmatprep.subr.bf16.mxu0 0
      %5136 = vmatpush1.bf16.msra.mxu0 0
      %5137 = vmatprep.subr.bf16.mxu0 0
      %5138 = vmatpush1.bf16.msra.mxu0 0
      %5139 = vmatprep.subr.bf16.mxu0 0
      %5140 = vmatpush1.bf16.msra.mxu0 0
      %5141 = vmatprep.subr.bf16.mxu0 0
      %5142 = vmatpush1.bf16.msra.mxu0 0
      %5143 = vmatprep.mubr.bf16.mxu0 0
      %5144 = vmatmul.mubr.bf16.gmra.mrb[0].mxu0 %v3449
      %v5145 = vpop.f32.mrb[0].mxu0
      %v5146 = vadd.f32 0.0, %v5145
      %v5147 = vpop.f32.mrb[0].mxu0
      %v5148 = vpop.f32.mrb[0].mxu0
      %v5149 = vpop.f32.mrb[0].mxu0
      %5150 = vdwg.mxu0
      %5152 = vrot.lane.b32.xlu0 %v5042, 120
      %v5153 = vpop.permute.xlu0 %5152
      %5155 = vrot.lane.b32.xlu0 %v5042, 112
      %v5156 = vpop.permute.xlu0 %5155
      %5158 = vrot.lane.b32.xlu0 %v5042, 104
      %v5159 = vpop.permute.xlu0 %5158
      %5162 = vrot.lane.b32.xlu0 %v5094, 120
      %v5163 = vpop.permute.xlu0 %5162
      %5165 = vrot.lane.b32.xlu0 %v5094, 112
      %v5166 = vpop.permute.xlu0 %5165
      %5168 = vrot.lane.b32.xlu0 %v5094, 104
      %v5169 = vpop.permute.xlu0 %5168
      %5172 = vrot.lane.b32.xlu0 %v5146, 120
      %v5173 = vpop.permute.xlu0 %5172
      %5175 = vrot.lane.b32.xlu0 %v5146, 112
      %v5176 = vpop.permute.xlu0 %5175
      %5178 = vrot.lane.b32.xlu0 %v5146, 104
      %v5179 = vpop.permute.xlu0 %5178
      %v5181 = vpack.c.bf16 %v5042, %v5042
      %v5182 = vpack.c.bf16 %v5153, %v5153
      %v5183 = vpack.c.bf16 %v5156, %v5156
      %v5184 = vpack.c.bf16 %v5159, %v5159
      %v5185 = vpack.c.bf16 %v5094, %v5094
      %v5186 = vpack.c.bf16 %v5163, %v5163
      %v5187 = vpack.c.bf16 %v5166, %v5166
      %v5188 = vpack.c.bf16 %v5169, %v5169
      %v5190 = vsel %vm1073, %v5181, 0
      %v5193 = vsel %vm1073, %v5185, 0
      %5195 = vmatprep.subr.bf16.mxu0 0
      %5196 = vmatpush1.bf16.xpose.msra.mxu0 %v5193
      %5197 = vmatprep.subr.bf16.mxu0 0
      %5198 = vmatpush1.bf16.xpose.msra.mxu0 0
      %5199 = vmatprep.subr.bf16.mxu0 0
      %5200 = vmatpush1.bf16.xpose.msra.mxu0 0
      %5201 = vmatprep.subr.bf16.mxu0 0
      %5202 = vmatpush1.bf16.xpose.msra.mxu0 0
      %5203 = vmatprep.subr.bf16.mxu0 0
      %5204 = vmatpush1.bf16.xpose.msra.mxu0 0
      %5205 = vmatprep.subr.bf16.mxu0 0
      %5206 = vmatpush1.bf16.xpose.msra.mxu0 0
      %5207 = vmatprep.subr.bf16.mxu0 0
      %5208 = vmatpush1.bf16.xpose.msra.mxu0 0
      %5209 = vmatprep.subr.bf16.mxu0 0
      %5210 = vmatpush1.bf16.xpose.msra.mxu0 0
      %5211 = vmatprep.subr.bf16.mxu0 0
      %5212 = vmatpush1.bf16.xpose.msra.mxu0 0
      %5213 = vmatprep.subr.bf16.mxu0 0
      %5214 = vmatpush1.bf16.xpose.msra.mxu0 0
      %5215 = vmatprep.subr.bf16.mxu0 0
      %5216 = vmatpush1.bf16.xpose.msra.mxu0 0
      %5217 = vmatprep.subr.bf16.mxu0 0
      %5218 = vmatpush1.bf16.xpose.msra.mxu0 0
      %5219 = vmatprep.subr.bf16.mxu0 0
      %5220 = vmatpush1.bf16.xpose.msra.mxu0 0
      %5221 = vmatprep.subr.bf16.mxu0 0
      %5222 = vmatpush1.bf16.xpose.msra.mxu0 0
      %5223 = vmatprep.subr.bf16.mxu0 0
      %5224 = vmatpush1.bf16.xpose.msra.mxu0 0
      %5225 = vmatprep.subr.bf16.mxu0 0
      %5226 = vmatpush1.bf16.xpose.msra.mxu0 0
      %5227 = vmatprep.mubr.bf16.mxu0 0
      %5228 = vmatmul.mubr.bf16.gmra.mrb[0].mxu0 %v5190
      %v5229 = vpop.f32.mrb[0].mxu0
      %v5230 = vadd.f32 0.0, %v5229
      %v5231 = vpop.f32.mrb[0].mxu0
      %v5232 = vpop.f32.mrb[0].mxu0
      %v5233 = vpop.f32.mrb[0].mxu0
      %5234 = vdwg.mxu0
      %v5236 = vsel %vm1073, %v5182, 0
      %v5239 = vsel %vm1073, %v5186, 0
      %5241 = vmatprep.subr.bf16.mxu0 0
      %5242 = vmatpush1.bf16.xpose.msra.mxu0 %v5239
      %5243 = vmatprep.subr.bf16.mxu0 0
      %5244 = vmatpush1.bf16.xpose.msra.mxu0 0
      %5245 = vmatprep.subr.bf16.mxu0 0
      %5246 = vmatpush1.bf16.xpose.msra.mxu0 0
      %5247 = vmatprep.subr.bf16.mxu0 0
      %5248 = vmatpush1.bf16.xpose.msra.mxu0 0
      %5249 = vmatprep.subr.bf16.mxu0 0
      %5250 = vmatpush1.bf16.xpose.msra.mxu0 0
      %5251 = vmatprep.subr.bf16.mxu0 0
      %5252 = vmatpush1.bf16.xpose.msra.mxu0 0
      %5253 = vmatprep.subr.bf16.mxu0 0
      %5254 = vmatpush1.bf16.xpose.msra.mxu0 0
      %5255 = vmatprep.subr.bf16.mxu0 0
      %5256 = vmatpush1.bf16.xpose.msra.mxu0 0
      %5257 = vmatprep.subr.bf16.mxu0 0
      %5258 = vmatpush1.bf16.xpose.msra.mxu0 0
      %5259 = vmatprep.subr.bf16.mxu0 0
      %5260 = vmatpush1.bf16.xpose.msra.mxu0 0
      %5261 = vmatprep.subr.bf16.mxu0 0
      %5262 = vmatpush1.bf16.xpose.msra.mxu0 0
      %5263 = vmatprep.subr.bf16.mxu0 0
      %5264 = vmatpush1.bf16.xpose.msra.mxu0 0
      %5265 = vmatprep.subr.bf16.mxu0 0
      %5266 = vmatpush1.bf16.xpose.msra.mxu0 0
      %5267 = vmatprep.subr.bf16.mxu0 0
      %5268 = vmatpush1.bf16.xpose.msra.mxu0 0
      %5269 = vmatprep.subr.bf16.mxu0 0
      %5270 = vmatpush1.bf16.xpose.msra.mxu0 0
      %5271 = vmatprep.subr.bf16.mxu0 0
      %5272 = vmatpush1.bf16.xpose.msra.mxu0 0
      %5273 = vmatprep.mubr.bf16.mxu0 0
      %5274 = vmatmul.mubr.bf16.gmra.mrb[0].mxu0 %v5236
      %v5275 = vpop.f32.mrb[0].mxu0
      %v5276 = vadd.f32 0.0, %v5275
      %v5277 = vpop.f32.mrb[0].mxu0
      %v5278 = vpop.f32.mrb[0].mxu0
      %v5279 = vpop.f32.mrb[0].mxu0
      %5280 = vdwg.mxu0
      %v5282 = vsel %vm1073, %v5183, 0
      %v5285 = vsel %vm1073, %v5187, 0
      %5287 = vmatprep.subr.bf16.mxu0 0
      %5288 = vmatpush1.bf16.xpose.msra.mxu0 %v5285
      %5289 = vmatprep.subr.bf16.mxu0 0
      %5290 = vmatpush1.bf16.xpose.msra.mxu0 0
      %5291 = vmatprep.subr.bf16.mxu0 0
      %5292 = vmatpush1.bf16.xpose.msra.mxu0 0
      %5293 = vmatprep.subr.bf16.mxu0 0
      %5294 = vmatpush1.bf16.xpose.msra.mxu0 0
      %5295 = vmatprep.subr.bf16.mxu0 0
      %5296 = vmatpush1.bf16.xpose.msra.mxu0 0
      %5297 = vmatprep.subr.bf16.mxu0 0
      %5298 = vmatpush1.bf16.xpose.msra.mxu0 0
      %5299 = vmatprep.subr.bf16.mxu0 0
      %5300 = vmatpush1.bf16.xpose.msra.mxu0 0
      %5301 = vmatprep.subr.bf16.mxu0 0
      %5302 = vmatpush1.bf16.xpose.msra.mxu0 0
      %5303 = vmatprep.subr.bf16.mxu0 0
      %5304 = vmatpush1.bf16.xpose.msra.mxu0 0
      %5305 = vmatprep.subr.bf16.mxu0 0
      %5306 = vmatpush1.bf16.xpose.msra.mxu0 0
      %5307 = vmatprep.subr.bf16.mxu0 0
      %5308 = vmatpush1.bf16.xpose.msra.mxu0 0
      %5309 = vmatprep.subr.bf16.mxu0 0
      %5310 = vmatpush1.bf16.xpose.msra.mxu0 0
      %5311 = vmatprep.subr.bf16.mxu0 0
      %5312 = vmatpush1.bf16.xpose.msra.mxu0 0
      %5313 = vmatprep.subr.bf16.mxu0 0
      %5314 = vmatpush1.bf16.xpose.msra.mxu0 0
      %5315 = vmatprep.subr.bf16.mxu0 0
      %5316 = vmatpush1.bf16.xpose.msra.mxu0 0
      %5317 = vmatprep.subr.bf16.mxu0 0
      %5318 = vmatpush1.bf16.xpose.msra.mxu0 0
      %5319 = vmatprep.mubr.bf16.mxu0 0
      %5320 = vmatmul.mubr.bf16.gmra.mrb[0].mxu0 %v5282
      %v5321 = vpop.f32.mrb[0].mxu0
      %v5322 = vadd.f32 0.0, %v5321
      %v5323 = vpop.f32.mrb[0].mxu0
      %v5324 = vpop.f32.mrb[0].mxu0
      %v5325 = vpop.f32.mrb[0].mxu0
      %5326 = vdwg.mxu0
      %v5328 = vsel %vm1073, %v5184, 0
      %v5331 = vsel %vm1073, %v5188, 0
      %5333 = vmatprep.subr.bf16.mxu0 0
      %5334 = vmatpush1.bf16.xpose.msra.mxu0 %v5331
      %5335 = vmatprep.subr.bf16.mxu0 0
      %5336 = vmatpush1.bf16.xpose.msra.mxu0 0
      %5337 = vmatprep.subr.bf16.mxu0 0
      %5338 = vmatpush1.bf16.xpose.msra.mxu0 0
      %5339 = vmatprep.subr.bf16.mxu0 0
      %5340 = vmatpush1.bf16.xpose.msra.mxu0 0
      %5341 = vmatprep.subr.bf16.mxu0 0
      %5342 = vmatpush1.bf16.xpose.msra.mxu0 0
      %5343 = vmatprep.subr.bf16.mxu0 0
      %5344 = vmatpush1.bf16.xpose.msra.mxu0 0
      %5345 = vmatprep.subr.bf16.mxu0 0
      %5346 = vmatpush1.bf16.xpose.msra.mxu0 0
      %5347 = vmatprep.subr.bf16.mxu0 0
      %5348 = vmatpush1.bf16.xpose.msra.mxu0 0
      %5349 = vmatprep.subr.bf16.mxu0 0
      %5350 = vmatpush1.bf16.xpose.msra.mxu0 0
      %5351 = vmatprep.subr.bf16.mxu0 0
      %5352 = vmatpush1.bf16.xpose.msra.mxu0 0
      %5353 = vmatprep.subr.bf16.mxu0 0
      %5354 = vmatpush1.bf16.xpose.msra.mxu0 0
      %5355 = vmatprep.subr.bf16.mxu0 0
      %5356 = vmatpush1.bf16.xpose.msra.mxu0 0
      %5357 = vmatprep.subr.bf16.mxu0 0
      %5358 = vmatpush1.bf16.xpose.msra.mxu0 0
      %5359 = vmatprep.subr.bf16.mxu0 0
      %5360 = vmatpush1.bf16.xpose.msra.mxu0 0
      %5361 = vmatprep.subr.bf16.mxu0 0
      %5362 = vmatpush1.bf16.xpose.msra.mxu0 0
      %5363 = vmatprep.subr.bf16.mxu0 0
      %5364 = vmatpush1.bf16.xpose.msra.mxu0 0
      %5365 = vmatprep.mubr.bf16.mxu0 0
      %5366 = vmatmul.mubr.bf16.gmra.mrb[0].mxu0 %v5328
      %v5367 = vpop.f32.mrb[0].mxu0
      %v5368 = vadd.f32 0.0, %v5367
      %v5369 = vpop.f32.mrb[0].mxu0
      %v5370 = vpop.f32.mrb[0].mxu0
      %v5371 = vpop.f32.mrb[0].mxu0
      %5372 = vdwg.mxu0
      %v5373 = vsel %vm1073, %v5230, -inf
      %5374 = vmax.xlane.f32.xlu0 %v5373
      %v5375 = vpop.xlane.xlu0 %5374
      %v5376 = vsel %vm1073, %v5276, -inf
      %5377 = vmax.xlane.f32.xlu0 %v5376
      %v5378 = vpop.xlane.xlu0 %5377
      %v5379 = vsel %vm1073, %v5322, -inf
      %5380 = vmax.xlane.f32.xlu0 %v5379
      %v5381 = vpop.xlane.xlu0 %5380
      %v5382 = vsel %vm1073, %v5368, -inf
      %5383 = vmax.xlane.f32.xlu0 %v5382
      %v5384 = vpop.xlane.xlu0 %5383
      %v5385 = vsub.f32 %v5230, %v5375
      %v5386 = vsub.f32 %v5276, %v5378
      %v5387 = vsub.f32 %v5322, %v5381
      %v5388 = vsub.f32 %v5368, %v5384
      %v5389 = vmul.f32 %v5385, 1.442695
      %v5390 = vpow.pop %v5389
      %v5391 = vmul.f32 %v5386, 1.442695
      %v5392 = vpow.pop %v5391
      %v5393 = vmul.f32 %v5387, 1.442695
      %v5394 = vpow.pop %v5393
      %v5395 = vmul.f32 %v5388, 1.442695
      %v5396 = vpow.pop %v5395
      %v5397 = vsel %vm1073, %v5390, 0.0
      %5398 = vadd.xlane.f32.xlu0 %v5397
      %v5399 = vpop.xlane.xlu0 %5398
      %v5400 = vsel %vm1073, %v5392, 0.0
      %5401 = vadd.xlane.f32.xlu0 %v5400
      %v5402 = vpop.xlane.xlu0 %5401
      %v5403 = vsel %vm1073, %v5394, 0.0
      %5404 = vadd.xlane.f32.xlu0 %v5403
      %v5405 = vpop.xlane.xlu0 %5404
      %v5406 = vsel %vm1073, %v5396, 0.0
      %5407 = vadd.xlane.f32.xlu0 %v5406
      %v5408 = vpop.xlane.xlu0 %5407
      %v5409 = vpack.c.bf16 %v5390, %v5390
      %v5410 = vpack.c.bf16 %v5392, %v5392
      %v5411 = vpack.c.bf16 %v5394, %v5394
      %v5412 = vpack.c.bf16 %v5396, %v5396
      %v5413 = vpack.c.bf16 %v5146, %v5146
      %v5414 = vpack.c.bf16 %v5173, %v5173
      %v5415 = vpack.c.bf16 %v5176, %v5176
      %v5416 = vpack.c.bf16 %v5179, %v5179
      %v5418 = vsel %vm1073, %v5409, 0
      %v5421 = vsel %vm1305, %v5413, 0
      %5423 = vmatprep.subr.bf16.mxu0 0
      %5424 = vmatpush1.bf16.msra.mxu0 %v5421
      %5425 = vmatprep.subr.bf16.mxu0 0
      %5426 = vmatpush1.bf16.msra.mxu0 0
      %5427 = vmatprep.subr.bf16.mxu0 0
      %5428 = vmatpush1.bf16.msra.mxu0 0
      %5429 = vmatprep.subr.bf16.mxu0 0
      %5430 = vmatpush1.bf16.msra.mxu0 0
      %5431 = vmatprep.subr.bf16.mxu0 0
      %5432 = vmatpush1.bf16.msra.mxu0 0
      %5433 = vmatprep.subr.bf16.mxu0 0
      %5434 = vmatpush1.bf16.msra.mxu0 0
      %5435 = vmatprep.subr.bf16.mxu0 0
      %5436 = vmatpush1.bf16.msra.mxu0 0
      %5437 = vmatprep.subr.bf16.mxu0 0
      %5438 = vmatpush1.bf16.msra.mxu0 0
      %5439 = vmatprep.subr.bf16.mxu0 0
      %5440 = vmatpush1.bf16.msra.mxu0 0
      %5441 = vmatprep.subr.bf16.mxu0 0
      %5442 = vmatpush1.bf16.msra.mxu0 0
      %5443 = vmatprep.subr.bf16.mxu0 0
      %5444 = vmatpush1.bf16.msra.mxu0 0
      %5445 = vmatprep.subr.bf16.mxu0 0
      %5446 = vmatpush1.bf16.msra.mxu0 0
      %5447 = vmatprep.subr.bf16.mxu0 0
      %5448 = vmatpush1.bf16.msra.mxu0 0
      %5449 = vmatprep.subr.bf16.mxu0 0
      %5450 = vmatpush1.bf16.msra.mxu0 0
      %5451 = vmatprep.subr.bf16.mxu0 0
      %5452 = vmatpush1.bf16.msra.mxu0 0
      %5453 = vmatprep.subr.bf16.mxu0 0
      %5454 = vmatpush1.bf16.msra.mxu0 0
      %5455 = vmatprep.mubr.bf16.mxu0 0
      %5456 = vmatmul.mubr.bf16.gmra.mrb[0].mxu0 %v5418
      %v5457 = vpop.f32.mrb[0].mxu0
      %v5458 = vadd.f32 0.0, %v5457
      %v5459 = vpop.f32.mrb[0].mxu0
      %v5460 = vpop.f32.mrb[0].mxu0
      %v5461 = vpop.f32.mrb[0].mxu0
      %5462 = vdwg.mxu0
      %v5464 = vsel %vm1073, %v5410, 0
      %v5467 = vsel %vm1305, %v5414, 0
      %5469 = vmatprep.subr.bf16.mxu0 0
      %5470 = vmatpush1.bf16.msra.mxu0 %v5467
      %5471 = vmatprep.subr.bf16.mxu0 0
      %5472 = vmatpush1.bf16.msra.mxu0 0
      %5473 = vmatprep.subr.bf16.mxu0 0
      %5474 = vmatpush1.bf16.msra.mxu0 0
      %5475 = vmatprep.subr.bf16.mxu0 0
      %5476 = vmatpush1.bf16.msra.mxu0 0
      %5477 = vmatprep.subr.bf16.mxu0 0
      %5478 = vmatpush1.bf16.msra.mxu0 0
      %5479 = vmatprep.subr.bf16.mxu0 0
      %5480 = vmatpush1.bf16.msra.mxu0 0
      %5481 = vmatprep.subr.bf16.mxu0 0
      %5482 = vmatpush1.bf16.msra.mxu0 0
      %5483 = vmatprep.subr.bf16.mxu0 0
      %5484 = vmatpush1.bf16.msra.mxu0 0
      %5485 = vmatprep.subr.bf16.mxu0 0
      %5486 = vmatpush1.bf16.msra.mxu0 0
      %5487 = vmatprep.subr.bf16.mxu0 0
      %5488 = vmatpush1.bf16.msra.mxu0 0
      %5489 = vmatprep.subr.bf16.mxu0 0
      %5490 = vmatpush1.bf16.msra.mxu0 0
      %5491 = vmatprep.subr.bf16.mxu0 0
      %5492 = vmatpush1.bf16.msra.mxu0 0
      %5493 = vmatprep.subr.bf16.mxu0 0
      %5494 = vmatpush1.bf16.msra.mxu0 0
      %5495 = vmatprep.subr.bf16.mxu0 0
      %5496 = vmatpush1.bf16.msra.mxu0 0
      %5497 = vmatprep.subr.bf16.mxu0 0
      %5498 = vmatpush1.bf16.msra.mxu0 0
      %5499 = vmatprep.subr.bf16.mxu0 0
      %5500 = vmatpush1.bf16.msra.mxu0 0
      %5501 = vmatprep.mubr.bf16.mxu0 0
      %5502 = vmatmul.mubr.bf16.gmra.mrb[0].mxu0 %v5464
      %v5503 = vpop.f32.mrb[0].mxu0
      %v5504 = vadd.f32 0.0, %v5503
      %v5505 = vpop.f32.mrb[0].mxu0
      %v5506 = vpop.f32.mrb[0].mxu0
      %v5507 = vpop.f32.mrb[0].mxu0
      %5508 = vdwg.mxu0
      %v5510 = vsel %vm1073, %v5411, 0
      %v5513 = vsel %vm1305, %v5415, 0
      %5515 = vmatprep.subr.bf16.mxu0 0
      %5516 = vmatpush1.bf16.msra.mxu0 %v5513
      %5517 = vmatprep.subr.bf16.mxu0 0
      %5518 = vmatpush1.bf16.msra.mxu0 0
      %5519 = vmatprep.subr.bf16.mxu0 0
      %5520 = vmatpush1.bf16.msra.mxu0 0
      %5521 = vmatprep.subr.bf16.mxu0 0
      %5522 = vmatpush1.bf16.msra.mxu0 0
      %5523 = vmatprep.subr.bf16.mxu0 0
      %5524 = vmatpush1.bf16.msra.mxu0 0
      %5525 = vmatprep.subr.bf16.mxu0 0
      %5526 = vmatpush1.bf16.msra.mxu0 0
      %5527 = vmatprep.subr.bf16.mxu0 0
      %5528 = vmatpush1.bf16.msra.mxu0 0
      %5529 = vmatprep.subr.bf16.mxu0 0
      %5530 = vmatpush1.bf16.msra.mxu0 0
      %5531 = vmatprep.subr.bf16.mxu0 0
      %5532 = vmatpush1.bf16.msra.mxu0 0
      %5533 = vmatprep.subr.bf16.mxu0 0
      %5534 = vmatpush1.bf16.msra.mxu0 0
      %5535 = vmatprep.subr.bf16.mxu0 0
      %5536 = vmatpush1.bf16.msra.mxu0 0
      %5537 = vmatprep.subr.bf16.mxu0 0
      %5538 = vmatpush1.bf16.msra.mxu0 0
      %5539 = vmatprep.subr.bf16.mxu0 0
      %5540 = vmatpush1.bf16.msra.mxu0 0
      %5541 = vmatprep.subr.bf16.mxu0 0
      %5542 = vmatpush1.bf16.msra.mxu0 0
      %5543 = vmatprep.subr.bf16.mxu0 0
      %5544 = vmatpush1.bf16.msra.mxu0 0
      %5545 = vmatprep.subr.bf16.mxu0 0
      %5546 = vmatpush1.bf16.msra.mxu0 0
      %5547 = vmatprep.mubr.bf16.mxu0 0
      %5548 = vmatmul.mubr.bf16.gmra.mrb[0].mxu0 %v5510
      %v5549 = vpop.f32.mrb[0].mxu0
      %v5550 = vadd.f32 0.0, %v5549
      %v5551 = vpop.f32.mrb[0].mxu0
      %v5552 = vpop.f32.mrb[0].mxu0
      %v5553 = vpop.f32.mrb[0].mxu0
      %5554 = vdwg.mxu0
      %v5556 = vsel %vm1073, %v5412, 0
      %v5559 = vsel %vm1305, %v5416, 0
      %5561 = vmatprep.subr.bf16.mxu0 0
      %5562 = vmatpush1.bf16.msra.mxu0 %v5559
      %5563 = vmatprep.subr.bf16.mxu0 0
      %5564 = vmatpush1.bf16.msra.mxu0 0
      %5565 = vmatprep.subr.bf16.mxu0 0
      %5566 = vmatpush1.bf16.msra.mxu0 0
      %5567 = vmatprep.subr.bf16.mxu0 0
      %5568 = vmatpush1.bf16.msra.mxu0 0
      %5569 = vmatprep.subr.bf16.mxu0 0
      %5570 = vmatpush1.bf16.msra.mxu0 0
      %5571 = vmatprep.subr.bf16.mxu0 0
      %5572 = vmatpush1.bf16.msra.mxu0 0
      %5573 = vmatprep.subr.bf16.mxu0 0
      %5574 = vmatpush1.bf16.msra.mxu0 0
      %5575 = vmatprep.subr.bf16.mxu0 0
      %5576 = vmatpush1.bf16.msra.mxu0 0
      %5577 = vmatprep.subr.bf16.mxu0 0
      %5578 = vmatpush1.bf16.msra.mxu0 0
      %5579 = vmatprep.subr.bf16.mxu0 0
      %5580 = vmatpush1.bf16.msra.mxu0 0
      %5581 = vmatprep.subr.bf16.mxu0 0
      %5582 = vmatpush1.bf16.msra.mxu0 0
      %5583 = vmatprep.subr.bf16.mxu0 0
      %5584 = vmatpush1.bf16.msra.mxu0 0
      %5585 = vmatprep.subr.bf16.mxu0 0
      %5586 = vmatpush1.bf16.msra.mxu0 0
      %5587 = vmatprep.subr.bf16.mxu0 0
      %5588 = vmatpush1.bf16.msra.mxu0 0
      %5589 = vmatprep.subr.bf16.mxu0 0
      %5590 = vmatpush1.bf16.msra.mxu0 0
      %5591 = vmatprep.subr.bf16.mxu0 0
      %5592 = vmatpush1.bf16.msra.mxu0 0
      %5593 = vmatprep.mubr.bf16.mxu0 0
      %5594 = vmatmul.mubr.bf16.gmra.mrb[0].mxu0 %v5556
      %v5595 = vpop.f32.mrb[0].mxu0
      %v5596 = vadd.f32 0.0, %v5595
      %v5597 = vpop.f32.mrb[0].mxu0
      %v5598 = vpop.f32.mrb[0].mxu0
      %v5599 = vpop.f32.mrb[0].mxu0
      %5600 = vdwg.mxu0
      %v5601 = vrcp.pop %v5399
      %v5602 = vrcp.pop %v5402
      %v5603 = vrcp.pop %v5405
      %v5604 = vrcp.pop %v5408
      %v5605 = vmul.f32 %v5458, %v5601
      %v5606 = vmul.f32 %v5504, %v5602
      %v5607 = vmul.f32 %v5550, %v5603
      %v5608 = vmul.f32 %v5596, %v5604
      %5610 = vrot.lane.b32.xlu0 %v5606, 8
      %v5611 = vpop.permute.xlu0 %5610
      %5614 = vrot.lane.b32.xlu0 %v5607, 16
      %v5615 = vpop.permute.xlu0 %5614
      %5618 = vrot.lane.b32.xlu0 %v5608, 24
      %v5619 = vpop.permute.xlu0 %5618
      %v5621 = vsel %vm1073, %v5605, %v5611
      %v5622 = vsel %vm1508, %v5621, %v5615
      %v5623 = vsel %vm1510, %v5622, %v5619
      %v5624 = vpack.c.bf16 %v5623, %v5623
      %v5629 = vunpack.c.l.b16 %v4987
      %v5630 = vunpack.c.l.b16 %v4988
      %v5631 = vunpack.c.l.b16 %v4989
      %v5632 = vunpack.c.l.b16 %v4990
      %v5633 = vpack.c.b16 %v5630, %v5629
      %v5634 = vpack.c.b16 %v5632, %v5631
      %v5638 = vsel %vm843, %v5624, 0
      %5640 = vmatprep.subr.bf16.mxu0 0
      %5641 = vmatpush1.bf16.msra.mxu0 %v5633
      %5642 = vmatprep.subr.bf16.mxu0 0
      %5643 = vmatpush1.bf16.msra.mxu0 %v5634
      %5644 = vmatprep.subr.bf16.mxu0 0
      %5645 = vmatpush1.bf16.msra.mxu0 0
      %5646 = vmatprep.subr.bf16.mxu0 0
      %5647 = vmatpush1.bf16.msra.mxu0 0
      %5648 = vmatprep.subr.bf16.mxu0 0
      %5649 = vmatpush1.bf16.msra.mxu0 0
      %5650 = vmatprep.subr.bf16.mxu0 0
      %5651 = vmatpush1.bf16.msra.mxu0 0
      %5652 = vmatprep.subr.bf16.mxu0 0
      %5653 = vmatpush1.bf16.msra.mxu0 0
      %5654 = vmatprep.subr.bf16.mxu0 0
      %5655 = vmatpush1.bf16.msra.mxu0 0
      %5656 = vmatprep.subr.bf16.mxu0 0
      %5657 = vmatpush1.bf16.msra.mxu0 0
      %5658 = vmatprep.subr.bf16.mxu0 0
      %5659 = vmatpush1.bf16.msra.mxu0 0
      %5660 = vmatprep.subr.bf16.mxu0 0
      %5661 = vmatpush1.bf16.msra.mxu0 0
      %5662 = vmatprep.subr.bf16.mxu0 0
      %5663 = vmatpush1.bf16.msra.mxu0 0
      %5664 = vmatprep.subr.bf16.mxu0 0
      %5665 = vmatpush1.bf16.msra.mxu0 0
      %5666 = vmatprep.subr.bf16.mxu0 0
      %5667 = vmatpush1.bf16.msra.mxu0 0
      %5668 = vmatprep.subr.bf16.mxu0 0
      %5669 = vmatpush1.bf16.msra.mxu0 0
      %5670 = vmatprep.subr.bf16.mxu0 0
      %5671 = vmatpush1.bf16.msra.mxu0 0
      %5672 = vmatprep.mubr.bf16.mxu0 0
      %5673 = vmatmul.mubr.bf16.gmra.mrb[0].mxu0 %v5638
      %v5674 = vpop.f32.mrb[0].mxu0
      %v5675 = vadd.f32 0.0, %v5674
      %v5676 = vpop.f32.mrb[0].mxu0
      %v5677 = vpop.f32.mrb[0].mxu0
      %v5678 = vpop.f32.mrb[0].mxu0
      %5679 = vdwg.mxu0
      %v5680 = vadd.f32 %v4953, %v5675
      %s5681 = scalar_lea.vmem %s23, 1
      %v5682 = vld [vmem:[%s5681] sm:$0x1]
      %v5683 = vmul.f32 %v5680, %v5680
      %v5684 = vsel %vm843, %v5683, 0.0
      %5685 = vadd.xlane.f32.xlu0 %v5684
      %v5686 = vpop.xlane.xlu0 %5685
      %v5687 = vmul.f32 %v5686, %v847
      %v5688 = vadd.f32 %v5687, 1e-06
      %v5689 = vrsqrt.pop %v5688
      %v5690 = vmul.f32 %v5680, %v5689
      %v5692 = vlaneseq
      %v5693 = vshrl.u32 %v5692, 7
      %v5694 = vsub.s32 0, %v5693
      %v5695 = vrot.slane %v5682, %v5694
      %v5697 = vmul.f32 %v5690, %v5695
      %s5698 = scalar_lea.vmem %s24, 16
      %v5699 = vld [vmem:[%s5698] sm:$0xf]
      %v5700 = vld [vmem:[%s5698 + $0x4] sm:$0xf]
      %v5701 = vld [vmem:[%s5698 + $0x8] sm:$0xf]
      %v5702 = vld [vmem:[%s5698 + $0xc] sm:$0xf]
      %s5703 = scalar_lea.vmem %s25, 32
      %v5704 = vld [vmem:[%s5703] sm:$0xf]
      %v5705 = vld [vmem:[%s5703 + $0x4] sm:$0xf]
      %v5706 = vld [vmem:[%s5703 + $0x8] sm:$0xf]
      %v5707 = vld [vmem:[%s5703 + $0xc] sm:$0xf]
      %v5708 = vld [vmem:[%s5703 + $0x10] sm:$0xf]
      %v5709 = vld [vmem:[%s5703 + $0x14] sm:$0xf]
      %v5710 = vld [vmem:[%s5703 + $0x18] sm:$0xf]
      %v5711 = vld [vmem:[%s5703 + $0x1c] sm:$0xf]
      %v5712 = vpack.c.bf16 %v5697, %v5697
      %v5717 = vunpack.c.l.b16 %v5699
      %v5718 = vunpack.c.l.b16 %v5700
      %v5719 = vunpack.c.l.b16 %v5701
      %v5720 = vunpack.c.l.b16 %v5702
      %v5721 = vpack.c.b16 %v5718, %v5717
      %v5722 = vpack.c.b16 %v5720, %v5719
      %v5726 = vsel %vm843, %v5712, 0
      %5728 = vmatprep.subr.bf16.mxu0 0
      %5729 = vmatpush1.bf16.msra.mxu0 %v5721
      %5730 = vmatprep.subr.bf16.mxu0 0
      %5731 = vmatpush1.bf16.msra.mxu0 %v5722
      %5732 = vmatprep.subr.bf16.mxu0 0
      %5733 = vmatpush1.bf16.msra.mxu0 0
      %5734 = vmatprep.subr.bf16.mxu0 0
      %5735 = vmatpush1.bf16.msra.mxu0 0
      %5736 = vmatprep.subr.bf16.mxu0 0
      %5737 = vmatpush1.bf16.msra.mxu0 0
      %5738 = vmatprep.subr.bf16.mxu0 0
      %5739 = vmatpush1.bf16.msra.mxu0 0
      %5740 = vmatprep.subr.bf16.mxu0 0
      %5741 = vmatpush1.bf16.msra.mxu0 0
      %5742 = vmatprep.subr.bf16.mxu0 0
      %5743 = vmatpush1.bf16.msra.mxu0 0
      %5744 = vmatprep.subr.bf16.mxu0 0
      %5745 = vmatpush1.bf16.msra.mxu0 0
      %5746 = vmatprep.subr.bf16.mxu0 0
      %5747 = vmatpush1.bf16.msra.mxu0 0
      %5748 = vmatprep.subr.bf16.mxu0 0
      %5749 = vmatpush1.bf16.msra.mxu0 0
      %5750 = vmatprep.subr.bf16.mxu0 0
      %5751 = vmatpush1.bf16.msra.mxu0 0
      %5752 = vmatprep.subr.bf16.mxu0 0
      %5753 = vmatpush1.bf16.msra.mxu0 0
      %5754 = vmatprep.subr.bf16.mxu0 0
      %5755 = vmatpush1.bf16.msra.mxu0 0
      %5756 = vmatprep.subr.bf16.mxu0 0
      %5757 = vmatpush1.bf16.msra.mxu0 0
      %5758 = vmatprep.subr.bf16.mxu0 0
      %5759 = vmatpush1.bf16.msra.mxu0 0
      %5760 = vmatprep.mubr.bf16.mxu0 0
      %5761 = vmatmul.mubr.bf16.gmra.mrb[0].mxu0 %v5726
      %v5762 = vpop.f32.mrb[0].mxu0
      %v5763 = vadd.f32 0.0, %v5762
      %v5764 = vpop.f32.mrb[0].mxu0
      %v5765 = vpop.f32.mrb[0].mxu0
      %v5766 = vpop.f32.mrb[0].mxu0
      %5767 = vdwg.mxu0
      %v5768 = vmax.f32 %v5763, 0.0
      %v5769 = vpack.c.bf16 %v5768, %v5768
      %v5778 = vunpack.c.l.b16 %v5704
      %v5779 = vunpack.c.l.b16 %v5705
      %v5780 = vunpack.c.l.b16 %v5706
      %v5781 = vunpack.c.l.b16 %v5707
      %v5782 = vunpack.c.l.b16 %v5708
      %v5783 = vunpack.c.l.b16 %v5709
      %v5784 = vunpack.c.l.b16 %v5710
      %v5785 = vunpack.c.l.b16 %v5711
      %v5786 = vpack.c.b16 %v5779, %v5778
      %v5787 = vpack.c.b16 %v5781, %v5780
      %v5788 = vpack.c.b16 %v5783, %v5782
      %v5789 = vpack.c.b16 %v5785, %v5784
      %v5795 = vsel %vm1679, %v5769, 0
      %5797 = vmatprep.subr.bf16.mxu0 0
      %5798 = vmatpush1.bf16.msra.mxu0 %v5786
      %5799 = vmatprep.subr.bf16.mxu0 0
      %5800 = vmatpush1.bf16.msra.mxu0 %v5787
      %5801 = vmatprep.subr.bf16.mxu0 0
      %5802 = vmatpush1.bf16.msra.mxu0 %v5788
      %5803 = vmatprep.subr.bf16.mxu0 0
      %5804 = vmatpush1.bf16.msra.mxu0 %v5789
      %5805 = vmatprep.subr.bf16.mxu0 0
      %5806 = vmatpush1.bf16.msra.mxu0 0
      %5807 = vmatprep.subr.bf16.mxu0 0
      %5808 = vmatpush1.bf16.msra.mxu0 0
      %5809 = vmatprep.subr.bf16.mxu0 0
      %5810 = vmatpush1.bf16.msra.mxu0 0
      %5811 = vmatprep.subr.bf16.mxu0 0
      %5812 = vmatpush1.bf16.msra.mxu0 0
      %5813 = vmatprep.subr.bf16.mxu0 0
      %5814 = vmatpush1.bf16.msra.mxu0 0
      %5815 = vmatprep.subr.bf16.mxu0 0
      %5816 = vmatpush1.bf16.msra.mxu0 0
      %5817 = vmatprep.subr.bf16.mxu0 0
      %5818 = vmatpush1.bf16.msra.mxu0 0
      %5819 = vmatprep.subr.bf16.mxu0 0
      %5820 = vmatpush1.bf16.msra.mxu0 0
      %5821 = vmatprep.subr.bf16.mxu0 0
      %5822 = vmatpush1.bf16.msra.mxu0 0
      %5823 = vmatprep.subr.bf16.mxu0 0
      %5824 = vmatpush1.bf16.msra.mxu0 0
      %5825 = vmatprep.subr.bf16.mxu0 0
      %5826 = vmatpush1.bf16.msra.mxu0 0
      %5827 = vmatprep.subr.bf16.mxu0 0
      %5828 = vmatpush1.bf16.msra.mxu0 0
      %5829 = vmatprep.mubr.bf16.mxu0 0
      %5830 = vmatmul.mubr.bf16.gmra.mrb[0].mxu0 %v5795
      %v5831 = vpop.f32.mrb[0].mxu0
      %v5832 = vadd.f32 0.0, %v5831
      %v5833 = vpop.f32.mrb[0].mxu0
      %v5834 = vpop.f32.mrb[0].mxu0
      %v5835 = vpop.f32.mrb[0].mxu0
      %5836 = vdwg.mxu0
      %v5837 = vadd.f32 %v5680, %v5832
      %v5838 = vld [vmem:[%s26] sm:$0x1]
      %v5839 = vmul.f32 %v5837, %v5837
      %v5840 = vsel %vm843, %v5839, 0.0
      %5841 = vadd.xlane.f32.xlu0 %v5840
      %v5842 = vpop.xlane.xlu0 %5841
      %v5843 = vmul.f32 %v5842, %v847
      %v5844 = vadd.f32 %v5843, 1e-06
      %v5845 = vrsqrt.pop %v5844
      %v5846 = vmul.f32 %v5837, %v5845
      %v5848 = vlaneseq
      %v5849 = vshrl.u32 %v5848, 7
      %v5850 = vsub.s32 0, %v5849
      %v5851 = vrot.slane %v5838, %v5850
      %v5853 = vmul.f32 %v5846, %v5851
      %v5855 = vrot.slane %v5853, 1
      %5856 = vrot.lane.b32.xlu0 %v5855, 32
      %v5857 = vpop.permute.xlu0 %5856
      %v5859 = vrot.slane %v5853, 2
      %5860 = vrot.lane.b32.xlu0 %v5859, 64
      %v5861 = vpop.permute.xlu0 %5860
      %v5863 = vrot.slane %v5853, 3
      %5864 = vrot.lane.b32.xlu0 %v5863, 96
      %v5865 = vpop.permute.xlu0 %5864
      %v5867 = vsel %vm843, %v5853, %v5857
      %v5868 = vsel %vm1679, %v5867, %v5861
      %vm5869 = vcmask 785408
      %v5870 = vsel %vm5869, %v5868, %v5865
      %v5872 = vrot.slane %v5870, 3
      %vm5874 = vcmask 1040384
      %v5875 = vsel %vm5874, %v5870, %v5872
      %5876 = vst [vmem:[%s830] sm:$0x3] %v5875
      %p5877 = scmp.lt.s32.totalorder %s38, 1
      %s5878 = scalar_select %p5877, %s38, 1
      %s5879 = smul.addr %s5878, 2
      %s5880 = scalar_lea.vmem %s27, %s5879
      // Predicated region
      $region129: #{t5_forward.1} parent=127 // pred_check
        %p5881 = pneg %p633
      $region130: #{t5_forward.1} parent=127 // pred_check_branch
        %5883 = sbr.rel (%p5881) target = $region132
      $region131: #{t5_forward.1} parent=127 // pred_region
        _
      $region132: #{t5_forward.1} parent=127 // pred_fallthru
        _
    $region128: #{t5_forward.1} parent=5 // pred_fallthru
      _
    %p5884 = scmp.le.s32.totalorder 2, %s33
    // Predicated region
    $region133: #{t5_forward.1} parent=5 // pred_check
      %p5885 = pneg %p5884
    $region134: #{t5_forward.1} parent=5 // pred_check_branch
      %5887 = sbr.rel (%p5885) target = $region136
    $region135: #{t5_forward.1} parent=5 // pred_region
      %s5888 = ssub.s32 %s33, 2
      // Predicated region
      $region137: #{t5_forward.1} parent=135 // pred_check
        %p5889 = pneg %p639
      $region138: #{t5_forward.1} parent=135 // pred_check_branch
        %5891 = sbr.rel (%p5889) target = $region140
      $region139: #{t5_forward.1} parent=135 // pred_region
        %p5892 = scmp.lt.s32.totalorder %s39, 1
        %s5893 = scalar_select %p5892, %s39, 1
        %s5894 = smul.addr %s5893, 2
        %s5895 = scalar_lea.vmem %s27, %s5894
      $region140: #{t5_forward.1} parent=135 // pred_fallthru
        _
    $region136: #{t5_forward.1} parent=5 // pred_fallthru
      _
  $region6: #{t5_forward.1} parent=0 // loop_footer
    %s37 = sadd.s32 1, %s33
  $region7: #{t5_forward.1} parent=0 // loop_footer_branch
    %32 = sbr.rel target = $region3
  $region8: #{t5_forward.1} parent=0 // loop_exit
    _

</llo_original>
